<compile_context>
chip_gen: v6e
topology: v6e:2x2x1
jax: 0.10.0
libtpu: 0.0.40
codegen_flags: <defaults>
</compile_context>

<pallas_src>
import functools

import jax
import jax.numpy as jnp
import numpy as np
from jax.experimental import pallas as pl
from jax.experimental.pallas import tpu as pltpu

LANE = 128   # HBM-facing output channel dims padded to the lane width
SUB = 16     # contraction-only channel dims padded to the bf16 sublane multiple


# ---------------------------------------------------------------------------
# Weight / bias preparation helpers (plain JAX, run once per model)
# ---------------------------------------------------------------------------
def _rup(c, m):
    return ((c + m - 1) // m) * m


def _pad_axis(a, size, axis):
    pad = [(0, 0)] * a.ndim
    pad[axis] = (0, size - a.shape[axis])
    return jnp.pad(a, pad)


def oihw_to_hwio(w):
    return jnp.transpose(w, (2, 3, 1, 0))


def _bias_pad(b, cp):
    return _pad_axis(b.reshape(1, -1), cp, 1).astype(jnp.float32)


def _im2col_weight(w_oihw, cin_p, cout_p, dtype=jnp.bfloat16):
    """OIHW conv weight -> (KH*KW*cin_p, cout_p) slab, row order (ky, kx, cin)."""
    w = oihw_to_hwio(w_oihw)                       # (KH, KW, Cin, Cout)
    KH, KW = w.shape[:2]
    w = _pad_axis(_pad_axis(w, cin_p, 2), cout_p, 3)
    return w.reshape(KH * KW * cin_p, cout_p).astype(dtype)


def _convt_phase_weight(w_t, cin_p, cout_p, dtype=jnp.bfloat16):
    """PyTorch ConvTranspose2d(k=4, s=2, p=1) weight (Cin, Cout, 4, 4) ->
    (4, 4*cin_p, cout_p): for each output phase (py, px) a 2x2 conv weight over the
    un-stuffed input, rows ordered (dy, dx, cin).  Derivation:
      y[2p+py, 2q+px] = sum_{dy,dx} x_pad1[p+py+dy, q+px+dx] * w[:, :, 3-py-2dy, 3-px-2dx]
    """
    assert w_t.shape[2] == 4 and w_t.shape[3] == 4, (
        "phase decomposition only valid for ConvTranspose2d(kernel=4, stride=2, padding=1)")
    wk = jnp.transpose(w_t, (2, 3, 0, 1))          # (KH, KW, Cin, Cout)
    phases = []
    for py in range(2):
        for px in range(2):
            taps = [wk[3 - py - 2 * dy, 3 - px - 2 * dx]
                    for dy in range(2) for dx in range(2)]     # each (Cin, Cout)
            sub = jnp.stack(taps, 0)                            # (4, Cin, Cout)
            sub = _pad_axis(_pad_axis(sub, cin_p, 1), cout_p, 2)
            phases.append(sub.reshape(4 * cin_p, cout_p))
    return jnp.stack(phases, 0).astype(dtype)                   # (4, 4*cin_p, cout_p)


# ---------------------------------------------------------------------------
# Fused stem kernel: conv0(3x3,p=1) + ResBlocks (grid axis r) + trailing ReLU
# ---------------------------------------------------------------------------
def _stem_kernel(x_ref, w0_ref, b0_ref, w1_ref, b1_ref, w2_ref, b2_ref,
                 o_ref, hpad_ref, *, H, W):
    r = pl.program_id(1)
    CP = hpad_ref.shape[-1]

    def im2col3x3(src, c):                         # src value, live cols 0..W+1
        return jnp.concatenate(
            [src[ky:ky + H, kx:kx + W, :].reshape(H * W, c)
             for ky in range(3) for kx in range(3)],
            axis=-1)                               # (H*W, 9*c)

    @pl.when(r == 0)
    def _():
        # new image: zero the padded accumulator (border supplies the padding=1
        # zeros for every 3x3 conv below), then conv0 as one im2col matmul.
        hpad_ref[...] = jnp.zeros_like(hpad_ref)
        cin = x_ref.shape[-1]
        h0 = jnp.dot(im2col3x3(x_ref[0], cin), w0_ref[...],
                     preferred_element_type=jnp.float32) + b0_ref[...]
        hpad_ref[1:1 + H, 1:1 + W, :] = h0.reshape(H, W, CP)

    # ResBlock r: h += conv1x1(relu(conv3x3(relu(h))))  (f32 accumulator in VMEM)
    hp = jnp.maximum(hpad_ref[...], 0.0).astype(jnp.bfloat16)
    t = jnp.dot(im2col3x3(hp, CP), w1_ref[0],
                preferred_element_type=jnp.float32) + b1_ref[0]
    t = jnp.maximum(t, 0.0).astype(jnp.bfloat16)
    u = jnp.dot(t, w2_ref[0], preferred_element_type=jnp.float32) + b2_ref[0]
    hpad_ref[1:1 + H, 1:1 + W, :] = (hpad_ref[1:1 + H, 1:1 + W, :]
                                     + u.reshape(H, W, CP))

    @pl.when(r == pl.num_programs(1) - 1)
    def _():
        # trailing decoder ReLU fused here; store lane-dense bf16
        o_ref[0] = jnp.maximum(hpad_ref[1:1 + H, 1:1 + W, :], 0.0).astype(o_ref.dtype)


def _stem_call(xp, w0, b0, w1, b1, w2, b2, *, H, W):
    N, Hp, Wpin, CinP = xp.shape
    CP = w0.shape[1]
    CrP = w1.shape[-1]
    Rg = w1.shape[0]                                 # max(n_res_block, 1)
    WPH = _rup(W + 2, SUB)
    kernel = functools.partial(_stem_kernel, H=H, W=W)
    flops = int(N * (2 * H * W * (9 * CinP) * CP
                     + Rg * (2 * H * W * (9 * CP) * CrP + 2 * H * W * CrP * CP)))
    bytes_acc = int(xp.size * 2 + 2 * (w0.size + w1.size + w2.size)
                    + 4 * (b0.size + b1.size + b2.size) + N * H * W * CP * 2)
    return pl.pallas_call(
        kernel,
        out_shape=jax.ShapeDtypeStruct((N, H, W, CP), jnp.bfloat16),
        grid_spec=pltpu.PrefetchScalarGridSpec(
            num_scalar_prefetch=0,
            grid=(N, Rg),                            # r innermost; hpad carried
            in_specs=[
                pl.BlockSpec((1, Hp, Wpin, CinP), lambda n, r: (n, 0, 0, 0)),
                pl.BlockSpec(w0.shape, lambda n, r: (0, 0)),
                pl.BlockSpec(b0.shape, lambda n, r: (0, 0)),
                pl.BlockSpec((1,) + w1.shape[1:], lambda n, r: (r, 0, 0)),
                pl.BlockSpec((1,) + b1.shape[1:], lambda n, r: (r, 0, 0)),
                pl.BlockSpec((1,) + w2.shape[1:], lambda n, r: (r, 0, 0)),
                pl.BlockSpec((1,) + b2.shape[1:], lambda n, r: (r, 0, 0)),
            ],
            out_specs=pl.BlockSpec((1, H, W, CP), lambda n, r: (n, 0, 0, 0)),
            scratch_shapes=[pltpu.VMEM((H + 2, WPH, CP), jnp.float32)],
        ),
        compiler_params=pltpu.CompilerParams(
            dimension_semantics=("parallel", "arbitrary")),
        cost_estimate=pl.CostEstimate(flops=flops, transcendentals=0,
                                      bytes_accessed=bytes_acc),
    )(xp, w0, b0, w1, b1, w2, b2)


# ---------------------------------------------------------------------------
# Phase-decomposed ConvTranspose2d(4, stride=2, padding=1): all 4 phases in one
# grid step, interleave done via lane-concat + free row-major reshape outside.
# ---------------------------------------------------------------------------
def _convt_kernel(x_ref, w_ref, b_ref, o_ref, xpad_ref, *, H, W, post_relu):
    cin = x_ref.shape[-1]
    cout = b_ref.shape[-1]

    # pad-1 the input inside VMEM (no XLA pad / HBM round-trip between kernels)
    xpad_ref[...] = jnp.zeros_like(xpad_ref)
    xpad_ref[1:1 + H, 1:1 + W, :] = x_ref[0]
    xv = xpad_ref[...]

    def phase(py, px):                       # one output phase = 2x2 conv, 1 matmul
        patch = jnp.concatenate(
            [xv[py + dy:py + dy + H, px + dx:px + dx + W, :].reshape(H * W, cin)
             for dy in range(2) for dx in range(2)],
            axis=-1)                                            # (H*W, 4*cin)
        acc = jnp.dot(patch, w_ref[2 * py + px],
                      preferred_element_type=jnp.float32) + b_ref[...]
        if post_relu:
            acc = jnp.maximum(acc, 0.0)
        return acc                                              # (H*W, cout)

    # out5[n, i, py, j, px*cout + c] == y[n, 2i+py, 2j+px, c]
    for py in range(2):
        row = jnp.concatenate([phase(py, 0), phase(py, 1)], axis=-1)  # (H*W, 2*cout)
        o_ref[0, :, py, :, :] = row.reshape(H, W, 2 * cout).astype(o_ref.dtype)


def _convt_call(x, w_ph, b, *, post_relu):
    N, H, W, CinP = x.shape
    CoutP = w_ph.shape[-1]
    WPI = _rup(W + 2, SUB)
    kernel = functools.partial(_convt_kernel, H=H, W=W, post_relu=post_relu)
    flops = int(N * 4 * 2 * H * W * (4 * CinP) * CoutP)
    bytes_acc = int(x.size * 2 + w_ph.size * 2 + b.size * 4
                    + N * 4 * H * W * CoutP * 2)
    out5 = pl.pallas_call(
        kernel,
        out_shape=jax.ShapeDtypeStruct((N, H, 2, W, 2 * CoutP), jnp.bfloat16),
        grid_spec=pltpu.PrefetchScalarGridSpec(
            num_scalar_prefetch=0,
            grid=(N,),
            in_specs=[
                pl.BlockSpec((1, H, W, CinP), lambda n: (n, 0, 0, 0)),
                pl.BlockSpec(w_ph.shape, lambda n: (0, 0, 0)),
                pl.BlockSpec(b.shape, lambda n: (0, 0)),
            ],
            out_specs=pl.BlockSpec((1, H, 2, W, 2 * CoutP),
                                   lambda n: (n, 0, 0, 0, 0)),
            scratch_shapes=[pltpu.VMEM((H + 2, WPI, CinP), jnp.bfloat16)],
        ),
        compiler_params=pltpu.CompilerParams(dimension_semantics=("parallel",)),
        cost_estimate=pl.CostEstimate(flops=flops, transcendentals=0,
                                      bytes_accessed=bytes_acc),
    )(x, w_ph, b)
    # layout-preserving (row-major) reshape: (N,H,2,W,2C) == (N,2H,2W,C) — free.
    return out5.reshape(N, 2 * H, 2 * W, CoutP)


# ---------------------------------------------------------------------------
# Parameter setup (deterministic, synthetic), preparation, full forward
# ---------------------------------------------------------------------------
def init_decoder_params(key, in_channel, out_channel, channel, n_res_block,
                        n_res_channel, stride):
    keys = iter(jax.random.split(key, 64))
    nrm = lambda k, s: 0.05 * jax.random.normal(k, s, jnp.float32)
    p = {
        "conv0_w": nrm(next(keys), (channel, in_channel, 3, 3)),   # OIHW
        "conv0_b": nrm(next(keys), (channel,)),
        "res": [],
    }
    for _ in range(n_res_block):
        p["res"].append(dict(
            w1=nrm(next(keys), (n_res_channel, channel, 3, 3)),
            b1=nrm(next(keys), (n_res_channel,)),
            w2=nrm(next(keys), (channel, n_res_channel, 1, 1)),
            b2=nrm(next(keys), (channel,)),
        ))
    if stride == 4:
        p["ct1_w"] = nrm(next(keys), (channel, channel // 2, 4, 4))  # (Cin,Cout,KH,KW)
        p["ct1_b"] = nrm(next(keys), (channel // 2,))
        p["ct2_w"] = nrm(next(keys), (channel // 2, out_channel, 4, 4))
        p["ct2_b"] = nrm(next(keys), (out_channel,))
    elif stride == 2:
        p["ct1_w"] = nrm(next(keys), (channel, out_channel, 4, 4))
        p["ct1_b"] = nrm(next(keys), (out_channel,))
    return p


def prepare_decoder_params(p, stride):
    """Pad channels (contraction dims -> 16, lane/output dims -> 128), flatten
    weights into im2col / phase slabs (bf16)."""
    channel, in_channel = p["conv0_w"].shape[:2]
    CinP = _rup(in_channel, SUB)          # contraction-only
    CP = _rup(channel, LANE)              # activation lane dim (HBM-facing)
    prep = {"w0": _im2col_weight(p["conv0_w"], CinP, CP),
            "b0": _bias_pad(p["conv0_b"], CP)}
    if p["res"]:
        CrP = _rup(p["res"][0]["w1"].shape[0], SUB)   # contraction-only (1x1 conv K)
        prep["w1"] = jnp.stack([_im2col_weight(b["w1"], CP, CrP) for b in p["res"]])
        prep["b1"] = jnp.stack([_bias_pad(b["b1"], CrP) for b in p["res"]])
        prep["w2"] = jnp.stack([_im2col_weight(b["w2"], CrP, CP) for b in p["res"]])
        prep["b2"] = jnp.stack([_bias_pad(b["b2"], CP) for b in p["res"]])
    else:
        CrP = SUB                                      # dummy no-op resblock
        prep["w1"] = jnp.zeros((1, 9 * CP, CrP), jnp.bfloat16)
        prep["b1"] = jnp.zeros((1, 1, CrP), jnp.float32)
        prep["w2"] = jnp.zeros((1, CrP, CP), jnp.bfloat16)
        prep["b2"] = jnp.zeros((1, 1, CP), jnp.float32)
    if stride == 4:
        CmP = _rup(p["ct1_w"].shape[1], LANE)          # HBM-facing between ct1/ct2
        CoutP = _rup(p["ct2_w"].shape[1], LANE)
        prep["ct1_w"] = _convt_phase_weight(p["ct1_w"], CP, CmP)
        prep["ct1_b"] = _bias_pad(p["ct1_b"], CmP)
        prep["ct2_w"] = _convt_phase_weight(p["ct2_w"], CmP, CoutP)
        prep["ct2_b"] = _bias_pad(p["ct2_b"], CoutP)
    else:
        CoutP = _rup(p["ct1_w"].shape[1], LANE)
        prep["ct1_w"] = _convt_phase_weight(p["ct1_w"], CP, CoutP)
        prep["ct1_b"] = _bias_pad(p["ct1_b"], CoutP)
    return prep


@functools.partial(jax.jit, static_argnames=("out_channel", "stride", "n_res_block"))
def decoder_forward_pallas(prep, x_nchw, *, out_channel, stride, n_res_block):
    del n_res_block  # grid length comes from the stacked resblock weights
    N, Cin, H, W = x_nchw.shape
    CinP = prep["w0"].shape[0] // 9
    WPI = _rup(W + 2, SUB)
    x = jnp.transpose(x_nchw, (0, 2, 3, 1)).astype(jnp.bfloat16)      # NCHW -> NHWC
    # tiny conv0 input: pad channels to 16, add the 1-pixel conv border and round
    # the row width up to a sublane multiple (extra zero columns are never read).
    xp = jnp.pad(x, ((0, 0), (1, 1), (1, WPI - W - 1), (0, CinP - Cin)))
    h = _stem_call(xp, prep["w0"], prep["b0"], prep["w1"], prep["b1"],
                   prep["w2"], prep["b2"], H=H, W=W)
    if stride == 4:
        h = _convt_call(h, prep["ct1_w"], prep["ct1_b"], post_relu=True)
        h = _convt_call(h, prep["ct2_w"], prep["ct2_b"], post_relu=False)
    elif stride == 2:
        h = _convt_call(h, prep["ct1_w"], prep["ct1_b"], post_relu=False)
    else:
        raise ValueError("stride must be 2 or 4")
    # slice real channels, NHWC -> NCHW; the f32 cast fuses with this transpose.
    return jnp.transpose(h[..., :out_channel], (0, 3, 1, 2)).astype(jnp.float32)


# ---------------------------------------------------------------------------
# Pure-JAX reference (lax conv, f32 HIGHEST) for the correctness check
# ---------------------------------------------------------------------------
def decoder_forward_ref(params, x_nchw, stride):
    dn = ("NHWC", "HWIO", "NHWC")
    prec = jax.lax.Precision.HIGHEST
    relu = lambda v: jnp.maximum(v, 0.0)

    def conv(x, w_oihw, b, pad):
        y = jax.lax.conv_general_dilated(x, oihw_to_hwio(w_oihw), (1, 1),
                                         [(pad, pad), (pad, pad)],
                                         dimension_numbers=dn, precision=prec)
        return y + b

    def convT(x, w_t, b):
        w_hwio = jnp.transpose(w_t[:, :, ::-1, ::-1], (2, 3, 0, 1))
        y = jax.lax.conv_general_dilated(x, w_hwio, (1, 1), [(2, 2), (2, 2)],
                                         lhs_dilation=(2, 2),
                                         dimension_numbers=dn, precision=prec)
        return y + b

    x = jnp.transpose(x_nchw, (0, 2, 3, 1))
    h = conv(x, params["conv0_w"], params["conv0_b"], 1)
    for blk in params["res"]:
        t = conv(relu(h), blk["w1"], blk["b1"], 1)
        t = conv(relu(t), blk["w2"], blk["b2"], 0)
        h = h + t
    h = relu(h)
    if stride == 4:
        h = relu(convT(h, params["ct1_w"], params["ct1_b"]))
        h = convT(h, params["ct2_w"], params["ct2_b"])
    else:
        h = convT(h, params["ct1_w"], params["ct1_b"])
    return jnp.transpose(h, (0, 3, 1, 2))


if __name__ == "__main__":
    key = jax.random.PRNGKey(0)
    k_x, k_p4, k_p2 = jax.random.split(key, 3)

    in_channel, out_channel, channel = 4, 3, 32
    n_res_block, n_res_channel = 2, 8
    N, H, W = 2, 8, 8

    x = jax.random.normal(k_x, (N, in_channel, H, W), jnp.float32)   # NCHW like PyTorch

    # stride == 4 decoder
    params4 = init_decoder_params(k_p4, in_channel, out_channel, channel,
                                  n_res_block, n_res_channel, 4)
    prep4 = prepare_decoder_params(params4, 4)
    out4 = jax.block_until_ready(decoder_forward_pallas(
        prep4, x, out_channel=out_channel, stride=4, n_res_block=n_res_block))
    assert out4.shape == (N, out_channel, H * 4, W * 4), out4.shape
    ref4 = jax.block_until_ready(decoder_forward_ref(params4, x, 4))
    np.testing.assert_allclose(np.asarray(out4), np.asarray(ref4),
                               rtol=2e-2, atol=2e-2)

    # stride == 2 decoder
    params2 = init_decoder_params(k_p2, in_channel, out_channel, channel,
                                  n_res_block, n_res_channel, 2)
    prep2 = prepare_decoder_params(params2, 2)
    out2 = jax.block_until_ready(decoder_forward_pallas(
        prep2, x, out_channel=out_channel, stride=2, n_res_block=n_res_block))
    assert out2.shape == (N, out_channel, H * 2, W * 2), out2.shape
    ref2 = jax.block_until_ready(decoder_forward_ref(params2, x, 2))
    np.testing.assert_allclose(np.asarray(out2), np.asarray(ref2),
                               rtol=2e-2, atol=2e-2)

    print("KERNEL_OK")
</pallas_src>

<mosaic_0001>
module attributes {stable_mosaic.version = 11 : i64} {
  func.func @_stem_kernel(%arg0: i32, %arg1: i32, %arg2: memref<1x10x16x16xbf16, #tpu.memory_space<vmem>>, %arg3: memref<144x128xbf16, #tpu.memory_space<vmem>>, %arg4: memref<1x128xf32, #tpu.memory_space<vmem>>, %arg5: memref<1x1152x16xbf16, #tpu.memory_space<vmem>>, %arg6: memref<1x1x16xf32, #tpu.memory_space<vmem>>, %arg7: memref<1x16x128xbf16, #tpu.memory_space<vmem>>, %arg8: memref<1x1x128xf32, #tpu.memory_space<vmem>>, %arg9: memref<1x8x8x128xbf16, #tpu.memory_space<vmem>>, %arg10: memref<10x16x128xf32, #tpu.memory_space<vmem>>) attributes {dimension_semantics = [#tpu.dimension_semantics<parallel>, #tpu.dimension_semantics<arbitrary>], iteration_bounds = array<i64: 2, 2>, scalar_prefetch = 0 : i64, scratch_operands = 1 : i64, tpu.core_type = #tpu.core_type<tc>, window_params = [{transform_indices = @transform_0, window_bounds = array<i64: 1, 10, 16, 16>}, {pipeline_mode = #tpu.pipeline_mode<synchronous>, transform_indices = @transform_1, window_bounds = array<i64: 144, 128>}, {pipeline_mode = #tpu.pipeline_mode<synchronous>, transform_indices = @transform_2, window_bounds = array<i64: 1, 128>}, {transform_indices = @transform_3, window_bounds = array<i64: 1, 1152, 16>}, {transform_indices = @transform_4, window_bounds = array<i64: 1, 1, 16>}, {transform_indices = @transform_5, window_bounds = array<i64: 1, 16, 128>}, {transform_indices = @transform_6, window_bounds = array<i64: 1, 1, 128>}, {transform_indices = @transform_7, window_bounds = array<i64: 1, 8, 8, 128>}]} {
    %c0_i32 = arith.constant 0 : i32
    %0 = arith.cmpi eq, %arg1, %c0_i32 : i32
    %1 = arith.extui %0 : i1 to i32
    %c0_i32_0 = arith.constant 0 : i32
    %2 = arith.cmpi ne, %1, %c0_i32_0 : i32
    scf.if %2 {
      %cst_24 = arith.constant 0.000000e+00 : f32
      %50 = vector.broadcast %cst_24 : f32 to vector<10x16x128xf32>
      %c0_25 = arith.constant 0 : index
      %c0_26 = arith.constant 0 : index
      %c0_27 = arith.constant 0 : index
      %51 = vector.load %arg10[%c0_25, %c0_26, %c0_27] : memref<10x16x128xf32, #tpu.memory_space<vmem>>, vector<10x16x128xf32>
      tpu.vector_store %arg10[%c0_25, %c0_26, %c0_27], %50 {strides = array<i32>} : memref<10x16x128xf32, #tpu.memory_space<vmem>>, vector<10x16x128xf32>,
      %c0_28 = arith.constant 0 : index
      %c0_29 = arith.constant 0 : index
      %c0_30 = arith.constant 0 : index
      %c0_31 = arith.constant 0 : index
      %52 = vector.load %arg2[%c0_28, %c0_29, %c0_30, %c0_31] : memref<1x10x16x16xbf16, #tpu.memory_space<vmem>>, vector<1x10x16x16xbf16>
      %53 = vector.shape_cast %52 : vector<1x10x16x16xbf16> to vector<10x16x16xbf16>
      %54 = vector.extract_strided_slice %53 {offsets = [0, 0, 0], sizes = [8, 8, 16], strides = [1, 1, 1]} : vector<10x16x16xbf16> to vector<8x8x16xbf16>
      %55 = vector.shape_cast %54 : vector<8x8x16xbf16> to vector<64x16xbf16>
      %56 = vector.extract_strided_slice %53 {offsets = [0, 1, 0], sizes = [8, 8, 16], strides = [1, 1, 1]} : vector<10x16x16xbf16> to vector<8x8x16xbf16>
      %57 = vector.shape_cast %56 : vector<8x8x16xbf16> to vector<64x16xbf16>
      %58 = vector.extract_strided_slice %53 {offsets = [0, 2, 0], sizes = [8, 8, 16], strides = [1, 1, 1]} : vector<10x16x16xbf16> to vector<8x8x16xbf16>
      %59 = vector.shape_cast %58 : vector<8x8x16xbf16> to vector<64x16xbf16>
      %60 = vector.extract_strided_slice %53 {offsets = [1, 0, 0], sizes = [8, 8, 16], strides = [1, 1, 1]} : vector<10x16x16xbf16> to vector<8x8x16xbf16>
      %61 = vector.shape_cast %60 : vector<8x8x16xbf16> to vector<64x16xbf16>
      %62 = vector.extract_strided_slice %53 {offsets = [1, 1, 0], sizes = [8, 8, 16], strides = [1, 1, 1]} : vector<10x16x16xbf16> to vector<8x8x16xbf16>
      %63 = vector.shape_cast %62 : vector<8x8x16xbf16> to vector<64x16xbf16>
      %64 = vector.extract_strided_slice %53 {offsets = [1, 2, 0], sizes = [8, 8, 16], strides = [1, 1, 1]} : vector<10x16x16xbf16> to vector<8x8x16xbf16>
      %65 = vector.shape_cast %64 : vector<8x8x16xbf16> to vector<64x16xbf16>
      %66 = vector.extract_strided_slice %53 {offsets = [2, 0, 0], sizes = [8, 8, 16], strides = [1, 1, 1]} : vector<10x16x16xbf16> to vector<8x8x16xbf16>
      %67 = vector.shape_cast %66 : vector<8x8x16xbf16> to vector<64x16xbf16>
      %68 = vector.extract_strided_slice %53 {offsets = [2, 1, 0], sizes = [8, 8, 16], strides = [1, 1, 1]} : vector<10x16x16xbf16> to vector<8x8x16xbf16>
      %69 = vector.shape_cast %68 : vector<8x8x16xbf16> to vector<64x16xbf16>
      %70 = vector.extract_strided_slice %53 {offsets = [2, 2, 0], sizes = [8, 8, 16], strides = [1, 1, 1]} : vector<10x16x16xbf16> to vector<8x8x16xbf16>
      %71 = vector.shape_cast %70 : vector<8x8x16xbf16> to vector<64x16xbf16>
      %72 = tpu.concatenate %55, %57, %59, %61, %63, %65, %67, %69, %71 in 1 : vector<64x16xbf16>, vector<64x16xbf16>, vector<64x16xbf16>, vector<64x16xbf16>, vector<64x16xbf16>, vector<64x16xbf16>, vector<64x16xbf16>, vector<64x16xbf16>, vector<64x16xbf16> -> vector<64x144xbf16>
      %c0_32 = arith.constant 0 : index
      %c0_33 = arith.constant 0 : index
      %73 = vector.load %arg3[%c0_32, %c0_33] : memref<144x128xbf16, #tpu.memory_space<vmem>>, vector<144x128xbf16>
      %cst_34 = arith.constant dense<0.000000e+00> : vector<64x128xf32>
      %74 = tpu.matmul %72, %73, %cst_34 {dimension_numbers = #tpu.dot_dimension_numbers<[1], [0], [0], [1], [0, 0, 1, 1], [], []>} : vector<64x144xbf16>, vector<144x128xbf16>, vector<64x128xf32> -> vector<64x128xf32>
      %c0_35 = arith.constant 0 : index
      %c0_36 = arith.constant 0 : index
      %75 = vector.load %arg4[%c0_35, %c0_36] : memref<1x128xf32, #tpu.memory_space<vmem>>, vector<1x128xf32>
      %76 = vector.broadcast %75 : vector<1x128xf32> to vector<64x128xf32>
      %77 = arith.addf %74, %76 : vector<64x128xf32>
      %78 = vector.shape_cast %77 : vector<64x128xf32> to vector<8x8x128xf32>
      %c1_37 = arith.constant 1 : index
      %c1_38 = arith.constant 1 : index
      %c0_39 = arith.constant 0 : index
      %79 = vector.load %arg10[%c1_37, %c1_38, %c0_39] : memref<10x16x128xf32, #tpu.memory_space<vmem>>, vector<8x8x128xf32>
      tpu.vector_store %arg10[%c1_37, %c1_38, %c0_39], %78 {strides = array<i32>} : memref<10x16x128xf32, #tpu.memory_space<vmem>>, vector<8x8x128xf32>,
    } else {
    }
    %c0 = arith.constant 0 : index
    %c0_1 = arith.constant 0 : index
    %c0_2 = arith.constant 0 : index
    %3 = vector.load %arg10[%c0, %c0_1, %c0_2] : memref<10x16x128xf32, #tpu.memory_space<vmem>>, vector<10x16x128xf32>
    %cst = arith.constant 0.000000e+00 : f32
    %4 = vector.broadcast %cst : f32 to vector<10x16x128xf32>
    %5 = arith.maximumf %3, %4 : vector<10x16x128xf32>
    %6 = arith.truncf %5 : vector<10x16x128xf32> to vector<10x16x128xbf16>
    %7 = vector.extract_strided_slice %6 {offsets = [0, 0, 0], sizes = [8, 8, 128], strides = [1, 1, 1]} : vector<10x16x128xbf16> to vector<8x8x128xbf16>
    %8 = vector.shape_cast %7 : vector<8x8x128xbf16> to vector<64x128xbf16>
    %9 = vector.extract_strided_slice %6 {offsets = [0, 1, 0], sizes = [8, 8, 128], strides = [1, 1, 1]} : vector<10x16x128xbf16> to vector<8x8x128xbf16>
    %10 = vector.shape_cast %9 : vector<8x8x128xbf16> to vector<64x128xbf16>
    %11 = vector.extract_strided_slice %6 {offsets = [0, 2, 0], sizes = [8, 8, 128], strides = [1, 1, 1]} : vector<10x16x128xbf16> to vector<8x8x128xbf16>
    %12 = vector.shape_cast %11 : vector<8x8x128xbf16> to vector<64x128xbf16>
    %13 = vector.extract_strided_slice %6 {offsets = [1, 0, 0], sizes = [8, 8, 128], strides = [1, 1, 1]} : vector<10x16x128xbf16> to vector<8x8x128xbf16>
    %14 = vector.shape_cast %13 : vector<8x8x128xbf16> to vector<64x128xbf16>
    %15 = vector.extract_strided_slice %6 {offsets = [1, 1, 0], sizes = [8, 8, 128], strides = [1, 1, 1]} : vector<10x16x128xbf16> to vector<8x8x128xbf16>
    %16 = vector.shape_cast %15 : vector<8x8x128xbf16> to vector<64x128xbf16>
    %17 = vector.extract_strided_slice %6 {offsets = [1, 2, 0], sizes = [8, 8, 128], strides = [1, 1, 1]} : vector<10x16x128xbf16> to vector<8x8x128xbf16>
    %18 = vector.shape_cast %17 : vector<8x8x128xbf16> to vector<64x128xbf16>
    %19 = vector.extract_strided_slice %6 {offsets = [2, 0, 0], sizes = [8, 8, 128], strides = [1, 1, 1]} : vector<10x16x128xbf16> to vector<8x8x128xbf16>
    %20 = vector.shape_cast %19 : vector<8x8x128xbf16> to vector<64x128xbf16>
    %21 = vector.extract_strided_slice %6 {offsets = [2, 1, 0], sizes = [8, 8, 128], strides = [1, 1, 1]} : vector<10x16x128xbf16> to vector<8x8x128xbf16>
    %22 = vector.shape_cast %21 : vector<8x8x128xbf16> to vector<64x128xbf16>
    %23 = vector.extract_strided_slice %6 {offsets = [2, 2, 0], sizes = [8, 8, 128], strides = [1, 1, 1]} : vector<10x16x128xbf16> to vector<8x8x128xbf16>
    %24 = vector.shape_cast %23 : vector<8x8x128xbf16> to vector<64x128xbf16>
    %25 = tpu.concatenate %8, %10, %12, %14, %16, %18, %20, %22, %24 in 1 : vector<64x128xbf16>, vector<64x128xbf16>, vector<64x128xbf16>, vector<64x128xbf16>, vector<64x128xbf16>, vector<64x128xbf16>, vector<64x128xbf16>, vector<64x128xbf16>, vector<64x128xbf16> -> vector<64x1152xbf16>
    %c0_3 = arith.constant 0 : index
    %c0_4 = arith.constant 0 : index
    %c0_5 = arith.constant 0 : index
    %26 = vector.load %arg5[%c0_3, %c0_4, %c0_5] : memref<1x1152x16xbf16, #tpu.memory_space<vmem>>, vector<1x1152x16xbf16>
    %27 = vector.shape_cast %26 : vector<1x1152x16xbf16> to vector<1152x16xbf16>
    %cst_6 = arith.constant dense<0.000000e+00> : vector<64x16xf32>
    %28 = tpu.matmul %25, %27, %cst_6 {dimension_numbers = #tpu.dot_dimension_numbers<[1], [0], [0], [1], [0, 0, 1, 1], [], []>} : vector<64x1152xbf16>, vector<1152x16xbf16>, vector<64x16xf32> -> vector<64x16xf32>
    %c0_7 = arith.constant 0 : index
    %c0_8 = arith.constant 0 : index
    %c0_9 = arith.constant 0 : index
    %29 = vector.load %arg6[%c0_7, %c0_8, %c0_9] : memref<1x1x16xf32, #tpu.memory_space<vmem>>, vector<1x1x16xf32>
    %30 = vector.shape_cast %29 : vector<1x1x16xf32> to vector<1x16xf32>
    %31 = vector.broadcast %30 : vector<1x16xf32> to vector<64x16xf32>
    %32 = arith.addf %28, %31 : vector<64x16xf32>
    %cst_10 = arith.constant 0.000000e+00 : f32
    %33 = vector.broadcast %cst_10 : f32 to vector<64x16xf32>
    %34 = arith.maximumf %32, %33 : vector<64x16xf32>
    %35 = arith.truncf %34 : vector<64x16xf32> to vector<64x16xbf16>
    %c0_11 = arith.constant 0 : index
    %c0_12 = arith.constant 0 : index
    %c0_13 = arith.constant 0 : index
    %36 = vector.load %arg7[%c0_11, %c0_12, %c0_13] : memref<1x16x128xbf16, #tpu.memory_space<vmem>>, vector<1x16x128xbf16>
    %37 = vector.shape_cast %36 : vector<1x16x128xbf16> to vector<16x128xbf16>
    %cst_14 = arith.constant dense<0.000000e+00> : vector<64x128xf32>
    %38 = tpu.matmul %35, %37, %cst_14 {dimension_numbers = #tpu.dot_dimension_numbers<[1], [0], [0], [1], [0, 0, 1, 1], [], []>} : vector<64x16xbf16>, vector<16x128xbf16>, vector<64x128xf32> -> vector<64x128xf32>
    %c0_15 = arith.constant 0 : index
    %c0_16 = arith.constant 0 : index
    %c0_17 = arith.constant 0 : index
    %39 = vector.load %arg8[%c0_15, %c0_16, %c0_17] : memref<1x1x128xf32, #tpu.memory_space<vmem>>, vector<1x1x128xf32>
    %40 = vector.shape_cast %39 : vector<1x1x128xf32> to vector<1x128xf32>
    %41 = vector.broadcast %40 : vector<1x128xf32> to vector<64x128xf32>
    %42 = arith.addf %38, %41 : vector<64x128xf32>
    %c1 = arith.constant 1 : index
    %c1_18 = arith.constant 1 : index
    %c0_19 = arith.constant 0 : index
    %43 = vector.load %arg10[%c1, %c1_18, %c0_19] : memref<10x16x128xf32, #tpu.memory_space<vmem>>, vector<8x8x128xf32>
    %44 = vector.shape_cast %42 : vector<64x128xf32> to vector<8x8x128xf32>
    %45 = arith.addf %43, %44 : vector<8x8x128xf32>
    %c1_20 = arith.constant 1 : index
    %c1_21 = arith.constant 1 : index
    %c0_22 = arith.constant 0 : index
    %46 = vector.load %arg10[%c1_20, %c1_21, %c0_22] : memref<10x16x128xf32, #tpu.memory_space<vmem>>, vector<8x8x128xf32>
    tpu.vector_store %arg10[%c1_20, %c1_21, %c0_22], %45 {strides = array<i32>} : memref<10x16x128xf32, #tpu.memory_space<vmem>>, vector<8x8x128xf32>,
    %c1_i32 = arith.constant 1 : i32
    %47 = arith.cmpi eq, %arg1, %c1_i32 : i32
    %48 = arith.extui %47 : i1 to i32
    %c0_i32_23 = arith.constant 0 : i32
    %49 = arith.cmpi ne, %48, %c0_i32_23 : i32
    scf.if %49 {
      %c1_24 = arith.constant 1 : index
      %c1_25 = arith.constant 1 : index
      %c0_26 = arith.constant 0 : index
      %50 = vector.load %arg10[%c1_24, %c1_25, %c0_26] : memref<10x16x128xf32, #tpu.memory_space<vmem>>, vector<8x8x128xf32>
      %cst_27 = arith.constant 0.000000e+00 : f32
      %51 = vector.broadcast %cst_27 : f32 to vector<8x8x128xf32>
      %52 = arith.maximumf %50, %51 : vector<8x8x128xf32>
      %53 = arith.truncf %52 : vector<8x8x128xf32> to vector<8x8x128xbf16>
      %c0_28 = arith.constant 0 : index
      %c0_29 = arith.constant 0 : index
      %c0_30 = arith.constant 0 : index
      %c0_31 = arith.constant 0 : index
      %54 = vector.load %arg9[%c0_28, %c0_29, %c0_30, %c0_31] : memref<1x8x8x128xbf16, #tpu.memory_space<vmem>>, vector<1x8x8x128xbf16>
      %55 = vector.shape_cast %54 : vector<1x8x8x128xbf16> to vector<8x8x128xbf16>
      %56 = vector.shape_cast %53 : vector<8x8x128xbf16> to vector<1x8x8x128xbf16>
      tpu.vector_store %arg9[%c0_28, %c0_29, %c0_30, %c0_31], %56 {strides = array<i32>} : memref<1x8x8x128xbf16, #tpu.memory_space<vmem>>, vector<1x8x8x128xbf16>,
    } else {
    }
    return
  }
  func.func @transform_0(%arg0: i32, %arg1: i32) -> (i32, i32, i32, i32) {
    %c0_i32 = arith.constant 0 : i32
    %c0_i32_0 = arith.constant 0 : i32
    %c0_i32_1 = arith.constant 0 : i32
    %c0_i32_2 = arith.constant 0 : i32
    return %arg0, %c0_i32, %c0_i32_0, %c0_i32_1 : i32, i32, i32, i32
  }
  func.func @transform_1(%arg0: i32, %arg1: i32) -> (i32, i32) {
    %c0_i32 = arith.constant 0 : i32
    %c0_i32_0 = arith.constant 0 : i32
    %c0_i32_1 = arith.constant 0 : i32
    return %c0_i32, %c0_i32_0 : i32, i32
  }
  func.func @transform_2(%arg0: i32, %arg1: i32) -> (i32, i32) {
    %c0_i32 = arith.constant 0 : i32
    %c0_i32_0 = arith.constant 0 : i32
    %c0_i32_1 = arith.constant 0 : i32
    return %c0_i32, %c0_i32_0 : i32, i32
  }
  func.func @transform_3(%arg0: i32, %arg1: i32) -> (i32, i32, i32) {
    %c0_i32 = arith.constant 0 : i32
    %c0_i32_0 = arith.constant 0 : i32
    %c0_i32_1 = arith.constant 0 : i32
    return %arg1, %c0_i32, %c0_i32_0 : i32, i32, i32
  }
  func.func @transform_4(%arg0: i32, %arg1: i32) -> (i32, i32, i32) {
    %c0_i32 = arith.constant 0 : i32
    %c0_i32_0 = arith.constant 0 : i32
    %c0_i32_1 = arith.constant 0 : i32
    return %arg1, %c0_i32, %c0_i32_0 : i32, i32, i32
  }
  func.func @transform_5(%arg0: i32, %arg1: i32) -> (i32, i32, i32) {
    %c0_i32 = arith.constant 0 : i32
    %c0_i32_0 = arith.constant 0 : i32
    %c0_i32_1 = arith.constant 0 : i32
    return %arg1, %c0_i32, %c0_i32_0 : i32, i32, i32
  }
  func.func @transform_6(%arg0: i32, %arg1: i32) -> (i32, i32, i32) {
    %c0_i32 = arith.constant 0 : i32
    %c0_i32_0 = arith.constant 0 : i32
    %c0_i32_1 = arith.constant 0 : i32
    return %arg1, %c0_i32, %c0_i32_0 : i32, i32, i32
  }
  func.func @transform_7(%arg0: i32, %arg1: i32) -> (i32, i32, i32, i32) {
    %c0_i32 = arith.constant 0 : i32
    %c0_i32_0 = arith.constant 0 : i32
    %c0_i32_1 = arith.constant 0 : i32
    %c0_i32_2 = arith.constant 0 : i32
    return %arg0, %c0_i32, %c0_i32_0, %c0_i32_1 : i32, i32, i32, i32
  }
}

module attributes {stable_mosaic.version = 11 : i64} {
  func.func @_convt_kernel(%arg0: i32, %arg1: memref<1x8x8x128xbf16, #tpu.memory_space<vmem>>, %arg2: memref<4x512x128xbf16, #tpu.memory_space<vmem>>, %arg3: memref<1x128xf32, #tpu.memory_space<vmem>>, %arg4: memref<1x8x2x8x256xbf16, #tpu.memory_space<vmem>>, %arg5: memref<10x16x128xbf16, #tpu.memory_space<vmem>>) attributes {dimension_semantics = [#tpu.dimension_semantics<parallel>], iteration_bounds = array<i64: 2>, scalar_prefetch = 0 : i64, scratch_operands = 1 : i64, tpu.core_type = #tpu.core_type<tc>, window_params = [{transform_indices = @transform_0, window_bounds = array<i64: 1, 8, 8, 128>}, {pipeline_mode = #tpu.pipeline_mode<synchronous>, transform_indices = @transform_1, window_bounds = array<i64: 4, 512, 128>}, {pipeline_mode = #tpu.pipeline_mode<synchronous>, transform_indices = @transform_2, window_bounds = array<i64: 1, 128>}, {transform_indices = @transform_3, window_bounds = array<i64: 1, 8, 2, 8, 256>}]} {
    %cst = arith.constant 0.000000e+00 : bf16
    %0 = vector.broadcast %cst : bf16 to vector<10x16x128xbf16>
    %c0 = arith.constant 0 : index
    %c0_0 = arith.constant 0 : index
    %c0_1 = arith.constant 0 : index
    %1 = vector.load %arg5[%c0, %c0_0, %c0_1] : memref<10x16x128xbf16, #tpu.memory_space<vmem>>, vector<10x16x128xbf16>
    tpu.vector_store %arg5[%c0, %c0_0, %c0_1], %0 {strides = array<i32>} : memref<10x16x128xbf16, #tpu.memory_space<vmem>>, vector<10x16x128xbf16>,
    %c0_2 = arith.constant 0 : index
    %c0_3 = arith.constant 0 : index
    %c0_4 = arith.constant 0 : index
    %c0_5 = arith.constant 0 : index
    %2 = vector.load %arg1[%c0_2, %c0_3, %c0_4, %c0_5] : memref<1x8x8x128xbf16, #tpu.memory_space<vmem>>, vector<1x8x8x128xbf16>
    %3 = vector.shape_cast %2 : vector<1x8x8x128xbf16> to vector<8x8x128xbf16>
    %c1 = arith.constant 1 : index
    %c1_6 = arith.constant 1 : index
    %c0_7 = arith.constant 0 : index
    %4 = vector.load %arg5[%c1, %c1_6, %c0_7] : memref<10x16x128xbf16, #tpu.memory_space<vmem>>, vector<8x8x128xbf16>
    tpu.vector_store %arg5[%c1, %c1_6, %c0_7], %3 {strides = array<i32>} : memref<10x16x128xbf16, #tpu.memory_space<vmem>>, vector<8x8x128xbf16>,
    %c0_8 = arith.constant 0 : index
    %c0_9 = arith.constant 0 : index
    %c0_10 = arith.constant 0 : index
    %5 = vector.load %arg5[%c0_8, %c0_9, %c0_10] : memref<10x16x128xbf16, #tpu.memory_space<vmem>>, vector<10x16x128xbf16>
    %6 = vector.extract_strided_slice %5 {offsets = [0, 0, 0], sizes = [8, 8, 128], strides = [1, 1, 1]} : vector<10x16x128xbf16> to vector<8x8x128xbf16>
    %7 = vector.shape_cast %6 : vector<8x8x128xbf16> to vector<64x128xbf16>
    %8 = vector.extract_strided_slice %5 {offsets = [0, 1, 0], sizes = [8, 8, 128], strides = [1, 1, 1]} : vector<10x16x128xbf16> to vector<8x8x128xbf16>
    %9 = vector.shape_cast %8 : vector<8x8x128xbf16> to vector<64x128xbf16>
    %10 = vector.extract_strided_slice %5 {offsets = [1, 0, 0], sizes = [8, 8, 128], strides = [1, 1, 1]} : vector<10x16x128xbf16> to vector<8x8x128xbf16>
    %11 = vector.shape_cast %10 : vector<8x8x128xbf16> to vector<64x128xbf16>
    %12 = vector.extract_strided_slice %5 {offsets = [1, 1, 0], sizes = [8, 8, 128], strides = [1, 1, 1]} : vector<10x16x128xbf16> to vector<8x8x128xbf16>
    %13 = vector.shape_cast %12 : vector<8x8x128xbf16> to vector<64x128xbf16>
    %14 = tpu.concatenate %7, %9, %11, %13 in 1 : vector<64x128xbf16>, vector<64x128xbf16>, vector<64x128xbf16>, vector<64x128xbf16> -> vector<64x512xbf16>
    %c0_11 = arith.constant 0 : index
    %c0_12 = arith.constant 0 : index
    %c0_13 = arith.constant 0 : index
    %15 = vector.load %arg2[%c0_11, %c0_12, %c0_13] : memref<4x512x128xbf16, #tpu.memory_space<vmem>>, vector<1x512x128xbf16>
    %16 = vector.shape_cast %15 : vector<1x512x128xbf16> to vector<512x128xbf16>
    %cst_14 = arith.constant dense<0.000000e+00> : vector<64x128xf32>
    %17 = tpu.matmul %14, %16, %cst_14 {dimension_numbers = #tpu.dot_dimension_numbers<[1], [0], [0], [1], [0, 0, 1, 1], [], []>} : vector<64x512xbf16>, vector<512x128xbf16>, vector<64x128xf32> -> vector<64x128xf32>
    %c0_15 = arith.constant 0 : index
    %c0_16 = arith.constant 0 : index
    %18 = vector.load %arg3[%c0_15, %c0_16] : memref<1x128xf32, #tpu.memory_space<vmem>>, vector<1x128xf32>
    %19 = vector.broadcast %18 : vector<1x128xf32> to vector<64x128xf32>
    %20 = arith.addf %17, %19 : vector<64x128xf32>
    %cst_17 = arith.constant 0.000000e+00 : f32
    %21 = vector.broadcast %cst_17 : f32 to vector<64x128xf32>
    %22 = arith.maximumf %20, %21 : vector<64x128xf32>
    %23 = vector.extract_strided_slice %5 {offsets = [0, 1, 0], sizes = [8, 8, 128], strides = [1, 1, 1]} : vector<10x16x128xbf16> to vector<8x8x128xbf16>
    %24 = vector.shape_cast %23 : vector<8x8x128xbf16> to vector<64x128xbf16>
    %25 = vector.extract_strided_slice %5 {offsets = [0, 2, 0], sizes = [8, 8, 128], strides = [1, 1, 1]} : vector<10x16x128xbf16> to vector<8x8x128xbf16>
    %26 = vector.shape_cast %25 : vector<8x8x128xbf16> to vector<64x128xbf16>
    %27 = vector.extract_strided_slice %5 {offsets = [1, 1, 0], sizes = [8, 8, 128], strides = [1, 1, 1]} : vector<10x16x128xbf16> to vector<8x8x128xbf16>
    %28 = vector.shape_cast %27 : vector<8x8x128xbf16> to vector<64x128xbf16>
    %29 = vector.extract_strided_slice %5 {offsets = [1, 2, 0], sizes = [8, 8, 128], strides = [1, 1, 1]} : vector<10x16x128xbf16> to vector<8x8x128xbf16>
    %30 = vector.shape_cast %29 : vector<8x8x128xbf16> to vector<64x128xbf16>
    %31 = tpu.concatenate %24, %26, %28, %30 in 1 : vector<64x128xbf16>, vector<64x128xbf16>, vector<64x128xbf16>, vector<64x128xbf16> -> vector<64x512xbf16>
    %c1_18 = arith.constant 1 : index
    %c0_19 = arith.constant 0 : index
    %c0_20 = arith.constant 0 : index
    %32 = vector.load %arg2[%c1_18, %c0_19, %c0_20] : memref<4x512x128xbf16, #tpu.memory_space<vmem>>, vector<1x512x128xbf16>
    %33 = vector.shape_cast %32 : vector<1x512x128xbf16> to vector<512x128xbf16>
    %cst_21 = arith.constant dense<0.000000e+00> : vector<64x128xf32>
    %34 = tpu.matmul %31, %33, %cst_21 {dimension_numbers = #tpu.dot_dimension_numbers<[1], [0], [0], [1], [0, 0, 1, 1], [], []>} : vector<64x512xbf16>, vector<512x128xbf16>, vector<64x128xf32> -> vector<64x128xf32>
    %c0_22 = arith.constant 0 : index
    %c0_23 = arith.constant 0 : index
    %35 = vector.load %arg3[%c0_22, %c0_23] : memref<1x128xf32, #tpu.memory_space<vmem>>, vector<1x128xf32>
    %36 = vector.broadcast %35 : vector<1x128xf32> to vector<64x128xf32>
    %37 = arith.addf %34, %36 : vector<64x128xf32>
    %cst_24 = arith.constant 0.000000e+00 : f32
    %38 = vector.broadcast %cst_24 : f32 to vector<64x128xf32>
    %39 = arith.maximumf %37, %38 : vector<64x128xf32>
    %40 = tpu.concatenate %22, %39 in 1 : vector<64x128xf32>, vector<64x128xf32> -> vector<64x256xf32>
    %41 = vector.shape_cast %40 : vector<64x256xf32> to vector<8x8x256xf32>
    %42 = arith.truncf %41 : vector<8x8x256xf32> to vector<8x8x256xbf16>
    %c0_25 = arith.constant 0 : index
    %c0_26 = arith.constant 0 : index
    %c0_27 = arith.constant 0 : index
    %c0_28 = arith.constant 0 : index
    %c0_29 = arith.constant 0 : index
    %43 = vector.load %arg4[%c0_25, %c0_26, %c0_27, %c0_28, %c0_29] : memref<1x8x2x8x256xbf16, #tpu.memory_space<vmem>>, vector<1x8x1x8x256xbf16>
    %44 = vector.shape_cast %43 : vector<1x8x1x8x256xbf16> to vector<8x8x256xbf16>
    %45 = vector.shape_cast %42 : vector<8x8x256xbf16> to vector<1x8x1x8x256xbf16>
    tpu.vector_store %arg4[%c0_25, %c0_26, %c0_27, %c0_28, %c0_29], %45 {strides = array<i32>} : memref<1x8x2x8x256xbf16, #tpu.memory_space<vmem>>, vector<1x8x1x8x256xbf16>,
    %46 = vector.extract_strided_slice %5 {offsets = [1, 0, 0], sizes = [8, 8, 128], strides = [1, 1, 1]} : vector<10x16x128xbf16> to vector<8x8x128xbf16>
    %47 = vector.shape_cast %46 : vector<8x8x128xbf16> to vector<64x128xbf16>
    %48 = vector.extract_strided_slice %5 {offsets = [1, 1, 0], sizes = [8, 8, 128], strides = [1, 1, 1]} : vector<10x16x128xbf16> to vector<8x8x128xbf16>
    %49 = vector.shape_cast %48 : vector<8x8x128xbf16> to vector<64x128xbf16>
    %50 = vector.extract_strided_slice %5 {offsets = [2, 0, 0], sizes = [8, 8, 128], strides = [1, 1, 1]} : vector<10x16x128xbf16> to vector<8x8x128xbf16>
    %51 = vector.shape_cast %50 : vector<8x8x128xbf16> to vector<64x128xbf16>
    %52 = vector.extract_strided_slice %5 {offsets = [2, 1, 0], sizes = [8, 8, 128], strides = [1, 1, 1]} : vector<10x16x128xbf16> to vector<8x8x128xbf16>
    %53 = vector.shape_cast %52 : vector<8x8x128xbf16> to vector<64x128xbf16>
    %54 = tpu.concatenate %47, %49, %51, %53 in 1 : vector<64x128xbf16>, vector<64x128xbf16>, vector<64x128xbf16>, vector<64x128xbf16> -> vector<64x512xbf16>
    %c2 = arith.constant 2 : index
    %c0_30 = arith.constant 0 : index
    %c0_31 = arith.constant 0 : index
    %55 = vector.load %arg2[%c2, %c0_30, %c0_31] : memref<4x512x128xbf16, #tpu.memory_space<vmem>>, vector<1x512x128xbf16>
    %56 = vector.shape_cast %55 : vector<1x512x128xbf16> to vector<512x128xbf16>
    %cst_32 = arith.constant dense<0.000000e+00> : vector<64x128xf32>
    %57 = tpu.matmul %54, %56, %cst_32 {dimension_numbers = #tpu.dot_dimension_numbers<[1], [0], [0], [1], [0, 0, 1, 1], [], []>} : vector<64x512xbf16>, vector<512x128xbf16>, vector<64x128xf32> -> vector<64x128xf32>
    %c0_33 = arith.constant 0 : index
    %c0_34 = arith.constant 0 : index
    %58 = vector.load %arg3[%c0_33, %c0_34] : memref<1x128xf32, #tpu.memory_space<vmem>>, vector<1x128xf32>
    %59 = vector.broadcast %58 : vector<1x128xf32> to vector<64x128xf32>
    %60 = arith.addf %57, %59 : vector<64x128xf32>
    %cst_35 = arith.constant 0.000000e+00 : f32
    %61 = vector.broadcast %cst_35 : f32 to vector<64x128xf32>
    %62 = arith.maximumf %60, %61 : vector<64x128xf32>
    %63 = vector.extract_strided_slice %5 {offsets = [1, 1, 0], sizes = [8, 8, 128], strides = [1, 1, 1]} : vector<10x16x128xbf16> to vector<8x8x128xbf16>
    %64 = vector.shape_cast %63 : vector<8x8x128xbf16> to vector<64x128xbf16>
    %65 = vector.extract_strided_slice %5 {offsets = [1, 2, 0], sizes = [8, 8, 128], strides = [1, 1, 1]} : vector<10x16x128xbf16> to vector<8x8x128xbf16>
    %66 = vector.shape_cast %65 : vector<8x8x128xbf16> to vector<64x128xbf16>
    %67 = vector.extract_strided_slice %5 {offsets = [2, 1, 0], sizes = [8, 8, 128], strides = [1, 1, 1]} : vector<10x16x128xbf16> to vector<8x8x128xbf16>
    %68 = vector.shape_cast %67 : vector<8x8x128xbf16> to vector<64x128xbf16>
    %69 = vector.extract_strided_slice %5 {offsets = [2, 2, 0], sizes = [8, 8, 128], strides = [1, 1, 1]} : vector<10x16x128xbf16> to vector<8x8x128xbf16>
    %70 = vector.shape_cast %69 : vector<8x8x128xbf16> to vector<64x128xbf16>
    %71 = tpu.concatenate %64, %66, %68, %70 in 1 : vector<64x128xbf16>, vector<64x128xbf16>, vector<64x128xbf16>, vector<64x128xbf16> -> vector<64x512xbf16>
    %c3 = arith.constant 3 : index
    %c0_36 = arith.constant 0 : index
    %c0_37 = arith.constant 0 : index
    %72 = vector.load %arg2[%c3, %c0_36, %c0_37] : memref<4x512x128xbf16, #tpu.memory_space<vmem>>, vector<1x512x128xbf16>
    %73 = vector.shape_cast %72 : vector<1x512x128xbf16> to vector<512x128xbf16>
    %cst_38 = arith.constant dense<0.000000e+00> : vector<64x128xf32>
    %74 = tpu.matmul %71, %73, %cst_38 {dimension_numbers = #tpu.dot_dimension_numbers<[1], [0], [0], [1], [0, 0, 1, 1], [], []>} : vector<64x512xbf16>, vector<512x128xbf16>, vector<64x128xf32> -> vector<64x128xf32>
    %c0_39 = arith.constant 0 : index
    %c0_40 = arith.constant 0 : index
    %75 = vector.load %arg3[%c0_39, %c0_40] : memref<1x128xf32, #tpu.memory_space<vmem>>, vector<1x128xf32>
    %76 = vector.broadcast %75 : vector<1x128xf32> to vector<64x128xf32>
    %77 = arith.addf %74, %76 : vector<64x128xf32>
    %cst_41 = arith.constant 0.000000e+00 : f32
    %78 = vector.broadcast %cst_41 : f32 to vector<64x128xf32>
    %79 = arith.maximumf %77, %78 : vector<64x128xf32>
    %80 = tpu.concatenate %62, %79 in 1 : vector<64x128xf32>, vector<64x128xf32> -> vector<64x256xf32>
    %81 = vector.shape_cast %80 : vector<64x256xf32> to vector<8x8x256xf32>
    %82 = arith.truncf %81 : vector<8x8x256xf32> to vector<8x8x256xbf16>
    %c0_42 = arith.constant 0 : index
    %c0_43 = arith.constant 0 : index
    %c1_44 = arith.constant 1 : index
    %c0_45 = arith.constant 0 : index
    %c0_46 = arith.constant 0 : index
    %83 = vector.load %arg4[%c0_42, %c0_43, %c1_44, %c0_45, %c0_46] : memref<1x8x2x8x256xbf16, #tpu.memory_space<vmem>>, vector<1x8x1x8x256xbf16>
    %84 = vector.shape_cast %83 : vector<1x8x1x8x256xbf16> to vector<8x8x256xbf16>
    %85 = vector.shape_cast %82 : vector<8x8x256xbf16> to vector<1x8x1x8x256xbf16>
    tpu.vector_store %arg4[%c0_42, %c0_43, %c1_44, %c0_45, %c0_46], %85 {strides = array<i32>} : memref<1x8x2x8x256xbf16, #tpu.memory_space<vmem>>, vector<1x8x1x8x256xbf16>,
    return
  }
  func.func @transform_0(%arg0: i32) -> (i32, i32, i32, i32) {
    %c0_i32 = arith.constant 0 : i32
    %c0_i32_0 = arith.constant 0 : i32
    %c0_i32_1 = arith.constant 0 : i32
    %c0_i32_2 = arith.constant 0 : i32
    return %arg0, %c0_i32, %c0_i32_0, %c0_i32_1 : i32, i32, i32, i32
  }
  func.func @transform_1(%arg0: i32) -> (i32, i32, i32) {
    %c0_i32 = arith.constant 0 : i32
    %c0_i32_0 = arith.constant 0 : i32
    %c0_i32_1 = arith.constant 0 : i32
    %c0_i32_2 = arith.constant 0 : i32
    return %c0_i32, %c0_i32_0, %c0_i32_1 : i32, i32, i32
  }
  func.func @transform_2(%arg0: i32) -> (i32, i32) {
    %c0_i32 = arith.constant 0 : i32
    %c0_i32_0 = arith.constant 0 : i32
    %c0_i32_1 = arith.constant 0 : i32
    return %c0_i32, %c0_i32_0 : i32, i32
  }
  func.func @transform_3(%arg0: i32) -> (i32, i32, i32, i32, i32) {
    %c0_i32 = arith.constant 0 : i32
    %c0_i32_0 = arith.constant 0 : i32
    %c0_i32_1 = arith.constant 0 : i32
    %c0_i32_2 = arith.constant 0 : i32
    %c0_i32_3 = arith.constant 0 : i32
    return %arg0, %c0_i32, %c0_i32_0, %c0_i32_1, %c0_i32_2 : i32, i32, i32, i32, i32
  }
}

module attributes {stable_mosaic.version = 11 : i64} {
  func.func @_convt_kernel(%arg0: i32, %arg1: memref<1x16x16x128xbf16, #tpu.memory_space<vmem>>, %arg2: memref<4x512x128xbf16, #tpu.memory_space<vmem>>, %arg3: memref<1x128xf32, #tpu.memory_space<vmem>>, %arg4: memref<1x16x2x16x256xbf16, #tpu.memory_space<vmem>>, %arg5: memref<18x32x128xbf16, #tpu.memory_space<vmem>>) attributes {dimension_semantics = [#tpu.dimension_semantics<parallel>], iteration_bounds = array<i64: 2>, scalar_prefetch = 0 : i64, scratch_operands = 1 : i64, tpu.core_type = #tpu.core_type<tc>, window_params = [{transform_indices = @transform_0, window_bounds = array<i64: 1, 16, 16, 128>}, {pipeline_mode = #tpu.pipeline_mode<synchronous>, transform_indices = @transform_1, window_bounds = array<i64: 4, 512, 128>}, {pipeline_mode = #tpu.pipeline_mode<synchronous>, transform_indices = @transform_2, window_bounds = array<i64: 1, 128>}, {transform_indices = @transform_3, window_bounds = array<i64: 1, 16, 2, 16, 256>}]} {
    %cst = arith.constant 0.000000e+00 : bf16
    %0 = vector.broadcast %cst : bf16 to vector<18x32x128xbf16>
    %c0 = arith.constant 0 : index
    %c0_0 = arith.constant 0 : index
    %c0_1 = arith.constant 0 : index
    %1 = vector.load %arg5[%c0, %c0_0, %c0_1] : memref<18x32x128xbf16, #tpu.memory_space<vmem>>, vector<18x32x128xbf16>
    tpu.vector_store %arg5[%c0, %c0_0, %c0_1], %0 {strides = array<i32>} : memref<18x32x128xbf16, #tpu.memory_space<vmem>>, vector<18x32x128xbf16>,
    %c0_2 = arith.constant 0 : index
    %c0_3 = arith.constant 0 : index
    %c0_4 = arith.constant 0 : index
    %c0_5 = arith.constant 0 : index
    %2 = vector.load %arg1[%c0_2, %c0_3, %c0_4, %c0_5] : memref<1x16x16x128xbf16, #tpu.memory_space<vmem>>, vector<1x16x16x128xbf16>
    %3 = vector.shape_cast %2 : vector<1x16x16x128xbf16> to vector<16x16x128xbf16>
    %c1 = arith.constant 1 : index
    %c1_6 = arith.constant 1 : index
    %c0_7 = arith.constant 0 : index
    %4 = vector.load %arg5[%c1, %c1_6, %c0_7] : memref<18x32x128xbf16, #tpu.memory_space<vmem>>, vector<16x16x128xbf16>
    tpu.vector_store %arg5[%c1, %c1_6, %c0_7], %3 {strides = array<i32>} : memref<18x32x128xbf16, #tpu.memory_space<vmem>>, vector<16x16x128xbf16>,
    %c0_8 = arith.constant 0 : index
    %c0_9 = arith.constant 0 : index
    %c0_10 = arith.constant 0 : index
    %5 = vector.load %arg5[%c0_8, %c0_9, %c0_10] : memref<18x32x128xbf16, #tpu.memory_space<vmem>>, vector<18x32x128xbf16>
    %6 = vector.extract_strided_slice %5 {offsets = [0, 0, 0], sizes = [16, 16, 128], strides = [1, 1, 1]} : vector<18x32x128xbf16> to vector<16x16x128xbf16>
    %7 = vector.shape_cast %6 : vector<16x16x128xbf16> to vector<256x128xbf16>
    %8 = vector.extract_strided_slice %5 {offsets = [0, 1, 0], sizes = [16, 16, 128], strides = [1, 1, 1]} : vector<18x32x128xbf16> to vector<16x16x128xbf16>
    %9 = vector.shape_cast %8 : vector<16x16x128xbf16> to vector<256x128xbf16>
    %10 = vector.extract_strided_slice %5 {offsets = [1, 0, 0], sizes = [16, 16, 128], strides = [1, 1, 1]} : vector<18x32x128xbf16> to vector<16x16x128xbf16>
    %11 = vector.shape_cast %10 : vector<16x16x128xbf16> to vector<256x128xbf16>
    %12 = vector.extract_strided_slice %5 {offsets = [1, 1, 0], sizes = [16, 16, 128], strides = [1, 1, 1]} : vector<18x32x128xbf16> to vector<16x16x128xbf16>
    %13 = vector.shape_cast %12 : vector<16x16x128xbf16> to vector<256x128xbf16>
    %14 = tpu.concatenate %7, %9, %11, %13 in 1 : vector<256x128xbf16>, vector<256x128xbf16>, vector<256x128xbf16>, vector<256x128xbf16> -> vector<256x512xbf16>
    %c0_11 = arith.constant 0 : index
    %c0_12 = arith.constant 0 : index
    %c0_13 = arith.constant 0 : index
    %15 = vector.load %arg2[%c0_11, %c0_12, %c0_13] : memref<4x512x128xbf16, #tpu.memory_space<vmem>>, vector<1x512x128xbf16>
    %16 = vector.shape_cast %15 : vector<1x512x128xbf16> to vector<512x128xbf16>
    %cst_14 = arith.constant dense<0.000000e+00> : vector<256x128xf32>
    %17 = tpu.matmul %14, %16, %cst_14 {dimension_numbers = #tpu.dot_dimension_numbers<[1], [0], [0], [1], [0, 0, 1, 1], [], []>} : vector<256x512xbf16>, vector<512x128xbf16>, vector<256x128xf32> -> vector<256x128xf32>
    %c0_15 = arith.constant 0 : index
    %c0_16 = arith.constant 0 : index
    %18 = vector.load %arg3[%c0_15, %c0_16] : memref<1x128xf32, #tpu.memory_space<vmem>>, vector<1x128xf32>
    %19 = vector.broadcast %18 : vector<1x128xf32> to vector<256x128xf32>
    %20 = arith.addf %17, %19 : vector<256x128xf32>
    %21 = vector.extract_strided_slice %5 {offsets = [0, 1, 0], sizes = [16, 16, 128], strides = [1, 1, 1]} : vector<18x32x128xbf16> to vector<16x16x128xbf16>
    %22 = vector.shape_cast %21 : vector<16x16x128xbf16> to vector<256x128xbf16>
    %23 = vector.extract_strided_slice %5 {offsets = [0, 2, 0], sizes = [16, 16, 128], strides = [1, 1, 1]} : vector<18x32x128xbf16> to vector<16x16x128xbf16>
    %24 = vector.shape_cast %23 : vector<16x16x128xbf16> to vector<256x128xbf16>
    %25 = vector.extract_strided_slice %5 {offsets = [1, 1, 0], sizes = [16, 16, 128], strides = [1, 1, 1]} : vector<18x32x128xbf16> to vector<16x16x128xbf16>
    %26 = vector.shape_cast %25 : vector<16x16x128xbf16> to vector<256x128xbf16>
    %27 = vector.extract_strided_slice %5 {offsets = [1, 2, 0], sizes = [16, 16, 128], strides = [1, 1, 1]} : vector<18x32x128xbf16> to vector<16x16x128xbf16>
    %28 = vector.shape_cast %27 : vector<16x16x128xbf16> to vector<256x128xbf16>
    %29 = tpu.concatenate %22, %24, %26, %28 in 1 : vector<256x128xbf16>, vector<256x128xbf16>, vector<256x128xbf16>, vector<256x128xbf16> -> vector<256x512xbf16>
    %c1_17 = arith.constant 1 : index
    %c0_18 = arith.constant 0 : index
    %c0_19 = arith.constant 0 : index
    %30 = vector.load %arg2[%c1_17, %c0_18, %c0_19] : memref<4x512x128xbf16, #tpu.memory_space<vmem>>, vector<1x512x128xbf16>
    %31 = vector.shape_cast %30 : vector<1x512x128xbf16> to vector<512x128xbf16>
    %cst_20 = arith.constant dense<0.000000e+00> : vector<256x128xf32>
    %32 = tpu.matmul %29, %31, %cst_20 {dimension_numbers = #tpu.dot_dimension_numbers<[1], [0], [0], [1], [0, 0, 1, 1], [], []>} : vector<256x512xbf16>, vector<512x128xbf16>, vector<256x128xf32> -> vector<256x128xf32>
    %c0_21 = arith.constant 0 : index
    %c0_22 = arith.constant 0 : index
    %33 = vector.load %arg3[%c0_21, %c0_22] : memref<1x128xf32, #tpu.memory_space<vmem>>, vector<1x128xf32>
    %34 = vector.broadcast %33 : vector<1x128xf32> to vector<256x128xf32>
    %35 = arith.addf %32, %34 : vector<256x128xf32>
    %36 = tpu.concatenate %20, %35 in 1 : vector<256x128xf32>, vector<256x128xf32> -> vector<256x256xf32>
    %37 = vector.shape_cast %36 : vector<256x256xf32> to vector<16x16x256xf32>
    %38 = arith.truncf %37 : vector<16x16x256xf32> to vector<16x16x256xbf16>
    %c0_23 = arith.constant 0 : index
    %c0_24 = arith.constant 0 : index
    %c0_25 = arith.constant 0 : index
    %c0_26 = arith.constant 0 : index
    %c0_27 = arith.constant 0 : index
    %39 = vector.load %arg4[%c0_23, %c0_24, %c0_25, %c0_26, %c0_27] : memref<1x16x2x16x256xbf16, #tpu.memory_space<vmem>>, vector<1x16x1x16x256xbf16>
    %40 = vector.shape_cast %39 : vector<1x16x1x16x256xbf16> to vector<16x16x256xbf16>
    %41 = vector.shape_cast %38 : vector<16x16x256xbf16> to vector<1x16x1x16x256xbf16>
    tpu.vector_store %arg4[%c0_23, %c0_24, %c0_25, %c0_26, %c0_27], %41 {strides = array<i32>} : memref<1x16x2x16x256xbf16, #tpu.memory_space<vmem>>, vector<1x16x1x16x256xbf16>,
    %42 = vector.extract_strided_slice %5 {offsets = [1, 0, 0], sizes = [16, 16, 128], strides = [1, 1, 1]} : vector<18x32x128xbf16> to vector<16x16x128xbf16>
    %43 = vector.shape_cast %42 : vector<16x16x128xbf16> to vector<256x128xbf16>
    %44 = vector.extract_strided_slice %5 {offsets = [1, 1, 0], sizes = [16, 16, 128], strides = [1, 1, 1]} : vector<18x32x128xbf16> to vector<16x16x128xbf16>
    %45 = vector.shape_cast %44 : vector<16x16x128xbf16> to vector<256x128xbf16>
    %46 = vector.extract_strided_slice %5 {offsets = [2, 0, 0], sizes = [16, 16, 128], strides = [1, 1, 1]} : vector<18x32x128xbf16> to vector<16x16x128xbf16>
    %47 = vector.shape_cast %46 : vector<16x16x128xbf16> to vector<256x128xbf16>
    %48 = vector.extract_strided_slice %5 {offsets = [2, 1, 0], sizes = [16, 16, 128], strides = [1, 1, 1]} : vector<18x32x128xbf16> to vector<16x16x128xbf16>
    %49 = vector.shape_cast %48 : vector<16x16x128xbf16> to vector<256x128xbf16>
    %50 = tpu.concatenate %43, %45, %47, %49 in 1 : vector<256x128xbf16>, vector<256x128xbf16>, vector<256x128xbf16>, vector<256x128xbf16> -> vector<256x512xbf16>
    %c2 = arith.constant 2 : index
    %c0_28 = arith.constant 0 : index
    %c0_29 = arith.constant 0 : index
    %51 = vector.load %arg2[%c2, %c0_28, %c0_29] : memref<4x512x128xbf16, #tpu.memory_space<vmem>>, vector<1x512x128xbf16>
    %52 = vector.shape_cast %51 : vector<1x512x128xbf16> to vector<512x128xbf16>
    %cst_30 = arith.constant dense<0.000000e+00> : vector<256x128xf32>
    %53 = tpu.matmul %50, %52, %cst_30 {dimension_numbers = #tpu.dot_dimension_numbers<[1], [0], [0], [1], [0, 0, 1, 1], [], []>} : vector<256x512xbf16>, vector<512x128xbf16>, vector<256x128xf32> -> vector<256x128xf32>
    %c0_31 = arith.constant 0 : index
    %c0_32 = arith.constant 0 : index
    %54 = vector.load %arg3[%c0_31, %c0_32] : memref<1x128xf32, #tpu.memory_space<vmem>>, vector<1x128xf32>
    %55 = vector.broadcast %54 : vector<1x128xf32> to vector<256x128xf32>
    %56 = arith.addf %53, %55 : vector<256x128xf32>
    %57 = vector.extract_strided_slice %5 {offsets = [1, 1, 0], sizes = [16, 16, 128], strides = [1, 1, 1]} : vector<18x32x128xbf16> to vector<16x16x128xbf16>
    %58 = vector.shape_cast %57 : vector<16x16x128xbf16> to vector<256x128xbf16>
    %59 = vector.extract_strided_slice %5 {offsets = [1, 2, 0], sizes = [16, 16, 128], strides = [1, 1, 1]} : vector<18x32x128xbf16> to vector<16x16x128xbf16>
    %60 = vector.shape_cast %59 : vector<16x16x128xbf16> to vector<256x128xbf16>
    %61 = vector.extract_strided_slice %5 {offsets = [2, 1, 0], sizes = [16, 16, 128], strides = [1, 1, 1]} : vector<18x32x128xbf16> to vector<16x16x128xbf16>
    %62 = vector.shape_cast %61 : vector<16x16x128xbf16> to vector<256x128xbf16>
    %63 = vector.extract_strided_slice %5 {offsets = [2, 2, 0], sizes = [16, 16, 128], strides = [1, 1, 1]} : vector<18x32x128xbf16> to vector<16x16x128xbf16>
    %64 = vector.shape_cast %63 : vector<16x16x128xbf16> to vector<256x128xbf16>
    %65 = tpu.concatenate %58, %60, %62, %64 in 1 : vector<256x128xbf16>, vector<256x128xbf16>, vector<256x128xbf16>, vector<256x128xbf16> -> vector<256x512xbf16>
    %c3 = arith.constant 3 : index
    %c0_33 = arith.constant 0 : index
    %c0_34 = arith.constant 0 : index
    %66 = vector.load %arg2[%c3, %c0_33, %c0_34] : memref<4x512x128xbf16, #tpu.memory_space<vmem>>, vector<1x512x128xbf16>
    %67 = vector.shape_cast %66 : vector<1x512x128xbf16> to vector<512x128xbf16>
    %cst_35 = arith.constant dense<0.000000e+00> : vector<256x128xf32>
    %68 = tpu.matmul %65, %67, %cst_35 {dimension_numbers = #tpu.dot_dimension_numbers<[1], [0], [0], [1], [0, 0, 1, 1], [], []>} : vector<256x512xbf16>, vector<512x128xbf16>, vector<256x128xf32> -> vector<256x128xf32>
    %c0_36 = arith.constant 0 : index
    %c0_37 = arith.constant 0 : index
    %69 = vector.load %arg3[%c0_36, %c0_37] : memref<1x128xf32, #tpu.memory_space<vmem>>, vector<1x128xf32>
    %70 = vector.broadcast %69 : vector<1x128xf32> to vector<256x128xf32>
    %71 = arith.addf %68, %70 : vector<256x128xf32>
    %72 = tpu.concatenate %56, %71 in 1 : vector<256x128xf32>, vector<256x128xf32> -> vector<256x256xf32>
    %73 = vector.shape_cast %72 : vector<256x256xf32> to vector<16x16x256xf32>
    %74 = arith.truncf %73 : vector<16x16x256xf32> to vector<16x16x256xbf16>
    %c0_38 = arith.constant 0 : index
    %c0_39 = arith.constant 0 : index
    %c1_40 = arith.constant 1 : index
    %c0_41 = arith.constant 0 : index
    %c0_42 = arith.constant 0 : index
    %75 = vector.load %arg4[%c0_38, %c0_39, %c1_40, %c0_41, %c0_42] : memref<1x16x2x16x256xbf16, #tpu.memory_space<vmem>>, vector<1x16x1x16x256xbf16>
    %76 = vector.shape_cast %75 : vector<1x16x1x16x256xbf16> to vector<16x16x256xbf16>
    %77 = vector.shape_cast %74 : vector<16x16x256xbf16> to vector<1x16x1x16x256xbf16>
    tpu.vector_store %arg4[%c0_38, %c0_39, %c1_40, %c0_41, %c0_42], %77 {strides = array<i32>} : memref<1x16x2x16x256xbf16, #tpu.memory_space<vmem>>, vector<1x16x1x16x256xbf16>,
    return
  }
  func.func @transform_0(%arg0: i32) -> (i32, i32, i32, i32) {
    %c0_i32 = arith.constant 0 : i32
    %c0_i32_0 = arith.constant 0 : i32
    %c0_i32_1 = arith.constant 0 : i32
    %c0_i32_2 = arith.constant 0 : i32
    return %arg0, %c0_i32, %c0_i32_0, %c0_i32_1 : i32, i32, i32, i32
  }
  func.func @transform_1(%arg0: i32) -> (i32, i32, i32) {
    %c0_i32 = arith.constant 0 : i32
    %c0_i32_0 = arith.constant 0 : i32
    %c0_i32_1 = arith.constant 0 : i32
    %c0_i32_2 = arith.constant 0 : i32
    return %c0_i32, %c0_i32_0, %c0_i32_1 : i32, i32, i32
  }
  func.func @transform_2(%arg0: i32) -> (i32, i32) {
    %c0_i32 = arith.constant 0 : i32
    %c0_i32_0 = arith.constant 0 : i32
    %c0_i32_1 = arith.constant 0 : i32
    return %c0_i32, %c0_i32_0 : i32, i32
  }
  func.func @transform_3(%arg0: i32) -> (i32, i32, i32, i32, i32) {
    %c0_i32 = arith.constant 0 : i32
    %c0_i32_0 = arith.constant 0 : i32
    %c0_i32_1 = arith.constant 0 : i32
    %c0_i32_2 = arith.constant 0 : i32
    %c0_i32_3 = arith.constant 0 : i32
    return %arg0, %c0_i32, %c0_i32_0, %c0_i32_1, %c0_i32_2 : i32, i32, i32, i32, i32
  }
}

</mosaic_0001>

<llo_original>
// kernel: decoder_forward_pallas.3
$region0: #{decoder_forward_pallas.3}
  #allocation0 [shape = 'u32[]', space=smem, size = 0x4, offset = 0x4, fixed_abs, tag = 'smem constant byte address 0x4 - core index']
  #allocation1 [shape = 'u32[144,128]{1,0:T(1,128)}', space=vmem, size = 0x12000, scoped, tag = 'internal scratch']
  #allocation2 [shape = 'f32[10,16,128]{2,1,0:T(8,128)}', space=vmem, size = 0x14000, scoped, tag = 'scratch operand']
  %s0 = inlined_call_operand.vmem [shape: bf16[2,10,16,16], index: 0, kind: input, shape index: {}]
  %s1 = inlined_call_operand.vmem [shape: bf16[144,128], index: 1, kind: input, shape index: {}]
  %s2 = inlined_call_operand.vmem [shape: f32[1,128], index: 2, kind: input, shape index: {}]
  %s3 = inlined_call_operand.vmem [shape: bf16[2,1152,16], index: 3, kind: input, shape index: {}]
  %s4 = inlined_call_operand.vmem [shape: f32[2,1,16], index: 4, kind: input, shape index: {}]
  %s5 = inlined_call_operand.vmem [shape: bf16[2,16,128], index: 5, kind: input, shape index: {}]
  %s6 = inlined_call_operand.vmem [shape: f32[2,1,128], index: 6, kind: input, shape index: {}]
  %s7 = inlined_call_operand.vmem [shape: bf16[2,8,8,128], index: 7, kind: output, shape index: {}]
  %s8 = sld [smem:[#allocation0]]
  $region69: #{decoder_forward_pallas.3} parent=0
    _
  %s10 = ssub.s32 1, %s8
  %s11 = scalar_select 0, %s10, %s8
  loop: start=0, step=1, limit=6
  $region2: #{decoder_forward_pallas.3} parent=0 // loop_pre_header
    _
  $region3: #{decoder_forward_pallas.3} parent=0 // loop_header
    %s13 = sphi 0, %s17
    %p14 = scmp.ge.s32.totalorder %s13, 6
    %s20 = sphi 0, %s32
    %s21 = sphi 0, %s28
    %s22 = sphi 0, %s20
    %s23 = sphi 0, %s21
    %s24 = sphi 0, %s22
    %s25 = sphi 0, %s23
    %s35 = sphi 0, %s37
    %s38 = sphi 0, %s35
    %s39 = sphi 0, %s38
    %s55 = sphi 0, %s39
    %s59 = sphi 0, %s59
    %s61 = sphi 0, %s59
    %s62 = sphi 0, %s61
    %s76 = sphi 0, %s62
    %s80 = sphi 0, %s80
    %s82 = sphi 0, %s80
    %s83 = sphi 0, %s82
    %s97 = sphi 0, %s83
    %s103 = sphi 0, %s105
    %s106 = sphi 0, %s103
    %s107 = sphi 0, %s106
    %s123 = sphi 0, %s107
    %s129 = sphi 0, %s131
    %s132 = sphi 0, %s129
    %s133 = sphi 0, %s132
    %s149 = sphi 0, %s133
    %s155 = sphi 0, %s157
    %s158 = sphi 0, %s155
    %s159 = sphi 0, %s158
    %s175 = sphi 0, %s159
    %s181 = sphi 0, %s183
    %s184 = sphi 0, %s181
    %s185 = sphi 0, %s184
    %s201 = sphi 0, %s185
    %s207 = sphi 0, %s209
    %s210 = sphi 0, %s207
    %s211 = sphi 0, %s210
    %s227 = sphi 0, %s211
  $region4: #{decoder_forward_pallas.3} parent=0 // loop_header_branch
    %16 = sbr.rel (%p14) target = $region8
  $region5: #{decoder_forward_pallas.3} parent=0 // loop_body
    %s18 = ssub.s32 %s13, 1
    %s19 = ssub.s32 %s13, 2
    %s26 = sadd.s32 1, %s21
    %p27 = scmp.ge.s32.totalorder %s26, 2
    %s28 = scalar_select %p27, 0, %s26
    %s29 = sadd.s32 1, %s20
    %s30 = scalar_select %p27, %s29, %s20
    %p31 = scmp.ge.s32.totalorder %s30, 2
    %s32 = scalar_select %p31, 0, %s30
    %s33 = ssub.s32 %s20, %s32
    %p34 = scmp.eq.s32.totalorder %s33, 0
    %s36 = sadd.s32 %s35, 1
    %s37 = scalar_select %p34, %s35, %s36
    %p40 = pneg %p34
    %p41 = scmp.eq.s32.totalorder %s13, 3
    %p42 = por %p40, %p41
    %p43 = scmp.ne.s32.totalorder %s35, %s38
    %p44 = scmp.eq.s32.totalorder %s13, 0
    %p45 = por %p43, %p44
    %p46 = scmp.ne.s32.totalorder %s35, %s38
    %p47 = scmp.eq.s32.totalorder %s18, 3
    %p48 = por %p46, %p47
    %p49 = scmp.ne.s32.totalorder %s38, %s39
    %p50 = scmp.eq.s32.totalorder %s18, 0
    %p51 = por %p49, %p50
    %p52 = scmp.ne.s32.totalorder %s38, %s39
    %p53 = scmp.eq.s32.totalorder %s19, 3
    %p54 = por %p52, %p53
    %p56 = scmp.ne.s32.totalorder %s39, %s55
    %p57 = scmp.eq.s32.totalorder %s19, 0
    %p58 = por %p56, %p57
    %s60 = sadd.s32 %s59, 1
    %p63 = scmp.eq.s32.totalorder %s13, 3
    %p64 = scmp.ne.s32.totalorder %s59, %s61
    %p65 = scmp.eq.s32.totalorder %s13, 0
    %p66 = por %p64, %p65
    %p67 = scmp.ne.s32.totalorder %s59, %s61
    %p68 = scmp.eq.s32.totalorder %s18, 3
    %p69 = por %p67, %p68
    %p70 = scmp.ne.s32.totalorder %s61, %s62
    %p71 = scmp.eq.s32.totalorder %s18, 0
    %p72 = por %p70, %p71
    %p73 = scmp.ne.s32.totalorder %s61, %s62
    %p74 = scmp.eq.s32.totalorder %s19, 3
    %p75 = por %p73, %p74
    %p77 = scmp.ne.s32.totalorder %s62, %s76
    %p78 = scmp.eq.s32.totalorder %s19, 0
    %p79 = por %p77, %p78
    %s81 = sadd.s32 %s80, 1
    %p84 = scmp.eq.s32.totalorder %s13, 3
    %p85 = scmp.ne.s32.totalorder %s80, %s82
    %p86 = scmp.eq.s32.totalorder %s13, 0
    %p87 = por %p85, %p86
    %p88 = scmp.ne.s32.totalorder %s80, %s82
    %p89 = scmp.eq.s32.totalorder %s18, 3
    %p90 = por %p88, %p89
    %p91 = scmp.ne.s32.totalorder %s82, %s83
    %p92 = scmp.eq.s32.totalorder %s18, 0
    %p93 = por %p91, %p92
    %p94 = scmp.ne.s32.totalorder %s82, %s83
    %p95 = scmp.eq.s32.totalorder %s19, 3
    %p96 = por %p94, %p95
    %p98 = scmp.ne.s32.totalorder %s83, %s97
    %p99 = scmp.eq.s32.totalorder %s19, 0
    %p100 = por %p98, %p99
    %s101 = ssub.s32 %s21, %s28
    %p102 = scmp.eq.s32.totalorder %s101, 0
    %s104 = sadd.s32 %s103, 1
    %s105 = scalar_select %p102, %s103, %s104
    %p108 = pneg %p102
    %p109 = scmp.eq.s32.totalorder %s13, 3
    %p110 = por %p108, %p109
    %p111 = scmp.ne.s32.totalorder %s103, %s106
    %p112 = scmp.eq.s32.totalorder %s13, 0
    %p113 = por %p111, %p112
    %p114 = scmp.ne.s32.totalorder %s103, %s106
    %p115 = scmp.eq.s32.totalorder %s18, 3
    %p116 = por %p114, %p115
    %p117 = scmp.ne.s32.totalorder %s106, %s107
    %p118 = scmp.eq.s32.totalorder %s18, 0
    %p119 = por %p117, %p118
    %p120 = scmp.ne.s32.totalorder %s106, %s107
    %p121 = scmp.eq.s32.totalorder %s19, 3
    %p122 = por %p120, %p121
    %p124 = scmp.ne.s32.totalorder %s107, %s123
    %p125 = scmp.eq.s32.totalorder %s19, 0
    %p126 = por %p124, %p125
    %s127 = ssub.s32 %s21, %s28
    %p128 = scmp.eq.s32.totalorder %s127, 0
    %s130 = sadd.s32 %s129, 1
    %s131 = scalar_select %p128, %s129, %s130
    %p134 = pneg %p128
    %p135 = scmp.eq.s32.totalorder %s13, 3
    %p136 = por %p134, %p135
    %p137 = scmp.ne.s32.totalorder %s129, %s132
    %p138 = scmp.eq.s32.totalorder %s13, 0
    %p139 = por %p137, %p138
    %p140 = scmp.ne.s32.totalorder %s129, %s132
    %p141 = scmp.eq.s32.totalorder %s18, 3
    %p142 = por %p140, %p141
    %p143 = scmp.ne.s32.totalorder %s132, %s133
    %p144 = scmp.eq.s32.totalorder %s18, 0
    %p145 = por %p143, %p144
    %p146 = scmp.ne.s32.totalorder %s132, %s133
    %p147 = scmp.eq.s32.totalorder %s19, 3
    %p148 = por %p146, %p147
    %p150 = scmp.ne.s32.totalorder %s133, %s149
    %p151 = scmp.eq.s32.totalorder %s19, 0
    %p152 = por %p150, %p151
    %s153 = ssub.s32 %s21, %s28
    %p154 = scmp.eq.s32.totalorder %s153, 0
    %s156 = sadd.s32 %s155, 1
    %s157 = scalar_select %p154, %s155, %s156
    %p160 = pneg %p154
    %p161 = scmp.eq.s32.totalorder %s13, 3
    %p162 = por %p160, %p161
    %p163 = scmp.ne.s32.totalorder %s155, %s158
    %p164 = scmp.eq.s32.totalorder %s13, 0
    %p165 = por %p163, %p164
    %p166 = scmp.ne.s32.totalorder %s155, %s158
    %p167 = scmp.eq.s32.totalorder %s18, 3
    %p168 = por %p166, %p167
    %p169 = scmp.ne.s32.totalorder %s158, %s159
    %p170 = scmp.eq.s32.totalorder %s18, 0
    %p171 = por %p169, %p170
    %p172 = scmp.ne.s32.totalorder %s158, %s159
    %p173 = scmp.eq.s32.totalorder %s19, 3
    %p174 = por %p172, %p173
    %p176 = scmp.ne.s32.totalorder %s159, %s175
    %p177 = scmp.eq.s32.totalorder %s19, 0
    %p178 = por %p176, %p177
    %s179 = ssub.s32 %s21, %s28
    %p180 = scmp.eq.s32.totalorder %s179, 0
    %s182 = sadd.s32 %s181, 1
    %s183 = scalar_select %p180, %s181, %s182
    %p186 = pneg %p180
    %p187 = scmp.eq.s32.totalorder %s13, 3
    %p188 = por %p186, %p187
    %p189 = scmp.ne.s32.totalorder %s181, %s184
    %p190 = scmp.eq.s32.totalorder %s13, 0
    %p191 = por %p189, %p190
    %p192 = scmp.ne.s32.totalorder %s181, %s184
    %p193 = scmp.eq.s32.totalorder %s18, 3
    %p194 = por %p192, %p193
    %p195 = scmp.ne.s32.totalorder %s184, %s185
    %p196 = scmp.eq.s32.totalorder %s18, 0
    %p197 = por %p195, %p196
    %p198 = scmp.ne.s32.totalorder %s184, %s185
    %p199 = scmp.eq.s32.totalorder %s19, 3
    %p200 = por %p198, %p199
    %p202 = scmp.ne.s32.totalorder %s185, %s201
    %p203 = scmp.eq.s32.totalorder %s19, 0
    %p204 = por %p202, %p203
    %s205 = ssub.s32 %s20, %s32
    %p206 = scmp.eq.s32.totalorder %s205, 0
    %s208 = sadd.s32 %s207, 1
    %s209 = scalar_select %p206, %s207, %s208
    %p212 = pneg %p206
    %p213 = scmp.eq.s32.totalorder %s13, 3
    %p214 = por %p212, %p213
    %p215 = scmp.ne.s32.totalorder %s207, %s210
    %p216 = scmp.eq.s32.totalorder %s13, 0
    %p217 = por %p215, %p216
    %p218 = scmp.ne.s32.totalorder %s207, %s210
    %p219 = scmp.eq.s32.totalorder %s18, 3
    %p220 = por %p218, %p219
    %p221 = scmp.ne.s32.totalorder %s210, %s211
    %p222 = scmp.eq.s32.totalorder %s18, 0
    %p223 = por %p221, %p222
    %p224 = scmp.ne.s32.totalorder %s210, %s211
    %p225 = scmp.eq.s32.totalorder %s19, 3
    %p226 = por %p224, %p225
    %p228 = scmp.ne.s32.totalorder %s211, %s227
    %p229 = scmp.eq.s32.totalorder %s19, 0
    %p230 = por %p228, %p229
    %p231 = scmp.le.s32.totalorder 1, %s13
    %p232 = scmp.lt.s32.totalorder %s13, 5
    %p233 = pnand %p231, %p232
    %p234 = pneg %p233
    // Predicated region
    $region9: #{decoder_forward_pallas.3} parent=5 // pred_check
      _
    $region10: #{decoder_forward_pallas.3} parent=5 // pred_check_branch
      %236 = sbr.rel (%p233) target = $region12
    $region11: #{decoder_forward_pallas.3} parent=5 // pred_region
      %s237 = ssub.s32 %s13, 1
      // Predicated region
      $region13: #{decoder_forward_pallas.3} parent=11 // pred_check
        %p238 = pneg %p72
      $region14: #{decoder_forward_pallas.3} parent=11 // pred_check_branch
        %240 = sbr.rel (%p238) target = $region16
      $region15: #{decoder_forward_pallas.3} parent=11 // pred_region
        _
      $region16: #{decoder_forward_pallas.3} parent=11 // pred_fallthru
        _
      // Predicated region
      $region17: #{decoder_forward_pallas.3} parent=11 // pred_check
        %p241 = pneg %p93
      $region18: #{decoder_forward_pallas.3} parent=11 // pred_check_branch
        %243 = sbr.rel (%p241) target = $region20
      $region19: #{decoder_forward_pallas.3} parent=11 // pred_region
        _
      $region20: #{decoder_forward_pallas.3} parent=11 // pred_fallthru
        _
    $region12: #{decoder_forward_pallas.3} parent=5 // pred_fallthru
      _
    %p244 = scmp.lt.s32.totalorder %s13, 4
    // Predicated region
    $region21: #{decoder_forward_pallas.3} parent=5 // pred_check
      %p245 = pneg %p244
    $region22: #{decoder_forward_pallas.3} parent=5 // pred_check_branch
      %247 = sbr.rel (%p245) target = $region24
    $region23: #{decoder_forward_pallas.3} parent=5 // pred_region
      // Predicated region
      $region25: #{decoder_forward_pallas.3} parent=23 // pred_check
        %p248 = pneg %p45
      $region26: #{decoder_forward_pallas.3} parent=23 // pred_check_branch
        %250 = sbr.rel (%p248) target = $region28
      $region27: #{decoder_forward_pallas.3} parent=23 // pred_region
        %p251 = scmp.lt.s32.totalorder %s20, 1
        %s252 = scalar_select %p251, %s20, 1
        %s253 = smul.addr %s252, 20
        %s254 = smul.addr %s253, 4
        %s255 = scalar_lea.vmem %s0, %s254
      $region28: #{decoder_forward_pallas.3} parent=23 // pred_fallthru
        _
      // Predicated region
      $region29: #{decoder_forward_pallas.3} parent=23 // pred_check
        %p256 = pneg %p113
      $region30: #{decoder_forward_pallas.3} parent=23 // pred_check_branch
        %258 = sbr.rel (%p256) target = $region32
      $region31: #{decoder_forward_pallas.3} parent=23 // pred_region
        %p259 = scmp.lt.s32.totalorder %s21, 1
        %s260 = scalar_select %p259, %s21, 1
        %s261 = smul.addr %s260, 144
        %s262 = smul.addr %s261, 4
        %s263 = scalar_lea.vmem %s3, %s262
      $region32: #{decoder_forward_pallas.3} parent=23 // pred_fallthru
        _
      // Predicated region
      $region33: #{decoder_forward_pallas.3} parent=23 // pred_check
        %p264 = pneg %p139
      $region34: #{decoder_forward_pallas.3} parent=23 // pred_check_branch
        %266 = sbr.rel (%p264) target = $region36
      $region35: #{decoder_forward_pallas.3} parent=23 // pred_region
        %p267 = scmp.lt.s32.totalorder %s21, 1
        %s268 = scalar_select %p267, %s21, 1
        %s269 = scalar_lea.vmem %s4, %s268
      $region36: #{decoder_forward_pallas.3} parent=23 // pred_fallthru
        _
      // Predicated region
      $region37: #{decoder_forward_pallas.3} parent=23 // pred_check
        %p270 = pneg %p165
      $region38: #{decoder_forward_pallas.3} parent=23 // pred_check_branch
        %272 = sbr.rel (%p270) target = $region40
      $region39: #{decoder_forward_pallas.3} parent=23 // pred_region
        %p273 = scmp.lt.s32.totalorder %s21, 1
        %s274 = scalar_select %p273, %s21, 1
        %s275 = smul.addr %s274, 2
        %s276 = smul.addr %s275, 4
        %s277 = scalar_lea.vmem %s5, %s276
      $region40: #{decoder_forward_pallas.3} parent=23 // pred_fallthru
        _
      // Predicated region
      $region41: #{decoder_forward_pallas.3} parent=23 // pred_check
        %p278 = pneg %p191
      $region42: #{decoder_forward_pallas.3} parent=23 // pred_check_branch
        %280 = sbr.rel (%p278) target = $region44
      $region43: #{decoder_forward_pallas.3} parent=23 // pred_region
        %p281 = scmp.lt.s32.totalorder %s21, 1
        %s282 = scalar_select %p281, %s21, 1
        %s283 = scalar_lea.vmem %s6, %s282
      $region44: #{decoder_forward_pallas.3} parent=23 // pred_fallthru
        _
    $region24: #{decoder_forward_pallas.3} parent=5 // pred_fallthru
      _
    %p284 = scmp.le.s32.totalorder 1, %s13
    %p285 = scmp.lt.s32.totalorder %s13, 5
    %p286 = pnand %p284, %p285
    %p287 = pneg %p286
    // Predicated region
    $region45: #{decoder_forward_pallas.3} parent=5 // pred_check
      _
    $region46: #{decoder_forward_pallas.3} parent=5 // pred_check_branch
      %289 = sbr.rel (%p286) target = $region48
    $region47: #{decoder_forward_pallas.3} parent=5 // pred_region
      %s290 = ssub.s32 %s13, 1
      %p291 = scmp.lt.s32.totalorder %s22, 1
      %s292 = scalar_select %p291, %s22, 1
      %s293 = smul.addr %s292, 20
      %s294 = smul.addr %s293, 4
      %s295 = scalar_lea.vmem %s0, %s294
      %p296 = pneg %p51
      %p297 = pneg %p48
      %p298 = pneg %p72
      %p299 = pneg %p69
      %p300 = pneg %p93
      %p301 = pneg %p90
      %p302 = scmp.lt.s32.totalorder %s23, 1
      %s303 = scalar_select %p302, %s23, 1
      %s304 = smul.addr %s303, 144
      %s305 = smul.addr %s304, 4
      %s306 = scalar_lea.vmem %s3, %s305
      %p307 = pneg %p119
      %p308 = pneg %p116
      %p309 = scmp.lt.s32.totalorder %s23, 1
      %s310 = scalar_select %p309, %s23, 1
      %s311 = scalar_lea.vmem %s4, %s310
      %p312 = pneg %p145
      %p313 = pneg %p142
      %p314 = scmp.lt.s32.totalorder %s23, 1
      %s315 = scalar_select %p314, %s23, 1
      %s316 = smul.addr %s315, 2
      %s317 = smul.addr %s316, 4
      %s318 = scalar_lea.vmem %s5, %s317
      %p319 = pneg %p171
      %p320 = pneg %p168
      %p321 = scmp.lt.s32.totalorder %s23, 1
      %s322 = scalar_select %p321, %s23, 1
      %s323 = scalar_lea.vmem %s6, %s322
      %p324 = pneg %p197
      %p325 = pneg %p194
      %p326 = pneg %p223
      %p327 = pneg %p220
      %p328 = scmp.lt.s32.totalorder %s22, 1
      %s329 = scalar_select %p328, %s22, 1
      %s330 = smul.addr %s329, 8
      %s331 = smul.addr %s330, 4
      %s332 = scalar_lea.vmem %s7, %s331
      %p333 = scmp.lt.s32.totalorder %s22, 1
      %s334 = scalar_select %p333, %s22, 1
      %s335 = smul.addr %s334, 20
      %s336 = smul.addr %s335, 4
      %s337 = scalar_lea.vmem %s0, %s336
      %p338 = scmp.lt.s32.totalorder %s23, 1
      %s339 = scalar_select %p338, %s23, 1
      %s340 = smul.addr %s339, 144
      %s341 = smul.addr %s340, 4
      %s342 = scalar_lea.vmem %s3, %s341
      %p343 = scmp.lt.s32.totalorder %s23, 1
      %s344 = scalar_select %p343, %s23, 1
      %s345 = scalar_lea.vmem %s4, %s344
      %p346 = scmp.lt.s32.totalorder %s23, 1
      %s347 = scalar_select %p346, %s23, 1
      %s348 = smul.addr %s347, 2
      %s349 = smul.addr %s348, 4
      %s350 = scalar_lea.vmem %s5, %s349
      %p351 = scmp.lt.s32.totalorder %s23, 1
      %s352 = scalar_select %p351, %s23, 1
      %s353 = scalar_lea.vmem %s6, %s352
      %p354 = scmp.lt.s32.totalorder %s22, 1
      %s355 = scalar_select %p354, %s22, 1
      %s356 = smul.addr %s355, 8
      %s357 = smul.addr %s356, 4
      %s358 = scalar_lea.vmem %s7, %s357
      %p360 = scmp.eq.s32.totalorder %s23, 0
      // Predicated region
      $region49: #{decoder_forward_pallas.3} parent=47 // pred_check
        %p361 = pneg %p360
      $region50: #{decoder_forward_pallas.3} parent=47 // pred_check_branch
        %363 = sbr.rel (%p361) target = $region52
      $region51: #{decoder_forward_pallas.3} parent=47 // pred_region
        %364 = vst [vmem:[#allocation2] sm:$0xff] 0.0
        %365 = vst [vmem:[#allocation2 + $0x8] sm:$0xff] 0.0
        %366 = vst [vmem:[#allocation2 + $0x10] sm:$0xff] 0.0
        %367 = vst [vmem:[#allocation2 + $0x18] sm:$0xff] 0.0
        %368 = vst [vmem:[#allocation2 + $0x20] sm:$0xff] 0.0
        %369 = vst [vmem:[#allocation2 + $0x28] sm:$0xff] 0.0
        %370 = vst [vmem:[#allocation2 + $0x30] sm:$0xff] 0.0
        %371 = vst [vmem:[#allocation2 + $0x38] sm:$0xff] 0.0
        %372 = vst [vmem:[#allocation2 + $0x40] sm:$0xff] 0.0
        %373 = vst [vmem:[#allocation2 + $0x48] sm:$0xff] 0.0
        %374 = vst [vmem:[#allocation2 + $0x50] sm:$0xff] 0.0
        %375 = vst [vmem:[#allocation2 + $0x58] sm:$0xff] 0.0
        %376 = vst [vmem:[#allocation2 + $0x60] sm:$0xff] 0.0
        %377 = vst [vmem:[#allocation2 + $0x68] sm:$0xff] 0.0
        %378 = vst [vmem:[#allocation2 + $0x70] sm:$0xff] 0.0
        %379 = vst [vmem:[#allocation2 + $0x78] sm:$0xff] 0.0
        %380 = vst [vmem:[#allocation2 + $0x80] sm:$0xff] 0.0
        %381 = vst [vmem:[#allocation2 + $0x88] sm:$0xff] 0.0
        %382 = vst [vmem:[#allocation2 + $0x90] sm:$0xff] 0.0
        %383 = vst [vmem:[#allocation2 + $0x98] sm:$0xff] 0.0
        %v384 = vld [vmem:[%s337] sm:$0xf]
        %v385 = vld [vmem:[%s337 + $0x4] sm:$0xf]
        %v386 = vld [vmem:[%s337 + $0x8] sm:$0xf]
        %v387 = vld [vmem:[%s337 + $0xc] sm:$0xf]
        %v388 = vld [vmem:[%s337 + $0x10] sm:$0xf]
        %v389 = vld [vmem:[%s337 + $0x14] sm:$0xf]
        %v390 = vld [vmem:[%s337 + $0x18] sm:$0xf]
        %v391 = vld [vmem:[%s337 + $0x1c] sm:$0xf]
        %v392 = vld [vmem:[%s337 + $0x20] sm:$0xf]
        %v393 = vld [vmem:[%s337 + $0x24] sm:$0xf]
        %v394 = vld [vmem:[%s337 + $0x28] sm:$0xf]
        %v395 = vld [vmem:[%s337 + $0x2c] sm:$0xf]
        %v396 = vld [vmem:[%s337 + $0x30] sm:$0xf]
        %v397 = vld [vmem:[%s337 + $0x34] sm:$0xf]
        %v398 = vld [vmem:[%s337 + $0x38] sm:$0xf]
        %v399 = vld [vmem:[%s337 + $0x3c] sm:$0xf]
        %v400 = vld [vmem:[%s337 + $0x40] sm:$0xf]
        %v401 = vld [vmem:[%s337 + $0x44] sm:$0xf]
        %v402 = vld [vmem:[%s337 + $0x48] sm:$0xf]
        %v403 = vld [vmem:[%s337 + $0x4c] sm:$0xf]
        %vm404 = vsmask.f32 3328
        %vm405 = vsmask.f32 7440
        %vm406 = vmor %vm404, %vm405
        %v408 = vshrl.u32 %v384, 16
        %v410 = vrot.slane %v408, 4
        %v411 = vshll.u32 %v384, 16
        %v413 = vrot.slane %v411, 5
        %v414 = vor.u32 %v410, %v413
        %v415 = vrot.slane %v414, 4
        %v417 = vshll.u32 %v385, 16
        %v419 = vrot.slane %v417, 5
        %v420 = vsel %vm406, %v415, %v419
        %v422 = vshrl.u32 %v386, 16
        %v424 = vrot.slane %v422, 4
        %v425 = vshll.u32 %v386, 16
        %v427 = vrot.slane %v425, 5
        %v428 = vor.u32 %v424, %v427
        %v429 = vrot.slane %v428, 4
        %v431 = vshll.u32 %v387, 16
        %v433 = vrot.slane %v431, 5
        %v434 = vsel %vm406, %v429, %v433
        %v436 = vshrl.u32 %v388, 16
        %v438 = vrot.slane %v436, 4
        %v439 = vshll.u32 %v388, 16
        %v441 = vrot.slane %v439, 5
        %v442 = vor.u32 %v438, %v441
        %v443 = vrot.slane %v442, 4
        %v445 = vshll.u32 %v389, 16
        %v447 = vrot.slane %v445, 5
        %v448 = vsel %vm406, %v443, %v447
        %v450 = vshrl.u32 %v390, 16
        %v452 = vrot.slane %v450, 4
        %v453 = vshll.u32 %v390, 16
        %v455 = vrot.slane %v453, 5
        %v456 = vor.u32 %v452, %v455
        %v457 = vrot.slane %v456, 4
        %v459 = vshll.u32 %v391, 16
        %v461 = vrot.slane %v459, 5
        %v462 = vsel %vm406, %v457, %v461
        %v464 = vshrl.u32 %v392, 16
        %v466 = vrot.slane %v464, 4
        %v467 = vshll.u32 %v392, 16
        %v469 = vrot.slane %v467, 5
        %v470 = vor.u32 %v466, %v469
        %v471 = vrot.slane %v470, 4
        %v473 = vshll.u32 %v393, 16
        %v475 = vrot.slane %v473, 5
        %v476 = vsel %vm406, %v471, %v475
        %v478 = vshrl.u32 %v394, 16
        %v480 = vrot.slane %v478, 4
        %v481 = vshll.u32 %v394, 16
        %v483 = vrot.slane %v481, 5
        %v484 = vor.u32 %v480, %v483
        %v485 = vrot.slane %v484, 4
        %v487 = vshll.u32 %v395, 16
        %v489 = vrot.slane %v487, 5
        %v490 = vsel %vm406, %v485, %v489
        %v492 = vshrl.u32 %v396, 16
        %v494 = vrot.slane %v492, 4
        %v495 = vshll.u32 %v396, 16
        %v497 = vrot.slane %v495, 5
        %v498 = vor.u32 %v494, %v497
        %v499 = vrot.slane %v498, 4
        %v501 = vshll.u32 %v397, 16
        %v503 = vrot.slane %v501, 5
        %v504 = vsel %vm406, %v499, %v503
        %v506 = vshrl.u32 %v398, 16
        %v508 = vrot.slane %v506, 4
        %v509 = vshll.u32 %v398, 16
        %v511 = vrot.slane %v509, 5
        %v512 = vor.u32 %v508, %v511
        %v513 = vrot.slane %v512, 4
        %v515 = vshll.u32 %v399, 16
        %v517 = vrot.slane %v515, 5
        %v518 = vsel %vm406, %v513, %v517
        %vm535 = vcmask 1042432
        %vm536 = vcmask 1046532
        %vm537 = vmor %vm535, %vm536
        %v538 = vrot.slane %v384, 5
        %v539 = vrot.slane %v538, 4
        %v540 = vrot.slane %v385, 5
        %v541 = vsel %vm537, %v539, %v540
        %v542 = vrot.slane %v386, 5
        %v543 = vrot.slane %v542, 4
        %v544 = vrot.slane %v387, 5
        %v545 = vsel %vm537, %v543, %v544
        %v546 = vrot.slane %v388, 5
        %v547 = vrot.slane %v546, 4
        %v548 = vrot.slane %v389, 5
        %v549 = vsel %vm537, %v547, %v548
        %v550 = vrot.slane %v390, 5
        %v551 = vrot.slane %v550, 4
        %v552 = vrot.slane %v391, 5
        %v553 = vsel %vm537, %v551, %v552
        %v554 = vrot.slane %v392, 5
        %v555 = vrot.slane %v554, 4
        %v556 = vrot.slane %v393, 5
        %v557 = vsel %vm537, %v555, %v556
        %v558 = vrot.slane %v394, 5
        %v559 = vrot.slane %v558, 4
        %v560 = vrot.slane %v395, 5
        %v561 = vsel %vm537, %v559, %v560
        %v562 = vrot.slane %v396, 5
        %v563 = vrot.slane %v562, 4
        %v564 = vrot.slane %v397, 5
        %v565 = vsel %vm537, %v563, %v564
        %v566 = vrot.slane %v398, 5
        %v567 = vrot.slane %v566, 4
        %v568 = vrot.slane %v399, 5
        %v569 = vsel %vm537, %v567, %v568
        %v571 = vshrl.u32 %v400, 16
        %v573 = vrot.slane %v571, 4
        %v574 = vshll.u32 %v400, 16
        %v576 = vrot.slane %v574, 5
        %v577 = vor.u32 %v573, %v576
        %v578 = vrot.slane %v577, 4
        %v580 = vshll.u32 %v401, 16
        %v582 = vrot.slane %v580, 5
        %v583 = vsel %vm406, %v578, %v582
        %v586 = vrot.slane %v400, 5
        %v587 = vrot.slane %v586, 4
        %v588 = vrot.slane %v401, 5
        %v589 = vsel %vm537, %v587, %v588
        %v591 = vshrl.u32 %v402, 16
        %v593 = vrot.slane %v591, 4
        %v594 = vshll.u32 %v402, 16
        %v596 = vrot.slane %v594, 5
        %v597 = vor.u32 %v593, %v596
        %v598 = vrot.slane %v597, 4
        %v600 = vshll.u32 %v403, 16
        %v602 = vrot.slane %v600, 5
        %v603 = vsel %vm406, %v598, %v602
        %v606 = vrot.slane %v402, 5
        %v607 = vrot.slane %v606, 4
        %v608 = vrot.slane %v403, 5
        %v609 = vsel %vm537, %v607, %v608
        %v610 = vunpack.c.l.b16 %v384
        %v611 = vunpack.c.l.b16 %v386
        %v612 = vunpack.c.l.b16 %v388
        %v613 = vunpack.c.l.b16 %v390
        %v614 = vunpack.c.l.b16 %v392
        %v615 = vunpack.c.l.b16 %v394
        %v616 = vunpack.c.l.b16 %v396
        %v617 = vunpack.c.l.b16 %v398
        %v618 = vpack.c.b16 %v611, %v610
        %v619 = vpack.c.b16 %v613, %v612
        %v620 = vpack.c.b16 %v615, %v614
        %v621 = vpack.c.b16 %v617, %v616
        %v622 = vunpack.c.l.b16 %v420
        %v623 = vunpack.c.l.b16 %v434
        %v624 = vunpack.c.l.b16 %v448
        %v625 = vunpack.c.l.b16 %v462
        %v626 = vunpack.c.l.b16 %v476
        %v627 = vunpack.c.l.b16 %v490
        %v628 = vunpack.c.l.b16 %v504
        %v629 = vunpack.c.l.b16 %v518
        %v630 = vpack.c.b16 %v623, %v622
        %v631 = vpack.c.b16 %v625, %v624
        %v632 = vpack.c.b16 %v627, %v626
        %v633 = vpack.c.b16 %v629, %v628
        %634 = vrot.lane.b32.xlu0 %v630, 16
        %v635 = vpop.permute.xlu0 %634
        %636 = vrot.lane.b32.xlu0 %v631, 16
        %v637 = vpop.permute.xlu0 %636
        %638 = vrot.lane.b32.xlu0 %v632, 16
        %v639 = vpop.permute.xlu0 %638
        %640 = vrot.lane.b32.xlu0 %v633, 16
        %v641 = vpop.permute.xlu0 %640
        %v642 = vunpack.c.l.b16 %v541
        %v643 = vunpack.c.l.b16 %v545
        %v644 = vunpack.c.l.b16 %v549
        %v645 = vunpack.c.l.b16 %v553
        %v646 = vunpack.c.l.b16 %v557
        %v647 = vunpack.c.l.b16 %v561
        %v648 = vunpack.c.l.b16 %v565
        %v649 = vunpack.c.l.b16 %v569
        %v650 = vpack.c.b16 %v643, %v642
        %v651 = vpack.c.b16 %v645, %v644
        %v652 = vpack.c.b16 %v647, %v646
        %v653 = vpack.c.b16 %v649, %v648
        %654 = vrot.lane.b32.xlu0 %v650, 32
        %v655 = vpop.permute.xlu0 %654
        %656 = vrot.lane.b32.xlu0 %v651, 32
        %v657 = vpop.permute.xlu0 %656
        %658 = vrot.lane.b32.xlu0 %v652, 32
        %v659 = vpop.permute.xlu0 %658
        %660 = vrot.lane.b32.xlu0 %v653, 32
        %v661 = vpop.permute.xlu0 %660
        %v662 = vunpack.c.l.b16 %v400
        %v663 = vpack.c.b16 %v612, %v611
        %v664 = vpack.c.b16 %v614, %v613
        %v665 = vpack.c.b16 %v616, %v615
        %v666 = vpack.c.b16 %v662, %v617
        %667 = vrot.lane.b32.xlu0 %v663, 48
        %v668 = vpop.permute.xlu0 %667
        %669 = vrot.lane.b32.xlu0 %v664, 48
        %v670 = vpop.permute.xlu0 %669
        %671 = vrot.lane.b32.xlu0 %v665, 48
        %v672 = vpop.permute.xlu0 %671
        %673 = vrot.lane.b32.xlu0 %v666, 48
        %v674 = vpop.permute.xlu0 %673
        %v675 = vunpack.c.l.b16 %v583
        %v676 = vpack.c.b16 %v624, %v623
        %v677 = vpack.c.b16 %v626, %v625
        %v678 = vpack.c.b16 %v628, %v627
        %v679 = vpack.c.b16 %v675, %v629
        %680 = vrot.lane.b32.xlu0 %v676, 64
        %v681 = vpop.permute.xlu0 %680
        %682 = vrot.lane.b32.xlu0 %v677, 64
        %v683 = vpop.permute.xlu0 %682
        %684 = vrot.lane.b32.xlu0 %v678, 64
        %v685 = vpop.permute.xlu0 %684
        %686 = vrot.lane.b32.xlu0 %v679, 64
        %v687 = vpop.permute.xlu0 %686
        %v688 = vunpack.c.l.b16 %v589
        %v689 = vpack.c.b16 %v644, %v643
        %v690 = vpack.c.b16 %v646, %v645
        %v691 = vpack.c.b16 %v648, %v647
        %v692 = vpack.c.b16 %v688, %v649
        %693 = vrot.lane.b32.xlu0 %v689, 80
        %v694 = vpop.permute.xlu0 %693
        %695 = vrot.lane.b32.xlu0 %v690, 80
        %v696 = vpop.permute.xlu0 %695
        %697 = vrot.lane.b32.xlu0 %v691, 80
        %v698 = vpop.permute.xlu0 %697
        %699 = vrot.lane.b32.xlu0 %v692, 80
        %v700 = vpop.permute.xlu0 %699
        %v701 = vunpack.c.l.b16 %v402
        %v702 = vpack.c.b16 %v701, %v662
        %703 = vrot.lane.b32.xlu0 %v619, 96
        %v704 = vpop.permute.xlu0 %703
        %705 = vrot.lane.b32.xlu0 %v620, 96
        %v706 = vpop.permute.xlu0 %705
        %707 = vrot.lane.b32.xlu0 %v621, 96
        %v708 = vpop.permute.xlu0 %707
        %709 = vrot.lane.b32.xlu0 %v702, 96
        %v710 = vpop.permute.xlu0 %709
        %v711 = vunpack.c.l.b16 %v603
        %v712 = vpack.c.b16 %v711, %v675
        %713 = vrot.lane.b32.xlu0 %v631, 112
        %v714 = vpop.permute.xlu0 %713
        %715 = vrot.lane.b32.xlu0 %v632, 112
        %v716 = vpop.permute.xlu0 %715
        %717 = vrot.lane.b32.xlu0 %v633, 112
        %v718 = vpop.permute.xlu0 %717
        %719 = vrot.lane.b32.xlu0 %v712, 112
        %v720 = vpop.permute.xlu0 %719
        %v721 = vunpack.c.l.b16 %v609
        %v722 = vpack.c.b16 %v721, %v688
        %vm723 = vcmask 130048
        %v726 = vsel %vm723, %v618, %v635
        %v729 = vsel %vm723, %v619, %v637
        %v732 = vsel %vm723, %v620, %v639
        %v735 = vsel %vm723, %v621, %v641
        %vm736 = vcmask 261120
        %v738 = vsel %vm736, %v726, %v655
        %v740 = vsel %vm736, %v729, %v657
        %v742 = vsel %vm736, %v732, %v659
        %v744 = vsel %vm736, %v735, %v661
        %vm745 = vcmask 392192
        %v747 = vsel %vm745, %v738, %v668
        %v749 = vsel %vm745, %v740, %v670
        %v751 = vsel %vm745, %v742, %v672
        %v753 = vsel %vm745, %v744, %v674
        %vm754 = vcmask 523264
        %v756 = vsel %vm754, %v747, %v681
        %v758 = vsel %vm754, %v749, %v683
        %v760 = vsel %vm754, %v751, %v685
        %v762 = vsel %vm754, %v753, %v687
        %vm763 = vcmask 654336
        %v765 = vsel %vm763, %v756, %v694
        %v767 = vsel %vm763, %v758, %v696
        %v769 = vsel %vm763, %v760, %v698
        %v771 = vsel %vm763, %v762, %v700
        %vm772 = vcmask 785408
        %v774 = vsel %vm772, %v765, %v704
        %v776 = vsel %vm772, %v767, %v706
        %v778 = vsel %vm772, %v769, %v708
        %v780 = vsel %vm772, %v771, %v710
        %vm781 = vcmask 916480
        %v783 = vsel %vm781, %v774, %v714
        %v786 = vsel %vm781, %v776, %v716
        %v789 = vsel %vm781, %v778, %v718
        %v792 = vsel %vm781, %v780, %v720
        %v794 = vld [vmem:[%s1] sm:$0xf]
        %v795 = vld [vmem:[%s1 + $0x4] sm:$0xf]
        %v796 = vld [vmem:[%s1 + $0x8] sm:$0xf]
        %v797 = vld [vmem:[%s1 + $0xc] sm:$0xf]
        %v798 = vld [vmem:[%s1 + $0x10] sm:$0xf]
        %v799 = vld [vmem:[%s1 + $0x14] sm:$0xf]
        %v800 = vld [vmem:[%s1 + $0x18] sm:$0xf]
        %v801 = vld [vmem:[%s1 + $0x1c] sm:$0xf]
        %v802 = vld [vmem:[%s1 + $0x20] sm:$0xf]
        %v803 = vld [vmem:[%s1 + $0x24] sm:$0xf]
        %v804 = vld [vmem:[%s1 + $0x28] sm:$0xf]
        %v805 = vld [vmem:[%s1 + $0x2c] sm:$0xf]
        %v806 = vld [vmem:[%s1 + $0x30] sm:$0xf]
        %v807 = vld [vmem:[%s1 + $0x34] sm:$0xf]
        %v808 = vld [vmem:[%s1 + $0x38] sm:$0xf]
        %v809 = vld [vmem:[%s1 + $0x3c] sm:$0xf]
        %v810 = vld [vmem:[%s1 + $0x40] sm:$0xf]
        %v811 = vld [vmem:[%s1 + $0x44] sm:$0xf]
        %v812 = vld [vmem:[%s2] sm:$0x1]
        %v814 = vlaneseq
        %v815 = vshrl.u32 %v814, 7
        %v816 = vsub.s32 0, %v815
        %v817 = vrot.slane %v812, %v816
        %v837 = vunpack.c.l.b16 %v794
        %v838 = vunpack.c.l.b16 %v795
        %v839 = vunpack.c.l.b16 %v796
        %v840 = vunpack.c.l.b16 %v797
        %v841 = vunpack.c.l.b16 %v798
        %v842 = vunpack.c.l.b16 %v799
        %v843 = vunpack.c.l.b16 %v800
        %v844 = vunpack.c.l.b16 %v801
        %v845 = vunpack.c.l.b16 %v802
        %v846 = vunpack.c.l.b16 %v803
        %v847 = vunpack.c.l.b16 %v804
        %v848 = vunpack.c.l.b16 %v805
        %v849 = vunpack.c.l.b16 %v806
        %v850 = vunpack.c.l.b16 %v807
        %v851 = vunpack.c.l.b16 %v808
        %v852 = vunpack.c.l.b16 %v809
        %v853 = vunpack.c.l.b16 %v810
        %v854 = vunpack.c.l.b16 %v811
        %v855 = vpack.c.b16 %v838, %v837
        %v856 = vpack.c.b16 %v840, %v839
        %v857 = vpack.c.b16 %v842, %v841
        %v858 = vpack.c.b16 %v844, %v843
        %v859 = vpack.c.b16 %v846, %v845
        %v860 = vpack.c.b16 %v848, %v847
        %v861 = vpack.c.b16 %v850, %v849
        %v862 = vpack.c.b16 %v852, %v851
        %v863 = vpack.c.b16 %v854, %v853
        %v874 = vsel %vm723, %v651, 0
        %v877 = vsel %vm723, %v652, 0
        %v880 = vsel %vm723, %v653, 0
        %v883 = vsel %vm723, %v722, 0
        %885 = vmatprep.subr.bf16.mxu0 0
        %886 = vmatpush1.bf16.msra.mxu0 %v862
        %887 = vmatprep.subr.bf16.mxu0 0
        %888 = vmatpush1.bf16.msra.mxu0 %v861
        %889 = vmatprep.subr.bf16.mxu0 0
        %890 = vmatpush1.bf16.msra.mxu0 %v860
        %891 = vmatprep.subr.bf16.mxu0 0
        %892 = vmatpush1.bf16.msra.mxu0 %v859
        %893 = vmatprep.subr.bf16.mxu0 0
        %894 = vmatpush1.bf16.msra.mxu0 %v858
        %895 = vmatprep.subr.bf16.mxu0 0
        %896 = vmatpush1.bf16.msra.mxu0 %v857
        %897 = vmatprep.subr.bf16.mxu0 0
        %898 = vmatpush1.bf16.msra.mxu0 %v856
        %899 = vmatprep.subr.bf16.mxu0 0
        %900 = vmatpush1.bf16.msra.mxu0 %v855
        %901 = vmatprep.subr.bf16.mxu0 0
        %902 = vmatpush2.bf16.msra.mxu0 0
        %903 = vmatprep.subr.bf16.mxu0 0
        %904 = vmatpush2.bf16.msra.mxu0 0
        %905 = vmatprep.subr.bf16.mxu0 0
        %906 = vmatpush2.bf16.msra.mxu0 0
        %907 = vmatprep.subr.bf16.mxu0 0
        %908 = vmatpush2.bf16.msra.mxu0 0
        %909 = vmatprep.subr.bf16.mxu0 0
        %910 = vmatpush2.bf16.msra.mxu0 0
        %911 = vmatprep.subr.bf16.mxu0 0
        %912 = vmatpush2.bf16.msra.mxu0 0
        %913 = vmatprep.subr.bf16.mxu0 0
        %914 = vmatpush2.bf16.msra.mxu0 0
        %915 = vmatprep.subr.bf16.mxu0 0
        %916 = vmatpush2.bf16.msra.mxu0 %v863
        %917 = vmatprep.mubr.bf16.mxu0 %v874
        %918 = vmatmul.mubr.bf16.gmra.mxu0 %v783
        %v919 = vpop.f32.mrf.mxu0
        %v920 = vadd.f32 %v817, %v919
        %v921 = vpop.f32.mrf.mxu0
        %v922 = vpop.f32.mrf.mxu0
        %v923 = vadd.f32 %v817, %v922
        %v924 = vpop.f32.mrf.mxu0
        %925 = vmatprep.mubr.bf16.mxu0 %v877
        %926 = vmatmul.mubr.bf16.gmra.mxu0 %v786
        %v927 = vpop.f32.mrf.mxu0
        %v928 = vadd.f32 %v817, %v927
        %v929 = vpop.f32.mrf.mxu0
        %v930 = vpop.f32.mrf.mxu0
        %v931 = vadd.f32 %v817, %v930
        %v932 = vpop.f32.mrf.mxu0
        %933 = vmatprep.mubr.bf16.mxu0 %v880
        %934 = vmatmul.mubr.bf16.gmra.mxu0 %v789
        %v935 = vpop.f32.mrf.mxu0
        %v936 = vadd.f32 %v817, %v935
        %v937 = vpop.f32.mrf.mxu0
        %v938 = vpop.f32.mrf.mxu0
        %v939 = vadd.f32 %v817, %v938
        %v940 = vpop.f32.mrf.mxu0
        %941 = vmatprep.mubr.bf16.mxu0 %v883
        %942 = vmatmul.mubr.bf16.gmra.mxu0 %v792
        %v943 = vpop.f32.mrf.mxu0
        %v944 = vadd.f32 %v817, %v943
        %v945 = vpop.f32.mrf.mxu0
        %v946 = vpop.f32.mrf.mxu0
        %v947 = vadd.f32 %v817, %v946
        %v948 = vpop.f32.mrf.mxu0
        %949 = vdwg.mxu0
        %s950 = scalar_lea.vmem [#allocation2], 16
        %951 = vst [vmem:[%s950 + $0x1] sm:$0xff] %v920
        %952 = vst [vmem:[%s950 + $0x11] sm:$0xff] %v923
        %953 = vst [vmem:[%s950 + $0x21] sm:$0xff] %v928
        %954 = vst [vmem:[%s950 + $0x31] sm:$0xff] %v931
        %955 = vst [vmem:[%s950 + $0x41] sm:$0xff] %v936
        %956 = vst [vmem:[%s950 + $0x51] sm:$0xff] %v939
        %957 = vst [vmem:[%s950 + $0x61] sm:$0xff] %v944
        %958 = vst [vmem:[%s950 + $0x71] sm:$0xff] %v947
      $region52: #{decoder_forward_pallas.3} parent=47 // pred_fallthru
        _
      %v959 = vld [vmem:[#allocation2] sm:$0xff]
      %v960 = vld [vmem:[#allocation2 + $0x8] sm:$0xff]
      %v961 = vld [vmem:[#allocation2 + $0x10] sm:$0xff]
      %v962 = vld [vmem:[#allocation2 + $0x18] sm:$0xff]
      %v963 = vld [vmem:[#allocation2 + $0x20] sm:$0xff]
      %v964 = vld [vmem:[#allocation2 + $0x28] sm:$0xff]
      %v965 = vld [vmem:[#allocation2 + $0x30] sm:$0xff]
      %v966 = vld [vmem:[#allocation2 + $0x38] sm:$0xff]
      %v967 = vld [vmem:[#allocation2 + $0x40] sm:$0xff]
      %v968 = vld [vmem:[#allocation2 + $0x48] sm:$0xff]
      %v969 = vld [vmem:[#allocation2 + $0x50] sm:$0xff]
      %v970 = vld [vmem:[#allocation2 + $0x58] sm:$0xff]
      %v971 = vld [vmem:[#allocation2 + $0x60] sm:$0xff]
      %v972 = vld [vmem:[#allocation2 + $0x68] sm:$0xff]
      %v973 = vld [vmem:[#allocation2 + $0x70] sm:$0xff]
      %v974 = vld [vmem:[#allocation2 + $0x78] sm:$0xff]
      %v975 = vld [vmem:[#allocation2 + $0x80] sm:$0xff]
      %v976 = vld [vmem:[#allocation2 + $0x88] sm:$0xff]
      %v977 = vld [vmem:[#allocation2 + $0x90] sm:$0xff]
      %v978 = vld [vmem:[#allocation2 + $0x98] sm:$0xff]
      %v979 = vmax.f32 %v959, 0.0
      %v980 = vmax.f32 %v960, 0.0
      %v981 = vmax.f32 %v961, 0.0
      %v982 = vmax.f32 %v962, 0.0
      %v983 = vmax.f32 %v963, 0.0
      %v984 = vmax.f32 %v964, 0.0
      %v985 = vmax.f32 %v965, 0.0
      %v986 = vmax.f32 %v966, 0.0
      %v987 = vmax.f32 %v967, 0.0
      %v988 = vmax.f32 %v968, 0.0
      %v989 = vmax.f32 %v969, 0.0
      %v990 = vmax.f32 %v970, 0.0
      %v991 = vmax.f32 %v971, 0.0
      %v992 = vmax.f32 %v972, 0.0
      %v993 = vmax.f32 %v973, 0.0
      %v994 = vmax.f32 %v974, 0.0
      %v995 = vmax.f32 %v975, 0.0
      %v996 = vmax.f32 %v976, 0.0
      %v997 = vmax.f32 %v977, 0.0
      %v998 = vmax.f32 %v978, 0.0
      %v999 = vpack.c.bf16 %v980, %v979
      %v1000 = vpack.c.bf16 %v982, %v981
      %v1001 = vpack.c.bf16 %v984, %v983
      %v1002 = vpack.c.bf16 %v986, %v985
      %v1003 = vpack.c.bf16 %v988, %v987
      %v1004 = vpack.c.bf16 %v990, %v989
      %v1005 = vpack.c.bf16 %v992, %v991
      %v1006 = vpack.c.bf16 %v994, %v993
      %v1007 = vpack.c.bf16 %v996, %v995
      %v1008 = vpack.c.bf16 %v998, %v997
      %v1017 = vunpack.c.l.b16 %v999
      %v1018 = vunpack.c.h.b16 %v999
      %v1019 = vunpack.c.l.b16 %v1000
      %v1020 = vunpack.c.h.b16 %v1000
      %v1021 = vunpack.c.l.b16 %v1001
      %v1022 = vunpack.c.h.b16 %v1001
      %v1023 = vunpack.c.l.b16 %v1002
      %v1024 = vunpack.c.h.b16 %v1002
      %v1025 = vunpack.c.l.b16 %v1003
      %v1026 = vunpack.c.h.b16 %v1003
      %v1027 = vunpack.c.l.b16 %v1004
      %v1028 = vunpack.c.h.b16 %v1004
      %v1029 = vunpack.c.l.b16 %v1005
      %v1030 = vunpack.c.h.b16 %v1005
      %v1031 = vunpack.c.l.b16 %v1006
      %v1032 = vunpack.c.h.b16 %v1006
      %v1033 = vpack.c.b16 %v1017, %v1017
      %v1034 = vpack.c.b16 %v1018, %v1018
      %v1035 = vpack.c.b16 %v1019, %v1019
      %v1036 = vpack.c.b16 %v1020, %v1020
      %v1037 = vpack.c.b16 %v1021, %v1021
      %v1038 = vpack.c.b16 %v1022, %v1022
      %v1039 = vpack.c.b16 %v1023, %v1023
      %v1040 = vpack.c.b16 %v1024, %v1024
      %v1041 = vpack.c.b16 %v1025, %v1025
      %v1042 = vpack.c.b16 %v1026, %v1026
      %v1043 = vpack.c.b16 %v1027, %v1027
      %v1044 = vpack.c.b16 %v1028, %v1028
      %v1045 = vpack.c.b16 %v1029, %v1029
      %v1046 = vpack.c.b16 %v1030, %v1030
      %v1047 = vpack.c.b16 %v1031, %v1031
      %v1048 = vpack.c.b16 %v1032, %v1032
      %vm1049 = vsmask.f32 3328
      %vm1050 = vsmask.f32 7440
      %vm1051 = vmor %vm1049, %vm1050
      %v1053 = vshrl.u32 %v1033, 16
      %v1055 = vrot.slane %v1053, 4
      %v1056 = vshll.u32 %v1033, 16
      %v1058 = vrot.slane %v1056, 5
      %v1059 = vor.u32 %v1055, %v1058
      %v1060 = vrot.slane %v1059, 4
      %v1062 = vshll.u32 %v1034, 16
      %v1064 = vrot.slane %v1062, 5
      %v1065 = vsel %vm1051, %v1060, %v1064
      %v1067 = vshrl.u32 %v1035, 16
      %v1069 = vrot.slane %v1067, 4
      %v1070 = vshll.u32 %v1035, 16
      %v1072 = vrot.slane %v1070, 5
      %v1073 = vor.u32 %v1069, %v1072
      %v1074 = vrot.slane %v1073, 4
      %v1076 = vshll.u32 %v1036, 16
      %v1078 = vrot.slane %v1076, 5
      %v1079 = vsel %vm1051, %v1074, %v1078
      %v1081 = vshrl.u32 %v1037, 16
      %v1083 = vrot.slane %v1081, 4
      %v1084 = vshll.u32 %v1037, 16
      %v1086 = vrot.slane %v1084, 5
      %v1087 = vor.u32 %v1083, %v1086
      %v1088 = vrot.slane %v1087, 4
      %v1090 = vshll.u32 %v1038, 16
      %v1092 = vrot.slane %v1090, 5
      %v1093 = vsel %vm1051, %v1088, %v1092
      %v1095 = vshrl.u32 %v1039, 16
      %v1097 = vrot.slane %v1095, 4
      %v1098 = vshll.u32 %v1039, 16
      %v1100 = vrot.slane %v1098, 5
      %v1101 = vor.u32 %v1097, %v1100
      %v1102 = vrot.slane %v1101, 4
      %v1104 = vshll.u32 %v1040, 16
      %v1106 = vrot.slane %v1104, 5
      %v1107 = vsel %vm1051, %v1102, %v1106
      %v1109 = vshrl.u32 %v1041, 16
      %v1111 = vrot.slane %v1109, 4
      %v1112 = vshll.u32 %v1041, 16
      %v1114 = vrot.slane %v1112, 5
      %v1115 = vor.u32 %v1111, %v1114
      %v1116 = vrot.slane %v1115, 4
      %v1118 = vshll.u32 %v1042, 16
      %v1120 = vrot.slane %v1118, 5
      %v1121 = vsel %vm1051, %v1116, %v1120
      %v1123 = vshrl.u32 %v1043, 16
      %v1125 = vrot.slane %v1123, 4
      %v1126 = vshll.u32 %v1043, 16
      %v1128 = vrot.slane %v1126, 5
      %v1129 = vor.u32 %v1125, %v1128
      %v1130 = vrot.slane %v1129, 4
      %v1132 = vshll.u32 %v1044, 16
      %v1134 = vrot.slane %v1132, 5
      %v1135 = vsel %vm1051, %v1130, %v1134
      %v1137 = vshrl.u32 %v1045, 16
      %v1139 = vrot.slane %v1137, 4
      %v1140 = vshll.u32 %v1045, 16
      %v1142 = vrot.slane %v1140, 5
      %v1143 = vor.u32 %v1139, %v1142
      %v1144 = vrot.slane %v1143, 4
      %v1146 = vshll.u32 %v1046, 16
      %v1148 = vrot.slane %v1146, 5
      %v1149 = vsel %vm1051, %v1144, %v1148
      %v1151 = vshrl.u32 %v1047, 16
      %v1153 = vrot.slane %v1151, 4
      %v1154 = vshll.u32 %v1047, 16
      %v1156 = vrot.slane %v1154, 5
      %v1157 = vor.u32 %v1153, %v1156
      %v1158 = vrot.slane %v1157, 4
      %v1160 = vshll.u32 %v1048, 16
      %v1162 = vrot.slane %v1160, 5
      %v1163 = vsel %vm1051, %v1158, %v1162
      %vm1164 = vcmask 1042432
      %vm1165 = vcmask 1046532
      %vm1166 = vmor %vm1164, %vm1165
      %v1167 = vrot.slane %v1033, 5
      %v1168 = vrot.slane %v1167, 4
      %v1169 = vrot.slane %v1034, 5
      %v1170 = vsel %vm1166, %v1168, %v1169
      %v1171 = vrot.slane %v1035, 5
      %v1172 = vrot.slane %v1171, 4
      %v1173 = vrot.slane %v1036, 5
      %v1174 = vsel %vm1166, %v1172, %v1173
      %v1175 = vrot.slane %v1037, 5
      %v1176 = vrot.slane %v1175, 4
      %v1177 = vrot.slane %v1038, 5
      %v1178 = vsel %vm1166, %v1176, %v1177
      %v1179 = vrot.slane %v1039, 5
      %v1180 = vrot.slane %v1179, 4
      %v1181 = vrot.slane %v1040, 5
      %v1182 = vsel %vm1166, %v1180, %v1181
      %v1183 = vrot.slane %v1041, 5
      %v1184 = vrot.slane %v1183, 4
      %v1185 = vrot.slane %v1042, 5
      %v1186 = vsel %vm1166, %v1184, %v1185
      %v1187 = vrot.slane %v1043, 5
      %v1188 = vrot.slane %v1187, 4
      %v1189 = vrot.slane %v1044, 5
      %v1190 = vsel %vm1166, %v1188, %v1189
      %v1191 = vrot.slane %v1045, 5
      %v1192 = vrot.slane %v1191, 4
      %v1193 = vrot.slane %v1046, 5
      %v1194 = vsel %vm1166, %v1192, %v1193
      %v1195 = vrot.slane %v1047, 5
      %v1196 = vrot.slane %v1195, 4
      %v1197 = vrot.slane %v1048, 5
      %v1198 = vsel %vm1166, %v1196, %v1197
      %v1200 = vunpack.c.l.b16 %v1007
      %v1201 = vunpack.c.h.b16 %v1007
      %v1202 = vpack.c.b16 %v1200, %v1200
      %v1203 = vpack.c.b16 %v1201, %v1201
      %v1205 = vshrl.u32 %v1202, 16
      %v1207 = vrot.slane %v1205, 4
      %v1208 = vshll.u32 %v1202, 16
      %v1210 = vrot.slane %v1208, 5
      %v1211 = vor.u32 %v1207, %v1210
      %v1212 = vrot.slane %v1211, 4
      %v1214 = vshll.u32 %v1203, 16
      %v1216 = vrot.slane %v1214, 5
      %v1217 = vsel %vm1051, %v1212, %v1216
      %v1218 = vrot.slane %v1202, 5
      %v1219 = vrot.slane %v1218, 4
      %v1220 = vrot.slane %v1203, 5
      %v1221 = vsel %vm1166, %v1219, %v1220
      %v1223 = vunpack.c.l.b16 %v1008
      %v1224 = vunpack.c.h.b16 %v1008
      %v1225 = vpack.c.b16 %v1223, %v1223
      %v1226 = vpack.c.b16 %v1224, %v1224
      %v1228 = vshrl.u32 %v1225, 16
      %v1230 = vrot.slane %v1228, 4
      %v1231 = vshll.u32 %v1225, 16
      %v1233 = vrot.slane %v1231, 5
      %v1234 = vor.u32 %v1230, %v1233
      %v1235 = vrot.slane %v1234, 4
      %v1237 = vshll.u32 %v1226, 16
      %v1239 = vrot.slane %v1237, 5
      %v1240 = vsel %vm1051, %v1235, %v1239
      %v1241 = vrot.slane %v1225, 5
      %v1242 = vrot.slane %v1241, 4
      %v1243 = vrot.slane %v1226, 5
      %v1244 = vsel %vm1166, %v1242, %v1243
      %v1245 = vpack.c.b16 %v1019, %v1017
      %v1246 = vpack.c.b16 %v1023, %v1021
      %v1247 = vpack.c.b16 %v1027, %v1025
      %v1248 = vpack.c.b16 %v1031, %v1029
      %v1253 = vunpack.c.l.b16 %v1065
      %v1254 = vunpack.c.l.b16 %v1079
      %v1255 = vunpack.c.l.b16 %v1093
      %v1256 = vunpack.c.l.b16 %v1107
      %v1257 = vunpack.c.l.b16 %v1121
      %v1258 = vunpack.c.l.b16 %v1135
      %v1259 = vunpack.c.l.b16 %v1149
      %v1260 = vunpack.c.l.b16 %v1163
      %v1261 = vpack.c.b16 %v1254, %v1253
      %v1262 = vpack.c.b16 %v1256, %v1255
      %v1263 = vpack.c.b16 %v1258, %v1257
      %v1264 = vpack.c.b16 %v1260, %v1259
      %v1269 = vunpack.c.l.b16 %v1170
      %v1270 = vunpack.c.l.b16 %v1174
      %v1271 = vunpack.c.l.b16 %v1178
      %v1272 = vunpack.c.l.b16 %v1182
      %v1273 = vunpack.c.l.b16 %v1186
      %v1274 = vunpack.c.l.b16 %v1190
      %v1275 = vunpack.c.l.b16 %v1194
      %v1276 = vunpack.c.l.b16 %v1198
      %v1277 = vpack.c.b16 %v1270, %v1269
      %v1278 = vpack.c.b16 %v1272, %v1271
      %v1279 = vpack.c.b16 %v1274, %v1273
      %v1280 = vpack.c.b16 %v1276, %v1275
      %v1285 = vpack.c.b16 %v1021, %v1019
      %v1286 = vpack.c.b16 %v1025, %v1023
      %v1287 = vpack.c.b16 %v1029, %v1027
      %v1288 = vpack.c.b16 %v1200, %v1031
      %v1293 = vunpack.c.l.b16 %v1217
      %v1294 = vpack.c.b16 %v1255, %v1254
      %v1295 = vpack.c.b16 %v1257, %v1256
      %v1296 = vpack.c.b16 %v1259, %v1258
      %v1297 = vpack.c.b16 %v1293, %v1260
      %v1302 = vunpack.c.l.b16 %v1221
      %v1303 = vpack.c.b16 %v1271, %v1270
      %v1304 = vpack.c.b16 %v1273, %v1272
      %v1305 = vpack.c.b16 %v1275, %v1274
      %v1306 = vpack.c.b16 %v1302, %v1276
      %v1311 = vpack.c.b16 %v1223, %v1200
      %v1313 = vunpack.c.l.b16 %v1240
      %v1314 = vpack.c.b16 %v1313, %v1293
      %v1316 = vunpack.c.l.b16 %v1244
      %v1317 = vpack.c.b16 %v1316, %v1302
      %v1319 = vld [vmem:[%s342] sm:$0xf]
      %v1320 = vld [vmem:[%s342 + $0x4] sm:$0xf]
      %v1321 = vld [vmem:[%s342 + $0x8] sm:$0xf]
      %v1322 = vld [vmem:[%s342 + $0xc] sm:$0xf]
      %v1323 = vld [vmem:[%s342 + $0x10] sm:$0xf]
      %v1324 = vld [vmem:[%s342 + $0x14] sm:$0xf]
      %v1325 = vld [vmem:[%s342 + $0x18] sm:$0xf]
      %v1326 = vld [vmem:[%s342 + $0x1c] sm:$0xf]
      %v1327 = vld [vmem:[%s342 + $0x20] sm:$0xf]
      %v1328 = vld [vmem:[%s342 + $0x24] sm:$0xf]
      %v1329 = vld [vmem:[%s342 + $0x28] sm:$0xf]
      %v1330 = vld [vmem:[%s342 + $0x2c] sm:$0xf]
      %v1331 = vld [vmem:[%s342 + $0x30] sm:$0xf]
      %v1332 = vld [vmem:[%s342 + $0x34] sm:$0xf]
      %v1333 = vld [vmem:[%s342 + $0x38] sm:$0xf]
      %v1334 = vld [vmem:[%s342 + $0x3c] sm:$0xf]
      %v1335 = vld [vmem:[%s342 + $0x40] sm:$0xf]
      %v1336 = vld [vmem:[%s342 + $0x44] sm:$0xf]
      %v1337 = vld [vmem:[%s342 + $0x48] sm:$0xf]
      %v1338 = vld [vmem:[%s342 + $0x4c] sm:$0xf]
      %v1339 = vld [vmem:[%s342 + $0x50] sm:$0xf]
      %v1340 = vld [vmem:[%s342 + $0x54] sm:$0xf]
      %v1341 = vld [vmem:[%s342 + $0x58] sm:$0xf]
      %v1342 = vld [vmem:[%s342 + $0x5c] sm:$0xf]
      %v1343 = vld [vmem:[%s342 + $0x60] sm:$0xf]
      %v1344 = vld [vmem:[%s342 + $0x64] sm:$0xf]
      %v1345 = vld [vmem:[%s342 + $0x68] sm:$0xf]
      %v1346 = vld [vmem:[%s342 + $0x6c] sm:$0xf]
      %v1347 = vld [vmem:[%s342 + $0x70] sm:$0xf]
      %v1348 = vld [vmem:[%s342 + $0x74] sm:$0xf]
      %v1349 = vld [vmem:[%s342 + $0x78] sm:$0xf]
      %v1350 = vld [vmem:[%s342 + $0x7c] sm:$0xf]
      %v1351 = vld [vmem:[%s342 + $0x80] sm:$0xf]
      %v1352 = vld [vmem:[%s342 + $0x84] sm:$0xf]
      %v1353 = vld [vmem:[%s342 + $0x88] sm:$0xf]
      %v1354 = vld [vmem:[%s342 + $0x8c] sm:$0xf]
      %v1355 = vld [vmem:[%s342 + $0x90] sm:$0xf]
      %v1356 = vld [vmem:[%s342 + $0x94] sm:$0xf]
      %v1357 = vld [vmem:[%s342 + $0x98] sm:$0xf]
      %v1358 = vld [vmem:[%s342 + $0x9c] sm:$0xf]
      %v1359 = vld [vmem:[%s342 + $0xa0] sm:$0xf]
      %v1360 = vld [vmem:[%s342 + $0xa4] sm:$0xf]
      %v1361 = vld [vmem:[%s342 + $0xa8] sm:$0xf]
      %v1362 = vld [vmem:[%s342 + $0xac] sm:$0xf]
      %v1363 = vld [vmem:[%s342 + $0xb0] sm:$0xf]
      %v1364 = vld [vmem:[%s342 + $0xb4] sm:$0xf]
      %v1365 = vld [vmem:[%s342 + $0xb8] sm:$0xf]
      %v1366 = vld [vmem:[%s342 + $0xbc] sm:$0xf]
      %v1367 = vld [vmem:[%s342 + $0xc0] sm:$0xf]
      %v1368 = vld [vmem:[%s342 + $0xc4] sm:$0xf]
      %v1369 = vld [vmem:[%s342 + $0xc8] sm:$0xf]
      %v1370 = vld [vmem:[%s342 + $0xcc] sm:$0xf]
      %v1371 = vld [vmem:[%s342 + $0xd0] sm:$0xf]
      %v1372 = vld [vmem:[%s342 + $0xd4] sm:$0xf]
      %v1373 = vld [vmem:[%s342 + $0xd8] sm:$0xf]
      %v1374 = vld [vmem:[%s342 + $0xdc] sm:$0xf]
      %v1375 = vld [vmem:[%s342 + $0xe0] sm:$0xf]
      %v1376 = vld [vmem:[%s342 + $0xe4] sm:$0xf]
      %v1377 = vld [vmem:[%s342 + $0xe8] sm:$0xf]
      %v1378 = vld [vmem:[%s342 + $0xec] sm:$0xf]
      %v1379 = vld [vmem:[%s342 + $0xf0] sm:$0xf]
      %v1380 = vld [vmem:[%s342 + $0xf4] sm:$0xf]
      %v1381 = vld [vmem:[%s342 + $0xf8] sm:$0xf]
      %v1382 = vld [vmem:[%s342 + $0xfc] sm:$0xf]
      %v1383 = vld [vmem:[%s342 + $0x100] sm:$0xf]
      %v1384 = vld [vmem:[%s342 + $0x104] sm:$0xf]
      %v1385 = vld [vmem:[%s342 + $0x108] sm:$0xf]
      %v1386 = vld [vmem:[%s342 + $0x10c] sm:$0xf]
      %v1387 = vld [vmem:[%s342 + $0x110] sm:$0xf]
      %v1388 = vld [vmem:[%s342 + $0x114] sm:$0xf]
      %v1389 = vld [vmem:[%s342 + $0x118] sm:$0xf]
      %v1390 = vld [vmem:[%s342 + $0x11c] sm:$0xf]
      %v1391 = vld [vmem:[%s342 + $0x120] sm:$0xf]
      %v1392 = vld [vmem:[%s342 + $0x124] sm:$0xf]
      %v1393 = vld [vmem:[%s342 + $0x128] sm:$0xf]
      %v1394 = vld [vmem:[%s342 + $0x12c] sm:$0xf]
      %v1395 = vld [vmem:[%s342 + $0x130] sm:$0xf]
      %v1396 = vld [vmem:[%s342 + $0x134] sm:$0xf]
      %v1397 = vld [vmem:[%s342 + $0x138] sm:$0xf]
      %v1398 = vld [vmem:[%s342 + $0x13c] sm:$0xf]
      %v1399 = vld [vmem:[%s342 + $0x140] sm:$0xf]
      %v1400 = vld [vmem:[%s342 + $0x144] sm:$0xf]
      %v1401 = vld [vmem:[%s342 + $0x148] sm:$0xf]
      %v1402 = vld [vmem:[%s342 + $0x14c] sm:$0xf]
      %v1403 = vld [vmem:[%s342 + $0x150] sm:$0xf]
      %v1404 = vld [vmem:[%s342 + $0x154] sm:$0xf]
      %v1405 = vld [vmem:[%s342 + $0x158] sm:$0xf]
      %v1406 = vld [vmem:[%s342 + $0x15c] sm:$0xf]
      %v1407 = vld [vmem:[%s342 + $0x160] sm:$0xf]
      %v1408 = vld [vmem:[%s342 + $0x164] sm:$0xf]
      %v1409 = vld [vmem:[%s342 + $0x168] sm:$0xf]
      %v1410 = vld [vmem:[%s342 + $0x16c] sm:$0xf]
      %v1411 = vld [vmem:[%s342 + $0x170] sm:$0xf]
      %v1412 = vld [vmem:[%s342 + $0x174] sm:$0xf]
      %v1413 = vld [vmem:[%s342 + $0x178] sm:$0xf]
      %v1414 = vld [vmem:[%s342 + $0x17c] sm:$0xf]
      %v1415 = vld [vmem:[%s342 + $0x180] sm:$0xf]
      %v1416 = vld [vmem:[%s342 + $0x184] sm:$0xf]
      %v1417 = vld [vmem:[%s342 + $0x188] sm:$0xf]
      %v1418 = vld [vmem:[%s342 + $0x18c] sm:$0xf]
      %v1419 = vld [vmem:[%s342 + $0x190] sm:$0xf]
      %v1420 = vld [vmem:[%s342 + $0x194] sm:$0xf]
      %v1421 = vld [vmem:[%s342 + $0x198] sm:$0xf]
      %v1422 = vld [vmem:[%s342 + $0x19c] sm:$0xf]
      %v1423 = vld [vmem:[%s342 + $0x1a0] sm:$0xf]
      %v1424 = vld [vmem:[%s342 + $0x1a4] sm:$0xf]
      %v1425 = vld [vmem:[%s342 + $0x1a8] sm:$0xf]
      %v1426 = vld [vmem:[%s342 + $0x1ac] sm:$0xf]
      %v1427 = vld [vmem:[%s342 + $0x1b0] sm:$0xf]
      %v1428 = vld [vmem:[%s342 + $0x1b4] sm:$0xf]
      %v1429 = vld [vmem:[%s342 + $0x1b8] sm:$0xf]
      %v1430 = vld [vmem:[%s342 + $0x1bc] sm:$0xf]
      %v1431 = vld [vmem:[%s342 + $0x1c0] sm:$0xf]
      %v1432 = vld [vmem:[%s342 + $0x1c4] sm:$0xf]
      %v1433 = vld [vmem:[%s342 + $0x1c8] sm:$0xf]
      %v1434 = vld [vmem:[%s342 + $0x1cc] sm:$0xf]
      %v1435 = vld [vmem:[%s342 + $0x1d0] sm:$0xf]
      %v1436 = vld [vmem:[%s342 + $0x1d4] sm:$0xf]
      %v1437 = vld [vmem:[%s342 + $0x1d8] sm:$0xf]
      %v1438 = vld [vmem:[%s342 + $0x1dc] sm:$0xf]
      %v1439 = vld [vmem:[%s342 + $0x1e0] sm:$0xf]
      %v1440 = vld [vmem:[%s342 + $0x1e4] sm:$0xf]
      %v1441 = vld [vmem:[%s342 + $0x1e8] sm:$0xf]
      %v1442 = vld [vmem:[%s342 + $0x1ec] sm:$0xf]
      %v1443 = vld [vmem:[%s342 + $0x1f0] sm:$0xf]
      %v1444 = vld [vmem:[%s342 + $0x1f4] sm:$0xf]
      %v1445 = vld [vmem:[%s342 + $0x1f8] sm:$0xf]
      %v1446 = vld [vmem:[%s342 + $0x1fc] sm:$0xf]
      %v1447 = vld [vmem:[%s342 + $0x200] sm:$0xf]
      %v1448 = vld [vmem:[%s342 + $0x204] sm:$0xf]
      %v1449 = vld [vmem:[%s342 + $0x208] sm:$0xf]
      %v1450 = vld [vmem:[%s342 + $0x20c] sm:$0xf]
      %v1451 = vld [vmem:[%s342 + $0x210] sm:$0xf]
      %v1452 = vld [vmem:[%s342 + $0x214] sm:$0xf]
      %v1453 = vld [vmem:[%s342 + $0x218] sm:$0xf]
      %v1454 = vld [vmem:[%s342 + $0x21c] sm:$0xf]
      %v1455 = vld [vmem:[%s342 + $0x220] sm:$0xf]
      %v1456 = vld [vmem:[%s342 + $0x224] sm:$0xf]
      %v1457 = vld [vmem:[%s342 + $0x228] sm:$0xf]
      %v1458 = vld [vmem:[%s342 + $0x22c] sm:$0xf]
      %v1459 = vld [vmem:[%s342 + $0x230] sm:$0xf]
      %v1460 = vld [vmem:[%s342 + $0x234] sm:$0xf]
      %v1461 = vld [vmem:[%s342 + $0x238] sm:$0xf]
      %v1462 = vld [vmem:[%s342 + $0x23c] sm:$0xf]
      %v1463 = vld [vmem:[%s345] sm:$0x1]
      %v1465 = vlaneseq
      %v1466 = vshrl.u32 %v1465, 7
      %v1467 = vsub.s32 0, %v1466
      %v1468 = vrot.slane %v1463, %v1467
      %v1614 = vunpack.c.l.b16 %v1319
      %v1615 = vunpack.c.l.b16 %v1320
      %v1616 = vunpack.c.l.b16 %v1321
      %v1617 = vunpack.c.l.b16 %v1322
      %v1618 = vunpack.c.l.b16 %v1323
      %v1619 = vunpack.c.l.b16 %v1324
      %v1620 = vunpack.c.l.b16 %v1325
      %v1621 = vunpack.c.l.b16 %v1326
      %v1622 = vunpack.c.l.b16 %v1327
      %v1623 = vunpack.c.l.b16 %v1328
      %v1624 = vunpack.c.l.b16 %v1329
      %v1625 = vunpack.c.l.b16 %v1330
      %v1626 = vunpack.c.l.b16 %v1331
      %v1627 = vunpack.c.l.b16 %v1332
      %v1628 = vunpack.c.l.b16 %v1333
      %v1629 = vunpack.c.l.b16 %v1334
      %v1630 = vunpack.c.l.b16 %v1335
      %v1631 = vunpack.c.l.b16 %v1336
      %v1632 = vunpack.c.l.b16 %v1337
      %v1633 = vunpack.c.l.b16 %v1338
      %v1634 = vunpack.c.l.b16 %v1339
      %v1635 = vunpack.c.l.b16 %v1340
      %v1636 = vunpack.c.l.b16 %v1341
      %v1637 = vunpack.c.l.b16 %v1342
      %v1638 = vunpack.c.l.b16 %v1343
      %v1639 = vunpack.c.l.b16 %v1344
      %v1640 = vunpack.c.l.b16 %v1345
      %v1641 = vunpack.c.l.b16 %v1346
      %v1642 = vunpack.c.l.b16 %v1347
      %v1643 = vunpack.c.l.b16 %v1348
      %v1644 = vunpack.c.l.b16 %v1349
      %v1645 = vunpack.c.l.b16 %v1350
      %v1646 = vunpack.c.l.b16 %v1351
      %v1647 = vunpack.c.l.b16 %v1352
      %v1648 = vunpack.c.l.b16 %v1353
      %v1649 = vunpack.c.l.b16 %v1354
      %v1650 = vunpack.c.l.b16 %v1355
      %v1651 = vunpack.c.l.b16 %v1356
      %v1652 = vunpack.c.l.b16 %v1357
      %v1653 = vunpack.c.l.b16 %v1358
      %v1654 = vunpack.c.l.b16 %v1359
      %v1655 = vunpack.c.l.b16 %v1360
      %v1656 = vunpack.c.l.b16 %v1361
      %v1657 = vunpack.c.l.b16 %v1362
      %v1658 = vunpack.c.l.b16 %v1363
      %v1659 = vunpack.c.l.b16 %v1364
      %v1660 = vunpack.c.l.b16 %v1365
      %v1661 = vunpack.c.l.b16 %v1366
      %v1662 = vunpack.c.l.b16 %v1367
      %v1663 = vunpack.c.l.b16 %v1368
      %v1664 = vunpack.c.l.b16 %v1369
      %v1665 = vunpack.c.l.b16 %v1370
      %v1666 = vunpack.c.l.b16 %v1371
      %v1667 = vunpack.c.l.b16 %v1372
      %v1668 = vunpack.c.l.b16 %v1373
      %v1669 = vunpack.c.l.b16 %v1374
      %v1670 = vunpack.c.l.b16 %v1375
      %v1671 = vunpack.c.l.b16 %v1376
      %v1672 = vunpack.c.l.b16 %v1377
      %v1673 = vunpack.c.l.b16 %v1378
      %v1674 = vunpack.c.l.b16 %v1379
      %v1675 = vunpack.c.l.b16 %v1380
      %v1676 = vunpack.c.l.b16 %v1381
      %v1677 = vunpack.c.l.b16 %v1382
      %v1678 = vunpack.c.l.b16 %v1383
      %v1679 = vunpack.c.l.b16 %v1384
      %v1680 = vunpack.c.l.b16 %v1385
      %v1681 = vunpack.c.l.b16 %v1386
      %v1682 = vunpack.c.l.b16 %v1387
      %v1683 = vunpack.c.l.b16 %v1388
      %v1684 = vunpack.c.l.b16 %v1389
      %v1685 = vunpack.c.l.b16 %v1390
      %v1686 = vunpack.c.l.b16 %v1391
      %v1687 = vunpack.c.l.b16 %v1392
      %v1688 = vunpack.c.l.b16 %v1393
      %v1689 = vunpack.c.l.b16 %v1394
      %v1690 = vunpack.c.l.b16 %v1395
      %v1691 = vunpack.c.l.b16 %v1396
      %v1692 = vunpack.c.l.b16 %v1397
      %v1693 = vunpack.c.l.b16 %v1398
      %v1694 = vunpack.c.l.b16 %v1399
      %v1695 = vunpack.c.l.b16 %v1400
      %v1696 = vunpack.c.l.b16 %v1401
      %v1697 = vunpack.c.l.b16 %v1402
      %v1698 = vunpack.c.l.b16 %v1403
      %v1699 = vunpack.c.l.b16 %v1404
      %v1700 = vunpack.c.l.b16 %v1405
      %v1701 = vunpack.c.l.b16 %v1406
      %v1702 = vunpack.c.l.b16 %v1407
      %v1703 = vunpack.c.l.b16 %v1408
      %v1704 = vunpack.c.l.b16 %v1409
      %v1705 = vunpack.c.l.b16 %v1410
      %v1706 = vunpack.c.l.b16 %v1411
      %v1707 = vunpack.c.l.b16 %v1412
      %v1708 = vunpack.c.l.b16 %v1413
      %v1709 = vunpack.c.l.b16 %v1414
      %v1710 = vunpack.c.l.b16 %v1415
      %v1711 = vunpack.c.l.b16 %v1416
      %v1712 = vunpack.c.l.b16 %v1417
      %v1713 = vunpack.c.l.b16 %v1418
      %v1714 = vunpack.c.l.b16 %v1419
      %v1715 = vunpack.c.l.b16 %v1420
      %v1716 = vunpack.c.l.b16 %v1421
      %v1717 = vunpack.c.l.b16 %v1422
      %v1718 = vunpack.c.l.b16 %v1423
      %v1719 = vunpack.c.l.b16 %v1424
      %v1720 = vunpack.c.l.b16 %v1425
      %v1721 = vunpack.c.l.b16 %v1426
      %v1722 = vunpack.c.l.b16 %v1427
      %v1723 = vunpack.c.l.b16 %v1428
      %v1724 = vunpack.c.l.b16 %v1429
      %v1725 = vunpack.c.l.b16 %v1430
      %v1726 = vunpack.c.l.b16 %v1431
      %v1727 = vunpack.c.l.b16 %v1432
      %v1728 = vunpack.c.l.b16 %v1433
      %v1729 = vunpack.c.l.b16 %v1434
      %v1730 = vunpack.c.l.b16 %v1435
      %v1731 = vunpack.c.l.b16 %v1436
      %v1732 = vunpack.c.l.b16 %v1437
      %v1733 = vunpack.c.l.b16 %v1438
      %v1734 = vunpack.c.l.b16 %v1439
      %v1735 = vunpack.c.l.b16 %v1440
      %v1736 = vunpack.c.l.b16 %v1441
      %v1737 = vunpack.c.l.b16 %v1442
      %v1738 = vunpack.c.l.b16 %v1443
      %v1739 = vunpack.c.l.b16 %v1444
      %v1740 = vunpack.c.l.b16 %v1445
      %v1741 = vunpack.c.l.b16 %v1446
      %v1742 = vunpack.c.l.b16 %v1447
      %v1743 = vunpack.c.l.b16 %v1448
      %v1744 = vunpack.c.l.b16 %v1449
      %v1745 = vunpack.c.l.b16 %v1450
      %v1746 = vunpack.c.l.b16 %v1451
      %v1747 = vunpack.c.l.b16 %v1452
      %v1748 = vunpack.c.l.b16 %v1453
      %v1749 = vunpack.c.l.b16 %v1454
      %v1750 = vunpack.c.l.b16 %v1455
      %v1751 = vunpack.c.l.b16 %v1456
      %v1752 = vunpack.c.l.b16 %v1457
      %v1753 = vunpack.c.l.b16 %v1458
      %v1754 = vunpack.c.l.b16 %v1459
      %v1755 = vunpack.c.l.b16 %v1460
      %v1756 = vunpack.c.l.b16 %v1461
      %v1757 = vunpack.c.l.b16 %v1462
      %v1758 = vpack.c.b16 %v1615, %v1614
      %v1759 = vpack.c.b16 %v1617, %v1616
      %v1760 = vpack.c.b16 %v1619, %v1618
      %v1761 = vpack.c.b16 %v1621, %v1620
      %v1762 = vpack.c.b16 %v1623, %v1622
      %v1763 = vpack.c.b16 %v1625, %v1624
      %v1764 = vpack.c.b16 %v1627, %v1626
      %v1765 = vpack.c.b16 %v1629, %v1628
      %v1766 = vpack.c.b16 %v1631, %v1630
      %v1767 = vpack.c.b16 %v1633, %v1632
      %v1768 = vpack.c.b16 %v1635, %v1634
      %v1769 = vpack.c.b16 %v1637, %v1636
      %v1770 = vpack.c.b16 %v1639, %v1638
      %v1771 = vpack.c.b16 %v1641, %v1640
      %v1772 = vpack.c.b16 %v1643, %v1642
      %v1773 = vpack.c.b16 %v1645, %v1644
      %v1774 = vpack.c.b16 %v1647, %v1646
      %v1775 = vpack.c.b16 %v1649, %v1648
      %v1776 = vpack.c.b16 %v1651, %v1650
      %v1777 = vpack.c.b16 %v1653, %v1652
      %v1778 = vpack.c.b16 %v1655, %v1654
      %v1779 = vpack.c.b16 %v1657, %v1656
      %v1780 = vpack.c.b16 %v1659, %v1658
      %v1781 = vpack.c.b16 %v1661, %v1660
      %v1782 = vpack.c.b16 %v1663, %v1662
      %v1783 = vpack.c.b16 %v1665, %v1664
      %v1784 = vpack.c.b16 %v1667, %v1666
      %v1785 = vpack.c.b16 %v1669, %v1668
      %v1786 = vpack.c.b16 %v1671, %v1670
      %v1787 = vpack.c.b16 %v1673, %v1672
      %v1788 = vpack.c.b16 %v1675, %v1674
      %v1789 = vpack.c.b16 %v1677, %v1676
      %v1790 = vpack.c.b16 %v1679, %v1678
      %v1791 = vpack.c.b16 %v1681, %v1680
      %v1792 = vpack.c.b16 %v1683, %v1682
      %v1793 = vpack.c.b16 %v1685, %v1684
      %v1794 = vpack.c.b16 %v1687, %v1686
      %v1795 = vpack.c.b16 %v1689, %v1688
      %v1796 = vpack.c.b16 %v1691, %v1690
      %v1797 = vpack.c.b16 %v1693, %v1692
      %v1798 = vpack.c.b16 %v1695, %v1694
      %v1799 = vpack.c.b16 %v1697, %v1696
      %v1800 = vpack.c.b16 %v1699, %v1698
      %v1801 = vpack.c.b16 %v1701, %v1700
      %v1802 = vpack.c.b16 %v1703, %v1702
      %v1803 = vpack.c.b16 %v1705, %v1704
      %v1804 = vpack.c.b16 %v1707, %v1706
      %v1805 = vpack.c.b16 %v1709, %v1708
      %v1806 = vpack.c.b16 %v1711, %v1710
      %v1807 = vpack.c.b16 %v1713, %v1712
      %v1808 = vpack.c.b16 %v1715, %v1714
      %v1809 = vpack.c.b16 %v1717, %v1716
      %v1810 = vpack.c.b16 %v1719, %v1718
      %v1811 = vpack.c.b16 %v1721, %v1720
      %v1812 = vpack.c.b16 %v1723, %v1722
      %v1813 = vpack.c.b16 %v1725, %v1724
      %v1814 = vpack.c.b16 %v1727, %v1726
      %v1815 = vpack.c.b16 %v1729, %v1728
      %v1816 = vpack.c.b16 %v1731, %v1730
      %v1817 = vpack.c.b16 %v1733, %v1732
      %v1818 = vpack.c.b16 %v1735, %v1734
      %v1819 = vpack.c.b16 %v1737, %v1736
      %v1820 = vpack.c.b16 %v1739, %v1738
      %v1821 = vpack.c.b16 %v1741, %v1740
      %v1822 = vpack.c.b16 %v1743, %v1742
      %v1823 = vpack.c.b16 %v1745, %v1744
      %v1824 = vpack.c.b16 %v1747, %v1746
      %v1825 = vpack.c.b16 %v1749, %v1748
      %v1826 = vpack.c.b16 %v1751, %v1750
      %v1827 = vpack.c.b16 %v1753, %v1752
      %v1828 = vpack.c.b16 %v1755, %v1754
      %v1829 = vpack.c.b16 %v1757, %v1756
      %1902 = vmatprep.subr.bf16.mxu0 0
      %1903 = vmatpush1.bf16.msra.mxu0 %v1765
      %1904 = vmatprep.subr.bf16.mxu0 0
      %1905 = vmatpush1.bf16.msra.mxu0 %v1764
      %1906 = vmatprep.subr.bf16.mxu0 0
      %1907 = vmatpush1.bf16.msra.mxu0 %v1763
      %1908 = vmatprep.subr.bf16.mxu0 0
      %1909 = vmatpush1.bf16.msra.mxu0 %v1762
      %1910 = vmatprep.subr.bf16.mxu0 0
      %1911 = vmatpush1.bf16.msra.mxu0 %v1761
      %1912 = vmatprep.subr.bf16.mxu0 0
      %1913 = vmatpush1.bf16.msra.mxu0 %v1760
      %1914 = vmatprep.subr.bf16.mxu0 0
      %1915 = vmatpush1.bf16.msra.mxu0 %v1759
      %1916 = vmatprep.subr.bf16.mxu0 0
      %1917 = vmatpush1.bf16.msra.mxu0 %v1758
      %1918 = vmatprep.subr.bf16.mxu0 0
      %1919 = vmatpush2.bf16.msra.mxu0 %v1773
      %1920 = vmatprep.subr.bf16.mxu0 0
      %1921 = vmatpush2.bf16.msra.mxu0 %v1772
      %1922 = vmatprep.subr.bf16.mxu0 0
      %1923 = vmatpush2.bf16.msra.mxu0 %v1771
      %1924 = vmatprep.subr.bf16.mxu0 0
      %1925 = vmatpush2.bf16.msra.mxu0 %v1770
      %1926 = vmatprep.subr.bf16.mxu0 0
      %1927 = vmatpush2.bf16.msra.mxu0 %v1769
      %1928 = vmatprep.subr.bf16.mxu0 0
      %1929 = vmatpush2.bf16.msra.mxu0 %v1768
      %1930 = vmatprep.subr.bf16.mxu0 0
      %1931 = vmatpush2.bf16.msra.mxu0 %v1767
      %1932 = vmatprep.subr.bf16.mxu0 0
      %1933 = vmatpush2.bf16.msra.mxu0 %v1766
      %1934 = vmatprep.mubr.bf16.mxu0 %v1261
      %1935 = vmatmul.mubr.bf16.gmra.mxu0 %v1245
      %v1936 = vpop.f32.mrf.mxu0
      %v1937 = vadd.f32 %v1468, %v1936
      %v1938 = vpop.f32.mrf.mxu0
      %v1939 = vpop.f32.mrf.mxu0
      %v1940 = vadd.f32 %v1468, %v1939
      %v1941 = vpop.f32.mrf.mxu0
      %1942 = vmatprep.mubr.bf16.mxu0 %v1262
      %1943 = vmatmul.mubr.bf16.gmra.mxu0 %v1246
      %v1944 = vpop.f32.mrf.mxu0
      %v1945 = vadd.f32 %v1468, %v1944
      %v1946 = vpop.f32.mrf.mxu0
      %v1947 = vpop.f32.mrf.mxu0
      %v1948 = vadd.f32 %v1468, %v1947
      %v1949 = vpop.f32.mrf.mxu0
      %1950 = vmatprep.mubr.bf16.mxu0 %v1263
      %1951 = vmatmul.mubr.bf16.gmra.mxu0 %v1247
      %v1952 = vpop.f32.mrf.mxu0
      %v1953 = vadd.f32 %v1468, %v1952
      %v1954 = vpop.f32.mrf.mxu0
      %v1955 = vpop.f32.mrf.mxu0
      %v1956 = vadd.f32 %v1468, %v1955
      %v1957 = vpop.f32.mrf.mxu0
      %1958 = vmatprep.mubr.bf16.mxu0 %v1264
      %1959 = vmatmul.mubr.bf16.gmra.mxu0 %v1248
      %v1960 = vpop.f32.mrf.mxu0
      %v1961 = vadd.f32 %v1468, %v1960
      %v1962 = vpop.f32.mrf.mxu0
      %v1963 = vpop.f32.mrf.mxu0
      %v1964 = vadd.f32 %v1468, %v1963
      %v1965 = vpop.f32.mrf.mxu0
      %1966 = vdwg.mxu0
      %1967 = vmatprep.subr.bf16.mxu0 0
      %1968 = vmatpush1.bf16.msra.mxu0 %v1781
      %1969 = vmatprep.subr.bf16.mxu0 0
      %1970 = vmatpush1.bf16.msra.mxu0 %v1780
      %1971 = vmatprep.subr.bf16.mxu0 0
      %1972 = vmatpush1.bf16.msra.mxu0 %v1779
      %1973 = vmatprep.subr.bf16.mxu0 0
      %1974 = vmatpush1.bf16.msra.mxu0 %v1778
      %1975 = vmatprep.subr.bf16.mxu0 0
      %1976 = vmatpush1.bf16.msra.mxu0 %v1777
      %1977 = vmatprep.subr.bf16.mxu0 0
      %1978 = vmatpush1.bf16.msra.mxu0 %v1776
      %1979 = vmatprep.subr.bf16.mxu0 0
      %1980 = vmatpush1.bf16.msra.mxu0 %v1775
      %1981 = vmatprep.subr.bf16.mxu0 0
      %1982 = vmatpush1.bf16.msra.mxu0 %v1774
      %1983 = vmatprep.subr.bf16.mxu0 0
      %1984 = vmatpush2.bf16.msra.mxu0 %v1789
      %1985 = vmatprep.subr.bf16.mxu0 0
      %1986 = vmatpush2.bf16.msra.mxu0 %v1788
      %1987 = vmatprep.subr.bf16.mxu0 0
      %1988 = vmatpush2.bf16.msra.mxu0 %v1787
      %1989 = vmatprep.subr.bf16.mxu0 0
      %1990 = vmatpush2.bf16.msra.mxu0 %v1786
      %1991 = vmatprep.subr.bf16.mxu0 0
      %1992 = vmatpush2.bf16.msra.mxu0 %v1785
      %1993 = vmatprep.subr.bf16.mxu0 0
      %1994 = vmatpush2.bf16.msra.mxu0 %v1784
      %1995 = vmatprep.subr.bf16.mxu0 0
      %1996 = vmatpush2.bf16.msra.mxu0 %v1783
      %1997 = vmatprep.subr.bf16.mxu0 0
      %1998 = vmatpush2.bf16.msra.mxu0 %v1782
      %1999 = vmatprep.mubr.bf16.mxu0 %v1285
      %2000 = vmatmul.mubr.bf16.gmra.mxu0 %v1277
      %v2001 = vpop.f32.mrf.mxu0
      %v2002 = vadd.f32 %v1937, %v2001
      %v2003 = vpop.f32.mrf.mxu0
      %v2004 = vpop.f32.mrf.mxu0
      %v2005 = vadd.f32 %v1940, %v2004
      %v2006 = vpop.f32.mrf.mxu0
      %2007 = vmatprep.mubr.bf16.mxu0 %v1286
      %2008 = vmatmul.mubr.bf16.gmra.mxu0 %v1278
      %v2009 = vpop.f32.mrf.mxu0
      %v2010 = vadd.f32 %v1945, %v2009
      %v2011 = vpop.f32.mrf.mxu0
      %v2012 = vpop.f32.mrf.mxu0
      %v2013 = vadd.f32 %v1948, %v2012
      %v2014 = vpop.f32.mrf.mxu0
      %2015 = vmatprep.mubr.bf16.mxu0 %v1287
      %2016 = vmatmul.mubr.bf16.gmra.mxu0 %v1279
      %v2017 = vpop.f32.mrf.mxu0
      %v2018 = vadd.f32 %v1953, %v2017
      %v2019 = vpop.f32.mrf.mxu0
      %v2020 = vpop.f32.mrf.mxu0
      %v2021 = vadd.f32 %v1956, %v2020
      %v2022 = vpop.f32.mrf.mxu0
      %2023 = vmatprep.mubr.bf16.mxu0 %v1288
      %2024 = vmatmul.mubr.bf16.gmra.mxu0 %v1280
      %v2025 = vpop.f32.mrf.mxu0
      %v2026 = vadd.f32 %v1961, %v2025
      %v2027 = vpop.f32.mrf.mxu0
      %v2028 = vpop.f32.mrf.mxu0
      %v2029 = vadd.f32 %v1964, %v2028
      %v2030 = vpop.f32.mrf.mxu0
      %2031 = vdwg.mxu0
      %2032 = vmatprep.subr.bf16.mxu0 0
      %2033 = vmatpush1.bf16.msra.mxu0 %v1797
      %2034 = vmatprep.subr.bf16.mxu0 0
      %2035 = vmatpush1.bf16.msra.mxu0 %v1796
      %2036 = vmatprep.subr.bf16.mxu0 0
      %2037 = vmatpush1.bf16.msra.mxu0 %v1795
      %2038 = vmatprep.subr.bf16.mxu0 0
      %2039 = vmatpush1.bf16.msra.mxu0 %v1794
      %2040 = vmatprep.subr.bf16.mxu0 0
      %2041 = vmatpush1.bf16.msra.mxu0 %v1793
      %2042 = vmatprep.subr.bf16.mxu0 0
      %2043 = vmatpush1.bf16.msra.mxu0 %v1792
      %2044 = vmatprep.subr.bf16.mxu0 0
      %2045 = vmatpush1.bf16.msra.mxu0 %v1791
      %2046 = vmatprep.subr.bf16.mxu0 0
      %2047 = vmatpush1.bf16.msra.mxu0 %v1790
      %2048 = vmatprep.subr.bf16.mxu0 0
      %2049 = vmatpush2.bf16.msra.mxu0 %v1805
      %2050 = vmatprep.subr.bf16.mxu0 0
      %2051 = vmatpush2.bf16.msra.mxu0 %v1804
      %2052 = vmatprep.subr.bf16.mxu0 0
      %2053 = vmatpush2.bf16.msra.mxu0 %v1803
      %2054 = vmatprep.subr.bf16.mxu0 0
      %2055 = vmatpush2.bf16.msra.mxu0 %v1802
      %2056 = vmatprep.subr.bf16.mxu0 0
      %2057 = vmatpush2.bf16.msra.mxu0 %v1801
      %2058 = vmatprep.subr.bf16.mxu0 0
      %2059 = vmatpush2.bf16.msra.mxu0 %v1800
      %2060 = vmatprep.subr.bf16.mxu0 0
      %2061 = vmatpush2.bf16.msra.mxu0 %v1799
      %2062 = vmatprep.subr.bf16.mxu0 0
      %2063 = vmatpush2.bf16.msra.mxu0 %v1798
      %2064 = vmatprep.mubr.bf16.mxu0 %v1303
      %2065 = vmatmul.mubr.bf16.gmra.mxu0 %v1294
      %v2066 = vpop.f32.mrf.mxu0
      %v2067 = vadd.f32 %v2002, %v2066
      %v2068 = vpop.f32.mrf.mxu0
      %v2069 = vpop.f32.mrf.mxu0
      %v2070 = vadd.f32 %v2005, %v2069
      %v2071 = vpop.f32.mrf.mxu0
      %2072 = vmatprep.mubr.bf16.mxu0 %v1304
      %2073 = vmatmul.mubr.bf16.gmra.mxu0 %v1295
      %v2074 = vpop.f32.mrf.mxu0
      %v2075 = vadd.f32 %v2010, %v2074
      %v2076 = vpop.f32.mrf.mxu0
      %v2077 = vpop.f32.mrf.mxu0
      %v2078 = vadd.f32 %v2013, %v2077
      %v2079 = vpop.f32.mrf.mxu0
      %2080 = vmatprep.mubr.bf16.mxu0 %v1305
      %2081 = vmatmul.mubr.bf16.gmra.mxu0 %v1296
      %v2082 = vpop.f32.mrf.mxu0
      %v2083 = vadd.f32 %v2018, %v2082
      %v2084 = vpop.f32.mrf.mxu0
      %v2085 = vpop.f32.mrf.mxu0
      %v2086 = vadd.f32 %v2021, %v2085
      %v2087 = vpop.f32.mrf.mxu0
      %2088 = vmatprep.mubr.bf16.mxu0 %v1306
      %2089 = vmatmul.mubr.bf16.gmra.mxu0 %v1297
      %v2090 = vpop.f32.mrf.mxu0
      %v2091 = vadd.f32 %v2026, %v2090
      %v2092 = vpop.f32.mrf.mxu0
      %v2093 = vpop.f32.mrf.mxu0
      %v2094 = vadd.f32 %v2029, %v2093
      %v2095 = vpop.f32.mrf.mxu0
      %2096 = vdwg.mxu0
      %2097 = vmatprep.subr.bf16.mxu0 0
      %2098 = vmatpush1.bf16.msra.mxu0 %v1813
      %2099 = vmatprep.subr.bf16.mxu0 0
      %2100 = vmatpush1.bf16.msra.mxu0 %v1812
      %2101 = vmatprep.subr.bf16.mxu0 0
      %2102 = vmatpush1.bf16.msra.mxu0 %v1811
      %2103 = vmatprep.subr.bf16.mxu0 0
      %2104 = vmatpush1.bf16.msra.mxu0 %v1810
      %2105 = vmatprep.subr.bf16.mxu0 0
      %2106 = vmatpush1.bf16.msra.mxu0 %v1809
      %2107 = vmatprep.subr.bf16.mxu0 0
      %2108 = vmatpush1.bf16.msra.mxu0 %v1808
      %2109 = vmatprep.subr.bf16.mxu0 0
      %2110 = vmatpush1.bf16.msra.mxu0 %v1807
      %2111 = vmatprep.subr.bf16.mxu0 0
      %2112 = vmatpush1.bf16.msra.mxu0 %v1806
      %2113 = vmatprep.subr.bf16.mxu0 0
      %2114 = vmatpush2.bf16.msra.mxu0 %v1821
      %2115 = vmatprep.subr.bf16.mxu0 0
      %2116 = vmatpush2.bf16.msra.mxu0 %v1820
      %2117 = vmatprep.subr.bf16.mxu0 0
      %2118 = vmatpush2.bf16.msra.mxu0 %v1819
      %2119 = vmatprep.subr.bf16.mxu0 0
      %2120 = vmatpush2.bf16.msra.mxu0 %v1818
      %2121 = vmatprep.subr.bf16.mxu0 0
      %2122 = vmatpush2.bf16.msra.mxu0 %v1817
      %2123 = vmatprep.subr.bf16.mxu0 0
      %2124 = vmatpush2.bf16.msra.mxu0 %v1816
      %2125 = vmatprep.subr.bf16.mxu0 0
      %2126 = vmatpush2.bf16.msra.mxu0 %v1815
      %2127 = vmatprep.subr.bf16.mxu0 0
      %2128 = vmatpush2.bf16.msra.mxu0 %v1814
      %2129 = vmatprep.mubr.bf16.mxu0 %v1262
      %2130 = vmatmul.mubr.bf16.gmra.mxu0 %v1246
      %v2131 = vpop.f32.mrf.mxu0
      %v2132 = vadd.f32 %v2067, %v2131
      %v2133 = vpop.f32.mrf.mxu0
      %v2134 = vpop.f32.mrf.mxu0
      %v2135 = vadd.f32 %v2070, %v2134
      %v2136 = vpop.f32.mrf.mxu0
      %2137 = vmatprep.mubr.bf16.mxu0 %v1263
      %2138 = vmatmul.mubr.bf16.gmra.mxu0 %v1247
      %v2139 = vpop.f32.mrf.mxu0
      %v2140 = vadd.f32 %v2075, %v2139
      %v2141 = vpop.f32.mrf.mxu0
      %v2142 = vpop.f32.mrf.mxu0
      %v2143 = vadd.f32 %v2078, %v2142
      %v2144 = vpop.f32.mrf.mxu0
      %2145 = vmatprep.mubr.bf16.mxu0 %v1264
      %2146 = vmatmul.mubr.bf16.gmra.mxu0 %v1248
      %v2147 = vpop.f32.mrf.mxu0
      %v2148 = vadd.f32 %v2083, %v2147
      %v2149 = vpop.f32.mrf.mxu0
      %v2150 = vpop.f32.mrf.mxu0
      %v2151 = vadd.f32 %v2086, %v2150
      %v2152 = vpop.f32.mrf.mxu0
      %2153 = vmatprep.mubr.bf16.mxu0 %v1314
      %2154 = vmatmul.mubr.bf16.gmra.mxu0 %v1311
      %v2155 = vpop.f32.mrf.mxu0
      %v2156 = vadd.f32 %v2091, %v2155
      %v2157 = vpop.f32.mrf.mxu0
      %v2158 = vpop.f32.mrf.mxu0
      %v2159 = vadd.f32 %v2094, %v2158
      %v2160 = vpop.f32.mrf.mxu0
      %2161 = vdwg.mxu0
      %2162 = vmatprep.subr.bf16.mxu0 0
      %2163 = vmatpush1.bf16.msra.mxu0 %v1829
      %2164 = vmatprep.subr.bf16.mxu0 0
      %2165 = vmatpush1.bf16.msra.mxu0 %v1828
      %2166 = vmatprep.subr.bf16.mxu0 0
      %2167 = vmatpush1.bf16.msra.mxu0 %v1827
      %2168 = vmatprep.subr.bf16.mxu0 0
      %2169 = vmatpush1.bf16.msra.mxu0 %v1826
      %2170 = vmatprep.subr.bf16.mxu0 0
      %2171 = vmatpush1.bf16.msra.mxu0 %v1825
      %2172 = vmatprep.subr.bf16.mxu0 0
      %2173 = vmatpush1.bf16.msra.mxu0 %v1824
      %2174 = vmatprep.subr.bf16.mxu0 0
      %2175 = vmatpush1.bf16.msra.mxu0 %v1823
      %2176 = vmatprep.subr.bf16.mxu0 0
      %2177 = vmatpush1.bf16.msra.mxu0 %v1822
      %2178 = vmatprep.subr.bf16.mxu0 0
      %2179 = vmatpush2.bf16.msra.mxu0 0
      %2180 = vmatprep.subr.bf16.mxu0 0
      %2181 = vmatpush2.bf16.msra.mxu0 0
      %2182 = vmatprep.subr.bf16.mxu0 0
      %2183 = vmatpush2.bf16.msra.mxu0 0
      %2184 = vmatprep.subr.bf16.mxu0 0
      %2185 = vmatpush2.bf16.msra.mxu0 0
      %2186 = vmatprep.subr.bf16.mxu0 0
      %2187 = vmatpush2.bf16.msra.mxu0 0
      %2188 = vmatprep.subr.bf16.mxu0 0
      %2189 = vmatpush2.bf16.msra.mxu0 0
      %2190 = vmatprep.subr.bf16.mxu0 0
      %2191 = vmatpush2.bf16.msra.mxu0 0
      %2192 = vmatprep.subr.bf16.mxu0 0
      %2193 = vmatpush2.bf16.msra.mxu0 0
      %2194 = vmatprep.mubr.bf16.mxu0 0
      %2195 = vmatmul.mubr.bf16.gmra.mxu0 %v1278
      %v2196 = vpop.f32.mrf.mxu0
      %v2197 = vadd.f32 %v2132, %v2196
      %v2198 = vpop.f32.mrf.mxu0
      %v2199 = vpop.f32.mrf.mxu0
      %v2200 = vadd.f32 %v2135, %v2199
      %v2201 = vpop.f32.mrf.mxu0
      %2202 = vmatprep.mubr.bf16.mxu0 0
      %2203 = vmatmul.mubr.bf16.gmra.mxu0 %v1279
      %v2204 = vpop.f32.mrf.mxu0
      %v2205 = vadd.f32 %v2140, %v2204
      %v2206 = vpop.f32.mrf.mxu0
      %v2207 = vpop.f32.mrf.mxu0
      %v2208 = vadd.f32 %v2143, %v2207
      %v2209 = vpop.f32.mrf.mxu0
      %2210 = vmatprep.mubr.bf16.mxu0 0
      %2211 = vmatmul.mubr.bf16.gmra.mxu0 %v1280
      %v2212 = vpop.f32.mrf.mxu0
      %v2213 = vadd.f32 %v2148, %v2212
      %v2214 = vpop.f32.mrf.mxu0
      %v2215 = vpop.f32.mrf.mxu0
      %v2216 = vadd.f32 %v2151, %v2215
      %v2217 = vpop.f32.mrf.mxu0
      %2218 = vmatprep.mubr.bf16.mxu0 0
      %2219 = vmatmul.mubr.bf16.gmra.mxu0 %v1317
      %v2220 = vpop.f32.mrf.mxu0
      %v2221 = vadd.f32 %v2156, %v2220
      %v2222 = vpop.f32.mrf.mxu0
      %v2223 = vpop.f32.mrf.mxu0
      %v2224 = vadd.f32 %v2159, %v2223
      %v2225 = vpop.f32.mrf.mxu0
      %2226 = vdwg.mxu0
      %v2227 = vmax.f32 %v2197, 0.0
      %v2228 = vmax.f32 %v2200, 0.0
      %v2229 = vmax.f32 %v2205, 0.0
      %v2230 = vmax.f32 %v2208, 0.0
      %v2231 = vmax.f32 %v2213, 0.0
      %v2232 = vmax.f32 %v2216, 0.0
      %v2233 = vmax.f32 %v2221, 0.0
      %v2234 = vmax.f32 %v2224, 0.0
      %v2235 = vpack.c.bf16 %v2228, %v2227
      %v2236 = vpack.c.bf16 %v2230, %v2229
      %v2237 = vpack.c.bf16 %v2232, %v2231
      %v2238 = vpack.c.bf16 %v2234, %v2233
      %v2239 = vld [vmem:[%s350] sm:$0xf]
      %v2240 = vld [vmem:[%s350 + $0x4] sm:$0xf]
      %v2241 = vld [vmem:[%s353] sm:$0x1]
      %v2243 = vlaneseq
      %v2244 = vshrl.u32 %v2243, 7
      %v2245 = vsub.s32 0, %v2244
      %v2246 = vrot.slane %v2241, %v2245
      %v2250 = vunpack.c.l.b16 %v2239
      %v2251 = vunpack.c.l.b16 %v2240
      %v2252 = vpack.c.b16 %v2251, %v2250
      %vm2254 = vcmask 130048
      %v2256 = vsel %vm2254, %v2235, 0
      %v2259 = vsel %vm2254, %v2236, 0
      %v2262 = vsel %vm2254, %v2237, 0
      %v2265 = vsel %vm2254, %v2238, 0
      %2267 = vmatprep.subr.bf16.mxu0 0
      %2268 = vmatpush1.bf16.msra.mxu0 0
      %2269 = vmatprep.subr.bf16.mxu0 0
      %2270 = vmatpush1.bf16.msra.mxu0 0
      %2271 = vmatprep.subr.bf16.mxu0 0
      %2272 = vmatpush1.bf16.msra.mxu0 0
      %2273 = vmatprep.subr.bf16.mxu0 0
      %2274 = vmatpush1.bf16.msra.mxu0 0
      %2275 = vmatprep.subr.bf16.mxu0 0
      %2276 = vmatpush1.bf16.msra.mxu0 0
      %2277 = vmatprep.subr.bf16.mxu0 0
      %2278 = vmatpush1.bf16.msra.mxu0 0
      %2279 = vmatprep.subr.bf16.mxu0 0
      %2280 = vmatpush1.bf16.msra.mxu0 0
      %2281 = vmatprep.subr.bf16.mxu0 0
      %2282 = vmatpush1.bf16.msra.mxu0 %v2252
      %2283 = vmatprep.subr.bf16.mxu0 0
      %2284 = vmatpush2.bf16.msra.mxu0 0
      %2285 = vmatprep.subr.bf16.mxu0 0
      %2286 = vmatpush2.bf16.msra.mxu0 0
      %2287 = vmatprep.subr.bf16.mxu0 0
      %2288 = vmatpush2.bf16.msra.mxu0 0
      %2289 = vmatprep.subr.bf16.mxu0 0
      %2290 = vmatpush2.bf16.msra.mxu0 0
      %2291 = vmatprep.subr.bf16.mxu0 0
      %2292 = vmatpush2.bf16.msra.mxu0 0
      %2293 = vmatprep.subr.bf16.mxu0 0
      %2294 = vmatpush2.bf16.msra.mxu0 0
      %2295 = vmatprep.subr.bf16.mxu0 0
      %2296 = vmatpush2.bf16.msra.mxu0 0
      %2297 = vmatprep.subr.bf16.mxu0 0
      %2298 = vmatpush2.bf16.msra.mxu0 0
      %2299 = vmatprep.mubr.bf16.mxu0 0
      %2300 = vmatmul.mubr.bf16.gmra.mxu0 %v2256
      %v2301 = vpop.f32.mrf.mxu0
      %v2302 = vadd.f32 %v2246, %v2301
      %v2303 = vpop.f32.mrf.mxu0
      %v2304 = vpop.f32.mrf.mxu0
      %v2305 = vadd.f32 %v2246, %v2304
      %v2306 = vpop.f32.mrf.mxu0
      %2307 = vmatprep.mubr.bf16.mxu0 0
      %2308 = vmatmul.mubr.bf16.gmra.mxu0 %v2259
      %v2309 = vpop.f32.mrf.mxu0
      %v2310 = vadd.f32 %v2246, %v2309
      %v2311 = vpop.f32.mrf.mxu0
      %v2312 = vpop.f32.mrf.mxu0
      %v2313 = vadd.f32 %v2246, %v2312
      %v2314 = vpop.f32.mrf.mxu0
      %2315 = vmatprep.mubr.bf16.mxu0 0
      %2316 = vmatmul.mubr.bf16.gmra.mxu0 %v2262
      %v2317 = vpop.f32.mrf.mxu0
      %v2318 = vadd.f32 %v2246, %v2317
      %v2319 = vpop.f32.mrf.mxu0
      %v2320 = vpop.f32.mrf.mxu0
      %v2321 = vadd.f32 %v2246, %v2320
      %v2322 = vpop.f32.mrf.mxu0
      %2323 = vmatprep.mubr.bf16.mxu0 0
      %2324 = vmatmul.mubr.bf16.gmra.mxu0 %v2265
      %v2325 = vpop.f32.mrf.mxu0
      %v2326 = vadd.f32 %v2246, %v2325
      %v2327 = vpop.f32.mrf.mxu0
      %v2328 = vpop.f32.mrf.mxu0
      %v2329 = vadd.f32 %v2246, %v2328
      %v2330 = vpop.f32.mrf.mxu0
      %2331 = vdwg.mxu0
      %s2332 = scalar_lea.vmem [#allocation2], 16
      %v2333 = vld [vmem:[%s2332 + $0x1] sm:$0xff]
      %v2334 = vld [vmem:[%s2332 + $0x11] sm:$0xff]
      %v2335 = vld [vmem:[%s2332 + $0x21] sm:$0xff]
      %v2336 = vld [vmem:[%s2332 + $0x31] sm:$0xff]
      %v2337 = vld [vmem:[%s2332 + $0x41] sm:$0xff]
      %v2338 = vld [vmem:[%s2332 + $0x51] sm:$0xff]
      %v2339 = vld [vmem:[%s2332 + $0x61] sm:$0xff]
      %v2340 = vld [vmem:[%s2332 + $0x71] sm:$0xff]
      %v2341 = vadd.f32 %v2333, %v2302
      %v2342 = vadd.f32 %v2334, %v2305
      %v2343 = vadd.f32 %v2335, %v2310
      %v2344 = vadd.f32 %v2336, %v2313
      %v2345 = vadd.f32 %v2337, %v2318
      %v2346 = vadd.f32 %v2338, %v2321
      %v2347 = vadd.f32 %v2339, %v2326
      %v2348 = vadd.f32 %v2340, %v2329
      %2349 = vst [vmem:[%s2332 + $0x1] sm:$0xff] %v2341
      %2350 = vst [vmem:[%s2332 + $0x11] sm:$0xff] %v2342
      %2351 = vst [vmem:[%s2332 + $0x21] sm:$0xff] %v2343
      %2352 = vst [vmem:[%s2332 + $0x31] sm:$0xff] %v2344
      %2353 = vst [vmem:[%s2332 + $0x41] sm:$0xff] %v2345
      %2354 = vst [vmem:[%s2332 + $0x51] sm:$0xff] %v2346
      %2355 = vst [vmem:[%s2332 + $0x61] sm:$0xff] %v2347
      %2356 = vst [vmem:[%s2332 + $0x71] sm:$0xff] %v2348
      %p2357 = scmp.eq.s32.totalorder %s23, 1
      // Predicated region
      $region53: #{decoder_forward_pallas.3} parent=47 // pred_check
        %p2358 = pneg %p2357
      $region54: #{decoder_forward_pallas.3} parent=47 // pred_check_branch
        %2360 = sbr.rel (%p2358) target = $region56
      $region55: #{decoder_forward_pallas.3} parent=47 // pred_region
        %v2361 = vld [vmem:[%s2332 + $0x1] sm:$0xff]
        %v2362 = vld [vmem:[%s2332 + $0x11] sm:$0xff]
        %v2363 = vld [vmem:[%s2332 + $0x21] sm:$0xff]
        %v2364 = vld [vmem:[%s2332 + $0x31] sm:$0xff]
        %v2365 = vld [vmem:[%s2332 + $0x41] sm:$0xff]
        %v2366 = vld [vmem:[%s2332 + $0x51] sm:$0xff]
        %v2367 = vld [vmem:[%s2332 + $0x61] sm:$0xff]
        %v2368 = vld [vmem:[%s2332 + $0x71] sm:$0xff]
        %v2369 = vmax.f32 %v2361, 0.0
        %v2370 = vmax.f32 %v2362, 0.0
        %v2371 = vmax.f32 %v2363, 0.0
        %v2372 = vmax.f32 %v2364, 0.0
        %v2373 = vmax.f32 %v2365, 0.0
        %v2374 = vmax.f32 %v2366, 0.0
        %v2375 = vmax.f32 %v2367, 0.0
        %v2376 = vmax.f32 %v2368, 0.0
        %v2377 = vpack.c.bf16 %v2369, %v2369
        %v2378 = vpack.c.bf16 %v2370, %v2370
        %v2379 = vpack.c.bf16 %v2371, %v2371
        %v2380 = vpack.c.bf16 %v2372, %v2372
        %v2381 = vpack.c.bf16 %v2373, %v2373
        %v2382 = vpack.c.bf16 %v2374, %v2374
        %v2383 = vpack.c.bf16 %v2375, %v2375
        %v2384 = vpack.c.bf16 %v2376, %v2376
        %2385 = vst [vmem:[%s358] sm:$0xf] %v2377
        %2386 = vst [vmem:[%s358 + $0x4] sm:$0xf] %v2378
        %2387 = vst [vmem:[%s358 + $0x8] sm:$0xf] %v2379
        %2388 = vst [vmem:[%s358 + $0xc] sm:$0xf] %v2380
        %2389 = vst [vmem:[%s358 + $0x10] sm:$0xf] %v2381
        %2390 = vst [vmem:[%s358 + $0x14] sm:$0xf] %v2382
        %2391 = vst [vmem:[%s358 + $0x18] sm:$0xf] %v2383
        %2392 = vst [vmem:[%s358 + $0x1c] sm:$0xf] %v2384
      $region56: #{decoder_forward_pallas.3} parent=47 // pred_fallthru
        _
      %p2393 = scmp.lt.s32.totalorder %s22, 1
      %s2394 = scalar_select %p2393, %s22, 1
      %s2395 = smul.addr %s2394, 8
      %s2396 = smul.addr %s2395, 4
      %s2397 = scalar_lea.vmem %s7, %s2396
      // Predicated region
      $region57: #{decoder_forward_pallas.3} parent=47 // pred_check
        %p2398 = pneg %p220
      $region58: #{decoder_forward_pallas.3} parent=47 // pred_check_branch
        %2400 = sbr.rel (%p2398) target = $region60
      $region59: #{decoder_forward_pallas.3} parent=47 // pred_region
        _
      $region60: #{decoder_forward_pallas.3} parent=47 // pred_fallthru
        _
    $region48: #{decoder_forward_pallas.3} parent=5 // pred_fallthru
      _
    %p2401 = scmp.le.s32.totalorder 2, %s13
    // Predicated region
    $region61: #{decoder_forward_pallas.3} parent=5 // pred_check
      %p2402 = pneg %p2401
    $region62: #{decoder_forward_pallas.3} parent=5 // pred_check_branch
      %2404 = sbr.rel (%p2402) target = $region64
    $region63: #{decoder_forward_pallas.3} parent=5 // pred_region
      %s2405 = ssub.s32 %s13, 2
      // Predicated region
      $region65: #{decoder_forward_pallas.3} parent=63 // pred_check
        %p2406 = pneg %p226
      $region66: #{decoder_forward_pallas.3} parent=63 // pred_check_branch
        %2408 = sbr.rel (%p2406) target = $region68
      $region67: #{decoder_forward_pallas.3} parent=63 // pred_region
        %p2409 = scmp.lt.s32.totalorder %s24, 1
        %s2410 = scalar_select %p2409, %s24, 1
        %s2411 = smul.addr %s2410, 8
        %s2412 = smul.addr %s2411, 4
        %s2413 = scalar_lea.vmem %s7, %s2412
      $region68: #{decoder_forward_pallas.3} parent=63 // pred_fallthru
        _
    $region64: #{decoder_forward_pallas.3} parent=5 // pred_fallthru
      _
  $region6: #{decoder_forward_pallas.3} parent=0 // loop_footer
    %s17 = sadd.s32 1, %s13
  $region7: #{decoder_forward_pallas.3} parent=0 // loop_footer_branch
    %12 = sbr.rel target = $region3
  $region8: #{decoder_forward_pallas.3} parent=0 // loop_exit
    _

// kernel: decoder_forward_pallas.4
$region0: #{decoder_forward_pallas.4}
  #allocation0 [shape = 'u32[]', space=smem, size = 0x4, offset = 0x4, fixed_abs, tag = 'smem constant byte address 0x4 - core index']
  #allocation1 [shape = 'u32[144,128]{1,0:T(1,128)}', space=vmem, size = 0x12000, scoped, tag = 'internal scratch']
  #allocation2 [shape = 'bf16[10,16,128]{2,1,0:T(8,128)(2,1)}', space=vmem, size = 0xa000, scoped, tag = 'scratch operand']
  %s0 = inlined_call_operand.vmem [shape: bf16[2,8,8,128], index: 0, kind: input, shape index: {}]
  %s1 = inlined_call_operand.vmem [shape: bf16[4,512,128], index: 1, kind: input, shape index: {}]
  %s2 = inlined_call_operand.vmem [shape: f32[1,128], index: 2, kind: input, shape index: {}]
  %s3 = inlined_call_operand.vmem [shape: bf16[2,8,2,8,256], index: 3, kind: output, shape index: {}]
  %s4 = sld [smem:[#allocation0]]
  $region45: #{decoder_forward_pallas.4} parent=0
    _
  %s6 = ssub.s32 1, %s4
  %s7 = scalar_select 0, %s6, %s4
  loop: start=0, step=1, limit=4
  $region2: #{decoder_forward_pallas.4} parent=0 // loop_pre_header
    _
  $region3: #{decoder_forward_pallas.4} parent=0 // loop_header
    %s9 = sphi 0, %s13
    %p10 = scmp.ge.s32.totalorder %s9, 4
    %s19 = sphi 0, %s21
    %s22 = sphi 0, %s19
    %s23 = sphi 0, %s22
    %s39 = sphi 0, %s23
    %s43 = sphi 0, %s43
    %s45 = sphi 0, %s43
    %s46 = sphi 0, %s45
    %s60 = sphi 0, %s46
    %s64 = sphi 0, %s64
    %s66 = sphi 0, %s64
    %s67 = sphi 0, %s66
    %s81 = sphi 0, %s67
    %s87 = sphi 0, %s89
    %s90 = sphi 0, %s87
    %s91 = sphi 0, %s90
    %s107 = sphi 0, %s91
  $region4: #{decoder_forward_pallas.4} parent=0 // loop_header_branch
    %12 = sbr.rel (%p10) target = $region8
  $region5: #{decoder_forward_pallas.4} parent=0 // loop_body
    %s14 = ssub.s32 %s9, 1
    %s15 = ssub.s32 %s9, 2
    %s16 = sadd.s32 %s9, 1
    %s17 = ssub.s32 %s9, %s16
    %p18 = scmp.eq.s32.totalorder %s17, 0
    %s20 = sadd.s32 %s19, 1
    %s21 = scalar_select %p18, %s19, %s20
    %p24 = pneg %p18
    %p25 = scmp.eq.s32.totalorder %s9, 1
    %p26 = por %p24, %p25
    %p27 = scmp.ne.s32.totalorder %s19, %s22
    %p28 = scmp.eq.s32.totalorder %s9, 0
    %p29 = por %p27, %p28
    %p30 = scmp.ne.s32.totalorder %s19, %s22
    %p31 = scmp.eq.s32.totalorder %s14, 1
    %p32 = por %p30, %p31
    %p33 = scmp.ne.s32.totalorder %s22, %s23
    %p34 = scmp.eq.s32.totalorder %s14, 0
    %p35 = por %p33, %p34
    %p36 = scmp.ne.s32.totalorder %s22, %s23
    %p37 = scmp.eq.s32.totalorder %s15, 1
    %p38 = por %p36, %p37
    %p40 = scmp.ne.s32.totalorder %s23, %s39
    %p41 = scmp.eq.s32.totalorder %s15, 0
    %p42 = por %p40, %p41
    %s44 = sadd.s32 %s43, 1
    %p47 = scmp.eq.s32.totalorder %s9, 1
    %p48 = scmp.ne.s32.totalorder %s43, %s45
    %p49 = scmp.eq.s32.totalorder %s9, 0
    %p50 = por %p48, %p49
    %p51 = scmp.ne.s32.totalorder %s43, %s45
    %p52 = scmp.eq.s32.totalorder %s14, 1
    %p53 = por %p51, %p52
    %p54 = scmp.ne.s32.totalorder %s45, %s46
    %p55 = scmp.eq.s32.totalorder %s14, 0
    %p56 = por %p54, %p55
    %p57 = scmp.ne.s32.totalorder %s45, %s46
    %p58 = scmp.eq.s32.totalorder %s15, 1
    %p59 = por %p57, %p58
    %p61 = scmp.ne.s32.totalorder %s46, %s60
    %p62 = scmp.eq.s32.totalorder %s15, 0
    %p63 = por %p61, %p62
    %s65 = sadd.s32 %s64, 1
    %p68 = scmp.eq.s32.totalorder %s9, 1
    %p69 = scmp.ne.s32.totalorder %s64, %s66
    %p70 = scmp.eq.s32.totalorder %s9, 0
    %p71 = por %p69, %p70
    %p72 = scmp.ne.s32.totalorder %s64, %s66
    %p73 = scmp.eq.s32.totalorder %s14, 1
    %p74 = por %p72, %p73
    %p75 = scmp.ne.s32.totalorder %s66, %s67
    %p76 = scmp.eq.s32.totalorder %s14, 0
    %p77 = por %p75, %p76
    %p78 = scmp.ne.s32.totalorder %s66, %s67
    %p79 = scmp.eq.s32.totalorder %s15, 1
    %p80 = por %p78, %p79
    %p82 = scmp.ne.s32.totalorder %s67, %s81
    %p83 = scmp.eq.s32.totalorder %s15, 0
    %p84 = por %p82, %p83
    %s85 = ssub.s32 %s9, %s16
    %p86 = scmp.eq.s32.totalorder %s85, 0
    %s88 = sadd.s32 %s87, 1
    %s89 = scalar_select %p86, %s87, %s88
    %p92 = pneg %p86
    %p93 = scmp.eq.s32.totalorder %s9, 1
    %p94 = por %p92, %p93
    %p95 = scmp.ne.s32.totalorder %s87, %s90
    %p96 = scmp.eq.s32.totalorder %s9, 0
    %p97 = por %p95, %p96
    %p98 = scmp.ne.s32.totalorder %s87, %s90
    %p99 = scmp.eq.s32.totalorder %s14, 1
    %p100 = por %p98, %p99
    %p101 = scmp.ne.s32.totalorder %s90, %s91
    %p102 = scmp.eq.s32.totalorder %s14, 0
    %p103 = por %p101, %p102
    %p104 = scmp.ne.s32.totalorder %s90, %s91
    %p105 = scmp.eq.s32.totalorder %s15, 1
    %p106 = por %p104, %p105
    %p108 = scmp.ne.s32.totalorder %s91, %s107
    %p109 = scmp.eq.s32.totalorder %s15, 0
    %p110 = por %p108, %p109
    %p111 = scmp.le.s32.totalorder 1, %s9
    %p112 = scmp.lt.s32.totalorder %s9, 3
    %p113 = pnand %p111, %p112
    %p114 = pneg %p113
    // Predicated region
    $region9: #{decoder_forward_pallas.4} parent=5 // pred_check
      _
    $region10: #{decoder_forward_pallas.4} parent=5 // pred_check_branch
      %116 = sbr.rel (%p113) target = $region12
    $region11: #{decoder_forward_pallas.4} parent=5 // pred_region
      %s117 = ssub.s32 %s9, 1
      // Predicated region
      $region13: #{decoder_forward_pallas.4} parent=11 // pred_check
        %p118 = pneg %p56
      $region14: #{decoder_forward_pallas.4} parent=11 // pred_check_branch
        %120 = sbr.rel (%p118) target = $region16
      $region15: #{decoder_forward_pallas.4} parent=11 // pred_region
        _
      $region16: #{decoder_forward_pallas.4} parent=11 // pred_fallthru
        _
      // Predicated region
      $region17: #{decoder_forward_pallas.4} parent=11 // pred_check
        %p121 = pneg %p77
      $region18: #{decoder_forward_pallas.4} parent=11 // pred_check_branch
        %123 = sbr.rel (%p121) target = $region20
      $region19: #{decoder_forward_pallas.4} parent=11 // pred_region
        _
      $region20: #{decoder_forward_pallas.4} parent=11 // pred_fallthru
        _
    $region12: #{decoder_forward_pallas.4} parent=5 // pred_fallthru
      _
    %p124 = scmp.lt.s32.totalorder %s9, 2
    // Predicated region
    $region21: #{decoder_forward_pallas.4} parent=5 // pred_check
      %p125 = pneg %p124
    $region22: #{decoder_forward_pallas.4} parent=5 // pred_check_branch
      %127 = sbr.rel (%p125) target = $region24
    $region23: #{decoder_forward_pallas.4} parent=5 // pred_region
      // Predicated region
      $region25: #{decoder_forward_pallas.4} parent=23 // pred_check
        %p128 = pneg %p29
      $region26: #{decoder_forward_pallas.4} parent=23 // pred_check_branch
        %130 = sbr.rel (%p128) target = $region28
      $region27: #{decoder_forward_pallas.4} parent=23 // pred_region
        %p131 = scmp.lt.s32.totalorder %s9, 1
        %s132 = scalar_select %p131, %s9, 1
        %s133 = smul.addr %s132, 8
        %s134 = smul.addr %s133, 4
        %s135 = scalar_lea.vmem %s0, %s134
      $region28: #{decoder_forward_pallas.4} parent=23 // pred_fallthru
        _
    $region24: #{decoder_forward_pallas.4} parent=5 // pred_fallthru
      _
    %p136 = scmp.le.s32.totalorder 1, %s9
    %p137 = scmp.lt.s32.totalorder %s9, 3
    %p138 = pnand %p136, %p137
    %p139 = pneg %p138
    // Predicated region
    $region29: #{decoder_forward_pallas.4} parent=5 // pred_check
      _
    $region30: #{decoder_forward_pallas.4} parent=5 // pred_check_branch
      %141 = sbr.rel (%p138) target = $region32
    $region31: #{decoder_forward_pallas.4} parent=5 // pred_region
      %s142 = ssub.s32 %s9, 1
      %p143 = scmp.lt.s32.totalorder %s14, 1
      %s144 = scalar_select %p143, %s14, 1
      %s145 = smul.addr %s144, 8
      %s146 = smul.addr %s145, 4
      %s147 = scalar_lea.vmem %s0, %s146
      %p148 = pneg %p35
      %p149 = pneg %p32
      %p150 = pneg %p56
      %p151 = pneg %p53
      %p152 = pneg %p77
      %p153 = pneg %p74
      %p154 = pneg %p103
      %p155 = pneg %p100
      %p156 = scmp.lt.s32.totalorder %s14, 1
      %s157 = scalar_select %p156, %s14, 1
      %s158 = smul.addr %s157, 32
      %s159 = smul.addr %s158, 4
      %s160 = scalar_lea.vmem %s3, %s159
      %p161 = scmp.lt.s32.totalorder %s14, 1
      %s162 = scalar_select %p161, %s14, 1
      %s163 = smul.addr %s162, 8
      %s164 = smul.addr %s163, 4
      %s165 = scalar_lea.vmem %s0, %s164
      %p166 = scmp.lt.s32.totalorder %s14, 1
      %s167 = scalar_select %p166, %s14, 1
      %s168 = smul.addr %s167, 32
      %s169 = smul.addr %s168, 4
      %s170 = scalar_lea.vmem %s3, %s169
      %172 = vst [vmem:[#allocation2] sm:$0xf] 0
      %173 = vst [vmem:[#allocation2 + $0x4] sm:$0xf] 0
      %174 = vst [vmem:[#allocation2 + $0x8] sm:$0xf] 0
      %175 = vst [vmem:[#allocation2 + $0xc] sm:$0xf] 0
      %176 = vst [vmem:[#allocation2 + $0x10] sm:$0xf] 0
      %177 = vst [vmem:[#allocation2 + $0x14] sm:$0xf] 0
      %178 = vst [vmem:[#allocation2 + $0x18] sm:$0xf] 0
      %179 = vst [vmem:[#allocation2 + $0x1c] sm:$0xf] 0
      %180 = vst [vmem:[#allocation2 + $0x20] sm:$0xf] 0
      %181 = vst [vmem:[#allocation2 + $0x24] sm:$0xf] 0
      %182 = vst [vmem:[#allocation2 + $0x28] sm:$0xf] 0
      %183 = vst [vmem:[#allocation2 + $0x2c] sm:$0xf] 0
      %184 = vst [vmem:[#allocation2 + $0x30] sm:$0xf] 0
      %185 = vst [vmem:[#allocation2 + $0x34] sm:$0xf] 0
      %186 = vst [vmem:[#allocation2 + $0x38] sm:$0xf] 0
      %187 = vst [vmem:[#allocation2 + $0x3c] sm:$0xf] 0
      %188 = vst [vmem:[#allocation2 + $0x40] sm:$0xf] 0
      %189 = vst [vmem:[#allocation2 + $0x44] sm:$0xf] 0
      %190 = vst [vmem:[#allocation2 + $0x48] sm:$0xf] 0
      %191 = vst [vmem:[#allocation2 + $0x4c] sm:$0xf] 0
      %v192 = vld [vmem:[%s165] sm:$0xf]
      %v193 = vld [vmem:[%s165 + $0x4] sm:$0xf]
      %v194 = vld [vmem:[%s165 + $0x8] sm:$0xf]
      %v195 = vld [vmem:[%s165 + $0xc] sm:$0xf]
      %v196 = vld [vmem:[%s165 + $0x10] sm:$0xf]
      %v197 = vld [vmem:[%s165 + $0x14] sm:$0xf]
      %v198 = vld [vmem:[%s165 + $0x18] sm:$0xf]
      %v199 = vld [vmem:[%s165 + $0x1c] sm:$0xf]
      %v201 = vshrl.u32 %v192, 16
      %v203 = vrot.slane %v201, 7
      %v204 = vshll.u32 %v192, 16
      %v206 = vor.u32 %v203, %v204
      %v207 = vrot.slane %v203, 4
      %v209 = vshrl.u32 %v193, 16
      %v211 = vrot.slane %v209, 7
      %v212 = vshll.u32 %v193, 16
      %v214 = vor.u32 %v211, %v212
      %v215 = vrot.slane %v211, 4
      %v217 = vshrl.u32 %v194, 16
      %v219 = vrot.slane %v217, 7
      %v220 = vshll.u32 %v194, 16
      %v222 = vor.u32 %v219, %v220
      %v223 = vrot.slane %v219, 4
      %v225 = vshrl.u32 %v195, 16
      %v227 = vrot.slane %v225, 7
      %v228 = vshll.u32 %v195, 16
      %v230 = vor.u32 %v227, %v228
      %v231 = vrot.slane %v227, 4
      %v233 = vshrl.u32 %v196, 16
      %v235 = vrot.slane %v233, 7
      %v236 = vshll.u32 %v196, 16
      %v238 = vor.u32 %v235, %v236
      %v239 = vrot.slane %v235, 4
      %v241 = vshrl.u32 %v197, 16
      %v243 = vrot.slane %v241, 7
      %v244 = vshll.u32 %v197, 16
      %v246 = vor.u32 %v243, %v244
      %v247 = vrot.slane %v243, 4
      %v249 = vshrl.u32 %v198, 16
      %v251 = vrot.slane %v249, 7
      %v252 = vshll.u32 %v198, 16
      %v254 = vor.u32 %v251, %v252
      %v255 = vrot.slane %v251, 4
      %v257 = vshrl.u32 %v199, 16
      %v259 = vrot.slane %v257, 7
      %v260 = vshll.u32 %v199, 16
      %v262 = vor.u32 %v259, %v260
      %v263 = vrot.slane %v259, 4
      %s280 = scalar_lea.vmem [#allocation2], 8
      %vm281 = vcmask 1043456
      %vm282 = vsmask.f32 7938
      %vm283 = vmand %vm281, %vm282
      %v284 = vld [vmem:[%s280] sm:$0xf]
      %v285 = vsel %vm283, %v206, %v284
      %286 = vst [vmem:[%s280] sm:$0xf] %v285
      %vm287 = vcmask 1040384
      %vm288 = vsmask.f32 256
      %vm289 = vmand %vm287, %vm288
      %v290 = vld [vmem:[%s280 + $0x4] sm:$0x1]
      %v291 = vsel %vm289, %v207, %v290
      %292 = vst [vmem:[%s280 + $0x4] sm:$0x1] %v291
      %v293 = vld [vmem:[%s280 + $0x8] sm:$0xf]
      %v294 = vsel %vm283, %v214, %v293
      %295 = vst [vmem:[%s280 + $0x8] sm:$0xf] %v294
      %v296 = vld [vmem:[%s280 + $0xc] sm:$0x1]
      %v297 = vsel %vm289, %v215, %v296
      %298 = vst [vmem:[%s280 + $0xc] sm:$0x1] %v297
      %v299 = vld [vmem:[%s280 + $0x10] sm:$0xf]
      %v300 = vsel %vm283, %v222, %v299
      %301 = vst [vmem:[%s280 + $0x10] sm:$0xf] %v300
      %v302 = vld [vmem:[%s280 + $0x14] sm:$0x1]
      %v303 = vsel %vm289, %v223, %v302
      %304 = vst [vmem:[%s280 + $0x14] sm:$0x1] %v303
      %v305 = vld [vmem:[%s280 + $0x18] sm:$0xf]
      %v306 = vsel %vm283, %v230, %v305
      %307 = vst [vmem:[%s280 + $0x18] sm:$0xf] %v306
      %v308 = vld [vmem:[%s280 + $0x1c] sm:$0x1]
      %v309 = vsel %vm289, %v231, %v308
      %310 = vst [vmem:[%s280 + $0x1c] sm:$0x1] %v309
      %v311 = vld [vmem:[%s280 + $0x20] sm:$0xf]
      %v312 = vsel %vm283, %v238, %v311
      %313 = vst [vmem:[%s280 + $0x20] sm:$0xf] %v312
      %v314 = vld [vmem:[%s280 + $0x24] sm:$0x1]
      %v315 = vsel %vm289, %v239, %v314
      %316 = vst [vmem:[%s280 + $0x24] sm:$0x1] %v315
      %v317 = vld [vmem:[%s280 + $0x28] sm:$0xf]
      %v318 = vsel %vm283, %v246, %v317
      %319 = vst [vmem:[%s280 + $0x28] sm:$0xf] %v318
      %v320 = vld [vmem:[%s280 + $0x2c] sm:$0x1]
      %v321 = vsel %vm289, %v247, %v320
      %322 = vst [vmem:[%s280 + $0x2c] sm:$0x1] %v321
      %v323 = vld [vmem:[%s280 + $0x30] sm:$0xf]
      %v324 = vsel %vm283, %v254, %v323
      %325 = vst [vmem:[%s280 + $0x30] sm:$0xf] %v324
      %v326 = vld [vmem:[%s280 + $0x34] sm:$0x1]
      %v327 = vsel %vm289, %v255, %v326
      %328 = vst [vmem:[%s280 + $0x34] sm:$0x1] %v327
      %v329 = vld [vmem:[%s280 + $0x38] sm:$0xf]
      %v330 = vsel %vm283, %v262, %v329
      %331 = vst [vmem:[%s280 + $0x38] sm:$0xf] %v330
      %v332 = vld [vmem:[%s280 + $0x3c] sm:$0x1]
      %v333 = vsel %vm289, %v263, %v332
      %334 = vst [vmem:[%s280 + $0x3c] sm:$0x1] %v333
      %v335 = vld [vmem:[#allocation2] sm:$0xf]
      %v336 = vld [vmem:[#allocation2 + $0x4] sm:$0xf]
      %v337 = vld [vmem:[#allocation2 + $0x8] sm:$0xf]
      %v338 = vld [vmem:[#allocation2 + $0xc] sm:$0xf]
      %v339 = vld [vmem:[#allocation2 + $0x10] sm:$0xf]
      %v340 = vld [vmem:[#allocation2 + $0x14] sm:$0xf]
      %v341 = vld [vmem:[#allocation2 + $0x18] sm:$0xf]
      %v342 = vld [vmem:[#allocation2 + $0x1c] sm:$0xf]
      %v343 = vld [vmem:[#allocation2 + $0x20] sm:$0xf]
      %v344 = vld [vmem:[#allocation2 + $0x24] sm:$0xf]
      %v345 = vld [vmem:[#allocation2 + $0x28] sm:$0xf]
      %v346 = vld [vmem:[#allocation2 + $0x2c] sm:$0xf]
      %v347 = vld [vmem:[#allocation2 + $0x30] sm:$0xf]
      %v348 = vld [vmem:[#allocation2 + $0x34] sm:$0xf]
      %v349 = vld [vmem:[#allocation2 + $0x38] sm:$0xf]
      %v350 = vld [vmem:[#allocation2 + $0x3c] sm:$0xf]
      %v351 = vld [vmem:[#allocation2 + $0x40] sm:$0xf]
      %v352 = vld [vmem:[#allocation2 + $0x44] sm:$0xf]
      %v353 = vld [vmem:[#allocation2 + $0x48] sm:$0xf]
      %v354 = vld [vmem:[#allocation2 + $0x4c] sm:$0xf]
      %vm355 = vsmask.f32 3328
      %vm356 = vsmask.f32 7440
      %vm357 = vmor %vm355, %vm356
      %v359 = vshrl.u32 %v335, 16
      %v361 = vrot.slane %v359, 4
      %v362 = vshll.u32 %v335, 16
      %v364 = vrot.slane %v362, 5
      %v365 = vor.u32 %v361, %v364
      %v366 = vrot.slane %v365, 4
      %v368 = vshll.u32 %v336, 16
      %v370 = vrot.slane %v368, 5
      %v371 = vsel %vm357, %v366, %v370
      %v373 = vshrl.u32 %v337, 16
      %v375 = vrot.slane %v373, 4
      %v376 = vshll.u32 %v337, 16
      %v378 = vrot.slane %v376, 5
      %v379 = vor.u32 %v375, %v378
      %v380 = vrot.slane %v379, 4
      %v382 = vshll.u32 %v338, 16
      %v384 = vrot.slane %v382, 5
      %v385 = vsel %vm357, %v380, %v384
      %v387 = vshrl.u32 %v339, 16
      %v389 = vrot.slane %v387, 4
      %v390 = vshll.u32 %v339, 16
      %v392 = vrot.slane %v390, 5
      %v393 = vor.u32 %v389, %v392
      %v394 = vrot.slane %v393, 4
      %v396 = vshll.u32 %v340, 16
      %v398 = vrot.slane %v396, 5
      %v399 = vsel %vm357, %v394, %v398
      %v401 = vshrl.u32 %v341, 16
      %v403 = vrot.slane %v401, 4
      %v404 = vshll.u32 %v341, 16
      %v406 = vrot.slane %v404, 5
      %v407 = vor.u32 %v403, %v406
      %v408 = vrot.slane %v407, 4
      %v410 = vshll.u32 %v342, 16
      %v412 = vrot.slane %v410, 5
      %v413 = vsel %vm357, %v408, %v412
      %v415 = vshrl.u32 %v343, 16
      %v417 = vrot.slane %v415, 4
      %v418 = vshll.u32 %v343, 16
      %v420 = vrot.slane %v418, 5
      %v421 = vor.u32 %v417, %v420
      %v422 = vrot.slane %v421, 4
      %v424 = vshll.u32 %v344, 16
      %v426 = vrot.slane %v424, 5
      %v427 = vsel %vm357, %v422, %v426
      %v429 = vshrl.u32 %v345, 16
      %v431 = vrot.slane %v429, 4
      %v432 = vshll.u32 %v345, 16
      %v434 = vrot.slane %v432, 5
      %v435 = vor.u32 %v431, %v434
      %v436 = vrot.slane %v435, 4
      %v438 = vshll.u32 %v346, 16
      %v440 = vrot.slane %v438, 5
      %v441 = vsel %vm357, %v436, %v440
      %v443 = vshrl.u32 %v347, 16
      %v445 = vrot.slane %v443, 4
      %v446 = vshll.u32 %v347, 16
      %v448 = vrot.slane %v446, 5
      %v449 = vor.u32 %v445, %v448
      %v450 = vrot.slane %v449, 4
      %v452 = vshll.u32 %v348, 16
      %v454 = vrot.slane %v452, 5
      %v455 = vsel %vm357, %v450, %v454
      %v457 = vshrl.u32 %v349, 16
      %v459 = vrot.slane %v457, 4
      %v460 = vshll.u32 %v349, 16
      %v462 = vrot.slane %v460, 5
      %v463 = vor.u32 %v459, %v462
      %v464 = vrot.slane %v463, 4
      %v466 = vshll.u32 %v350, 16
      %v468 = vrot.slane %v466, 5
      %v469 = vsel %vm357, %v464, %v468
      %v471 = vshrl.u32 %v351, 16
      %v473 = vrot.slane %v471, 4
      %v474 = vshll.u32 %v351, 16
      %v476 = vrot.slane %v474, 5
      %v477 = vor.u32 %v473, %v476
      %v478 = vrot.slane %v477, 4
      %v480 = vshll.u32 %v352, 16
      %v482 = vrot.slane %v480, 5
      %v483 = vsel %vm357, %v478, %v482
      %v492 = vunpack.c.l.b16 %v335
      %v493 = vunpack.c.l.b16 %v337
      %v494 = vunpack.c.l.b16 %v339
      %v495 = vunpack.c.l.b16 %v341
      %v496 = vunpack.c.l.b16 %v343
      %v497 = vunpack.c.l.b16 %v345
      %v498 = vunpack.c.l.b16 %v347
      %v499 = vunpack.c.l.b16 %v349
      %v500 = vpack.c.b16 %v493, %v492
      %v501 = vpack.c.b16 %v495, %v494
      %v502 = vpack.c.b16 %v497, %v496
      %v503 = vpack.c.b16 %v499, %v498
      %v508 = vunpack.c.l.b16 %v371
      %v509 = vunpack.c.l.b16 %v385
      %v510 = vunpack.c.l.b16 %v399
      %v511 = vunpack.c.l.b16 %v413
      %v512 = vunpack.c.l.b16 %v427
      %v513 = vunpack.c.l.b16 %v441
      %v514 = vunpack.c.l.b16 %v455
      %v515 = vunpack.c.l.b16 %v469
      %v516 = vpack.c.b16 %v509, %v508
      %v517 = vpack.c.b16 %v511, %v510
      %v518 = vpack.c.b16 %v513, %v512
      %v519 = vpack.c.b16 %v515, %v514
      %v525 = vunpack.c.l.b16 %v351
      %v526 = vpack.c.b16 %v494, %v493
      %v527 = vpack.c.b16 %v496, %v495
      %v528 = vpack.c.b16 %v498, %v497
      %v529 = vpack.c.b16 %v525, %v499
      %v534 = vunpack.c.l.b16 %v483
      %v535 = vpack.c.b16 %v510, %v509
      %v536 = vpack.c.b16 %v512, %v511
      %v537 = vpack.c.b16 %v514, %v513
      %v538 = vpack.c.b16 %v534, %v515
      %v543 = vld [vmem:[%s1] sm:$0xf]
      %v544 = vld [vmem:[%s1 + $0x4] sm:$0xf]
      %v545 = vld [vmem:[%s1 + $0x8] sm:$0xf]
      %v546 = vld [vmem:[%s1 + $0xc] sm:$0xf]
      %v547 = vld [vmem:[%s1 + $0x10] sm:$0xf]
      %v548 = vld [vmem:[%s1 + $0x14] sm:$0xf]
      %v549 = vld [vmem:[%s1 + $0x18] sm:$0xf]
      %v550 = vld [vmem:[%s1 + $0x1c] sm:$0xf]
      %v551 = vld [vmem:[%s1 + $0x20] sm:$0xf]
      %v552 = vld [vmem:[%s1 + $0x24] sm:$0xf]
      %v553 = vld [vmem:[%s1 + $0x28] sm:$0xf]
      %v554 = vld [vmem:[%s1 + $0x2c] sm:$0xf]
      %v555 = vld [vmem:[%s1 + $0x30] sm:$0xf]
      %v556 = vld [vmem:[%s1 + $0x34] sm:$0xf]
      %v557 = vld [vmem:[%s1 + $0x38] sm:$0xf]
      %v558 = vld [vmem:[%s1 + $0x3c] sm:$0xf]
      %v559 = vld [vmem:[%s1 + $0x40] sm:$0xf]
      %v560 = vld [vmem:[%s1 + $0x44] sm:$0xf]
      %v561 = vld [vmem:[%s1 + $0x48] sm:$0xf]
      %v562 = vld [vmem:[%s1 + $0x4c] sm:$0xf]
      %v563 = vld [vmem:[%s1 + $0x50] sm:$0xf]
      %v564 = vld [vmem:[%s1 + $0x54] sm:$0xf]
      %v565 = vld [vmem:[%s1 + $0x58] sm:$0xf]
      %v566 = vld [vmem:[%s1 + $0x5c] sm:$0xf]
      %v567 = vld [vmem:[%s1 + $0x60] sm:$0xf]
      %v568 = vld [vmem:[%s1 + $0x64] sm:$0xf]
      %v569 = vld [vmem:[%s1 + $0x68] sm:$0xf]
      %v570 = vld [vmem:[%s1 + $0x6c] sm:$0xf]
      %v571 = vld [vmem:[%s1 + $0x70] sm:$0xf]
      %v572 = vld [vmem:[%s1 + $0x74] sm:$0xf]
      %v573 = vld [vmem:[%s1 + $0x78] sm:$0xf]
      %v574 = vld [vmem:[%s1 + $0x7c] sm:$0xf]
      %v575 = vld [vmem:[%s1 + $0x80] sm:$0xf]
      %v576 = vld [vmem:[%s1 + $0x84] sm:$0xf]
      %v577 = vld [vmem:[%s1 + $0x88] sm:$0xf]
      %v578 = vld [vmem:[%s1 + $0x8c] sm:$0xf]
      %v579 = vld [vmem:[%s1 + $0x90] sm:$0xf]
      %v580 = vld [vmem:[%s1 + $0x94] sm:$0xf]
      %v581 = vld [vmem:[%s1 + $0x98] sm:$0xf]
      %v582 = vld [vmem:[%s1 + $0x9c] sm:$0xf]
      %v583 = vld [vmem:[%s1 + $0xa0] sm:$0xf]
      %v584 = vld [vmem:[%s1 + $0xa4] sm:$0xf]
      %v585 = vld [vmem:[%s1 + $0xa8] sm:$0xf]
      %v586 = vld [vmem:[%s1 + $0xac] sm:$0xf]
      %v587 = vld [vmem:[%s1 + $0xb0] sm:$0xf]
      %v588 = vld [vmem:[%s1 + $0xb4] sm:$0xf]
      %v589 = vld [vmem:[%s1 + $0xb8] sm:$0xf]
      %v590 = vld [vmem:[%s1 + $0xbc] sm:$0xf]
      %v591 = vld [vmem:[%s1 + $0xc0] sm:$0xf]
      %v592 = vld [vmem:[%s1 + $0xc4] sm:$0xf]
      %v593 = vld [vmem:[%s1 + $0xc8] sm:$0xf]
      %v594 = vld [vmem:[%s1 + $0xcc] sm:$0xf]
      %v595 = vld [vmem:[%s1 + $0xd0] sm:$0xf]
      %v596 = vld [vmem:[%s1 + $0xd4] sm:$0xf]
      %v597 = vld [vmem:[%s1 + $0xd8] sm:$0xf]
      %v598 = vld [vmem:[%s1 + $0xdc] sm:$0xf]
      %v599 = vld [vmem:[%s1 + $0xe0] sm:$0xf]
      %v600 = vld [vmem:[%s1 + $0xe4] sm:$0xf]
      %v601 = vld [vmem:[%s1 + $0xe8] sm:$0xf]
      %v602 = vld [vmem:[%s1 + $0xec] sm:$0xf]
      %v603 = vld [vmem:[%s1 + $0xf0] sm:$0xf]
      %v604 = vld [vmem:[%s1 + $0xf4] sm:$0xf]
      %v605 = vld [vmem:[%s1 + $0xf8] sm:$0xf]
      %v606 = vld [vmem:[%s1 + $0xfc] sm:$0xf]
      %v607 = vld [vmem:[%s2] sm:$0x1]
      %v609 = vlaneseq
      %v610 = vshrl.u32 %v609, 7
      %v611 = vsub.s32 0, %v610
      %v612 = vrot.slane %v607, %v611
      %v678 = vunpack.c.l.b16 %v543
      %v679 = vunpack.c.l.b16 %v544
      %v680 = vunpack.c.l.b16 %v545
      %v681 = vunpack.c.l.b16 %v546
      %v682 = vunpack.c.l.b16 %v547
      %v683 = vunpack.c.l.b16 %v548
      %v684 = vunpack.c.l.b16 %v549
      %v685 = vunpack.c.l.b16 %v550
      %v686 = vunpack.c.l.b16 %v551
      %v687 = vunpack.c.l.b16 %v552
      %v688 = vunpack.c.l.b16 %v553
      %v689 = vunpack.c.l.b16 %v554
      %v690 = vunpack.c.l.b16 %v555
      %v691 = vunpack.c.l.b16 %v556
      %v692 = vunpack.c.l.b16 %v557
      %v693 = vunpack.c.l.b16 %v558
      %v694 = vunpack.c.l.b16 %v559
      %v695 = vunpack.c.l.b16 %v560
      %v696 = vunpack.c.l.b16 %v561
      %v697 = vunpack.c.l.b16 %v562
      %v698 = vunpack.c.l.b16 %v563
      %v699 = vunpack.c.l.b16 %v564
      %v700 = vunpack.c.l.b16 %v565
      %v701 = vunpack.c.l.b16 %v566
      %v702 = vunpack.c.l.b16 %v567
      %v703 = vunpack.c.l.b16 %v568
      %v704 = vunpack.c.l.b16 %v569
      %v705 = vunpack.c.l.b16 %v570
      %v706 = vunpack.c.l.b16 %v571
      %v707 = vunpack.c.l.b16 %v572
      %v708 = vunpack.c.l.b16 %v573
      %v709 = vunpack.c.l.b16 %v574
      %v710 = vunpack.c.l.b16 %v575
      %v711 = vunpack.c.l.b16 %v576
      %v712 = vunpack.c.l.b16 %v577
      %v713 = vunpack.c.l.b16 %v578
      %v714 = vunpack.c.l.b16 %v579
      %v715 = vunpack.c.l.b16 %v580
      %v716 = vunpack.c.l.b16 %v581
      %v717 = vunpack.c.l.b16 %v582
      %v718 = vunpack.c.l.b16 %v583
      %v719 = vunpack.c.l.b16 %v584
      %v720 = vunpack.c.l.b16 %v585
      %v721 = vunpack.c.l.b16 %v586
      %v722 = vunpack.c.l.b16 %v587
      %v723 = vunpack.c.l.b16 %v588
      %v724 = vunpack.c.l.b16 %v589
      %v725 = vunpack.c.l.b16 %v590
      %v726 = vunpack.c.l.b16 %v591
      %v727 = vunpack.c.l.b16 %v592
      %v728 = vunpack.c.l.b16 %v593
      %v729 = vunpack.c.l.b16 %v594
      %v730 = vunpack.c.l.b16 %v595
      %v731 = vunpack.c.l.b16 %v596
      %v732 = vunpack.c.l.b16 %v597
      %v733 = vunpack.c.l.b16 %v598
      %v734 = vunpack.c.l.b16 %v599
      %v735 = vunpack.c.l.b16 %v600
      %v736 = vunpack.c.l.b16 %v601
      %v737 = vunpack.c.l.b16 %v602
      %v738 = vunpack.c.l.b16 %v603
      %v739 = vunpack.c.l.b16 %v604
      %v740 = vunpack.c.l.b16 %v605
      %v741 = vunpack.c.l.b16 %v606
      %v742 = vpack.c.b16 %v679, %v678
      %v743 = vpack.c.b16 %v681, %v680
      %v744 = vpack.c.b16 %v683, %v682
      %v745 = vpack.c.b16 %v685, %v684
      %v746 = vpack.c.b16 %v687, %v686
      %v747 = vpack.c.b16 %v689, %v688
      %v748 = vpack.c.b16 %v691, %v690
      %v749 = vpack.c.b16 %v693, %v692
      %v750 = vpack.c.b16 %v695, %v694
      %v751 = vpack.c.b16 %v697, %v696
      %v752 = vpack.c.b16 %v699, %v698
      %v753 = vpack.c.b16 %v701, %v700
      %v754 = vpack.c.b16 %v703, %v702
      %v755 = vpack.c.b16 %v705, %v704
      %v756 = vpack.c.b16 %v707, %v706
      %v757 = vpack.c.b16 %v709, %v708
      %v758 = vpack.c.b16 %v711, %v710
      %v759 = vpack.c.b16 %v713, %v712
      %v760 = vpack.c.b16 %v715, %v714
      %v761 = vpack.c.b16 %v717, %v716
      %v762 = vpack.c.b16 %v719, %v718
      %v763 = vpack.c.b16 %v721, %v720
      %v764 = vpack.c.b16 %v723, %v722
      %v765 = vpack.c.b16 %v725, %v724
      %v766 = vpack.c.b16 %v727, %v726
      %v767 = vpack.c.b16 %v729, %v728
      %v768 = vpack.c.b16 %v731, %v730
      %v769 = vpack.c.b16 %v733, %v732
      %v770 = vpack.c.b16 %v735, %v734
      %v771 = vpack.c.b16 %v737, %v736
      %v772 = vpack.c.b16 %v739, %v738
      %v773 = vpack.c.b16 %v741, %v740
      %806 = vmatprep.subr.bf16.mxu0 0
      %807 = vmatpush1.bf16.msra.mxu0 %v749
      %808 = vmatprep.subr.bf16.mxu0 0
      %809 = vmatpush1.bf16.msra.mxu0 %v748
      %810 = vmatprep.subr.bf16.mxu0 0
      %811 = vmatpush1.bf16.msra.mxu0 %v747
      %812 = vmatprep.subr.bf16.mxu0 0
      %813 = vmatpush1.bf16.msra.mxu0 %v746
      %814 = vmatprep.subr.bf16.mxu0 0
      %815 = vmatpush1.bf16.msra.mxu0 %v745
      %816 = vmatprep.subr.bf16.mxu0 0
      %817 = vmatpush1.bf16.msra.mxu0 %v744
      %818 = vmatprep.subr.bf16.mxu0 0
      %819 = vmatpush1.bf16.msra.mxu0 %v743
      %820 = vmatprep.subr.bf16.mxu0 0
      %821 = vmatpush1.bf16.msra.mxu0 %v742
      %822 = vmatprep.subr.bf16.mxu0 0
      %823 = vmatpush2.bf16.msra.mxu0 %v757
      %824 = vmatprep.subr.bf16.mxu0 0
      %825 = vmatpush2.bf16.msra.mxu0 %v756
      %826 = vmatprep.subr.bf16.mxu0 0
      %827 = vmatpush2.bf16.msra.mxu0 %v755
      %828 = vmatprep.subr.bf16.mxu0 0
      %829 = vmatpush2.bf16.msra.mxu0 %v754
      %830 = vmatprep.subr.bf16.mxu0 0
      %831 = vmatpush2.bf16.msra.mxu0 %v753
      %832 = vmatprep.subr.bf16.mxu0 0
      %833 = vmatpush2.bf16.msra.mxu0 %v752
      %834 = vmatprep.subr.bf16.mxu0 0
      %835 = vmatpush2.bf16.msra.mxu0 %v751
      %836 = vmatprep.subr.bf16.mxu0 0
      %837 = vmatpush2.bf16.msra.mxu0 %v750
      %838 = vmatprep.mubr.bf16.mxu0 %v516
      %839 = vmatmul.mubr.bf16.gmra.mxu0 %v500
      %v840 = vpop.f32.mrf.mxu0
      %v841 = vadd.f32 %v612, %v840
      %v842 = vpop.f32.mrf.mxu0
      %v843 = vpop.f32.mrf.mxu0
      %v844 = vadd.f32 %v612, %v843
      %v845 = vpop.f32.mrf.mxu0
      %846 = vmatprep.mubr.bf16.mxu0 %v517
      %847 = vmatmul.mubr.bf16.gmra.mxu0 %v501
      %v848 = vpop.f32.mrf.mxu0
      %v849 = vadd.f32 %v612, %v848
      %v850 = vpop.f32.mrf.mxu0
      %v851 = vpop.f32.mrf.mxu0
      %v852 = vadd.f32 %v612, %v851
      %v853 = vpop.f32.mrf.mxu0
      %854 = vmatprep.mubr.bf16.mxu0 %v518
      %855 = vmatmul.mubr.bf16.gmra.mxu0 %v502
      %v856 = vpop.f32.mrf.mxu0
      %v857 = vadd.f32 %v612, %v856
      %v858 = vpop.f32.mrf.mxu0
      %v859 = vpop.f32.mrf.mxu0
      %v860 = vadd.f32 %v612, %v859
      %v861 = vpop.f32.mrf.mxu0
      %862 = vmatprep.mubr.bf16.mxu0 %v519
      %863 = vmatmul.mubr.bf16.gmra.mxu0 %v503
      %v864 = vpop.f32.mrf.mxu0
      %v865 = vadd.f32 %v612, %v864
      %v866 = vpop.f32.mrf.mxu0
      %v867 = vpop.f32.mrf.mxu0
      %v868 = vadd.f32 %v612, %v867
      %v869 = vpop.f32.mrf.mxu0
      %870 = vdwg.mxu0
      %871 = vmatprep.subr.bf16.mxu0 0
      %872 = vmatpush1.bf16.msra.mxu0 %v765
      %873 = vmatprep.subr.bf16.mxu0 0
      %874 = vmatpush1.bf16.msra.mxu0 %v764
      %875 = vmatprep.subr.bf16.mxu0 0
      %876 = vmatpush1.bf16.msra.mxu0 %v763
      %877 = vmatprep.subr.bf16.mxu0 0
      %878 = vmatpush1.bf16.msra.mxu0 %v762
      %879 = vmatprep.subr.bf16.mxu0 0
      %880 = vmatpush1.bf16.msra.mxu0 %v761
      %881 = vmatprep.subr.bf16.mxu0 0
      %882 = vmatpush1.bf16.msra.mxu0 %v760
      %883 = vmatprep.subr.bf16.mxu0 0
      %884 = vmatpush1.bf16.msra.mxu0 %v759
      %885 = vmatprep.subr.bf16.mxu0 0
      %886 = vmatpush1.bf16.msra.mxu0 %v758
      %887 = vmatprep.subr.bf16.mxu0 0
      %888 = vmatpush2.bf16.msra.mxu0 %v773
      %889 = vmatprep.subr.bf16.mxu0 0
      %890 = vmatpush2.bf16.msra.mxu0 %v772
      %891 = vmatprep.subr.bf16.mxu0 0
      %892 = vmatpush2.bf16.msra.mxu0 %v771
      %893 = vmatprep.subr.bf16.mxu0 0
      %894 = vmatpush2.bf16.msra.mxu0 %v770
      %895 = vmatprep.subr.bf16.mxu0 0
      %896 = vmatpush2.bf16.msra.mxu0 %v769
      %897 = vmatprep.subr.bf16.mxu0 0
      %898 = vmatpush2.bf16.msra.mxu0 %v768
      %899 = vmatprep.subr.bf16.mxu0 0
      %900 = vmatpush2.bf16.msra.mxu0 %v767
      %901 = vmatprep.subr.bf16.mxu0 0
      %902 = vmatpush2.bf16.msra.mxu0 %v766
      %903 = vmatprep.mubr.bf16.mxu0 %v535
      %904 = vmatmul.mubr.bf16.gmra.mxu0 %v526
      %v905 = vpop.f32.mrf.mxu0
      %v906 = vadd.f32 %v841, %v905
      %v907 = vpop.f32.mrf.mxu0
      %v908 = vpop.f32.mrf.mxu0
      %v909 = vadd.f32 %v844, %v908
      %v910 = vpop.f32.mrf.mxu0
      %911 = vmatprep.mubr.bf16.mxu0 %v536
      %912 = vmatmul.mubr.bf16.gmra.mxu0 %v527
      %v913 = vpop.f32.mrf.mxu0
      %v914 = vadd.f32 %v849, %v913
      %v915 = vpop.f32.mrf.mxu0
      %v916 = vpop.f32.mrf.mxu0
      %v917 = vadd.f32 %v852, %v916
      %v918 = vpop.f32.mrf.mxu0
      %919 = vmatprep.mubr.bf16.mxu0 %v537
      %920 = vmatmul.mubr.bf16.gmra.mxu0 %v528
      %v921 = vpop.f32.mrf.mxu0
      %v922 = vadd.f32 %v857, %v921
      %v923 = vpop.f32.mrf.mxu0
      %v924 = vpop.f32.mrf.mxu0
      %v925 = vadd.f32 %v860, %v924
      %v926 = vpop.f32.mrf.mxu0
      %927 = vmatprep.mubr.bf16.mxu0 %v538
      %928 = vmatmul.mubr.bf16.gmra.mxu0 %v529
      %v929 = vpop.f32.mrf.mxu0
      %v930 = vadd.f32 %v865, %v929
      %v931 = vpop.f32.mrf.mxu0
      %v932 = vpop.f32.mrf.mxu0
      %v933 = vadd.f32 %v868, %v932
      %v934 = vpop.f32.mrf.mxu0
      %935 = vdwg.mxu0
      %v936 = vmax.f32 %v906, 0.0
      %v937 = vmax.f32 %v909, 0.0
      %v938 = vmax.f32 %v914, 0.0
      %v939 = vmax.f32 %v917, 0.0
      %v940 = vmax.f32 %v922, 0.0
      %v941 = vmax.f32 %v925, 0.0
      %v942 = vmax.f32 %v930, 0.0
      %v943 = vmax.f32 %v933, 0.0
      %vm952 = vcmask 1042432
      %vm953 = vcmask 1046532
      %vm954 = vmor %vm952, %vm953
      %v955 = vrot.slane %v335, 5
      %v956 = vrot.slane %v955, 4
      %v957 = vrot.slane %v336, 5
      %v958 = vsel %vm954, %v956, %v957
      %v959 = vrot.slane %v337, 5
      %v960 = vrot.slane %v959, 4
      %v961 = vrot.slane %v338, 5
      %v962 = vsel %vm954, %v960, %v961
      %v963 = vrot.slane %v339, 5
      %v964 = vrot.slane %v963, 4
      %v965 = vrot.slane %v340, 5
      %v966 = vsel %vm954, %v964, %v965
      %v967 = vrot.slane %v341, 5
      %v968 = vrot.slane %v967, 4
      %v969 = vrot.slane %v342, 5
      %v970 = vsel %vm954, %v968, %v969
      %v971 = vrot.slane %v343, 5
      %v972 = vrot.slane %v971, 4
      %v973 = vrot.slane %v344, 5
      %v974 = vsel %vm954, %v972, %v973
      %v975 = vrot.slane %v345, 5
      %v976 = vrot.slane %v975, 4
      %v977 = vrot.slane %v346, 5
      %v978 = vsel %vm954, %v976, %v977
      %v979 = vrot.slane %v347, 5
      %v980 = vrot.slane %v979, 4
      %v981 = vrot.slane %v348, 5
      %v982 = vsel %vm954, %v980, %v981
      %v983 = vrot.slane %v349, 5
      %v984 = vrot.slane %v983, 4
      %v985 = vrot.slane %v350, 5
      %v986 = vsel %vm954, %v984, %v985
      %v988 = vrot.slane %v351, 5
      %v989 = vrot.slane %v988, 4
      %v990 = vrot.slane %v352, 5
      %v991 = vsel %vm954, %v989, %v990
      %v992 = vunpack.c.l.b16 %v958
      %v993 = vunpack.c.l.b16 %v962
      %v994 = vunpack.c.l.b16 %v966
      %v995 = vunpack.c.l.b16 %v970
      %v996 = vunpack.c.l.b16 %v974
      %v997 = vunpack.c.l.b16 %v978
      %v998 = vunpack.c.l.b16 %v982
      %v999 = vunpack.c.l.b16 %v986
      %v1000 = vpack.c.b16 %v993, %v992
      %v1001 = vpack.c.b16 %v995, %v994
      %v1002 = vpack.c.b16 %v997, %v996
      %v1003 = vpack.c.b16 %v999, %v998
      %v1008 = vunpack.c.l.b16 %v991
      %v1009 = vpack.c.b16 %v994, %v993
      %v1010 = vpack.c.b16 %v996, %v995
      %v1011 = vpack.c.b16 %v998, %v997
      %v1012 = vpack.c.b16 %v1008, %v999
      %s1017 = scalar_lea.vmem %s1, 256
      %v1018 = vld [vmem:[%s1017] sm:$0xf]
      %v1019 = vld [vmem:[%s1017 + $0x4] sm:$0xf]
      %v1020 = vld [vmem:[%s1017 + $0x8] sm:$0xf]
      %v1021 = vld [vmem:[%s1017 + $0xc] sm:$0xf]
      %v1022 = vld [vmem:[%s1017 + $0x10] sm:$0xf]
      %v1023 = vld [vmem:[%s1017 + $0x14] sm:$0xf]
      %v1024 = vld [vmem:[%s1017 + $0x18] sm:$0xf]
      %v1025 = vld [vmem:[%s1017 + $0x1c] sm:$0xf]
      %v1026 = vld [vmem:[%s1017 + $0x20] sm:$0xf]
      %v1027 = vld [vmem:[%s1017 + $0x24] sm:$0xf]
      %v1028 = vld [vmem:[%s1017 + $0x28] sm:$0xf]
      %v1029 = vld [vmem:[%s1017 + $0x2c] sm:$0xf]
      %v1030 = vld [vmem:[%s1017 + $0x30] sm:$0xf]
      %v1031 = vld [vmem:[%s1017 + $0x34] sm:$0xf]
      %v1032 = vld [vmem:[%s1017 + $0x38] sm:$0xf]
      %v1033 = vld [vmem:[%s1017 + $0x3c] sm:$0xf]
      %v1034 = vld [vmem:[%s1017 + $0x40] sm:$0xf]
      %v1035 = vld [vmem:[%s1017 + $0x44] sm:$0xf]
      %v1036 = vld [vmem:[%s1017 + $0x48] sm:$0xf]
      %v1037 = vld [vmem:[%s1017 + $0x4c] sm:$0xf]
      %v1038 = vld [vmem:[%s1017 + $0x50] sm:$0xf]
      %v1039 = vld [vmem:[%s1017 + $0x54] sm:$0xf]
      %v1040 = vld [vmem:[%s1017 + $0x58] sm:$0xf]
      %v1041 = vld [vmem:[%s1017 + $0x5c] sm:$0xf]
      %v1042 = vld [vmem:[%s1017 + $0x60] sm:$0xf]
      %v1043 = vld [vmem:[%s1017 + $0x64] sm:$0xf]
      %v1044 = vld [vmem:[%s1017 + $0x68] sm:$0xf]
      %v1045 = vld [vmem:[%s1017 + $0x6c] sm:$0xf]
      %v1046 = vld [vmem:[%s1017 + $0x70] sm:$0xf]
      %v1047 = vld [vmem:[%s1017 + $0x74] sm:$0xf]
      %v1048 = vld [vmem:[%s1017 + $0x78] sm:$0xf]
      %v1049 = vld [vmem:[%s1017 + $0x7c] sm:$0xf]
      %v1050 = vld [vmem:[%s1017 + $0x80] sm:$0xf]
      %v1051 = vld [vmem:[%s1017 + $0x84] sm:$0xf]
      %v1052 = vld [vmem:[%s1017 + $0x88] sm:$0xf]
      %v1053 = vld [vmem:[%s1017 + $0x8c] sm:$0xf]
      %v1054 = vld [vmem:[%s1017 + $0x90] sm:$0xf]
      %v1055 = vld [vmem:[%s1017 + $0x94] sm:$0xf]
      %v1056 = vld [vmem:[%s1017 + $0x98] sm:$0xf]
      %v1057 = vld [vmem:[%s1017 + $0x9c] sm:$0xf]
      %v1058 = vld [vmem:[%s1017 + $0xa0] sm:$0xf]
      %v1059 = vld [vmem:[%s1017 + $0xa4] sm:$0xf]
      %v1060 = vld [vmem:[%s1017 + $0xa8] sm:$0xf]
      %v1061 = vld [vmem:[%s1017 + $0xac] sm:$0xf]
      %v1062 = vld [vmem:[%s1017 + $0xb0] sm:$0xf]
      %v1063 = vld [vmem:[%s1017 + $0xb4] sm:$0xf]
      %v1064 = vld [vmem:[%s1017 + $0xb8] sm:$0xf]
      %v1065 = vld [vmem:[%s1017 + $0xbc] sm:$0xf]
      %v1066 = vld [vmem:[%s1017 + $0xc0] sm:$0xf]
      %v1067 = vld [vmem:[%s1017 + $0xc4] sm:$0xf]
      %v1068 = vld [vmem:[%s1017 + $0xc8] sm:$0xf]
      %v1069 = vld [vmem:[%s1017 + $0xcc] sm:$0xf]
      %v1070 = vld [vmem:[%s1017 + $0xd0] sm:$0xf]
      %v1071 = vld [vmem:[%s1017 + $0xd4] sm:$0xf]
      %v1072 = vld [vmem:[%s1017 + $0xd8] sm:$0xf]
      %v1073 = vld [vmem:[%s1017 + $0xdc] sm:$0xf]
      %v1074 = vld [vmem:[%s1017 + $0xe0] sm:$0xf]
      %v1075 = vld [vmem:[%s1017 + $0xe4] sm:$0xf]
      %v1076 = vld [vmem:[%s1017 + $0xe8] sm:$0xf]
      %v1077 = vld [vmem:[%s1017 + $0xec] sm:$0xf]
      %v1078 = vld [vmem:[%s1017 + $0xf0] sm:$0xf]
      %v1079 = vld [vmem:[%s1017 + $0xf4] sm:$0xf]
      %v1080 = vld [vmem:[%s1017 + $0xf8] sm:$0xf]
      %v1081 = vld [vmem:[%s1017 + $0xfc] sm:$0xf]
      %v1146 = vunpack.c.l.b16 %v1018
      %v1147 = vunpack.c.l.b16 %v1019
      %v1148 = vunpack.c.l.b16 %v1020
      %v1149 = vunpack.c.l.b16 %v1021
      %v1150 = vunpack.c.l.b16 %v1022
      %v1151 = vunpack.c.l.b16 %v1023
      %v1152 = vunpack.c.l.b16 %v1024
      %v1153 = vunpack.c.l.b16 %v1025
      %v1154 = vunpack.c.l.b16 %v1026
      %v1155 = vunpack.c.l.b16 %v1027
      %v1156 = vunpack.c.l.b16 %v1028
      %v1157 = vunpack.c.l.b16 %v1029
      %v1158 = vunpack.c.l.b16 %v1030
      %v1159 = vunpack.c.l.b16 %v1031
      %v1160 = vunpack.c.l.b16 %v1032
      %v1161 = vunpack.c.l.b16 %v1033
      %v1162 = vunpack.c.l.b16 %v1034
      %v1163 = vunpack.c.l.b16 %v1035
      %v1164 = vunpack.c.l.b16 %v1036
      %v1165 = vunpack.c.l.b16 %v1037
      %v1166 = vunpack.c.l.b16 %v1038
      %v1167 = vunpack.c.l.b16 %v1039
      %v1168 = vunpack.c.l.b16 %v1040
      %v1169 = vunpack.c.l.b16 %v1041
      %v1170 = vunpack.c.l.b16 %v1042
      %v1171 = vunpack.c.l.b16 %v1043
      %v1172 = vunpack.c.l.b16 %v1044
      %v1173 = vunpack.c.l.b16 %v1045
      %v1174 = vunpack.c.l.b16 %v1046
      %v1175 = vunpack.c.l.b16 %v1047
      %v1176 = vunpack.c.l.b16 %v1048
      %v1177 = vunpack.c.l.b16 %v1049
      %v1178 = vunpack.c.l.b16 %v1050
      %v1179 = vunpack.c.l.b16 %v1051
      %v1180 = vunpack.c.l.b16 %v1052
      %v1181 = vunpack.c.l.b16 %v1053
      %v1182 = vunpack.c.l.b16 %v1054
      %v1183 = vunpack.c.l.b16 %v1055
      %v1184 = vunpack.c.l.b16 %v1056
      %v1185 = vunpack.c.l.b16 %v1057
      %v1186 = vunpack.c.l.b16 %v1058
      %v1187 = vunpack.c.l.b16 %v1059
      %v1188 = vunpack.c.l.b16 %v1060
      %v1189 = vunpack.c.l.b16 %v1061
      %v1190 = vunpack.c.l.b16 %v1062
      %v1191 = vunpack.c.l.b16 %v1063
      %v1192 = vunpack.c.l.b16 %v1064
      %v1193 = vunpack.c.l.b16 %v1065
      %v1194 = vunpack.c.l.b16 %v1066
      %v1195 = vunpack.c.l.b16 %v1067
      %v1196 = vunpack.c.l.b16 %v1068
      %v1197 = vunpack.c.l.b16 %v1069
      %v1198 = vunpack.c.l.b16 %v1070
      %v1199 = vunpack.c.l.b16 %v1071
      %v1200 = vunpack.c.l.b16 %v1072
      %v1201 = vunpack.c.l.b16 %v1073
      %v1202 = vunpack.c.l.b16 %v1074
      %v1203 = vunpack.c.l.b16 %v1075
      %v1204 = vunpack.c.l.b16 %v1076
      %v1205 = vunpack.c.l.b16 %v1077
      %v1206 = vunpack.c.l.b16 %v1078
      %v1207 = vunpack.c.l.b16 %v1079
      %v1208 = vunpack.c.l.b16 %v1080
      %v1209 = vunpack.c.l.b16 %v1081
      %v1210 = vpack.c.b16 %v1147, %v1146
      %v1211 = vpack.c.b16 %v1149, %v1148
      %v1212 = vpack.c.b16 %v1151, %v1150
      %v1213 = vpack.c.b16 %v1153, %v1152
      %v1214 = vpack.c.b16 %v1155, %v1154
      %v1215 = vpack.c.b16 %v1157, %v1156
      %v1216 = vpack.c.b16 %v1159, %v1158
      %v1217 = vpack.c.b16 %v1161, %v1160
      %v1218 = vpack.c.b16 %v1163, %v1162
      %v1219 = vpack.c.b16 %v1165, %v1164
      %v1220 = vpack.c.b16 %v1167, %v1166
      %v1221 = vpack.c.b16 %v1169, %v1168
      %v1222 = vpack.c.b16 %v1171, %v1170
      %v1223 = vpack.c.b16 %v1173, %v1172
      %v1224 = vpack.c.b16 %v1175, %v1174
      %v1225 = vpack.c.b16 %v1177, %v1176
      %v1226 = vpack.c.b16 %v1179, %v1178
      %v1227 = vpack.c.b16 %v1181, %v1180
      %v1228 = vpack.c.b16 %v1183, %v1182
      %v1229 = vpack.c.b16 %v1185, %v1184
      %v1230 = vpack.c.b16 %v1187, %v1186
      %v1231 = vpack.c.b16 %v1189, %v1188
      %v1232 = vpack.c.b16 %v1191, %v1190
      %v1233 = vpack.c.b16 %v1193, %v1192
      %v1234 = vpack.c.b16 %v1195, %v1194
      %v1235 = vpack.c.b16 %v1197, %v1196
      %v1236 = vpack.c.b16 %v1199, %v1198
      %v1237 = vpack.c.b16 %v1201, %v1200
      %v1238 = vpack.c.b16 %v1203, %v1202
      %v1239 = vpack.c.b16 %v1205, %v1204
      %v1240 = vpack.c.b16 %v1207, %v1206
      %v1241 = vpack.c.b16 %v1209, %v1208
      %1274 = vmatprep.subr.bf16.mxu0 0
      %1275 = vmatpush1.bf16.msra.mxu0 %v1217
      %1276 = vmatprep.subr.bf16.mxu0 0
      %1277 = vmatpush1.bf16.msra.mxu0 %v1216
      %1278 = vmatprep.subr.bf16.mxu0 0
      %1279 = vmatpush1.bf16.msra.mxu0 %v1215
      %1280 = vmatprep.subr.bf16.mxu0 0
      %1281 = vmatpush1.bf16.msra.mxu0 %v1214
      %1282 = vmatprep.subr.bf16.mxu0 0
      %1283 = vmatpush1.bf16.msra.mxu0 %v1213
      %1284 = vmatprep.subr.bf16.mxu0 0
      %1285 = vmatpush1.bf16.msra.mxu0 %v1212
      %1286 = vmatprep.subr.bf16.mxu0 0
      %1287 = vmatpush1.bf16.msra.mxu0 %v1211
      %1288 = vmatprep.subr.bf16.mxu0 0
      %1289 = vmatpush1.bf16.msra.mxu0 %v1210
      %1290 = vmatprep.subr.bf16.mxu0 0
      %1291 = vmatpush2.bf16.msra.mxu0 %v1225
      %1292 = vmatprep.subr.bf16.mxu0 0
      %1293 = vmatpush2.bf16.msra.mxu0 %v1224
      %1294 = vmatprep.subr.bf16.mxu0 0
      %1295 = vmatpush2.bf16.msra.mxu0 %v1223
      %1296 = vmatprep.subr.bf16.mxu0 0
      %1297 = vmatpush2.bf16.msra.mxu0 %v1222
      %1298 = vmatprep.subr.bf16.mxu0 0
      %1299 = vmatpush2.bf16.msra.mxu0 %v1221
      %1300 = vmatprep.subr.bf16.mxu0 0
      %1301 = vmatpush2.bf16.msra.mxu0 %v1220
      %1302 = vmatprep.subr.bf16.mxu0 0
      %1303 = vmatpush2.bf16.msra.mxu0 %v1219
      %1304 = vmatprep.subr.bf16.mxu0 0
      %1305 = vmatpush2.bf16.msra.mxu0 %v1218
      %1306 = vmatprep.mubr.bf16.mxu0 %v1000
      %1307 = vmatmul.mubr.bf16.gmra.mxu0 %v516
      %v1308 = vpop.f32.mrf.mxu0
      %v1309 = vadd.f32 %v612, %v1308
      %v1310 = vpop.f32.mrf.mxu0
      %v1311 = vpop.f32.mrf.mxu0
      %v1312 = vadd.f32 %v612, %v1311
      %v1313 = vpop.f32.mrf.mxu0
      %1314 = vmatprep.mubr.bf16.mxu0 %v1001
      %1315 = vmatmul.mubr.bf16.gmra.mxu0 %v517
      %v1316 = vpop.f32.mrf.mxu0
      %v1317 = vadd.f32 %v612, %v1316
      %v1318 = vpop.f32.mrf.mxu0
      %v1319 = vpop.f32.mrf.mxu0
      %v1320 = vadd.f32 %v612, %v1319
      %v1321 = vpop.f32.mrf.mxu0
      %1322 = vmatprep.mubr.bf16.mxu0 %v1002
      %1323 = vmatmul.mubr.bf16.gmra.mxu0 %v518
      %v1324 = vpop.f32.mrf.mxu0
      %v1325 = vadd.f32 %v612, %v1324
      %v1326 = vpop.f32.mrf.mxu0
      %v1327 = vpop.f32.mrf.mxu0
      %v1328 = vadd.f32 %v612, %v1327
      %v1329 = vpop.f32.mrf.mxu0
      %1330 = vmatprep.mubr.bf16.mxu0 %v1003
      %1331 = vmatmul.mubr.bf16.gmra.mxu0 %v519
      %v1332 = vpop.f32.mrf.mxu0
      %v1333 = vadd.f32 %v612, %v1332
      %v1334 = vpop.f32.mrf.mxu0
      %v1335 = vpop.f32.mrf.mxu0
      %v1336 = vadd.f32 %v612, %v1335
      %v1337 = vpop.f32.mrf.mxu0
      %1338 = vdwg.mxu0
      %1339 = vmatprep.subr.bf16.mxu0 0
      %1340 = vmatpush1.bf16.msra.mxu0 %v1233
      %1341 = vmatprep.subr.bf16.mxu0 0
      %1342 = vmatpush1.bf16.msra.mxu0 %v1232
      %1343 = vmatprep.subr.bf16.mxu0 0
      %1344 = vmatpush1.bf16.msra.mxu0 %v1231
      %1345 = vmatprep.subr.bf16.mxu0 0
      %1346 = vmatpush1.bf16.msra.mxu0 %v1230
      %1347 = vmatprep.subr.bf16.mxu0 0
      %1348 = vmatpush1.bf16.msra.mxu0 %v1229
      %1349 = vmatprep.subr.bf16.mxu0 0
      %1350 = vmatpush1.bf16.msra.mxu0 %v1228
      %1351 = vmatprep.subr.bf16.mxu0 0
      %1352 = vmatpush1.bf16.msra.mxu0 %v1227
      %1353 = vmatprep.subr.bf16.mxu0 0
      %1354 = vmatpush1.bf16.msra.mxu0 %v1226
      %1355 = vmatprep.subr.bf16.mxu0 0
      %1356 = vmatpush2.bf16.msra.mxu0 %v1241
      %1357 = vmatprep.subr.bf16.mxu0 0
      %1358 = vmatpush2.bf16.msra.mxu0 %v1240
      %1359 = vmatprep.subr.bf16.mxu0 0
      %1360 = vmatpush2.bf16.msra.mxu0 %v1239
      %1361 = vmatprep.subr.bf16.mxu0 0
      %1362 = vmatpush2.bf16.msra.mxu0 %v1238
      %1363 = vmatprep.subr.bf16.mxu0 0
      %1364 = vmatpush2.bf16.msra.mxu0 %v1237
      %1365 = vmatprep.subr.bf16.mxu0 0
      %1366 = vmatpush2.bf16.msra.mxu0 %v1236
      %1367 = vmatprep.subr.bf16.mxu0 0
      %1368 = vmatpush2.bf16.msra.mxu0 %v1235
      %1369 = vmatprep.subr.bf16.mxu0 0
      %1370 = vmatpush2.bf16.msra.mxu0 %v1234
      %1371 = vmatprep.mubr.bf16.mxu0 %v1009
      %1372 = vmatmul.mubr.bf16.gmra.mxu0 %v535
      %v1373 = vpop.f32.mrf.mxu0
      %v1374 = vadd.f32 %v1309, %v1373
      %v1375 = vpop.f32.mrf.mxu0
      %v1376 = vpop.f32.mrf.mxu0
      %v1377 = vadd.f32 %v1312, %v1376
      %v1378 = vpop.f32.mrf.mxu0
      %1379 = vmatprep.mubr.bf16.mxu0 %v1010
      %1380 = vmatmul.mubr.bf16.gmra.mxu0 %v536
      %v1381 = vpop.f32.mrf.mxu0
      %v1382 = vadd.f32 %v1317, %v1381
      %v1383 = vpop.f32.mrf.mxu0
      %v1384 = vpop.f32.mrf.mxu0
      %v1385 = vadd.f32 %v1320, %v1384
      %v1386 = vpop.f32.mrf.mxu0
      %1387 = vmatprep.mubr.bf16.mxu0 %v1011
      %1388 = vmatmul.mubr.bf16.gmra.mxu0 %v537
      %v1389 = vpop.f32.mrf.mxu0
      %v1390 = vadd.f32 %v1325, %v1389
      %v1391 = vpop.f32.mrf.mxu0
      %v1392 = vpop.f32.mrf.mxu0
      %v1393 = vadd.f32 %v1328, %v1392
      %v1394 = vpop.f32.mrf.mxu0
      %1395 = vmatprep.mubr.bf16.mxu0 %v1012
      %1396 = vmatmul.mubr.bf16.gmra.mxu0 %v538
      %v1397 = vpop.f32.mrf.mxu0
      %v1398 = vadd.f32 %v1333, %v1397
      %v1399 = vpop.f32.mrf.mxu0
      %v1400 = vpop.f32.mrf.mxu0
      %v1401 = vadd.f32 %v1336, %v1400
      %v1402 = vpop.f32.mrf.mxu0
      %1403 = vdwg.mxu0
      %v1404 = vmax.f32 %v1374, 0.0
      %v1405 = vmax.f32 %v1377, 0.0
      %v1406 = vmax.f32 %v1382, 0.0
      %v1407 = vmax.f32 %v1385, 0.0
      %v1408 = vmax.f32 %v1390, 0.0
      %v1409 = vmax.f32 %v1393, 0.0
      %v1410 = vmax.f32 %v1398, 0.0
      %v1411 = vmax.f32 %v1401, 0.0
      %v1412 = vpack.c.bf16 %v936, %v936
      %v1413 = vpack.c.bf16 %v1404, %v1404
      %v1414 = vpack.c.bf16 %v937, %v937
      %v1415 = vpack.c.bf16 %v1405, %v1405
      %v1416 = vpack.c.bf16 %v938, %v938
      %v1417 = vpack.c.bf16 %v1406, %v1406
      %v1418 = vpack.c.bf16 %v939, %v939
      %v1419 = vpack.c.bf16 %v1407, %v1407
      %v1420 = vpack.c.bf16 %v940, %v940
      %v1421 = vpack.c.bf16 %v1408, %v1408
      %v1422 = vpack.c.bf16 %v941, %v941
      %v1423 = vpack.c.bf16 %v1409, %v1409
      %v1424 = vpack.c.bf16 %v942, %v942
      %v1425 = vpack.c.bf16 %v1410, %v1410
      %v1426 = vpack.c.bf16 %v943, %v943
      %v1427 = vpack.c.bf16 %v1411, %v1411
      %v1444 = vunpack.c.l.b16 %v1412
      %v1445 = vunpack.c.l.b16 %v1413
      %v1446 = vunpack.c.l.b16 %v1414
      %v1447 = vunpack.c.l.b16 %v1415
      %v1448 = vunpack.c.l.b16 %v1416
      %v1449 = vunpack.c.l.b16 %v1417
      %v1450 = vunpack.c.l.b16 %v1418
      %v1451 = vunpack.c.l.b16 %v1419
      %v1452 = vunpack.c.l.b16 %v1420
      %v1453 = vunpack.c.l.b16 %v1421
      %v1454 = vunpack.c.l.b16 %v1422
      %v1455 = vunpack.c.l.b16 %v1423
      %v1456 = vunpack.c.l.b16 %v1424
      %v1457 = vunpack.c.l.b16 %v1425
      %v1458 = vunpack.c.l.b16 %v1426
      %v1459 = vunpack.c.l.b16 %v1427
      %v1460 = vpack.c.b16 %v1445, %v1444
      %v1461 = vpack.c.b16 %v1447, %v1446
      %v1462 = vpack.c.b16 %v1449, %v1448
      %v1463 = vpack.c.b16 %v1451, %v1450
      %v1464 = vpack.c.b16 %v1453, %v1452
      %v1465 = vpack.c.b16 %v1455, %v1454
      %v1466 = vpack.c.b16 %v1457, %v1456
      %v1467 = vpack.c.b16 %v1459, %v1458
      %1476 = vst [vmem:[%s170] sm:$0xff] %v1460
      %1477 = vst [vmem:[%s170 + $0x10] sm:$0xff] %v1461
      %1478 = vst [vmem:[%s170 + $0x20] sm:$0xff] %v1462
      %1479 = vst [vmem:[%s170 + $0x30] sm:$0xff] %v1463
      %1480 = vst [vmem:[%s170 + $0x40] sm:$0xff] %v1464
      %1481 = vst [vmem:[%s170 + $0x50] sm:$0xff] %v1465
      %1482 = vst [vmem:[%s170 + $0x60] sm:$0xff] %v1466
      %1483 = vst [vmem:[%s170 + $0x70] sm:$0xff] %v1467
      %v1485 = vshrl.u32 %v353, 16
      %v1487 = vrot.slane %v1485, 4
      %v1488 = vshll.u32 %v353, 16
      %v1490 = vrot.slane %v1488, 5
      %v1491 = vor.u32 %v1487, %v1490
      %v1492 = vrot.slane %v1491, 4
      %v1494 = vshll.u32 %v354, 16
      %v1496 = vrot.slane %v1494, 5
      %v1497 = vsel %vm357, %v1492, %v1496
      %v1499 = vunpack.c.l.b16 %v353
      %v1500 = vpack.c.b16 %v1499, %v525
      %v1502 = vunpack.c.l.b16 %v1497
      %v1503 = vpack.c.b16 %v1502, %v534
      %s1505 = scalar_lea.vmem %s1, 512
      %v1506 = vld [vmem:[%s1505] sm:$0xf]
      %v1507 = vld [vmem:[%s1505 + $0x4] sm:$0xf]
      %v1508 = vld [vmem:[%s1505 + $0x8] sm:$0xf]
      %v1509 = vld [vmem:[%s1505 + $0xc] sm:$0xf]
      %v1510 = vld [vmem:[%s1505 + $0x10] sm:$0xf]
      %v1511 = vld [vmem:[%s1505 + $0x14] sm:$0xf]
      %v1512 = vld [vmem:[%s1505 + $0x18] sm:$0xf]
      %v1513 = vld [vmem:[%s1505 + $0x1c] sm:$0xf]
      %v1514 = vld [vmem:[%s1505 + $0x20] sm:$0xf]
      %v1515 = vld [vmem:[%s1505 + $0x24] sm:$0xf]
      %v1516 = vld [vmem:[%s1505 + $0x28] sm:$0xf]
      %v1517 = vld [vmem:[%s1505 + $0x2c] sm:$0xf]
      %v1518 = vld [vmem:[%s1505 + $0x30] sm:$0xf]
      %v1519 = vld [vmem:[%s1505 + $0x34] sm:$0xf]
      %v1520 = vld [vmem:[%s1505 + $0x38] sm:$0xf]
      %v1521 = vld [vmem:[%s1505 + $0x3c] sm:$0xf]
      %v1522 = vld [vmem:[%s1505 + $0x40] sm:$0xf]
      %v1523 = vld [vmem:[%s1505 + $0x44] sm:$0xf]
      %v1524 = vld [vmem:[%s1505 + $0x48] sm:$0xf]
      %v1525 = vld [vmem:[%s1505 + $0x4c] sm:$0xf]
      %v1526 = vld [vmem:[%s1505 + $0x50] sm:$0xf]
      %v1527 = vld [vmem:[%s1505 + $0x54] sm:$0xf]
      %v1528 = vld [vmem:[%s1505 + $0x58] sm:$0xf]
      %v1529 = vld [vmem:[%s1505 + $0x5c] sm:$0xf]
      %v1530 = vld [vmem:[%s1505 + $0x60] sm:$0xf]
      %v1531 = vld [vmem:[%s1505 + $0x64] sm:$0xf]
      %v1532 = vld [vmem:[%s1505 + $0x68] sm:$0xf]
      %v1533 = vld [vmem:[%s1505 + $0x6c] sm:$0xf]
      %v1534 = vld [vmem:[%s1505 + $0x70] sm:$0xf]
      %v1535 = vld [vmem:[%s1505 + $0x74] sm:$0xf]
      %v1536 = vld [vmem:[%s1505 + $0x78] sm:$0xf]
      %v1537 = vld [vmem:[%s1505 + $0x7c] sm:$0xf]
      %v1538 = vld [vmem:[%s1505 + $0x80] sm:$0xf]
      %v1539 = vld [vmem:[%s1505 + $0x84] sm:$0xf]
      %v1540 = vld [vmem:[%s1505 + $0x88] sm:$0xf]
      %v1541 = vld [vmem:[%s1505 + $0x8c] sm:$0xf]
      %v1542 = vld [vmem:[%s1505 + $0x90] sm:$0xf]
      %v1543 = vld [vmem:[%s1505 + $0x94] sm:$0xf]
      %v1544 = vld [vmem:[%s1505 + $0x98] sm:$0xf]
      %v1545 = vld [vmem:[%s1505 + $0x9c] sm:$0xf]
      %v1546 = vld [vmem:[%s1505 + $0xa0] sm:$0xf]
      %v1547 = vld [vmem:[%s1505 + $0xa4] sm:$0xf]
      %v1548 = vld [vmem:[%s1505 + $0xa8] sm:$0xf]
      %v1549 = vld [vmem:[%s1505 + $0xac] sm:$0xf]
      %v1550 = vld [vmem:[%s1505 + $0xb0] sm:$0xf]
      %v1551 = vld [vmem:[%s1505 + $0xb4] sm:$0xf]
      %v1552 = vld [vmem:[%s1505 + $0xb8] sm:$0xf]
      %v1553 = vld [vmem:[%s1505 + $0xbc] sm:$0xf]
      %v1554 = vld [vmem:[%s1505 + $0xc0] sm:$0xf]
      %v1555 = vld [vmem:[%s1505 + $0xc4] sm:$0xf]
      %v1556 = vld [vmem:[%s1505 + $0xc8] sm:$0xf]
      %v1557 = vld [vmem:[%s1505 + $0xcc] sm:$0xf]
      %v1558 = vld [vmem:[%s1505 + $0xd0] sm:$0xf]
      %v1559 = vld [vmem:[%s1505 + $0xd4] sm:$0xf]
      %v1560 = vld [vmem:[%s1505 + $0xd8] sm:$0xf]
      %v1561 = vld [vmem:[%s1505 + $0xdc] sm:$0xf]
      %v1562 = vld [vmem:[%s1505 + $0xe0] sm:$0xf]
      %v1563 = vld [vmem:[%s1505 + $0xe4] sm:$0xf]
      %v1564 = vld [vmem:[%s1505 + $0xe8] sm:$0xf]
      %v1565 = vld [vmem:[%s1505 + $0xec] sm:$0xf]
      %v1566 = vld [vmem:[%s1505 + $0xf0] sm:$0xf]
      %v1567 = vld [vmem:[%s1505 + $0xf4] sm:$0xf]
      %v1568 = vld [vmem:[%s1505 + $0xf8] sm:$0xf]
      %v1569 = vld [vmem:[%s1505 + $0xfc] sm:$0xf]
      %v1570 = vld [vmem:[%s2] sm:$0x1]
      %v1572 = vlaneseq
      %v1573 = vshrl.u32 %v1572, 7
      %v1574 = vsub.s32 0, %v1573
      %v1575 = vrot.slane %v1570, %v1574
      %v1641 = vunpack.c.l.b16 %v1506
      %v1642 = vunpack.c.l.b16 %v1507
      %v1643 = vunpack.c.l.b16 %v1508
      %v1644 = vunpack.c.l.b16 %v1509
      %v1645 = vunpack.c.l.b16 %v1510
      %v1646 = vunpack.c.l.b16 %v1511
      %v1647 = vunpack.c.l.b16 %v1512
      %v1648 = vunpack.c.l.b16 %v1513
      %v1649 = vunpack.c.l.b16 %v1514
      %v1650 = vunpack.c.l.b16 %v1515
      %v1651 = vunpack.c.l.b16 %v1516
      %v1652 = vunpack.c.l.b16 %v1517
      %v1653 = vunpack.c.l.b16 %v1518
      %v1654 = vunpack.c.l.b16 %v1519
      %v1655 = vunpack.c.l.b16 %v1520
      %v1656 = vunpack.c.l.b16 %v1521
      %v1657 = vunpack.c.l.b16 %v1522
      %v1658 = vunpack.c.l.b16 %v1523
      %v1659 = vunpack.c.l.b16 %v1524
      %v1660 = vunpack.c.l.b16 %v1525
      %v1661 = vunpack.c.l.b16 %v1526
      %v1662 = vunpack.c.l.b16 %v1527
      %v1663 = vunpack.c.l.b16 %v1528
      %v1664 = vunpack.c.l.b16 %v1529
      %v1665 = vunpack.c.l.b16 %v1530
      %v1666 = vunpack.c.l.b16 %v1531
      %v1667 = vunpack.c.l.b16 %v1532
      %v1668 = vunpack.c.l.b16 %v1533
      %v1669 = vunpack.c.l.b16 %v1534
      %v1670 = vunpack.c.l.b16 %v1535
      %v1671 = vunpack.c.l.b16 %v1536
      %v1672 = vunpack.c.l.b16 %v1537
      %v1673 = vunpack.c.l.b16 %v1538
      %v1674 = vunpack.c.l.b16 %v1539
      %v1675 = vunpack.c.l.b16 %v1540
      %v1676 = vunpack.c.l.b16 %v1541
      %v1677 = vunpack.c.l.b16 %v1542
      %v1678 = vunpack.c.l.b16 %v1543
      %v1679 = vunpack.c.l.b16 %v1544
      %v1680 = vunpack.c.l.b16 %v1545
      %v1681 = vunpack.c.l.b16 %v1546
      %v1682 = vunpack.c.l.b16 %v1547
      %v1683 = vunpack.c.l.b16 %v1548
      %v1684 = vunpack.c.l.b16 %v1549
      %v1685 = vunpack.c.l.b16 %v1550
      %v1686 = vunpack.c.l.b16 %v1551
      %v1687 = vunpack.c.l.b16 %v1552
      %v1688 = vunpack.c.l.b16 %v1553
      %v1689 = vunpack.c.l.b16 %v1554
      %v1690 = vunpack.c.l.b16 %v1555
      %v1691 = vunpack.c.l.b16 %v1556
      %v1692 = vunpack.c.l.b16 %v1557
      %v1693 = vunpack.c.l.b16 %v1558
      %v1694 = vunpack.c.l.b16 %v1559
      %v1695 = vunpack.c.l.b16 %v1560
      %v1696 = vunpack.c.l.b16 %v1561
      %v1697 = vunpack.c.l.b16 %v1562
      %v1698 = vunpack.c.l.b16 %v1563
      %v1699 = vunpack.c.l.b16 %v1564
      %v1700 = vunpack.c.l.b16 %v1565
      %v1701 = vunpack.c.l.b16 %v1566
      %v1702 = vunpack.c.l.b16 %v1567
      %v1703 = vunpack.c.l.b16 %v1568
      %v1704 = vunpack.c.l.b16 %v1569
      %v1705 = vpack.c.b16 %v1642, %v1641
      %v1706 = vpack.c.b16 %v1644, %v1643
      %v1707 = vpack.c.b16 %v1646, %v1645
      %v1708 = vpack.c.b16 %v1648, %v1647
      %v1709 = vpack.c.b16 %v1650, %v1649
      %v1710 = vpack.c.b16 %v1652, %v1651
      %v1711 = vpack.c.b16 %v1654, %v1653
      %v1712 = vpack.c.b16 %v1656, %v1655
      %v1713 = vpack.c.b16 %v1658, %v1657
      %v1714 = vpack.c.b16 %v1660, %v1659
      %v1715 = vpack.c.b16 %v1662, %v1661
      %v1716 = vpack.c.b16 %v1664, %v1663
      %v1717 = vpack.c.b16 %v1666, %v1665
      %v1718 = vpack.c.b16 %v1668, %v1667
      %v1719 = vpack.c.b16 %v1670, %v1669
      %v1720 = vpack.c.b16 %v1672, %v1671
      %v1721 = vpack.c.b16 %v1674, %v1673
      %v1722 = vpack.c.b16 %v1676, %v1675
      %v1723 = vpack.c.b16 %v1678, %v1677
      %v1724 = vpack.c.b16 %v1680, %v1679
      %v1725 = vpack.c.b16 %v1682, %v1681
      %v1726 = vpack.c.b16 %v1684, %v1683
      %v1727 = vpack.c.b16 %v1686, %v1685
      %v1728 = vpack.c.b16 %v1688, %v1687
      %v1729 = vpack.c.b16 %v1690, %v1689
      %v1730 = vpack.c.b16 %v1692, %v1691
      %v1731 = vpack.c.b16 %v1694, %v1693
      %v1732 = vpack.c.b16 %v1696, %v1695
      %v1733 = vpack.c.b16 %v1698, %v1697
      %v1734 = vpack.c.b16 %v1700, %v1699
      %v1735 = vpack.c.b16 %v1702, %v1701
      %v1736 = vpack.c.b16 %v1704, %v1703
      %1769 = vmatprep.subr.bf16.mxu0 0
      %1770 = vmatpush1.bf16.msra.mxu0 %v1712
      %1771 = vmatprep.subr.bf16.mxu0 0
      %1772 = vmatpush1.bf16.msra.mxu0 %v1711
      %1773 = vmatprep.subr.bf16.mxu0 0
      %1774 = vmatpush1.bf16.msra.mxu0 %v1710
      %1775 = vmatprep.subr.bf16.mxu0 0
      %1776 = vmatpush1.bf16.msra.mxu0 %v1709
      %1777 = vmatprep.subr.bf16.mxu0 0
      %1778 = vmatpush1.bf16.msra.mxu0 %v1708
      %1779 = vmatprep.subr.bf16.mxu0 0
      %1780 = vmatpush1.bf16.msra.mxu0 %v1707
      %1781 = vmatprep.subr.bf16.mxu0 0
      %1782 = vmatpush1.bf16.msra.mxu0 %v1706
      %1783 = vmatprep.subr.bf16.mxu0 0
      %1784 = vmatpush1.bf16.msra.mxu0 %v1705
      %1785 = vmatprep.subr.bf16.mxu0 0
      %1786 = vmatpush2.bf16.msra.mxu0 %v1720
      %1787 = vmatprep.subr.bf16.mxu0 0
      %1788 = vmatpush2.bf16.msra.mxu0 %v1719
      %1789 = vmatprep.subr.bf16.mxu0 0
      %1790 = vmatpush2.bf16.msra.mxu0 %v1718
      %1791 = vmatprep.subr.bf16.mxu0 0
      %1792 = vmatpush2.bf16.msra.mxu0 %v1717
      %1793 = vmatprep.subr.bf16.mxu0 0
      %1794 = vmatpush2.bf16.msra.mxu0 %v1716
      %1795 = vmatprep.subr.bf16.mxu0 0
      %1796 = vmatpush2.bf16.msra.mxu0 %v1715
      %1797 = vmatprep.subr.bf16.mxu0 0
      %1798 = vmatpush2.bf16.msra.mxu0 %v1714
      %1799 = vmatprep.subr.bf16.mxu0 0
      %1800 = vmatpush2.bf16.msra.mxu0 %v1713
      %1801 = vmatprep.mubr.bf16.mxu0 %v535
      %1802 = vmatmul.mubr.bf16.gmra.mxu0 %v526
      %v1803 = vpop.f32.mrf.mxu0
      %v1804 = vadd.f32 %v1575, %v1803
      %v1805 = vpop.f32.mrf.mxu0
      %v1806 = vpop.f32.mrf.mxu0
      %v1807 = vadd.f32 %v1575, %v1806
      %v1808 = vpop.f32.mrf.mxu0
      %1809 = vmatprep.mubr.bf16.mxu0 %v536
      %1810 = vmatmul.mubr.bf16.gmra.mxu0 %v527
      %v1811 = vpop.f32.mrf.mxu0
      %v1812 = vadd.f32 %v1575, %v1811
      %v1813 = vpop.f32.mrf.mxu0
      %v1814 = vpop.f32.mrf.mxu0
      %v1815 = vadd.f32 %v1575, %v1814
      %v1816 = vpop.f32.mrf.mxu0
      %1817 = vmatprep.mubr.bf16.mxu0 %v537
      %1818 = vmatmul.mubr.bf16.gmra.mxu0 %v528
      %v1819 = vpop.f32.mrf.mxu0
      %v1820 = vadd.f32 %v1575, %v1819
      %v1821 = vpop.f32.mrf.mxu0
      %v1822 = vpop.f32.mrf.mxu0
      %v1823 = vadd.f32 %v1575, %v1822
      %v1824 = vpop.f32.mrf.mxu0
      %1825 = vmatprep.mubr.bf16.mxu0 %v538
      %1826 = vmatmul.mubr.bf16.gmra.mxu0 %v529
      %v1827 = vpop.f32.mrf.mxu0
      %v1828 = vadd.f32 %v1575, %v1827
      %v1829 = vpop.f32.mrf.mxu0
      %v1830 = vpop.f32.mrf.mxu0
      %v1831 = vadd.f32 %v1575, %v1830
      %v1832 = vpop.f32.mrf.mxu0
      %1833 = vdwg.mxu0
      %1834 = vmatprep.subr.bf16.mxu0 0
      %1835 = vmatpush1.bf16.msra.mxu0 %v1728
      %1836 = vmatprep.subr.bf16.mxu0 0
      %1837 = vmatpush1.bf16.msra.mxu0 %v1727
      %1838 = vmatprep.subr.bf16.mxu0 0
      %1839 = vmatpush1.bf16.msra.mxu0 %v1726
      %1840 = vmatprep.subr.bf16.mxu0 0
      %1841 = vmatpush1.bf16.msra.mxu0 %v1725
      %1842 = vmatprep.subr.bf16.mxu0 0
      %1843 = vmatpush1.bf16.msra.mxu0 %v1724
      %1844 = vmatprep.subr.bf16.mxu0 0
      %1845 = vmatpush1.bf16.msra.mxu0 %v1723
      %1846 = vmatprep.subr.bf16.mxu0 0
      %1847 = vmatpush1.bf16.msra.mxu0 %v1722
      %1848 = vmatprep.subr.bf16.mxu0 0
      %1849 = vmatpush1.bf16.msra.mxu0 %v1721
      %1850 = vmatprep.subr.bf16.mxu0 0
      %1851 = vmatpush2.bf16.msra.mxu0 %v1736
      %1852 = vmatprep.subr.bf16.mxu0 0
      %1853 = vmatpush2.bf16.msra.mxu0 %v1735
      %1854 = vmatprep.subr.bf16.mxu0 0
      %1855 = vmatpush2.bf16.msra.mxu0 %v1734
      %1856 = vmatprep.subr.bf16.mxu0 0
      %1857 = vmatpush2.bf16.msra.mxu0 %v1733
      %1858 = vmatprep.subr.bf16.mxu0 0
      %1859 = vmatpush2.bf16.msra.mxu0 %v1732
      %1860 = vmatprep.subr.bf16.mxu0 0
      %1861 = vmatpush2.bf16.msra.mxu0 %v1731
      %1862 = vmatprep.subr.bf16.mxu0 0
      %1863 = vmatpush2.bf16.msra.mxu0 %v1730
      %1864 = vmatprep.subr.bf16.mxu0 0
      %1865 = vmatpush2.bf16.msra.mxu0 %v1729
      %1866 = vmatprep.mubr.bf16.mxu0 %v517
      %1867 = vmatmul.mubr.bf16.gmra.mxu0 %v501
      %v1868 = vpop.f32.mrf.mxu0
      %v1869 = vadd.f32 %v1804, %v1868
      %v1870 = vpop.f32.mrf.mxu0
      %v1871 = vpop.f32.mrf.mxu0
      %v1872 = vadd.f32 %v1807, %v1871
      %v1873 = vpop.f32.mrf.mxu0
      %1874 = vmatprep.mubr.bf16.mxu0 %v518
      %1875 = vmatmul.mubr.bf16.gmra.mxu0 %v502
      %v1876 = vpop.f32.mrf.mxu0
      %v1877 = vadd.f32 %v1812, %v1876
      %v1878 = vpop.f32.mrf.mxu0
      %v1879 = vpop.f32.mrf.mxu0
      %v1880 = vadd.f32 %v1815, %v1879
      %v1881 = vpop.f32.mrf.mxu0
      %1882 = vmatprep.mubr.bf16.mxu0 %v519
      %1883 = vmatmul.mubr.bf16.gmra.mxu0 %v503
      %v1884 = vpop.f32.mrf.mxu0
      %v1885 = vadd.f32 %v1820, %v1884
      %v1886 = vpop.f32.mrf.mxu0
      %v1887 = vpop.f32.mrf.mxu0
      %v1888 = vadd.f32 %v1823, %v1887
      %v1889 = vpop.f32.mrf.mxu0
      %1890 = vmatprep.mubr.bf16.mxu0 %v1503
      %1891 = vmatmul.mubr.bf16.gmra.mxu0 %v1500
      %v1892 = vpop.f32.mrf.mxu0
      %v1893 = vadd.f32 %v1828, %v1892
      %v1894 = vpop.f32.mrf.mxu0
      %v1895 = vpop.f32.mrf.mxu0
      %v1896 = vadd.f32 %v1831, %v1895
      %v1897 = vpop.f32.mrf.mxu0
      %1898 = vdwg.mxu0
      %v1899 = vmax.f32 %v1869, 0.0
      %v1900 = vmax.f32 %v1872, 0.0
      %v1901 = vmax.f32 %v1877, 0.0
      %v1902 = vmax.f32 %v1880, 0.0
      %v1903 = vmax.f32 %v1885, 0.0
      %v1904 = vmax.f32 %v1888, 0.0
      %v1905 = vmax.f32 %v1893, 0.0
      %v1906 = vmax.f32 %v1896, 0.0
      %v1908 = vrot.slane %v353, 5
      %v1909 = vrot.slane %v1908, 4
      %v1910 = vrot.slane %v354, 5
      %v1911 = vsel %vm954, %v1909, %v1910
      %v1912 = vunpack.c.l.b16 %v1911
      %v1913 = vpack.c.b16 %v1912, %v1008
      %s1915 = scalar_lea.vmem %s1, 768
      %v1916 = vld [vmem:[%s1915] sm:$0xf]
      %v1917 = vld [vmem:[%s1915 + $0x4] sm:$0xf]
      %v1918 = vld [vmem:[%s1915 + $0x8] sm:$0xf]
      %v1919 = vld [vmem:[%s1915 + $0xc] sm:$0xf]
      %v1920 = vld [vmem:[%s1915 + $0x10] sm:$0xf]
      %v1921 = vld [vmem:[%s1915 + $0x14] sm:$0xf]
      %v1922 = vld [vmem:[%s1915 + $0x18] sm:$0xf]
      %v1923 = vld [vmem:[%s1915 + $0x1c] sm:$0xf]
      %v1924 = vld [vmem:[%s1915 + $0x20] sm:$0xf]
      %v1925 = vld [vmem:[%s1915 + $0x24] sm:$0xf]
      %v1926 = vld [vmem:[%s1915 + $0x28] sm:$0xf]
      %v1927 = vld [vmem:[%s1915 + $0x2c] sm:$0xf]
      %v1928 = vld [vmem:[%s1915 + $0x30] sm:$0xf]
      %v1929 = vld [vmem:[%s1915 + $0x34] sm:$0xf]
      %v1930 = vld [vmem:[%s1915 + $0x38] sm:$0xf]
      %v1931 = vld [vmem:[%s1915 + $0x3c] sm:$0xf]
      %v1932 = vld [vmem:[%s1915 + $0x40] sm:$0xf]
      %v1933 = vld [vmem:[%s1915 + $0x44] sm:$0xf]
      %v1934 = vld [vmem:[%s1915 + $0x48] sm:$0xf]
      %v1935 = vld [vmem:[%s1915 + $0x4c] sm:$0xf]
      %v1936 = vld [vmem:[%s1915 + $0x50] sm:$0xf]
      %v1937 = vld [vmem:[%s1915 + $0x54] sm:$0xf]
      %v1938 = vld [vmem:[%s1915 + $0x58] sm:$0xf]
      %v1939 = vld [vmem:[%s1915 + $0x5c] sm:$0xf]
      %v1940 = vld [vmem:[%s1915 + $0x60] sm:$0xf]
      %v1941 = vld [vmem:[%s1915 + $0x64] sm:$0xf]
      %v1942 = vld [vmem:[%s1915 + $0x68] sm:$0xf]
      %v1943 = vld [vmem:[%s1915 + $0x6c] sm:$0xf]
      %v1944 = vld [vmem:[%s1915 + $0x70] sm:$0xf]
      %v1945 = vld [vmem:[%s1915 + $0x74] sm:$0xf]
      %v1946 = vld [vmem:[%s1915 + $0x78] sm:$0xf]
      %v1947 = vld [vmem:[%s1915 + $0x7c] sm:$0xf]
      %v1948 = vld [vmem:[%s1915 + $0x80] sm:$0xf]
      %v1949 = vld [vmem:[%s1915 + $0x84] sm:$0xf]
      %v1950 = vld [vmem:[%s1915 + $0x88] sm:$0xf]
      %v1951 = vld [vmem:[%s1915 + $0x8c] sm:$0xf]
      %v1952 = vld [vmem:[%s1915 + $0x90] sm:$0xf]
      %v1953 = vld [vmem:[%s1915 + $0x94] sm:$0xf]
      %v1954 = vld [vmem:[%s1915 + $0x98] sm:$0xf]
      %v1955 = vld [vmem:[%s1915 + $0x9c] sm:$0xf]
      %v1956 = vld [vmem:[%s1915 + $0xa0] sm:$0xf]
      %v1957 = vld [vmem:[%s1915 + $0xa4] sm:$0xf]
      %v1958 = vld [vmem:[%s1915 + $0xa8] sm:$0xf]
      %v1959 = vld [vmem:[%s1915 + $0xac] sm:$0xf]
      %v1960 = vld [vmem:[%s1915 + $0xb0] sm:$0xf]
      %v1961 = vld [vmem:[%s1915 + $0xb4] sm:$0xf]
      %v1962 = vld [vmem:[%s1915 + $0xb8] sm:$0xf]
      %v1963 = vld [vmem:[%s1915 + $0xbc] sm:$0xf]
      %v1964 = vld [vmem:[%s1915 + $0xc0] sm:$0xf]
      %v1965 = vld [vmem:[%s1915 + $0xc4] sm:$0xf]
      %v1966 = vld [vmem:[%s1915 + $0xc8] sm:$0xf]
      %v1967 = vld [vmem:[%s1915 + $0xcc] sm:$0xf]
      %v1968 = vld [vmem:[%s1915 + $0xd0] sm:$0xf]
      %v1969 = vld [vmem:[%s1915 + $0xd4] sm:$0xf]
      %v1970 = vld [vmem:[%s1915 + $0xd8] sm:$0xf]
      %v1971 = vld [vmem:[%s1915 + $0xdc] sm:$0xf]
      %v1972 = vld [vmem:[%s1915 + $0xe0] sm:$0xf]
      %v1973 = vld [vmem:[%s1915 + $0xe4] sm:$0xf]
      %v1974 = vld [vmem:[%s1915 + $0xe8] sm:$0xf]
      %v1975 = vld [vmem:[%s1915 + $0xec] sm:$0xf]
      %v1976 = vld [vmem:[%s1915 + $0xf0] sm:$0xf]
      %v1977 = vld [vmem:[%s1915 + $0xf4] sm:$0xf]
      %v1978 = vld [vmem:[%s1915 + $0xf8] sm:$0xf]
      %v1979 = vld [vmem:[%s1915 + $0xfc] sm:$0xf]
      %v2044 = vunpack.c.l.b16 %v1916
      %v2045 = vunpack.c.l.b16 %v1917
      %v2046 = vunpack.c.l.b16 %v1918
      %v2047 = vunpack.c.l.b16 %v1919
      %v2048 = vunpack.c.l.b16 %v1920
      %v2049 = vunpack.c.l.b16 %v1921
      %v2050 = vunpack.c.l.b16 %v1922
      %v2051 = vunpack.c.l.b16 %v1923
      %v2052 = vunpack.c.l.b16 %v1924
      %v2053 = vunpack.c.l.b16 %v1925
      %v2054 = vunpack.c.l.b16 %v1926
      %v2055 = vunpack.c.l.b16 %v1927
      %v2056 = vunpack.c.l.b16 %v1928
      %v2057 = vunpack.c.l.b16 %v1929
      %v2058 = vunpack.c.l.b16 %v1930
      %v2059 = vunpack.c.l.b16 %v1931
      %v2060 = vunpack.c.l.b16 %v1932
      %v2061 = vunpack.c.l.b16 %v1933
      %v2062 = vunpack.c.l.b16 %v1934
      %v2063 = vunpack.c.l.b16 %v1935
      %v2064 = vunpack.c.l.b16 %v1936
      %v2065 = vunpack.c.l.b16 %v1937
      %v2066 = vunpack.c.l.b16 %v1938
      %v2067 = vunpack.c.l.b16 %v1939
      %v2068 = vunpack.c.l.b16 %v1940
      %v2069 = vunpack.c.l.b16 %v1941
      %v2070 = vunpack.c.l.b16 %v1942
      %v2071 = vunpack.c.l.b16 %v1943
      %v2072 = vunpack.c.l.b16 %v1944
      %v2073 = vunpack.c.l.b16 %v1945
      %v2074 = vunpack.c.l.b16 %v1946
      %v2075 = vunpack.c.l.b16 %v1947
      %v2076 = vunpack.c.l.b16 %v1948
      %v2077 = vunpack.c.l.b16 %v1949
      %v2078 = vunpack.c.l.b16 %v1950
      %v2079 = vunpack.c.l.b16 %v1951
      %v2080 = vunpack.c.l.b16 %v1952
      %v2081 = vunpack.c.l.b16 %v1953
      %v2082 = vunpack.c.l.b16 %v1954
      %v2083 = vunpack.c.l.b16 %v1955
      %v2084 = vunpack.c.l.b16 %v1956
      %v2085 = vunpack.c.l.b16 %v1957
      %v2086 = vunpack.c.l.b16 %v1958
      %v2087 = vunpack.c.l.b16 %v1959
      %v2088 = vunpack.c.l.b16 %v1960
      %v2089 = vunpack.c.l.b16 %v1961
      %v2090 = vunpack.c.l.b16 %v1962
      %v2091 = vunpack.c.l.b16 %v1963
      %v2092 = vunpack.c.l.b16 %v1964
      %v2093 = vunpack.c.l.b16 %v1965
      %v2094 = vunpack.c.l.b16 %v1966
      %v2095 = vunpack.c.l.b16 %v1967
      %v2096 = vunpack.c.l.b16 %v1968
      %v2097 = vunpack.c.l.b16 %v1969
      %v2098 = vunpack.c.l.b16 %v1970
      %v2099 = vunpack.c.l.b16 %v1971
      %v2100 = vunpack.c.l.b16 %v1972
      %v2101 = vunpack.c.l.b16 %v1973
      %v2102 = vunpack.c.l.b16 %v1974
      %v2103 = vunpack.c.l.b16 %v1975
      %v2104 = vunpack.c.l.b16 %v1976
      %v2105 = vunpack.c.l.b16 %v1977
      %v2106 = vunpack.c.l.b16 %v1978
      %v2107 = vunpack.c.l.b16 %v1979
      %v2108 = vpack.c.b16 %v2045, %v2044
      %v2109 = vpack.c.b16 %v2047, %v2046
      %v2110 = vpack.c.b16 %v2049, %v2048
      %v2111 = vpack.c.b16 %v2051, %v2050
      %v2112 = vpack.c.b16 %v2053, %v2052
      %v2113 = vpack.c.b16 %v2055, %v2054
      %v2114 = vpack.c.b16 %v2057, %v2056
      %v2115 = vpack.c.b16 %v2059, %v2058
      %v2116 = vpack.c.b16 %v2061, %v2060
      %v2117 = vpack.c.b16 %v2063, %v2062
      %v2118 = vpack.c.b16 %v2065, %v2064
      %v2119 = vpack.c.b16 %v2067, %v2066
      %v2120 = vpack.c.b16 %v2069, %v2068
      %v2121 = vpack.c.b16 %v2071, %v2070
      %v2122 = vpack.c.b16 %v2073, %v2072
      %v2123 = vpack.c.b16 %v2075, %v2074
      %v2124 = vpack.c.b16 %v2077, %v2076
      %v2125 = vpack.c.b16 %v2079, %v2078
      %v2126 = vpack.c.b16 %v2081, %v2080
      %v2127 = vpack.c.b16 %v2083, %v2082
      %v2128 = vpack.c.b16 %v2085, %v2084
      %v2129 = vpack.c.b16 %v2087, %v2086
      %v2130 = vpack.c.b16 %v2089, %v2088
      %v2131 = vpack.c.b16 %v2091, %v2090
      %v2132 = vpack.c.b16 %v2093, %v2092
      %v2133 = vpack.c.b16 %v2095, %v2094
      %v2134 = vpack.c.b16 %v2097, %v2096
      %v2135 = vpack.c.b16 %v2099, %v2098
      %v2136 = vpack.c.b16 %v2101, %v2100
      %v2137 = vpack.c.b16 %v2103, %v2102
      %v2138 = vpack.c.b16 %v2105, %v2104
      %v2139 = vpack.c.b16 %v2107, %v2106
      %2172 = vmatprep.subr.bf16.mxu0 0
      %2173 = vmatpush1.bf16.msra.mxu0 %v2115
      %2174 = vmatprep.subr.bf16.mxu0 0
      %2175 = vmatpush1.bf16.msra.mxu0 %v2114
      %2176 = vmatprep.subr.bf16.mxu0 0
      %2177 = vmatpush1.bf16.msra.mxu0 %v2113
      %2178 = vmatprep.subr.bf16.mxu0 0
      %2179 = vmatpush1.bf16.msra.mxu0 %v2112
      %2180 = vmatprep.subr.bf16.mxu0 0
      %2181 = vmatpush1.bf16.msra.mxu0 %v2111
      %2182 = vmatprep.subr.bf16.mxu0 0
      %2183 = vmatpush1.bf16.msra.mxu0 %v2110
      %2184 = vmatprep.subr.bf16.mxu0 0
      %2185 = vmatpush1.bf16.msra.mxu0 %v2109
      %2186 = vmatprep.subr.bf16.mxu0 0
      %2187 = vmatpush1.bf16.msra.mxu0 %v2108
      %2188 = vmatprep.subr.bf16.mxu0 0
      %2189 = vmatpush2.bf16.msra.mxu0 %v2123
      %2190 = vmatprep.subr.bf16.mxu0 0
      %2191 = vmatpush2.bf16.msra.mxu0 %v2122
      %2192 = vmatprep.subr.bf16.mxu0 0
      %2193 = vmatpush2.bf16.msra.mxu0 %v2121
      %2194 = vmatprep.subr.bf16.mxu0 0
      %2195 = vmatpush2.bf16.msra.mxu0 %v2120
      %2196 = vmatprep.subr.bf16.mxu0 0
      %2197 = vmatpush2.bf16.msra.mxu0 %v2119
      %2198 = vmatprep.subr.bf16.mxu0 0
      %2199 = vmatpush2.bf16.msra.mxu0 %v2118
      %2200 = vmatprep.subr.bf16.mxu0 0
      %2201 = vmatpush2.bf16.msra.mxu0 %v2117
      %2202 = vmatprep.subr.bf16.mxu0 0
      %2203 = vmatpush2.bf16.msra.mxu0 %v2116
      %2204 = vmatprep.mubr.bf16.mxu0 %v1009
      %2205 = vmatmul.mubr.bf16.gmra.mxu0 %v535
      %v2206 = vpop.f32.mrf.mxu0
      %v2207 = vadd.f32 %v1575, %v2206
      %v2208 = vpop.f32.mrf.mxu0
      %v2209 = vpop.f32.mrf.mxu0
      %v2210 = vadd.f32 %v1575, %v2209
      %v2211 = vpop.f32.mrf.mxu0
      %2212 = vmatprep.mubr.bf16.mxu0 %v1010
      %2213 = vmatmul.mubr.bf16.gmra.mxu0 %v536
      %v2214 = vpop.f32.mrf.mxu0
      %v2215 = vadd.f32 %v1575, %v2214
      %v2216 = vpop.f32.mrf.mxu0
      %v2217 = vpop.f32.mrf.mxu0
      %v2218 = vadd.f32 %v1575, %v2217
      %v2219 = vpop.f32.mrf.mxu0
      %2220 = vmatprep.mubr.bf16.mxu0 %v1011
      %2221 = vmatmul.mubr.bf16.gmra.mxu0 %v537
      %v2222 = vpop.f32.mrf.mxu0
      %v2223 = vadd.f32 %v1575, %v2222
      %v2224 = vpop.f32.mrf.mxu0
      %v2225 = vpop.f32.mrf.mxu0
      %v2226 = vadd.f32 %v1575, %v2225
      %v2227 = vpop.f32.mrf.mxu0
      %2228 = vmatprep.mubr.bf16.mxu0 %v1012
      %2229 = vmatmul.mubr.bf16.gmra.mxu0 %v538
      %v2230 = vpop.f32.mrf.mxu0
      %v2231 = vadd.f32 %v1575, %v2230
      %v2232 = vpop.f32.mrf.mxu0
      %v2233 = vpop.f32.mrf.mxu0
      %v2234 = vadd.f32 %v1575, %v2233
      %v2235 = vpop.f32.mrf.mxu0
      %2236 = vdwg.mxu0
      %2237 = vmatprep.subr.bf16.mxu0 0
      %2238 = vmatpush1.bf16.msra.mxu0 %v2131
      %2239 = vmatprep.subr.bf16.mxu0 0
      %2240 = vmatpush1.bf16.msra.mxu0 %v2130
      %2241 = vmatprep.subr.bf16.mxu0 0
      %2242 = vmatpush1.bf16.msra.mxu0 %v2129
      %2243 = vmatprep.subr.bf16.mxu0 0
      %2244 = vmatpush1.bf16.msra.mxu0 %v2128
      %2245 = vmatprep.subr.bf16.mxu0 0
      %2246 = vmatpush1.bf16.msra.mxu0 %v2127
      %2247 = vmatprep.subr.bf16.mxu0 0
      %2248 = vmatpush1.bf16.msra.mxu0 %v2126
      %2249 = vmatprep.subr.bf16.mxu0 0
      %2250 = vmatpush1.bf16.msra.mxu0 %v2125
      %2251 = vmatprep.subr.bf16.mxu0 0
      %2252 = vmatpush1.bf16.msra.mxu0 %v2124
      %2253 = vmatprep.subr.bf16.mxu0 0
      %2254 = vmatpush2.bf16.msra.mxu0 %v2139
      %2255 = vmatprep.subr.bf16.mxu0 0
      %2256 = vmatpush2.bf16.msra.mxu0 %v2138
      %2257 = vmatprep.subr.bf16.mxu0 0
      %2258 = vmatpush2.bf16.msra.mxu0 %v2137
      %2259 = vmatprep.subr.bf16.mxu0 0
      %2260 = vmatpush2.bf16.msra.mxu0 %v2136
      %2261 = vmatprep.subr.bf16.mxu0 0
      %2262 = vmatpush2.bf16.msra.mxu0 %v2135
      %2263 = vmatprep.subr.bf16.mxu0 0
      %2264 = vmatpush2.bf16.msra.mxu0 %v2134
      %2265 = vmatprep.subr.bf16.mxu0 0
      %2266 = vmatpush2.bf16.msra.mxu0 %v2133
      %2267 = vmatprep.subr.bf16.mxu0 0
      %2268 = vmatpush2.bf16.msra.mxu0 %v2132
      %2269 = vmatprep.mubr.bf16.mxu0 %v1001
      %2270 = vmatmul.mubr.bf16.gmra.mxu0 %v517
      %v2271 = vpop.f32.mrf.mxu0
      %v2272 = vadd.f32 %v2207, %v2271
      %v2273 = vpop.f32.mrf.mxu0
      %v2274 = vpop.f32.mrf.mxu0
      %v2275 = vadd.f32 %v2210, %v2274
      %v2276 = vpop.f32.mrf.mxu0
      %2277 = vmatprep.mubr.bf16.mxu0 %v1002
      %2278 = vmatmul.mubr.bf16.gmra.mxu0 %v518
      %v2279 = vpop.f32.mrf.mxu0
      %v2280 = vadd.f32 %v2215, %v2279
      %v2281 = vpop.f32.mrf.mxu0
      %v2282 = vpop.f32.mrf.mxu0
      %v2283 = vadd.f32 %v2218, %v2282
      %v2284 = vpop.f32.mrf.mxu0
      %2285 = vmatprep.mubr.bf16.mxu0 %v1003
      %2286 = vmatmul.mubr.bf16.gmra.mxu0 %v519
      %v2287 = vpop.f32.mrf.mxu0
      %v2288 = vadd.f32 %v2223, %v2287
      %v2289 = vpop.f32.mrf.mxu0
      %v2290 = vpop.f32.mrf.mxu0
      %v2291 = vadd.f32 %v2226, %v2290
      %v2292 = vpop.f32.mrf.mxu0
      %2293 = vmatprep.mubr.bf16.mxu0 %v1913
      %2294 = vmatmul.mubr.bf16.gmra.mxu0 %v1503
      %v2295 = vpop.f32.mrf.mxu0
      %v2296 = vadd.f32 %v2231, %v2295
      %v2297 = vpop.f32.mrf.mxu0
      %v2298 = vpop.f32.mrf.mxu0
      %v2299 = vadd.f32 %v2234, %v2298
      %v2300 = vpop.f32.mrf.mxu0
      %2301 = vdwg.mxu0
      %v2302 = vmax.f32 %v2272, 0.0
      %v2303 = vmax.f32 %v2275, 0.0
      %v2304 = vmax.f32 %v2280, 0.0
      %v2305 = vmax.f32 %v2283, 0.0
      %v2306 = vmax.f32 %v2288, 0.0
      %v2307 = vmax.f32 %v2291, 0.0
      %v2308 = vmax.f32 %v2296, 0.0
      %v2309 = vmax.f32 %v2299, 0.0
      %v2310 = vpack.c.bf16 %v1899, %v1899
      %v2311 = vpack.c.bf16 %v2302, %v2302
      %v2312 = vpack.c.bf16 %v1900, %v1900
      %v2313 = vpack.c.bf16 %v2303, %v2303
      %v2314 = vpack.c.bf16 %v1901, %v1901
      %v2315 = vpack.c.bf16 %v2304, %v2304
      %v2316 = vpack.c.bf16 %v1902, %v1902
      %v2317 = vpack.c.bf16 %v2305, %v2305
      %v2318 = vpack.c.bf16 %v1903, %v1903
      %v2319 = vpack.c.bf16 %v2306, %v2306
      %v2320 = vpack.c.bf16 %v1904, %v1904
      %v2321 = vpack.c.bf16 %v2307, %v2307
      %v2322 = vpack.c.bf16 %v1905, %v1905
      %v2323 = vpack.c.bf16 %v2308, %v2308
      %v2324 = vpack.c.bf16 %v1906, %v1906
      %v2325 = vpack.c.bf16 %v2309, %v2309
      %v2342 = vunpack.c.l.b16 %v2310
      %v2343 = vunpack.c.l.b16 %v2311
      %v2344 = vunpack.c.l.b16 %v2312
      %v2345 = vunpack.c.l.b16 %v2313
      %v2346 = vunpack.c.l.b16 %v2314
      %v2347 = vunpack.c.l.b16 %v2315
      %v2348 = vunpack.c.l.b16 %v2316
      %v2349 = vunpack.c.l.b16 %v2317
      %v2350 = vunpack.c.l.b16 %v2318
      %v2351 = vunpack.c.l.b16 %v2319
      %v2352 = vunpack.c.l.b16 %v2320
      %v2353 = vunpack.c.l.b16 %v2321
      %v2354 = vunpack.c.l.b16 %v2322
      %v2355 = vunpack.c.l.b16 %v2323
      %v2356 = vunpack.c.l.b16 %v2324
      %v2357 = vunpack.c.l.b16 %v2325
      %v2358 = vpack.c.b16 %v2343, %v2342
      %v2359 = vpack.c.b16 %v2345, %v2344
      %v2360 = vpack.c.b16 %v2347, %v2346
      %v2361 = vpack.c.b16 %v2349, %v2348
      %v2362 = vpack.c.b16 %v2351, %v2350
      %v2363 = vpack.c.b16 %v2353, %v2352
      %v2364 = vpack.c.b16 %v2355, %v2354
      %v2365 = vpack.c.b16 %v2357, %v2356
      %s2374 = scalar_lea.vmem %s170, 8
      %2375 = vst [vmem:[%s2374] sm:$0xff] %v2358
      %2376 = vst [vmem:[%s2374 + $0x10] sm:$0xff] %v2359
      %2377 = vst [vmem:[%s2374 + $0x20] sm:$0xff] %v2360
      %2378 = vst [vmem:[%s2374 + $0x30] sm:$0xff] %v2361
      %2379 = vst [vmem:[%s2374 + $0x40] sm:$0xff] %v2362
      %2380 = vst [vmem:[%s2374 + $0x50] sm:$0xff] %v2363
      %2381 = vst [vmem:[%s2374 + $0x60] sm:$0xff] %v2364
      %2382 = vst [vmem:[%s2374 + $0x70] sm:$0xff] %v2365
      %p2383 = scmp.lt.s32.totalorder %s14, 1
      %s2384 = scalar_select %p2383, %s14, 1
      %s2385 = smul.addr %s2384, 32
      %s2386 = smul.addr %s2385, 4
      %s2387 = scalar_lea.vmem %s3, %s2386
      // Predicated region
      $region33: #{decoder_forward_pallas.4} parent=31 // pred_check
        %p2388 = pneg %p100
      $region34: #{decoder_forward_pallas.4} parent=31 // pred_check_branch
        %2390 = sbr.rel (%p2388) target = $region36
      $region35: #{decoder_forward_pallas.4} parent=31 // pred_region
        _
      $region36: #{decoder_forward_pallas.4} parent=31 // pred_fallthru
        _
    $region32: #{decoder_forward_pallas.4} parent=5 // pred_fallthru
      _
    %p2391 = scmp.le.s32.totalorder 2, %s9
    // Predicated region
    $region37: #{decoder_forward_pallas.4} parent=5 // pred_check
      %p2392 = pneg %p2391
    $region38: #{decoder_forward_pallas.4} parent=5 // pred_check_branch
      %2394 = sbr.rel (%p2392) target = $region40
    $region39: #{decoder_forward_pallas.4} parent=5 // pred_region
      %s2395 = ssub.s32 %s9, 2
      // Predicated region
      $region41: #{decoder_forward_pallas.4} parent=39 // pred_check
        %p2396 = pneg %p106
      $region42: #{decoder_forward_pallas.4} parent=39 // pred_check_branch
        %2398 = sbr.rel (%p2396) target = $region44
      $region43: #{decoder_forward_pallas.4} parent=39 // pred_region
        %p2399 = scmp.lt.s32.totalorder %s15, 1
        %s2400 = scalar_select %p2399, %s15, 1
        %s2401 = smul.addr %s2400, 32
        %s2402 = smul.addr %s2401, 4
        %s2403 = scalar_lea.vmem %s3, %s2402
      $region44: #{decoder_forward_pallas.4} parent=39 // pred_fallthru
        _
    $region40: #{decoder_forward_pallas.4} parent=5 // pred_fallthru
      _
  $region6: #{decoder_forward_pallas.4} parent=0 // loop_footer
    %s13 = sadd.s32 1, %s9
  $region7: #{decoder_forward_pallas.4} parent=0 // loop_footer_branch
    %8 = sbr.rel target = $region3
  $region8: #{decoder_forward_pallas.4} parent=0 // loop_exit
    _

// kernel: decoder_forward_pallas.5
$region0: #{decoder_forward_pallas.5}
  #allocation0 [shape = 'u32[]', space=smem, size = 0x4, offset = 0x4, fixed_abs, tag = 'smem constant byte address 0x4 - core index']
  #allocation1 [shape = 'u32[144,128]{1,0:T(1,128)}', space=vmem, size = 0x12000, scoped, tag = 'internal scratch']
  #allocation2 [shape = 'bf16[18,32,128]{2,1,0:T(8,128)(2,1)}', space=vmem, size = 0x24000, scoped, tag = 'scratch operand']
  %s0 = inlined_call_operand.vmem [shape: bf16[2,16,16,128], index: 0, kind: input, shape index: {}]
  %s1 = inlined_call_operand.vmem [shape: bf16[4,512,128], index: 1, kind: input, shape index: {}]
  %s2 = inlined_call_operand.vmem [shape: f32[1,128], index: 2, kind: input, shape index: {}]
  %s3 = inlined_call_operand.vmem [shape: bf16[2,16,2,16,256], index: 3, kind: output, shape index: {}]
  %s4 = sld [smem:[#allocation0]]
  $region45: #{decoder_forward_pallas.5} parent=0
    _
  %s6 = ssub.s32 1, %s4
  %s7 = scalar_select 0, %s6, %s4
  loop: start=0, step=1, limit=4
  $region2: #{decoder_forward_pallas.5} parent=0 // loop_pre_header
    _
  $region3: #{decoder_forward_pallas.5} parent=0 // loop_header
    %s9 = sphi 0, %s13
    %p10 = scmp.ge.s32.totalorder %s9, 4
    %s19 = sphi 0, %s21
    %s22 = sphi 0, %s19
    %s23 = sphi 0, %s22
    %s39 = sphi 0, %s23
    %s43 = sphi 0, %s43
    %s45 = sphi 0, %s43
    %s46 = sphi 0, %s45
    %s60 = sphi 0, %s46
    %s64 = sphi 0, %s64
    %s66 = sphi 0, %s64
    %s67 = sphi 0, %s66
    %s81 = sphi 0, %s67
    %s87 = sphi 0, %s89
    %s90 = sphi 0, %s87
    %s91 = sphi 0, %s90
    %s107 = sphi 0, %s91
  $region4: #{decoder_forward_pallas.5} parent=0 // loop_header_branch
    %12 = sbr.rel (%p10) target = $region8
  $region5: #{decoder_forward_pallas.5} parent=0 // loop_body
    %s14 = ssub.s32 %s9, 1
    %s15 = ssub.s32 %s9, 2
    %s16 = sadd.s32 %s9, 1
    %s17 = ssub.s32 %s9, %s16
    %p18 = scmp.eq.s32.totalorder %s17, 0
    %s20 = sadd.s32 %s19, 1
    %s21 = scalar_select %p18, %s19, %s20
    %p24 = pneg %p18
    %p25 = scmp.eq.s32.totalorder %s9, 1
    %p26 = por %p24, %p25
    %p27 = scmp.ne.s32.totalorder %s19, %s22
    %p28 = scmp.eq.s32.totalorder %s9, 0
    %p29 = por %p27, %p28
    %p30 = scmp.ne.s32.totalorder %s19, %s22
    %p31 = scmp.eq.s32.totalorder %s14, 1
    %p32 = por %p30, %p31
    %p33 = scmp.ne.s32.totalorder %s22, %s23
    %p34 = scmp.eq.s32.totalorder %s14, 0
    %p35 = por %p33, %p34
    %p36 = scmp.ne.s32.totalorder %s22, %s23
    %p37 = scmp.eq.s32.totalorder %s15, 1
    %p38 = por %p36, %p37
    %p40 = scmp.ne.s32.totalorder %s23, %s39
    %p41 = scmp.eq.s32.totalorder %s15, 0
    %p42 = por %p40, %p41
    %s44 = sadd.s32 %s43, 1
    %p47 = scmp.eq.s32.totalorder %s9, 1
    %p48 = scmp.ne.s32.totalorder %s43, %s45
    %p49 = scmp.eq.s32.totalorder %s9, 0
    %p50 = por %p48, %p49
    %p51 = scmp.ne.s32.totalorder %s43, %s45
    %p52 = scmp.eq.s32.totalorder %s14, 1
    %p53 = por %p51, %p52
    %p54 = scmp.ne.s32.totalorder %s45, %s46
    %p55 = scmp.eq.s32.totalorder %s14, 0
    %p56 = por %p54, %p55
    %p57 = scmp.ne.s32.totalorder %s45, %s46
    %p58 = scmp.eq.s32.totalorder %s15, 1
    %p59 = por %p57, %p58
    %p61 = scmp.ne.s32.totalorder %s46, %s60
    %p62 = scmp.eq.s32.totalorder %s15, 0
    %p63 = por %p61, %p62
    %s65 = sadd.s32 %s64, 1
    %p68 = scmp.eq.s32.totalorder %s9, 1
    %p69 = scmp.ne.s32.totalorder %s64, %s66
    %p70 = scmp.eq.s32.totalorder %s9, 0
    %p71 = por %p69, %p70
    %p72 = scmp.ne.s32.totalorder %s64, %s66
    %p73 = scmp.eq.s32.totalorder %s14, 1
    %p74 = por %p72, %p73
    %p75 = scmp.ne.s32.totalorder %s66, %s67
    %p76 = scmp.eq.s32.totalorder %s14, 0
    %p77 = por %p75, %p76
    %p78 = scmp.ne.s32.totalorder %s66, %s67
    %p79 = scmp.eq.s32.totalorder %s15, 1
    %p80 = por %p78, %p79
    %p82 = scmp.ne.s32.totalorder %s67, %s81
    %p83 = scmp.eq.s32.totalorder %s15, 0
    %p84 = por %p82, %p83
    %s85 = ssub.s32 %s9, %s16
    %p86 = scmp.eq.s32.totalorder %s85, 0
    %s88 = sadd.s32 %s87, 1
    %s89 = scalar_select %p86, %s87, %s88
    %p92 = pneg %p86
    %p93 = scmp.eq.s32.totalorder %s9, 1
    %p94 = por %p92, %p93
    %p95 = scmp.ne.s32.totalorder %s87, %s90
    %p96 = scmp.eq.s32.totalorder %s9, 0
    %p97 = por %p95, %p96
    %p98 = scmp.ne.s32.totalorder %s87, %s90
    %p99 = scmp.eq.s32.totalorder %s14, 1
    %p100 = por %p98, %p99
    %p101 = scmp.ne.s32.totalorder %s90, %s91
    %p102 = scmp.eq.s32.totalorder %s14, 0
    %p103 = por %p101, %p102
    %p104 = scmp.ne.s32.totalorder %s90, %s91
    %p105 = scmp.eq.s32.totalorder %s15, 1
    %p106 = por %p104, %p105
    %p108 = scmp.ne.s32.totalorder %s91, %s107
    %p109 = scmp.eq.s32.totalorder %s15, 0
    %p110 = por %p108, %p109
    %p111 = scmp.le.s32.totalorder 1, %s9
    %p112 = scmp.lt.s32.totalorder %s9, 3
    %p113 = pnand %p111, %p112
    %p114 = pneg %p113
    // Predicated region
    $region9: #{decoder_forward_pallas.5} parent=5 // pred_check
      _
    $region10: #{decoder_forward_pallas.5} parent=5 // pred_check_branch
      %116 = sbr.rel (%p113) target = $region12
    $region11: #{decoder_forward_pallas.5} parent=5 // pred_region
      %s117 = ssub.s32 %s9, 1
      // Predicated region
      $region13: #{decoder_forward_pallas.5} parent=11 // pred_check
        %p118 = pneg %p56
      $region14: #{decoder_forward_pallas.5} parent=11 // pred_check_branch
        %120 = sbr.rel (%p118) target = $region16
      $region15: #{decoder_forward_pallas.5} parent=11 // pred_region
        _
      $region16: #{decoder_forward_pallas.5} parent=11 // pred_fallthru
        _
      // Predicated region
      $region17: #{decoder_forward_pallas.5} parent=11 // pred_check
        %p121 = pneg %p77
      $region18: #{decoder_forward_pallas.5} parent=11 // pred_check_branch
        %123 = sbr.rel (%p121) target = $region20
      $region19: #{decoder_forward_pallas.5} parent=11 // pred_region
        _
      $region20: #{decoder_forward_pallas.5} parent=11 // pred_fallthru
        _
    $region12: #{decoder_forward_pallas.5} parent=5 // pred_fallthru
      _
    %p124 = scmp.lt.s32.totalorder %s9, 2
    // Predicated region
    $region21: #{decoder_forward_pallas.5} parent=5 // pred_check
      %p125 = pneg %p124
    $region22: #{decoder_forward_pallas.5} parent=5 // pred_check_branch
      %127 = sbr.rel (%p125) target = $region24
    $region23: #{decoder_forward_pallas.5} parent=5 // pred_region
      // Predicated region
      $region25: #{decoder_forward_pallas.5} parent=23 // pred_check
        %p128 = pneg %p29
      $region26: #{decoder_forward_pallas.5} parent=23 // pred_check_branch
        %130 = sbr.rel (%p128) target = $region28
      $region27: #{decoder_forward_pallas.5} parent=23 // pred_region
        %p131 = scmp.lt.s32.totalorder %s9, 1
        %s132 = scalar_select %p131, %s9, 1
        %s133 = smul.addr %s132, 32
        %s134 = smul.addr %s133, 4
        %s135 = scalar_lea.vmem %s0, %s134
      $region28: #{decoder_forward_pallas.5} parent=23 // pred_fallthru
        _
    $region24: #{decoder_forward_pallas.5} parent=5 // pred_fallthru
      _
    %p136 = scmp.le.s32.totalorder 1, %s9
    %p137 = scmp.lt.s32.totalorder %s9, 3
    %p138 = pnand %p136, %p137
    %p139 = pneg %p138
    // Predicated region
    $region29: #{decoder_forward_pallas.5} parent=5 // pred_check
      _
    $region30: #{decoder_forward_pallas.5} parent=5 // pred_check_branch
      %141 = sbr.rel (%p138) target = $region32
    $region31: #{decoder_forward_pallas.5} parent=5 // pred_region
      %s142 = ssub.s32 %s9, 1
      %p143 = scmp.lt.s32.totalorder %s14, 1
      %s144 = scalar_select %p143, %s14, 1
      %s145 = smul.addr %s144, 32
      %s146 = smul.addr %s145, 4
      %s147 = scalar_lea.vmem %s0, %s146
      %p148 = pneg %p35
      %p149 = pneg %p32
      %p150 = pneg %p56
      %p151 = pneg %p53
      %p152 = pneg %p77
      %p153 = pneg %p74
      %p154 = pneg %p103
      %p155 = pneg %p100
      %p156 = scmp.lt.s32.totalorder %s14, 1
      %s157 = scalar_select %p156, %s14, 1
      %s158 = smul.addr %s157, 128
      %s159 = smul.addr %s158, 4
      %s160 = scalar_lea.vmem %s3, %s159
      %p161 = scmp.lt.s32.totalorder %s14, 1
      %s162 = scalar_select %p161, %s14, 1
      %s163 = smul.addr %s162, 32
      %s164 = smul.addr %s163, 4
      %s165 = scalar_lea.vmem %s0, %s164
      %p166 = scmp.lt.s32.totalorder %s14, 1
      %s167 = scalar_select %p166, %s14, 1
      %s168 = smul.addr %s167, 128
      %s169 = smul.addr %s168, 4
      %s170 = scalar_lea.vmem %s3, %s169
      %172 = vst [vmem:[#allocation2] sm:$0xf] 0
      %173 = vst [vmem:[#allocation2 + $0x4] sm:$0xf] 0
      %174 = vst [vmem:[#allocation2 + $0x8] sm:$0xf] 0
      %175 = vst [vmem:[#allocation2 + $0xc] sm:$0xf] 0
      %176 = vst [vmem:[#allocation2 + $0x10] sm:$0xf] 0
      %177 = vst [vmem:[#allocation2 + $0x14] sm:$0xf] 0
      %178 = vst [vmem:[#allocation2 + $0x18] sm:$0xf] 0
      %179 = vst [vmem:[#allocation2 + $0x1c] sm:$0xf] 0
      %180 = vst [vmem:[#allocation2 + $0x20] sm:$0xf] 0
      %181 = vst [vmem:[#allocation2 + $0x24] sm:$0xf] 0
      %182 = vst [vmem:[#allocation2 + $0x28] sm:$0xf] 0
      %183 = vst [vmem:[#allocation2 + $0x2c] sm:$0xf] 0
      %184 = vst [vmem:[#allocation2 + $0x30] sm:$0xf] 0
      %185 = vst [vmem:[#allocation2 + $0x34] sm:$0xf] 0
      %186 = vst [vmem:[#allocation2 + $0x38] sm:$0xf] 0
      %187 = vst [vmem:[#allocation2 + $0x3c] sm:$0xf] 0
      %188 = vst [vmem:[#allocation2 + $0x40] sm:$0xf] 0
      %189 = vst [vmem:[#allocation2 + $0x44] sm:$0xf] 0
      %190 = vst [vmem:[#allocation2 + $0x48] sm:$0xf] 0
      %191 = vst [vmem:[#allocation2 + $0x4c] sm:$0xf] 0
      %192 = vst [vmem:[#allocation2 + $0x50] sm:$0xf] 0
      %193 = vst [vmem:[#allocation2 + $0x54] sm:$0xf] 0
      %194 = vst [vmem:[#allocation2 + $0x58] sm:$0xf] 0
      %195 = vst [vmem:[#allocation2 + $0x5c] sm:$0xf] 0
      %196 = vst [vmem:[#allocation2 + $0x60] sm:$0xf] 0
      %197 = vst [vmem:[#allocation2 + $0x64] sm:$0xf] 0
      %198 = vst [vmem:[#allocation2 + $0x68] sm:$0xf] 0
      %199 = vst [vmem:[#allocation2 + $0x6c] sm:$0xf] 0
      %200 = vst [vmem:[#allocation2 + $0x70] sm:$0xf] 0
      %201 = vst [vmem:[#allocation2 + $0x74] sm:$0xf] 0
      %202 = vst [vmem:[#allocation2 + $0x78] sm:$0xf] 0
      %203 = vst [vmem:[#allocation2 + $0x7c] sm:$0xf] 0
      %204 = vst [vmem:[#allocation2 + $0x80] sm:$0xf] 0
      %205 = vst [vmem:[#allocation2 + $0x84] sm:$0xf] 0
      %206 = vst [vmem:[#allocation2 + $0x88] sm:$0xf] 0
      %207 = vst [vmem:[#allocation2 + $0x8c] sm:$0xf] 0
      %208 = vst [vmem:[#allocation2 + $0x90] sm:$0xf] 0
      %209 = vst [vmem:[#allocation2 + $0x94] sm:$0xf] 0
      %210 = vst [vmem:[#allocation2 + $0x98] sm:$0xf] 0
      %211 = vst [vmem:[#allocation2 + $0x9c] sm:$0xf] 0
      %212 = vst [vmem:[#allocation2 + $0xa0] sm:$0xf] 0
      %213 = vst [vmem:[#allocation2 + $0xa4] sm:$0xf] 0
      %214 = vst [vmem:[#allocation2 + $0xa8] sm:$0xf] 0
      %215 = vst [vmem:[#allocation2 + $0xac] sm:$0xf] 0
      %216 = vst [vmem:[#allocation2 + $0xb0] sm:$0xf] 0
      %217 = vst [vmem:[#allocation2 + $0xb4] sm:$0xf] 0
      %218 = vst [vmem:[#allocation2 + $0xb8] sm:$0xf] 0
      %219 = vst [vmem:[#allocation2 + $0xbc] sm:$0xf] 0
      %220 = vst [vmem:[#allocation2 + $0xc0] sm:$0xf] 0
      %221 = vst [vmem:[#allocation2 + $0xc4] sm:$0xf] 0
      %222 = vst [vmem:[#allocation2 + $0xc8] sm:$0xf] 0
      %223 = vst [vmem:[#allocation2 + $0xcc] sm:$0xf] 0
      %224 = vst [vmem:[#allocation2 + $0xd0] sm:$0xf] 0
      %225 = vst [vmem:[#allocation2 + $0xd4] sm:$0xf] 0
      %226 = vst [vmem:[#allocation2 + $0xd8] sm:$0xf] 0
      %227 = vst [vmem:[#allocation2 + $0xdc] sm:$0xf] 0
      %228 = vst [vmem:[#allocation2 + $0xe0] sm:$0xf] 0
      %229 = vst [vmem:[#allocation2 + $0xe4] sm:$0xf] 0
      %230 = vst [vmem:[#allocation2 + $0xe8] sm:$0xf] 0
      %231 = vst [vmem:[#allocation2 + $0xec] sm:$0xf] 0
      %232 = vst [vmem:[#allocation2 + $0xf0] sm:$0xf] 0
      %233 = vst [vmem:[#allocation2 + $0xf4] sm:$0xf] 0
      %234 = vst [vmem:[#allocation2 + $0xf8] sm:$0xf] 0
      %235 = vst [vmem:[#allocation2 + $0xfc] sm:$0xf] 0
      %236 = vst [vmem:[#allocation2 + $0x100] sm:$0xf] 0
      %237 = vst [vmem:[#allocation2 + $0x104] sm:$0xf] 0
      %238 = vst [vmem:[#allocation2 + $0x108] sm:$0xf] 0
      %239 = vst [vmem:[#allocation2 + $0x10c] sm:$0xf] 0
      %240 = vst [vmem:[#allocation2 + $0x110] sm:$0xf] 0
      %241 = vst [vmem:[#allocation2 + $0x114] sm:$0xf] 0
      %242 = vst [vmem:[#allocation2 + $0x118] sm:$0xf] 0
      %243 = vst [vmem:[#allocation2 + $0x11c] sm:$0xf] 0
      %v244 = vld [vmem:[%s165] sm:$0xf]
      %v245 = vld [vmem:[%s165 + $0x4] sm:$0xf]
      %v246 = vld [vmem:[%s165 + $0x8] sm:$0xf]
      %v247 = vld [vmem:[%s165 + $0xc] sm:$0xf]
      %v248 = vld [vmem:[%s165 + $0x10] sm:$0xf]
      %v249 = vld [vmem:[%s165 + $0x14] sm:$0xf]
      %v250 = vld [vmem:[%s165 + $0x18] sm:$0xf]
      %v251 = vld [vmem:[%s165 + $0x1c] sm:$0xf]
      %v252 = vld [vmem:[%s165 + $0x20] sm:$0xf]
      %v253 = vld [vmem:[%s165 + $0x24] sm:$0xf]
      %v254 = vld [vmem:[%s165 + $0x28] sm:$0xf]
      %v255 = vld [vmem:[%s165 + $0x2c] sm:$0xf]
      %v256 = vld [vmem:[%s165 + $0x30] sm:$0xf]
      %v257 = vld [vmem:[%s165 + $0x34] sm:$0xf]
      %v258 = vld [vmem:[%s165 + $0x38] sm:$0xf]
      %v259 = vld [vmem:[%s165 + $0x3c] sm:$0xf]
      %v260 = vld [vmem:[%s165 + $0x40] sm:$0xf]
      %v261 = vld [vmem:[%s165 + $0x44] sm:$0xf]
      %v262 = vld [vmem:[%s165 + $0x48] sm:$0xf]
      %v263 = vld [vmem:[%s165 + $0x4c] sm:$0xf]
      %v264 = vld [vmem:[%s165 + $0x50] sm:$0xf]
      %v265 = vld [vmem:[%s165 + $0x54] sm:$0xf]
      %v266 = vld [vmem:[%s165 + $0x58] sm:$0xf]
      %v267 = vld [vmem:[%s165 + $0x5c] sm:$0xf]
      %v268 = vld [vmem:[%s165 + $0x60] sm:$0xf]
      %v269 = vld [vmem:[%s165 + $0x64] sm:$0xf]
      %v270 = vld [vmem:[%s165 + $0x68] sm:$0xf]
      %v271 = vld [vmem:[%s165 + $0x6c] sm:$0xf]
      %v272 = vld [vmem:[%s165 + $0x70] sm:$0xf]
      %v273 = vld [vmem:[%s165 + $0x74] sm:$0xf]
      %v274 = vld [vmem:[%s165 + $0x78] sm:$0xf]
      %v275 = vld [vmem:[%s165 + $0x7c] sm:$0xf]
      %vm276 = vsmask.f32 256
      %vm277 = vsmask.f32 4368
      %vm278 = vmor %vm276, %vm277
      %v280 = vshrl.u32 %v244, 16
      %v282 = vrot.slane %v280, 7
      %v283 = vshll.u32 %v244, 16
      %v285 = vor.u32 %v282, %v283
      %v286 = vrot.slane %v282, 4
      %v288 = vshrl.u32 %v245, 16
      %v290 = vrot.slane %v288, 7
      %v291 = vshll.u32 %v245, 16
      %v293 = vor.u32 %v290, %v291
      %v294 = vsel %vm278, %v286, %v293
      %v295 = vrot.slane %v290, 4
      %v297 = vshrl.u32 %v246, 16
      %v299 = vrot.slane %v297, 7
      %v300 = vshll.u32 %v246, 16
      %v302 = vor.u32 %v299, %v300
      %v303 = vrot.slane %v299, 4
      %v305 = vshrl.u32 %v247, 16
      %v307 = vrot.slane %v305, 7
      %v308 = vshll.u32 %v247, 16
      %v310 = vor.u32 %v307, %v308
      %v311 = vsel %vm278, %v303, %v310
      %v312 = vrot.slane %v307, 4
      %v314 = vshrl.u32 %v248, 16
      %v316 = vrot.slane %v314, 7
      %v317 = vshll.u32 %v248, 16
      %v319 = vor.u32 %v316, %v317
      %v320 = vrot.slane %v316, 4
      %v322 = vshrl.u32 %v249, 16
      %v324 = vrot.slane %v322, 7
      %v325 = vshll.u32 %v249, 16
      %v327 = vor.u32 %v324, %v325
      %v328 = vsel %vm278, %v320, %v327
      %v329 = vrot.slane %v324, 4
      %v331 = vshrl.u32 %v250, 16
      %v333 = vrot.slane %v331, 7
      %v334 = vshll.u32 %v250, 16
      %v336 = vor.u32 %v333, %v334
      %v337 = vrot.slane %v333, 4
      %v339 = vshrl.u32 %v251, 16
      %v341 = vrot.slane %v339, 7
      %v342 = vshll.u32 %v251, 16
      %v344 = vor.u32 %v341, %v342
      %v345 = vsel %vm278, %v337, %v344
      %v346 = vrot.slane %v341, 4
      %v348 = vshrl.u32 %v252, 16
      %v350 = vrot.slane %v348, 7
      %v351 = vshll.u32 %v252, 16
      %v353 = vor.u32 %v350, %v351
      %v354 = vrot.slane %v350, 4
      %v356 = vshrl.u32 %v253, 16
      %v358 = vrot.slane %v356, 7
      %v359 = vshll.u32 %v253, 16
      %v361 = vor.u32 %v358, %v359
      %v362 = vsel %vm278, %v354, %v361
      %v363 = vrot.slane %v358, 4
      %v365 = vshrl.u32 %v254, 16
      %v367 = vrot.slane %v365, 7
      %v368 = vshll.u32 %v254, 16
      %v370 = vor.u32 %v367, %v368
      %v371 = vrot.slane %v367, 4
      %v373 = vshrl.u32 %v255, 16
      %v375 = vrot.slane %v373, 7
      %v376 = vshll.u32 %v255, 16
      %v378 = vor.u32 %v375, %v376
      %v379 = vsel %vm278, %v371, %v378
      %v380 = vrot.slane %v375, 4
      %v382 = vshrl.u32 %v256, 16
      %v384 = vrot.slane %v382, 7
      %v385 = vshll.u32 %v256, 16
      %v387 = vor.u32 %v384, %v385
      %v388 = vrot.slane %v384, 4
      %v390 = vshrl.u32 %v257, 16
      %v392 = vrot.slane %v390, 7
      %v393 = vshll.u32 %v257, 16
      %v395 = vor.u32 %v392, %v393
      %v396 = vsel %vm278, %v388, %v395
      %v397 = vrot.slane %v392, 4
      %v399 = vshrl.u32 %v258, 16
      %v401 = vrot.slane %v399, 7
      %v402 = vshll.u32 %v258, 16
      %v404 = vor.u32 %v401, %v402
      %v405 = vrot.slane %v401, 4
      %v407 = vshrl.u32 %v259, 16
      %v409 = vrot.slane %v407, 7
      %v410 = vshll.u32 %v259, 16
      %v412 = vor.u32 %v409, %v410
      %v413 = vsel %vm278, %v405, %v412
      %v414 = vrot.slane %v409, 4
      %v416 = vshrl.u32 %v260, 16
      %v418 = vrot.slane %v416, 7
      %v419 = vshll.u32 %v260, 16
      %v421 = vor.u32 %v418, %v419
      %v422 = vrot.slane %v418, 4
      %v424 = vshrl.u32 %v261, 16
      %v426 = vrot.slane %v424, 7
      %v427 = vshll.u32 %v261, 16
      %v429 = vor.u32 %v426, %v427
      %v430 = vsel %vm278, %v422, %v429
      %v431 = vrot.slane %v426, 4
      %v433 = vshrl.u32 %v262, 16
      %v435 = vrot.slane %v433, 7
      %v436 = vshll.u32 %v262, 16
      %v438 = vor.u32 %v435, %v436
      %v439 = vrot.slane %v435, 4
      %v441 = vshrl.u32 %v263, 16
      %v443 = vrot.slane %v441, 7
      %v444 = vshll.u32 %v263, 16
      %v446 = vor.u32 %v443, %v444
      %v447 = vsel %vm278, %v439, %v446
      %v448 = vrot.slane %v443, 4
      %v450 = vshrl.u32 %v264, 16
      %v452 = vrot.slane %v450, 7
      %v453 = vshll.u32 %v264, 16
      %v455 = vor.u32 %v452, %v453
      %v456 = vrot.slane %v452, 4
      %v458 = vshrl.u32 %v265, 16
      %v460 = vrot.slane %v458, 7
      %v461 = vshll.u32 %v265, 16
      %v463 = vor.u32 %v460, %v461
      %v464 = vsel %vm278, %v456, %v463
      %v465 = vrot.slane %v460, 4
      %v467 = vshrl.u32 %v266, 16
      %v469 = vrot.slane %v467, 7
      %v470 = vshll.u32 %v266, 16
      %v472 = vor.u32 %v469, %v470
      %v473 = vrot.slane %v469, 4
      %v475 = vshrl.u32 %v267, 16
      %v477 = vrot.slane %v475, 7
      %v478 = vshll.u32 %v267, 16
      %v480 = vor.u32 %v477, %v478
      %v481 = vsel %vm278, %v473, %v480
      %v482 = vrot.slane %v477, 4
      %v484 = vshrl.u32 %v268, 16
      %v486 = vrot.slane %v484, 7
      %v487 = vshll.u32 %v268, 16
      %v489 = vor.u32 %v486, %v487
      %v490 = vrot.slane %v486, 4
      %v492 = vshrl.u32 %v269, 16
      %v494 = vrot.slane %v492, 7
      %v495 = vshll.u32 %v269, 16
      %v497 = vor.u32 %v494, %v495
      %v498 = vsel %vm278, %v490, %v497
      %v499 = vrot.slane %v494, 4
      %v501 = vshrl.u32 %v270, 16
      %v503 = vrot.slane %v501, 7
      %v504 = vshll.u32 %v270, 16
      %v506 = vor.u32 %v503, %v504
      %v507 = vrot.slane %v503, 4
      %v509 = vshrl.u32 %v271, 16
      %v511 = vrot.slane %v509, 7
      %v512 = vshll.u32 %v271, 16
      %v514 = vor.u32 %v511, %v512
      %v515 = vsel %vm278, %v507, %v514
      %v516 = vrot.slane %v511, 4
      %v518 = vshrl.u32 %v272, 16
      %v520 = vrot.slane %v518, 7
      %v521 = vshll.u32 %v272, 16
      %v523 = vor.u32 %v520, %v521
      %v524 = vrot.slane %v520, 4
      %v526 = vshrl.u32 %v273, 16
      %v528 = vrot.slane %v526, 7
      %v529 = vshll.u32 %v273, 16
      %v531 = vor.u32 %v528, %v529
      %v532 = vsel %vm278, %v524, %v531
      %v533 = vrot.slane %v528, 4
      %v535 = vshrl.u32 %v274, 16
      %v537 = vrot.slane %v535, 7
      %v538 = vshll.u32 %v274, 16
      %v540 = vor.u32 %v537, %v538
      %v541 = vrot.slane %v537, 4
      %v543 = vshrl.u32 %v275, 16
      %v545 = vrot.slane %v543, 7
      %v546 = vshll.u32 %v275, 16
      %v548 = vor.u32 %v545, %v546
      %v549 = vsel %vm278, %v541, %v548
      %v550 = vrot.slane %v545, 4
      %s599 = scalar_lea.vmem [#allocation2], 16
      %vm600 = vcmask 1043456
      %vm601 = vsmask.f32 7938
      %vm602 = vmand %vm600, %vm601
      %v603 = vld [vmem:[%s599] sm:$0xf]
      %v604 = vsel %vm602, %v285, %v603
      %605 = vst [vmem:[%s599] sm:$0xf] %v604
      %606 = vst [vmem:[%s599 + $0x4] sm:$0xf] %v294
      %vm607 = vcmask 1040384
      %vm608 = vmand %vm607, %vm276
      %v609 = vld [vmem:[%s599 + $0x8] sm:$0x1]
      %v610 = vsel %vm608, %v295, %v609
      %611 = vst [vmem:[%s599 + $0x8] sm:$0x1] %v610
      %v612 = vld [vmem:[%s599 + $0x10] sm:$0xf]
      %v613 = vsel %vm602, %v302, %v612
      %614 = vst [vmem:[%s599 + $0x10] sm:$0xf] %v613
      %615 = vst [vmem:[%s599 + $0x14] sm:$0xf] %v311
      %v616 = vld [vmem:[%s599 + $0x18] sm:$0x1]
      %v617 = vsel %vm608, %v312, %v616
      %618 = vst [vmem:[%s599 + $0x18] sm:$0x1] %v617
      %v619 = vld [vmem:[%s599 + $0x20] sm:$0xf]
      %v620 = vsel %vm602, %v319, %v619
      %621 = vst [vmem:[%s599 + $0x20] sm:$0xf] %v620
      %622 = vst [vmem:[%s599 + $0x24] sm:$0xf] %v328
      %v623 = vld [vmem:[%s599 + $0x28] sm:$0x1]
      %v624 = vsel %vm608, %v329, %v623
      %625 = vst [vmem:[%s599 + $0x28] sm:$0x1] %v624
      %v626 = vld [vmem:[%s599 + $0x30] sm:$0xf]
      %v627 = vsel %vm602, %v336, %v626
      %628 = vst [vmem:[%s599 + $0x30] sm:$0xf] %v627
      %629 = vst [vmem:[%s599 + $0x34] sm:$0xf] %v345
      %v630 = vld [vmem:[%s599 + $0x38] sm:$0x1]
      %v631 = vsel %vm608, %v346, %v630
      %632 = vst [vmem:[%s599 + $0x38] sm:$0x1] %v631
      %v633 = vld [vmem:[%s599 + $0x40] sm:$0xf]
      %v634 = vsel %vm602, %v353, %v633
      %635 = vst [vmem:[%s599 + $0x40] sm:$0xf] %v634
      %636 = vst [vmem:[%s599 + $0x44] sm:$0xf] %v362
      %v637 = vld [vmem:[%s599 + $0x48] sm:$0x1]
      %v638 = vsel %vm608, %v363, %v637
      %639 = vst [vmem:[%s599 + $0x48] sm:$0x1] %v638
      %v640 = vld [vmem:[%s599 + $0x50] sm:$0xf]
      %v641 = vsel %vm602, %v370, %v640
      %642 = vst [vmem:[%s599 + $0x50] sm:$0xf] %v641
      %643 = vst [vmem:[%s599 + $0x54] sm:$0xf] %v379
      %v644 = vld [vmem:[%s599 + $0x58] sm:$0x1]
      %v645 = vsel %vm608, %v380, %v644
      %646 = vst [vmem:[%s599 + $0x58] sm:$0x1] %v645
      %v647 = vld [vmem:[%s599 + $0x60] sm:$0xf]
      %v648 = vsel %vm602, %v387, %v647
      %649 = vst [vmem:[%s599 + $0x60] sm:$0xf] %v648
      %650 = vst [vmem:[%s599 + $0x64] sm:$0xf] %v396
      %v651 = vld [vmem:[%s599 + $0x68] sm:$0x1]
      %v652 = vsel %vm608, %v397, %v651
      %653 = vst [vmem:[%s599 + $0x68] sm:$0x1] %v652
      %v654 = vld [vmem:[%s599 + $0x70] sm:$0xf]
      %v655 = vsel %vm602, %v404, %v654
      %656 = vst [vmem:[%s599 + $0x70] sm:$0xf] %v655
      %657 = vst [vmem:[%s599 + $0x74] sm:$0xf] %v413
      %v658 = vld [vmem:[%s599 + $0x78] sm:$0x1]
      %v659 = vsel %vm608, %v414, %v658
      %660 = vst [vmem:[%s599 + $0x78] sm:$0x1] %v659
      %v661 = vld [vmem:[%s599 + $0x80] sm:$0xf]
      %v662 = vsel %vm602, %v421, %v661
      %663 = vst [vmem:[%s599 + $0x80] sm:$0xf] %v662
      %664 = vst [vmem:[%s599 + $0x84] sm:$0xf] %v430
      %v665 = vld [vmem:[%s599 + $0x88] sm:$0x1]
      %v666 = vsel %vm608, %v431, %v665
      %667 = vst [vmem:[%s599 + $0x88] sm:$0x1] %v666
      %v668 = vld [vmem:[%s599 + $0x90] sm:$0xf]
      %v669 = vsel %vm602, %v438, %v668
      %670 = vst [vmem:[%s599 + $0x90] sm:$0xf] %v669
      %671 = vst [vmem:[%s599 + $0x94] sm:$0xf] %v447
      %v672 = vld [vmem:[%s599 + $0x98] sm:$0x1]
      %v673 = vsel %vm608, %v448, %v672
      %674 = vst [vmem:[%s599 + $0x98] sm:$0x1] %v673
      %v675 = vld [vmem:[%s599 + $0xa0] sm:$0xf]
      %v676 = vsel %vm602, %v455, %v675
      %677 = vst [vmem:[%s599 + $0xa0] sm:$0xf] %v676
      %678 = vst [vmem:[%s599 + $0xa4] sm:$0xf] %v464
      %v679 = vld [vmem:[%s599 + $0xa8] sm:$0x1]
      %v680 = vsel %vm608, %v465, %v679
      %681 = vst [vmem:[%s599 + $0xa8] sm:$0x1] %v680
      %v682 = vld [vmem:[%s599 + $0xb0] sm:$0xf]
      %v683 = vsel %vm602, %v472, %v682
      %684 = vst [vmem:[%s599 + $0xb0] sm:$0xf] %v683
      %685 = vst [vmem:[%s599 + $0xb4] sm:$0xf] %v481
      %v686 = vld [vmem:[%s599 + $0xb8] sm:$0x1]
      %v687 = vsel %vm608, %v482, %v686
      %688 = vst [vmem:[%s599 + $0xb8] sm:$0x1] %v687
      %v689 = vld [vmem:[%s599 + $0xc0] sm:$0xf]
      %v690 = vsel %vm602, %v489, %v689
      %691 = vst [vmem:[%s599 + $0xc0] sm:$0xf] %v690
      %692 = vst [vmem:[%s599 + $0xc4] sm:$0xf] %v498
      %v693 = vld [vmem:[%s599 + $0xc8] sm:$0x1]
      %v694 = vsel %vm608, %v499, %v693
      %695 = vst [vmem:[%s599 + $0xc8] sm:$0x1] %v694
      %v696 = vld [vmem:[%s599 + $0xd0] sm:$0xf]
      %v697 = vsel %vm602, %v506, %v696
      %698 = vst [vmem:[%s599 + $0xd0] sm:$0xf] %v697
      %699 = vst [vmem:[%s599 + $0xd4] sm:$0xf] %v515
      %v700 = vld [vmem:[%s599 + $0xd8] sm:$0x1]
      %v701 = vsel %vm608, %v516, %v700
      %702 = vst [vmem:[%s599 + $0xd8] sm:$0x1] %v701
      %v703 = vld [vmem:[%s599 + $0xe0] sm:$0xf]
      %v704 = vsel %vm602, %v523, %v703
      %705 = vst [vmem:[%s599 + $0xe0] sm:$0xf] %v704
      %706 = vst [vmem:[%s599 + $0xe4] sm:$0xf] %v532
      %v707 = vld [vmem:[%s599 + $0xe8] sm:$0x1]
      %v708 = vsel %vm608, %v533, %v707
      %709 = vst [vmem:[%s599 + $0xe8] sm:$0x1] %v708
      %v710 = vld [vmem:[%s599 + $0xf0] sm:$0xf]
      %v711 = vsel %vm602, %v540, %v710
      %712 = vst [vmem:[%s599 + $0xf0] sm:$0xf] %v711
      %713 = vst [vmem:[%s599 + $0xf4] sm:$0xf] %v549
      %v714 = vld [vmem:[%s599 + $0xf8] sm:$0x1]
      %v715 = vsel %vm608, %v550, %v714
      %716 = vst [vmem:[%s599 + $0xf8] sm:$0x1] %v715
      %v717 = vld [vmem:[#allocation2] sm:$0xf]
      %v718 = vld [vmem:[#allocation2 + $0x4] sm:$0xf]
      %v719 = vld [vmem:[#allocation2 + $0x8] sm:$0xf]
      %v720 = vld [vmem:[#allocation2 + $0x10] sm:$0xf]
      %v721 = vld [vmem:[#allocation2 + $0x14] sm:$0xf]
      %v722 = vld [vmem:[#allocation2 + $0x18] sm:$0xf]
      %v723 = vld [vmem:[#allocation2 + $0x20] sm:$0xf]
      %v724 = vld [vmem:[#allocation2 + $0x24] sm:$0xf]
      %v725 = vld [vmem:[#allocation2 + $0x28] sm:$0xf]
      %v726 = vld [vmem:[#allocation2 + $0x30] sm:$0xf]
      %v727 = vld [vmem:[#allocation2 + $0x34] sm:$0xf]
      %v728 = vld [vmem:[#allocation2 + $0x38] sm:$0xf]
      %v729 = vld [vmem:[#allocation2 + $0x40] sm:$0xf]
      %v730 = vld [vmem:[#allocation2 + $0x44] sm:$0xf]
      %v731 = vld [vmem:[#allocation2 + $0x48] sm:$0xf]
      %v732 = vld [vmem:[#allocation2 + $0x50] sm:$0xf]
      %v733 = vld [vmem:[#allocation2 + $0x54] sm:$0xf]
      %v734 = vld [vmem:[#allocation2 + $0x58] sm:$0xf]
      %v735 = vld [vmem:[#allocation2 + $0x60] sm:$0xf]
      %v736 = vld [vmem:[#allocation2 + $0x64] sm:$0xf]
      %v737 = vld [vmem:[#allocation2 + $0x68] sm:$0xf]
      %v738 = vld [vmem:[#allocation2 + $0x70] sm:$0xf]
      %v739 = vld [vmem:[#allocation2 + $0x74] sm:$0xf]
      %v740 = vld [vmem:[#allocation2 + $0x78] sm:$0xf]
      %v741 = vld [vmem:[#allocation2 + $0x80] sm:$0xf]
      %v742 = vld [vmem:[#allocation2 + $0x84] sm:$0xf]
      %v743 = vld [vmem:[#allocation2 + $0x88] sm:$0xf]
      %v744 = vld [vmem:[#allocation2 + $0x90] sm:$0xf]
      %v745 = vld [vmem:[#allocation2 + $0x94] sm:$0xf]
      %v746 = vld [vmem:[#allocation2 + $0x98] sm:$0xf]
      %v747 = vld [vmem:[#allocation2 + $0xa0] sm:$0xf]
      %v748 = vld [vmem:[#allocation2 + $0xa4] sm:$0xf]
      %v749 = vld [vmem:[#allocation2 + $0xa8] sm:$0xf]
      %v750 = vld [vmem:[#allocation2 + $0xb0] sm:$0xf]
      %v751 = vld [vmem:[#allocation2 + $0xb4] sm:$0xf]
      %v752 = vld [vmem:[#allocation2 + $0xb8] sm:$0xf]
      %v753 = vld [vmem:[#allocation2 + $0xc0] sm:$0xf]
      %v754 = vld [vmem:[#allocation2 + $0xc4] sm:$0xf]
      %v755 = vld [vmem:[#allocation2 + $0xc8] sm:$0xf]
      %v756 = vld [vmem:[#allocation2 + $0xd0] sm:$0xf]
      %v757 = vld [vmem:[#allocation2 + $0xd4] sm:$0xf]
      %v758 = vld [vmem:[#allocation2 + $0xd8] sm:$0xf]
      %v759 = vld [vmem:[#allocation2 + $0xe0] sm:$0xf]
      %v760 = vld [vmem:[#allocation2 + $0xe4] sm:$0xf]
      %v761 = vld [vmem:[#allocation2 + $0xe8] sm:$0xf]
      %v762 = vld [vmem:[#allocation2 + $0xf0] sm:$0xf]
      %v763 = vld [vmem:[#allocation2 + $0xf4] sm:$0xf]
      %v764 = vld [vmem:[#allocation2 + $0xf8] sm:$0xf]
      %v765 = vld [vmem:[#allocation2 + $0x100] sm:$0xf]
      %v766 = vld [vmem:[#allocation2 + $0x104] sm:$0xf]
      %v767 = vld [vmem:[#allocation2 + $0x108] sm:$0xf]
      %v768 = vld [vmem:[#allocation2 + $0x110] sm:$0xf]
      %v769 = vld [vmem:[#allocation2 + $0x114] sm:$0xf]
      %v770 = vld [vmem:[#allocation2 + $0x118] sm:$0xf]
      %vm771 = vsmask.f32 3328
      %vm772 = vsmask.f32 7440
      %vm773 = vmor %vm771, %vm772
      %v775 = vshrl.u32 %v717, 16
      %v777 = vrot.slane %v775, 4
      %v778 = vshll.u32 %v717, 16
      %v780 = vrot.slane %v778, 5
      %v781 = vor.u32 %v777, %v780
      %v782 = vrot.slane %v781, 4
      %v784 = vshll.u32 %v718, 16
      %v786 = vrot.slane %v784, 5
      %v787 = vsel %vm773, %v782, %v786
      %v788 = vshrl.u32 %v718, 16
      %v790 = vrot.slane %v788, 4
      %v791 = vor.u32 %v790, %v786
      %v792 = vrot.slane %v791, 4
      %v794 = vshll.u32 %v719, 16
      %v796 = vrot.slane %v794, 5
      %v797 = vsel %vm773, %v792, %v796
      %v799 = vshrl.u32 %v720, 16
      %v801 = vrot.slane %v799, 4
      %v802 = vshll.u32 %v720, 16
      %v804 = vrot.slane %v802, 5
      %v805 = vor.u32 %v801, %v804
      %v806 = vrot.slane %v805, 4
      %v808 = vshll.u32 %v721, 16
      %v810 = vrot.slane %v808, 5
      %v811 = vsel %vm773, %v806, %v810
      %v812 = vshrl.u32 %v721, 16
      %v814 = vrot.slane %v812, 4
      %v815 = vor.u32 %v814, %v810
      %v816 = vrot.slane %v815, 4
      %v818 = vshll.u32 %v722, 16
      %v820 = vrot.slane %v818, 5
      %v821 = vsel %vm773, %v816, %v820
      %v823 = vshrl.u32 %v723, 16
      %v825 = vrot.slane %v823, 4
      %v826 = vshll.u32 %v723, 16
      %v828 = vrot.slane %v826, 5
      %v829 = vor.u32 %v825, %v828
      %v830 = vrot.slane %v829, 4
      %v832 = vshll.u32 %v724, 16
      %v834 = vrot.slane %v832, 5
      %v835 = vsel %vm773, %v830, %v834
      %v836 = vshrl.u32 %v724, 16
      %v838 = vrot.slane %v836, 4
      %v839 = vor.u32 %v838, %v834
      %v840 = vrot.slane %v839, 4
      %v842 = vshll.u32 %v725, 16
      %v844 = vrot.slane %v842, 5
      %v845 = vsel %vm773, %v840, %v844
      %v847 = vshrl.u32 %v726, 16
      %v849 = vrot.slane %v847, 4
      %v850 = vshll.u32 %v726, 16
      %v852 = vrot.slane %v850, 5
      %v853 = vor.u32 %v849, %v852
      %v854 = vrot.slane %v853, 4
      %v856 = vshll.u32 %v727, 16
      %v858 = vrot.slane %v856, 5
      %v859 = vsel %vm773, %v854, %v858
      %v860 = vshrl.u32 %v727, 16
      %v862 = vrot.slane %v860, 4
      %v863 = vor.u32 %v862, %v858
      %v864 = vrot.slane %v863, 4
      %v866 = vshll.u32 %v728, 16
      %v868 = vrot.slane %v866, 5
      %v869 = vsel %vm773, %v864, %v868
      %v871 = vshrl.u32 %v729, 16
      %v873 = vrot.slane %v871, 4
      %v874 = vshll.u32 %v729, 16
      %v876 = vrot.slane %v874, 5
      %v877 = vor.u32 %v873, %v876
      %v878 = vrot.slane %v877, 4
      %v880 = vshll.u32 %v730, 16
      %v882 = vrot.slane %v880, 5
      %v883 = vsel %vm773, %v878, %v882
      %v884 = vshrl.u32 %v730, 16
      %v886 = vrot.slane %v884, 4
      %v887 = vor.u32 %v886, %v882
      %v888 = vrot.slane %v887, 4
      %v890 = vshll.u32 %v731, 16
      %v892 = vrot.slane %v890, 5
      %v893 = vsel %vm773, %v888, %v892
      %v895 = vshrl.u32 %v732, 16
      %v897 = vrot.slane %v895, 4
      %v898 = vshll.u32 %v732, 16
      %v900 = vrot.slane %v898, 5
      %v901 = vor.u32 %v897, %v900
      %v902 = vrot.slane %v901, 4
      %v904 = vshll.u32 %v733, 16
      %v906 = vrot.slane %v904, 5
      %v907 = vsel %vm773, %v902, %v906
      %v908 = vshrl.u32 %v733, 16
      %v910 = vrot.slane %v908, 4
      %v911 = vor.u32 %v910, %v906
      %v912 = vrot.slane %v911, 4
      %v914 = vshll.u32 %v734, 16
      %v916 = vrot.slane %v914, 5
      %v917 = vsel %vm773, %v912, %v916
      %v919 = vshrl.u32 %v735, 16
      %v921 = vrot.slane %v919, 4
      %v922 = vshll.u32 %v735, 16
      %v924 = vrot.slane %v922, 5
      %v925 = vor.u32 %v921, %v924
      %v926 = vrot.slane %v925, 4
      %v928 = vshll.u32 %v736, 16
      %v930 = vrot.slane %v928, 5
      %v931 = vsel %vm773, %v926, %v930
      %v932 = vshrl.u32 %v736, 16
      %v934 = vrot.slane %v932, 4
      %v935 = vor.u32 %v934, %v930
      %v936 = vrot.slane %v935, 4
      %v938 = vshll.u32 %v737, 16
      %v940 = vrot.slane %v938, 5
      %v941 = vsel %vm773, %v936, %v940
      %v943 = vshrl.u32 %v738, 16
      %v945 = vrot.slane %v943, 4
      %v946 = vshll.u32 %v738, 16
      %v948 = vrot.slane %v946, 5
      %v949 = vor.u32 %v945, %v948
      %v950 = vrot.slane %v949, 4
      %v952 = vshll.u32 %v739, 16
      %v954 = vrot.slane %v952, 5
      %v955 = vsel %vm773, %v950, %v954
      %v956 = vshrl.u32 %v739, 16
      %v958 = vrot.slane %v956, 4
      %v959 = vor.u32 %v958, %v954
      %v960 = vrot.slane %v959, 4
      %v962 = vshll.u32 %v740, 16
      %v964 = vrot.slane %v962, 5
      %v965 = vsel %vm773, %v960, %v964
      %v967 = vshrl.u32 %v741, 16
      %v969 = vrot.slane %v967, 4
      %v970 = vshll.u32 %v741, 16
      %v972 = vrot.slane %v970, 5
      %v973 = vor.u32 %v969, %v972
      %v974 = vrot.slane %v973, 4
      %v976 = vshll.u32 %v742, 16
      %v978 = vrot.slane %v976, 5
      %v979 = vsel %vm773, %v974, %v978
      %v980 = vshrl.u32 %v742, 16
      %v982 = vrot.slane %v980, 4
      %v983 = vor.u32 %v982, %v978
      %v984 = vrot.slane %v983, 4
      %v986 = vshll.u32 %v743, 16
      %v988 = vrot.slane %v986, 5
      %v989 = vsel %vm773, %v984, %v988
      %v991 = vshrl.u32 %v744, 16
      %v993 = vrot.slane %v991, 4
      %v994 = vshll.u32 %v744, 16
      %v996 = vrot.slane %v994, 5
      %v997 = vor.u32 %v993, %v996
      %v998 = vrot.slane %v997, 4
      %v1000 = vshll.u32 %v745, 16
      %v1002 = vrot.slane %v1000, 5
      %v1003 = vsel %vm773, %v998, %v1002
      %v1004 = vshrl.u32 %v745, 16
      %v1006 = vrot.slane %v1004, 4
      %v1007 = vor.u32 %v1006, %v1002
      %v1008 = vrot.slane %v1007, 4
      %v1010 = vshll.u32 %v746, 16
      %v1012 = vrot.slane %v1010, 5
      %v1013 = vsel %vm773, %v1008, %v1012
      %v1015 = vshrl.u32 %v747, 16
      %v1017 = vrot.slane %v1015, 4
      %v1018 = vshll.u32 %v747, 16
      %v1020 = vrot.slane %v1018, 5
      %v1021 = vor.u32 %v1017, %v1020
      %v1022 = vrot.slane %v1021, 4
      %v1024 = vshll.u32 %v748, 16
      %v1026 = vrot.slane %v1024, 5
      %v1027 = vsel %vm773, %v1022, %v1026
      %v1028 = vshrl.u32 %v748, 16
      %v1030 = vrot.slane %v1028, 4
      %v1031 = vor.u32 %v1030, %v1026
      %v1032 = vrot.slane %v1031, 4
      %v1034 = vshll.u32 %v749, 16
      %v1036 = vrot.slane %v1034, 5
      %v1037 = vsel %vm773, %v1032, %v1036
      %v1039 = vshrl.u32 %v750, 16
      %v1041 = vrot.slane %v1039, 4
      %v1042 = vshll.u32 %v750, 16
      %v1044 = vrot.slane %v1042, 5
      %v1045 = vor.u32 %v1041, %v1044
      %v1046 = vrot.slane %v1045, 4
      %v1048 = vshll.u32 %v751, 16
      %v1050 = vrot.slane %v1048, 5
      %v1051 = vsel %vm773, %v1046, %v1050
      %v1052 = vshrl.u32 %v751, 16
      %v1054 = vrot.slane %v1052, 4
      %v1055 = vor.u32 %v1054, %v1050
      %v1056 = vrot.slane %v1055, 4
      %v1058 = vshll.u32 %v752, 16
      %v1060 = vrot.slane %v1058, 5
      %v1061 = vsel %vm773, %v1056, %v1060
      %v1063 = vshrl.u32 %v753, 16
      %v1065 = vrot.slane %v1063, 4
      %v1066 = vshll.u32 %v753, 16
      %v1068 = vrot.slane %v1066, 5
      %v1069 = vor.u32 %v1065, %v1068
      %v1070 = vrot.slane %v1069, 4
      %v1072 = vshll.u32 %v754, 16
      %v1074 = vrot.slane %v1072, 5
      %v1075 = vsel %vm773, %v1070, %v1074
      %v1076 = vshrl.u32 %v754, 16
      %v1078 = vrot.slane %v1076, 4
      %v1079 = vor.u32 %v1078, %v1074
      %v1080 = vrot.slane %v1079, 4
      %v1082 = vshll.u32 %v755, 16
      %v1084 = vrot.slane %v1082, 5
      %v1085 = vsel %vm773, %v1080, %v1084
      %v1087 = vshrl.u32 %v756, 16
      %v1089 = vrot.slane %v1087, 4
      %v1090 = vshll.u32 %v756, 16
      %v1092 = vrot.slane %v1090, 5
      %v1093 = vor.u32 %v1089, %v1092
      %v1094 = vrot.slane %v1093, 4
      %v1096 = vshll.u32 %v757, 16
      %v1098 = vrot.slane %v1096, 5
      %v1099 = vsel %vm773, %v1094, %v1098
      %v1100 = vshrl.u32 %v757, 16
      %v1102 = vrot.slane %v1100, 4
      %v1103 = vor.u32 %v1102, %v1098
      %v1104 = vrot.slane %v1103, 4
      %v1106 = vshll.u32 %v758, 16
      %v1108 = vrot.slane %v1106, 5
      %v1109 = vsel %vm773, %v1104, %v1108
      %v1111 = vshrl.u32 %v759, 16
      %v1113 = vrot.slane %v1111, 4
      %v1114 = vshll.u32 %v759, 16
      %v1116 = vrot.slane %v1114, 5
      %v1117 = vor.u32 %v1113, %v1116
      %v1118 = vrot.slane %v1117, 4
      %v1120 = vshll.u32 %v760, 16
      %v1122 = vrot.slane %v1120, 5
      %v1123 = vsel %vm773, %v1118, %v1122
      %v1124 = vshrl.u32 %v760, 16
      %v1126 = vrot.slane %v1124, 4
      %v1127 = vor.u32 %v1126, %v1122
      %v1128 = vrot.slane %v1127, 4
      %v1130 = vshll.u32 %v761, 16
      %v1132 = vrot.slane %v1130, 5
      %v1133 = vsel %vm773, %v1128, %v1132
      %v1135 = vshrl.u32 %v762, 16
      %v1137 = vrot.slane %v1135, 4
      %v1138 = vshll.u32 %v762, 16
      %v1140 = vrot.slane %v1138, 5
      %v1141 = vor.u32 %v1137, %v1140
      %v1142 = vrot.slane %v1141, 4
      %v1144 = vshll.u32 %v763, 16
      %v1146 = vrot.slane %v1144, 5
      %v1147 = vsel %vm773, %v1142, %v1146
      %v1148 = vshrl.u32 %v763, 16
      %v1150 = vrot.slane %v1148, 4
      %v1151 = vor.u32 %v1150, %v1146
      %v1152 = vrot.slane %v1151, 4
      %v1154 = vshll.u32 %v764, 16
      %v1156 = vrot.slane %v1154, 5
      %v1157 = vsel %vm773, %v1152, %v1156
      %v1159 = vshrl.u32 %v765, 16
      %v1161 = vrot.slane %v1159, 4
      %v1162 = vshll.u32 %v765, 16
      %v1164 = vrot.slane %v1162, 5
      %v1165 = vor.u32 %v1161, %v1164
      %v1166 = vrot.slane %v1165, 4
      %v1168 = vshll.u32 %v766, 16
      %v1170 = vrot.slane %v1168, 5
      %v1171 = vsel %vm773, %v1166, %v1170
      %v1172 = vshrl.u32 %v766, 16
      %v1174 = vrot.slane %v1172, 4
      %v1175 = vor.u32 %v1174, %v1170
      %v1176 = vrot.slane %v1175, 4
      %v1178 = vshll.u32 %v767, 16
      %v1180 = vrot.slane %v1178, 5
      %v1181 = vsel %vm773, %v1176, %v1180
      %v1214 = vunpack.c.l.b16 %v717
      %v1215 = vunpack.c.l.b16 %v718
      %v1216 = vunpack.c.l.b16 %v720
      %v1217 = vunpack.c.l.b16 %v721
      %v1218 = vunpack.c.l.b16 %v723
      %v1219 = vunpack.c.l.b16 %v724
      %v1220 = vunpack.c.l.b16 %v726
      %v1221 = vunpack.c.l.b16 %v727
      %v1222 = vunpack.c.l.b16 %v729
      %v1223 = vunpack.c.l.b16 %v730
      %v1224 = vunpack.c.l.b16 %v732
      %v1225 = vunpack.c.l.b16 %v733
      %v1226 = vunpack.c.l.b16 %v735
      %v1227 = vunpack.c.l.b16 %v736
      %v1228 = vunpack.c.l.b16 %v738
      %v1229 = vunpack.c.l.b16 %v739
      %v1230 = vunpack.c.l.b16 %v741
      %v1231 = vunpack.c.l.b16 %v742
      %v1232 = vunpack.c.l.b16 %v744
      %v1233 = vunpack.c.l.b16 %v745
      %v1234 = vunpack.c.l.b16 %v747
      %v1235 = vunpack.c.l.b16 %v748
      %v1236 = vunpack.c.l.b16 %v750
      %v1237 = vunpack.c.l.b16 %v751
      %v1238 = vunpack.c.l.b16 %v753
      %v1239 = vunpack.c.l.b16 %v754
      %v1240 = vunpack.c.l.b16 %v756
      %v1241 = vunpack.c.l.b16 %v757
      %v1242 = vunpack.c.l.b16 %v759
      %v1243 = vunpack.c.l.b16 %v760
      %v1244 = vunpack.c.l.b16 %v762
      %v1245 = vunpack.c.l.b16 %v763
      %v1246 = vpack.c.b16 %v1215, %v1214
      %v1247 = vpack.c.b16 %v1217, %v1216
      %v1248 = vpack.c.b16 %v1219, %v1218
      %v1249 = vpack.c.b16 %v1221, %v1220
      %v1250 = vpack.c.b16 %v1223, %v1222
      %v1251 = vpack.c.b16 %v1225, %v1224
      %v1252 = vpack.c.b16 %v1227, %v1226
      %v1253 = vpack.c.b16 %v1229, %v1228
      %v1254 = vpack.c.b16 %v1231, %v1230
      %v1255 = vpack.c.b16 %v1233, %v1232
      %v1256 = vpack.c.b16 %v1235, %v1234
      %v1257 = vpack.c.b16 %v1237, %v1236
      %v1258 = vpack.c.b16 %v1239, %v1238
      %v1259 = vpack.c.b16 %v1241, %v1240
      %v1260 = vpack.c.b16 %v1243, %v1242
      %v1261 = vpack.c.b16 %v1245, %v1244
      %v1278 = vunpack.c.l.b16 %v787
      %v1279 = vunpack.c.l.b16 %v797
      %v1280 = vunpack.c.l.b16 %v811
      %v1281 = vunpack.c.l.b16 %v821
      %v1282 = vunpack.c.l.b16 %v835
      %v1283 = vunpack.c.l.b16 %v845
      %v1284 = vunpack.c.l.b16 %v859
      %v1285 = vunpack.c.l.b16 %v869
      %v1286 = vunpack.c.l.b16 %v883
      %v1287 = vunpack.c.l.b16 %v893
      %v1288 = vunpack.c.l.b16 %v907
      %v1289 = vunpack.c.l.b16 %v917
      %v1290 = vunpack.c.l.b16 %v931
      %v1291 = vunpack.c.l.b16 %v941
      %v1292 = vunpack.c.l.b16 %v955
      %v1293 = vunpack.c.l.b16 %v965
      %v1294 = vunpack.c.l.b16 %v979
      %v1295 = vunpack.c.l.b16 %v989
      %v1296 = vunpack.c.l.b16 %v1003
      %v1297 = vunpack.c.l.b16 %v1013
      %v1298 = vunpack.c.l.b16 %v1027
      %v1299 = vunpack.c.l.b16 %v1037
      %v1300 = vunpack.c.l.b16 %v1051
      %v1301 = vunpack.c.l.b16 %v1061
      %v1302 = vunpack.c.l.b16 %v1075
      %v1303 = vunpack.c.l.b16 %v1085
      %v1304 = vunpack.c.l.b16 %v1099
      %v1305 = vunpack.c.l.b16 %v1109
      %v1306 = vunpack.c.l.b16 %v1123
      %v1307 = vunpack.c.l.b16 %v1133
      %v1308 = vunpack.c.l.b16 %v1147
      %v1309 = vunpack.c.l.b16 %v1157
      %v1310 = vpack.c.b16 %v1279, %v1278
      %v1311 = vpack.c.b16 %v1281, %v1280
      %v1312 = vpack.c.b16 %v1283, %v1282
      %v1313 = vpack.c.b16 %v1285, %v1284
      %v1314 = vpack.c.b16 %v1287, %v1286
      %v1315 = vpack.c.b16 %v1289, %v1288
      %v1316 = vpack.c.b16 %v1291, %v1290
      %v1317 = vpack.c.b16 %v1293, %v1292
      %v1318 = vpack.c.b16 %v1295, %v1294
      %v1319 = vpack.c.b16 %v1297, %v1296
      %v1320 = vpack.c.b16 %v1299, %v1298
      %v1321 = vpack.c.b16 %v1301, %v1300
      %v1322 = vpack.c.b16 %v1303, %v1302
      %v1323 = vpack.c.b16 %v1305, %v1304
      %v1324 = vpack.c.b16 %v1307, %v1306
      %v1325 = vpack.c.b16 %v1309, %v1308
      %v1344 = vunpack.c.l.b16 %v765
      %v1345 = vunpack.c.l.b16 %v766
      %v1346 = vpack.c.b16 %v1345, %v1344
      %v1348 = vunpack.c.l.b16 %v1171
      %v1349 = vunpack.c.l.b16 %v1181
      %v1350 = vpack.c.b16 %v1349, %v1348
      %v1352 = vld [vmem:[%s1] sm:$0xf]
      %v1353 = vld [vmem:[%s1 + $0x4] sm:$0xf]
      %v1354 = vld [vmem:[%s1 + $0x8] sm:$0xf]
      %v1355 = vld [vmem:[%s1 + $0xc] sm:$0xf]
      %v1356 = vld [vmem:[%s1 + $0x10] sm:$0xf]
      %v1357 = vld [vmem:[%s1 + $0x14] sm:$0xf]
      %v1358 = vld [vmem:[%s1 + $0x18] sm:$0xf]
      %v1359 = vld [vmem:[%s1 + $0x1c] sm:$0xf]
      %v1360 = vld [vmem:[%s1 + $0x20] sm:$0xf]
      %v1361 = vld [vmem:[%s1 + $0x24] sm:$0xf]
      %v1362 = vld [vmem:[%s1 + $0x28] sm:$0xf]
      %v1363 = vld [vmem:[%s1 + $0x2c] sm:$0xf]
      %v1364 = vld [vmem:[%s1 + $0x30] sm:$0xf]
      %v1365 = vld [vmem:[%s1 + $0x34] sm:$0xf]
      %v1366 = vld [vmem:[%s1 + $0x38] sm:$0xf]
      %v1367 = vld [vmem:[%s1 + $0x3c] sm:$0xf]
      %v1368 = vld [vmem:[%s1 + $0x40] sm:$0xf]
      %v1369 = vld [vmem:[%s1 + $0x44] sm:$0xf]
      %v1370 = vld [vmem:[%s1 + $0x48] sm:$0xf]
      %v1371 = vld [vmem:[%s1 + $0x4c] sm:$0xf]
      %v1372 = vld [vmem:[%s1 + $0x50] sm:$0xf]
      %v1373 = vld [vmem:[%s1 + $0x54] sm:$0xf]
      %v1374 = vld [vmem:[%s1 + $0x58] sm:$0xf]
      %v1375 = vld [vmem:[%s1 + $0x5c] sm:$0xf]
      %v1376 = vld [vmem:[%s1 + $0x60] sm:$0xf]
      %v1377 = vld [vmem:[%s1 + $0x64] sm:$0xf]
      %v1378 = vld [vmem:[%s1 + $0x68] sm:$0xf]
      %v1379 = vld [vmem:[%s1 + $0x6c] sm:$0xf]
      %v1380 = vld [vmem:[%s1 + $0x70] sm:$0xf]
      %v1381 = vld [vmem:[%s1 + $0x74] sm:$0xf]
      %v1382 = vld [vmem:[%s1 + $0x78] sm:$0xf]
      %v1383 = vld [vmem:[%s1 + $0x7c] sm:$0xf]
      %v1384 = vld [vmem:[%s1 + $0x80] sm:$0xf]
      %v1385 = vld [vmem:[%s1 + $0x84] sm:$0xf]
      %v1386 = vld [vmem:[%s1 + $0x88] sm:$0xf]
      %v1387 = vld [vmem:[%s1 + $0x8c] sm:$0xf]
      %v1388 = vld [vmem:[%s1 + $0x90] sm:$0xf]
      %v1389 = vld [vmem:[%s1 + $0x94] sm:$0xf]
      %v1390 = vld [vmem:[%s1 + $0x98] sm:$0xf]
      %v1391 = vld [vmem:[%s1 + $0x9c] sm:$0xf]
      %v1392 = vld [vmem:[%s1 + $0xa0] sm:$0xf]
      %v1393 = vld [vmem:[%s1 + $0xa4] sm:$0xf]
      %v1394 = vld [vmem:[%s1 + $0xa8] sm:$0xf]
      %v1395 = vld [vmem:[%s1 + $0xac] sm:$0xf]
      %v1396 = vld [vmem:[%s1 + $0xb0] sm:$0xf]
      %v1397 = vld [vmem:[%s1 + $0xb4] sm:$0xf]
      %v1398 = vld [vmem:[%s1 + $0xb8] sm:$0xf]
      %v1399 = vld [vmem:[%s1 + $0xbc] sm:$0xf]
      %v1400 = vld [vmem:[%s1 + $0xc0] sm:$0xf]
      %v1401 = vld [vmem:[%s1 + $0xc4] sm:$0xf]
      %v1402 = vld [vmem:[%s1 + $0xc8] sm:$0xf]
      %v1403 = vld [vmem:[%s1 + $0xcc] sm:$0xf]
      %v1404 = vld [vmem:[%s1 + $0xd0] sm:$0xf]
      %v1405 = vld [vmem:[%s1 + $0xd4] sm:$0xf]
      %v1406 = vld [vmem:[%s1 + $0xd8] sm:$0xf]
      %v1407 = vld [vmem:[%s1 + $0xdc] sm:$0xf]
      %v1408 = vld [vmem:[%s1 + $0xe0] sm:$0xf]
      %v1409 = vld [vmem:[%s1 + $0xe4] sm:$0xf]
      %v1410 = vld [vmem:[%s1 + $0xe8] sm:$0xf]
      %v1411 = vld [vmem:[%s1 + $0xec] sm:$0xf]
      %v1412 = vld [vmem:[%s1 + $0xf0] sm:$0xf]
      %v1413 = vld [vmem:[%s1 + $0xf4] sm:$0xf]
      %v1414 = vld [vmem:[%s1 + $0xf8] sm:$0xf]
      %v1415 = vld [vmem:[%s1 + $0xfc] sm:$0xf]
      %v1416 = vld [vmem:[%s2] sm:$0x1]
      %v1418 = vlaneseq
      %v1419 = vshrl.u32 %v1418, 7
      %v1420 = vsub.s32 0, %v1419
      %v1421 = vrot.slane %v1416, %v1420
      %v1487 = vunpack.c.l.b16 %v1352
      %v1488 = vunpack.c.l.b16 %v1353
      %v1489 = vunpack.c.l.b16 %v1354
      %v1490 = vunpack.c.l.b16 %v1355
      %v1491 = vunpack.c.l.b16 %v1356
      %v1492 = vunpack.c.l.b16 %v1357
      %v1493 = vunpack.c.l.b16 %v1358
      %v1494 = vunpack.c.l.b16 %v1359
      %v1495 = vunpack.c.l.b16 %v1360
      %v1496 = vunpack.c.l.b16 %v1361
      %v1497 = vunpack.c.l.b16 %v1362
      %v1498 = vunpack.c.l.b16 %v1363
      %v1499 = vunpack.c.l.b16 %v1364
      %v1500 = vunpack.c.l.b16 %v1365
      %v1501 = vunpack.c.l.b16 %v1366
      %v1502 = vunpack.c.l.b16 %v1367
      %v1503 = vunpack.c.l.b16 %v1368
      %v1504 = vunpack.c.l.b16 %v1369
      %v1505 = vunpack.c.l.b16 %v1370
      %v1506 = vunpack.c.l.b16 %v1371
      %v1507 = vunpack.c.l.b16 %v1372
      %v1508 = vunpack.c.l.b16 %v1373
      %v1509 = vunpack.c.l.b16 %v1374
      %v1510 = vunpack.c.l.b16 %v1375
      %v1511 = vunpack.c.l.b16 %v1376
      %v1512 = vunpack.c.l.b16 %v1377
      %v1513 = vunpack.c.l.b16 %v1378
      %v1514 = vunpack.c.l.b16 %v1379
      %v1515 = vunpack.c.l.b16 %v1380
      %v1516 = vunpack.c.l.b16 %v1381
      %v1517 = vunpack.c.l.b16 %v1382
      %v1518 = vunpack.c.l.b16 %v1383
      %v1519 = vunpack.c.l.b16 %v1384
      %v1520 = vunpack.c.l.b16 %v1385
      %v1521 = vunpack.c.l.b16 %v1386
      %v1522 = vunpack.c.l.b16 %v1387
      %v1523 = vunpack.c.l.b16 %v1388
      %v1524 = vunpack.c.l.b16 %v1389
      %v1525 = vunpack.c.l.b16 %v1390
      %v1526 = vunpack.c.l.b16 %v1391
      %v1527 = vunpack.c.l.b16 %v1392
      %v1528 = vunpack.c.l.b16 %v1393
      %v1529 = vunpack.c.l.b16 %v1394
      %v1530 = vunpack.c.l.b16 %v1395
      %v1531 = vunpack.c.l.b16 %v1396
      %v1532 = vunpack.c.l.b16 %v1397
      %v1533 = vunpack.c.l.b16 %v1398
      %v1534 = vunpack.c.l.b16 %v1399
      %v1535 = vunpack.c.l.b16 %v1400
      %v1536 = vunpack.c.l.b16 %v1401
      %v1537 = vunpack.c.l.b16 %v1402
      %v1538 = vunpack.c.l.b16 %v1403
      %v1539 = vunpack.c.l.b16 %v1404
      %v1540 = vunpack.c.l.b16 %v1405
      %v1541 = vunpack.c.l.b16 %v1406
      %v1542 = vunpack.c.l.b16 %v1407
      %v1543 = vunpack.c.l.b16 %v1408
      %v1544 = vunpack.c.l.b16 %v1409
      %v1545 = vunpack.c.l.b16 %v1410
      %v1546 = vunpack.c.l.b16 %v1411
      %v1547 = vunpack.c.l.b16 %v1412
      %v1548 = vunpack.c.l.b16 %v1413
      %v1549 = vunpack.c.l.b16 %v1414
      %v1550 = vunpack.c.l.b16 %v1415
      %v1551 = vpack.c.b16 %v1488, %v1487
      %v1552 = vpack.c.b16 %v1490, %v1489
      %v1553 = vpack.c.b16 %v1492, %v1491
      %v1554 = vpack.c.b16 %v1494, %v1493
      %v1555 = vpack.c.b16 %v1496, %v1495
      %v1556 = vpack.c.b16 %v1498, %v1497
      %v1557 = vpack.c.b16 %v1500, %v1499
      %v1558 = vpack.c.b16 %v1502, %v1501
      %v1559 = vpack.c.b16 %v1504, %v1503
      %v1560 = vpack.c.b16 %v1506, %v1505
      %v1561 = vpack.c.b16 %v1508, %v1507
      %v1562 = vpack.c.b16 %v1510, %v1509
      %v1563 = vpack.c.b16 %v1512, %v1511
      %v1564 = vpack.c.b16 %v1514, %v1513
      %v1565 = vpack.c.b16 %v1516, %v1515
      %v1566 = vpack.c.b16 %v1518, %v1517
      %v1567 = vpack.c.b16 %v1520, %v1519
      %v1568 = vpack.c.b16 %v1522, %v1521
      %v1569 = vpack.c.b16 %v1524, %v1523
      %v1570 = vpack.c.b16 %v1526, %v1525
      %v1571 = vpack.c.b16 %v1528, %v1527
      %v1572 = vpack.c.b16 %v1530, %v1529
      %v1573 = vpack.c.b16 %v1532, %v1531
      %v1574 = vpack.c.b16 %v1534, %v1533
      %v1575 = vpack.c.b16 %v1536, %v1535
      %v1576 = vpack.c.b16 %v1538, %v1537
      %v1577 = vpack.c.b16 %v1540, %v1539
      %v1578 = vpack.c.b16 %v1542, %v1541
      %v1579 = vpack.c.b16 %v1544, %v1543
      %v1580 = vpack.c.b16 %v1546, %v1545
      %v1581 = vpack.c.b16 %v1548, %v1547
      %v1582 = vpack.c.b16 %v1550, %v1549
      %1615 = vmatprep.subr.bf16.mxu0 0
      %1616 = vmatpush1.bf16.msra.mxu0 %v1558
      %1617 = vmatprep.subr.bf16.mxu0 0
      %1618 = vmatpush1.bf16.msra.mxu0 %v1557
      %1619 = vmatprep.subr.bf16.mxu0 0
      %1620 = vmatpush1.bf16.msra.mxu0 %v1556
      %1621 = vmatprep.subr.bf16.mxu0 0
      %1622 = vmatpush1.bf16.msra.mxu0 %v1555
      %1623 = vmatprep.subr.bf16.mxu0 0
      %1624 = vmatpush1.bf16.msra.mxu0 %v1554
      %1625 = vmatprep.subr.bf16.mxu0 0
      %1626 = vmatpush1.bf16.msra.mxu0 %v1553
      %1627 = vmatprep.subr.bf16.mxu0 0
      %1628 = vmatpush1.bf16.msra.mxu0 %v1552
      %1629 = vmatprep.subr.bf16.mxu0 0
      %1630 = vmatpush1.bf16.msra.mxu0 %v1551
      %1631 = vmatprep.subr.bf16.mxu0 0
      %1632 = vmatpush2.bf16.msra.mxu0 %v1566
      %1633 = vmatprep.subr.bf16.mxu0 0
      %1634 = vmatpush2.bf16.msra.mxu0 %v1565
      %1635 = vmatprep.subr.bf16.mxu0 0
      %1636 = vmatpush2.bf16.msra.mxu0 %v1564
      %1637 = vmatprep.subr.bf16.mxu0 0
      %1638 = vmatpush2.bf16.msra.mxu0 %v1563
      %1639 = vmatprep.subr.bf16.mxu0 0
      %1640 = vmatpush2.bf16.msra.mxu0 %v1562
      %1641 = vmatprep.subr.bf16.mxu0 0
      %1642 = vmatpush2.bf16.msra.mxu0 %v1561
      %1643 = vmatprep.subr.bf16.mxu0 0
      %1644 = vmatpush2.bf16.msra.mxu0 %v1560
      %1645 = vmatprep.subr.bf16.mxu0 0
      %1646 = vmatpush2.bf16.msra.mxu0 %v1559
      %1647 = vmatprep.mubr.bf16.mxu0 %v1310
      %1648 = vmatmul.mubr.bf16.gmra.mxu0 %v1246
      %v1649 = vpop.f32.mrf.mxu0
      %v1650 = vadd.f32 %v1421, %v1649
      %v1651 = vpop.f32.mrf.mxu0
      %v1652 = vpop.f32.mrf.mxu0
      %v1653 = vadd.f32 %v1421, %v1652
      %v1654 = vpop.f32.mrf.mxu0
      %1655 = vmatprep.mubr.bf16.mxu0 %v1311
      %1656 = vmatmul.mubr.bf16.gmra.mxu0 %v1247
      %v1657 = vpop.f32.mrf.mxu0
      %v1658 = vadd.f32 %v1421, %v1657
      %v1659 = vpop.f32.mrf.mxu0
      %v1660 = vpop.f32.mrf.mxu0
      %v1661 = vadd.f32 %v1421, %v1660
      %v1662 = vpop.f32.mrf.mxu0
      %1663 = vmatprep.mubr.bf16.mxu0 %v1312
      %1664 = vmatmul.mubr.bf16.gmra.mxu0 %v1248
      %v1665 = vpop.f32.mrf.mxu0
      %v1666 = vadd.f32 %v1421, %v1665
      %v1667 = vpop.f32.mrf.mxu0
      %v1668 = vpop.f32.mrf.mxu0
      %v1669 = vadd.f32 %v1421, %v1668
      %v1670 = vpop.f32.mrf.mxu0
      %1671 = vmatprep.mubr.bf16.mxu0 %v1313
      %1672 = vmatmul.mubr.bf16.gmra.mxu0 %v1249
      %v1673 = vpop.f32.mrf.mxu0
      %v1674 = vadd.f32 %v1421, %v1673
      %v1675 = vpop.f32.mrf.mxu0
      %v1676 = vpop.f32.mrf.mxu0
      %v1677 = vadd.f32 %v1421, %v1676
      %v1678 = vpop.f32.mrf.mxu0
      %1679 = vmatprep.mubr.bf16.mxu0 %v1314
      %1680 = vmatmul.mubr.bf16.gmra.mxu0 %v1250
      %v1681 = vpop.f32.mrf.mxu0
      %v1682 = vadd.f32 %v1421, %v1681
      %v1683 = vpop.f32.mrf.mxu0
      %v1684 = vpop.f32.mrf.mxu0
      %v1685 = vadd.f32 %v1421, %v1684
      %v1686 = vpop.f32.mrf.mxu0
      %1687 = vmatprep.mubr.bf16.mxu0 %v1315
      %1688 = vmatmul.mubr.bf16.gmra.mxu0 %v1251
      %v1689 = vpop.f32.mrf.mxu0
      %v1690 = vadd.f32 %v1421, %v1689
      %v1691 = vpop.f32.mrf.mxu0
      %v1692 = vpop.f32.mrf.mxu0
      %v1693 = vadd.f32 %v1421, %v1692
      %v1694 = vpop.f32.mrf.mxu0
      %1695 = vmatprep.mubr.bf16.mxu0 %v1316
      %1696 = vmatmul.mubr.bf16.gmra.mxu0 %v1252
      %v1697 = vpop.f32.mrf.mxu0
      %v1698 = vadd.f32 %v1421, %v1697
      %v1699 = vpop.f32.mrf.mxu0
      %v1700 = vpop.f32.mrf.mxu0
      %v1701 = vadd.f32 %v1421, %v1700
      %v1702 = vpop.f32.mrf.mxu0
      %1703 = vmatprep.mubr.bf16.mxu0 %v1317
      %1704 = vmatmul.mubr.bf16.gmra.mxu0 %v1253
      %v1705 = vpop.f32.mrf.mxu0
      %v1706 = vadd.f32 %v1421, %v1705
      %v1707 = vpop.f32.mrf.mxu0
      %v1708 = vpop.f32.mrf.mxu0
      %v1709 = vadd.f32 %v1421, %v1708
      %v1710 = vpop.f32.mrf.mxu0
      %1711 = vmatprep.mubr.bf16.mxu0 %v1318
      %1712 = vmatmul.mubr.bf16.gmra.mxu0 %v1254
      %v1713 = vpop.f32.mrf.mxu0
      %v1714 = vadd.f32 %v1421, %v1713
      %v1715 = vpop.f32.mrf.mxu0
      %v1716 = vpop.f32.mrf.mxu0
      %v1717 = vadd.f32 %v1421, %v1716
      %v1718 = vpop.f32.mrf.mxu0
      %1719 = vmatprep.mubr.bf16.mxu0 %v1319
      %1720 = vmatmul.mubr.bf16.gmra.mxu0 %v1255
      %v1721 = vpop.f32.mrf.mxu0
      %v1722 = vadd.f32 %v1421, %v1721
      %v1723 = vpop.f32.mrf.mxu0
      %v1724 = vpop.f32.mrf.mxu0
      %v1725 = vadd.f32 %v1421, %v1724
      %v1726 = vpop.f32.mrf.mxu0
      %1727 = vmatprep.mubr.bf16.mxu0 %v1320
      %1728 = vmatmul.mubr.bf16.gmra.mxu0 %v1256
      %v1729 = vpop.f32.mrf.mxu0
      %v1730 = vadd.f32 %v1421, %v1729
      %v1731 = vpop.f32.mrf.mxu0
      %v1732 = vpop.f32.mrf.mxu0
      %v1733 = vadd.f32 %v1421, %v1732
      %v1734 = vpop.f32.mrf.mxu0
      %1735 = vmatprep.mubr.bf16.mxu0 %v1321
      %1736 = vmatmul.mubr.bf16.gmra.mxu0 %v1257
      %v1737 = vpop.f32.mrf.mxu0
      %v1738 = vadd.f32 %v1421, %v1737
      %v1739 = vpop.f32.mrf.mxu0
      %v1740 = vpop.f32.mrf.mxu0
      %v1741 = vadd.f32 %v1421, %v1740
      %v1742 = vpop.f32.mrf.mxu0
      %1743 = vmatprep.mubr.bf16.mxu0 %v1322
      %1744 = vmatmul.mubr.bf16.gmra.mxu0 %v1258
      %v1745 = vpop.f32.mrf.mxu0
      %v1746 = vadd.f32 %v1421, %v1745
      %v1747 = vpop.f32.mrf.mxu0
      %v1748 = vpop.f32.mrf.mxu0
      %v1749 = vadd.f32 %v1421, %v1748
      %v1750 = vpop.f32.mrf.mxu0
      %1751 = vmatprep.mubr.bf16.mxu0 %v1323
      %1752 = vmatmul.mubr.bf16.gmra.mxu0 %v1259
      %v1753 = vpop.f32.mrf.mxu0
      %v1754 = vadd.f32 %v1421, %v1753
      %v1755 = vpop.f32.mrf.mxu0
      %v1756 = vpop.f32.mrf.mxu0
      %v1757 = vadd.f32 %v1421, %v1756
      %v1758 = vpop.f32.mrf.mxu0
      %1759 = vmatprep.mubr.bf16.mxu0 %v1324
      %1760 = vmatmul.mubr.bf16.gmra.mxu0 %v1260
      %v1761 = vpop.f32.mrf.mxu0
      %v1762 = vadd.f32 %v1421, %v1761
      %v1763 = vpop.f32.mrf.mxu0
      %v1764 = vpop.f32.mrf.mxu0
      %v1765 = vadd.f32 %v1421, %v1764
      %v1766 = vpop.f32.mrf.mxu0
      %1767 = vmatprep.mubr.bf16.mxu0 %v1325
      %1768 = vmatmul.mubr.bf16.gmra.mxu0 %v1261
      %v1769 = vpop.f32.mrf.mxu0
      %v1770 = vadd.f32 %v1421, %v1769
      %v1771 = vpop.f32.mrf.mxu0
      %v1772 = vpop.f32.mrf.mxu0
      %v1773 = vadd.f32 %v1421, %v1772
      %v1774 = vpop.f32.mrf.mxu0
      %1775 = vdwg.mxu0
      %1776 = vmatprep.subr.bf16.mxu0 0
      %1777 = vmatpush1.bf16.msra.mxu0 %v1574
      %1778 = vmatprep.subr.bf16.mxu0 0
      %1779 = vmatpush1.bf16.msra.mxu0 %v1573
      %1780 = vmatprep.subr.bf16.mxu0 0
      %1781 = vmatpush1.bf16.msra.mxu0 %v1572
      %1782 = vmatprep.subr.bf16.mxu0 0
      %1783 = vmatpush1.bf16.msra.mxu0 %v1571
      %1784 = vmatprep.subr.bf16.mxu0 0
      %1785 = vmatpush1.bf16.msra.mxu0 %v1570
      %1786 = vmatprep.subr.bf16.mxu0 0
      %1787 = vmatpush1.bf16.msra.mxu0 %v1569
      %1788 = vmatprep.subr.bf16.mxu0 0
      %1789 = vmatpush1.bf16.msra.mxu0 %v1568
      %1790 = vmatprep.subr.bf16.mxu0 0
      %1791 = vmatpush1.bf16.msra.mxu0 %v1567
      %1792 = vmatprep.subr.bf16.mxu0 0
      %1793 = vmatpush2.bf16.msra.mxu0 %v1582
      %1794 = vmatprep.subr.bf16.mxu0 0
      %1795 = vmatpush2.bf16.msra.mxu0 %v1581
      %1796 = vmatprep.subr.bf16.mxu0 0
      %1797 = vmatpush2.bf16.msra.mxu0 %v1580
      %1798 = vmatprep.subr.bf16.mxu0 0
      %1799 = vmatpush2.bf16.msra.mxu0 %v1579
      %1800 = vmatprep.subr.bf16.mxu0 0
      %1801 = vmatpush2.bf16.msra.mxu0 %v1578
      %1802 = vmatprep.subr.bf16.mxu0 0
      %1803 = vmatpush2.bf16.msra.mxu0 %v1577
      %1804 = vmatprep.subr.bf16.mxu0 0
      %1805 = vmatpush2.bf16.msra.mxu0 %v1576
      %1806 = vmatprep.subr.bf16.mxu0 0
      %1807 = vmatpush2.bf16.msra.mxu0 %v1575
      %1808 = vmatprep.mubr.bf16.mxu0 %v1311
      %1809 = vmatmul.mubr.bf16.gmra.mxu0 %v1247
      %v1810 = vpop.f32.mrf.mxu0
      %v1811 = vadd.f32 %v1650, %v1810
      %v1812 = vpop.f32.mrf.mxu0
      %v1813 = vpop.f32.mrf.mxu0
      %v1814 = vadd.f32 %v1653, %v1813
      %v1815 = vpop.f32.mrf.mxu0
      %1816 = vmatprep.mubr.bf16.mxu0 %v1312
      %1817 = vmatmul.mubr.bf16.gmra.mxu0 %v1248
      %v1818 = vpop.f32.mrf.mxu0
      %v1819 = vadd.f32 %v1658, %v1818
      %v1820 = vpop.f32.mrf.mxu0
      %v1821 = vpop.f32.mrf.mxu0
      %v1822 = vadd.f32 %v1661, %v1821
      %v1823 = vpop.f32.mrf.mxu0
      %1824 = vmatprep.mubr.bf16.mxu0 %v1313
      %1825 = vmatmul.mubr.bf16.gmra.mxu0 %v1249
      %v1826 = vpop.f32.mrf.mxu0
      %v1827 = vadd.f32 %v1666, %v1826
      %v1828 = vpop.f32.mrf.mxu0
      %v1829 = vpop.f32.mrf.mxu0
      %v1830 = vadd.f32 %v1669, %v1829
      %v1831 = vpop.f32.mrf.mxu0
      %1832 = vmatprep.mubr.bf16.mxu0 %v1314
      %1833 = vmatmul.mubr.bf16.gmra.mxu0 %v1250
      %v1834 = vpop.f32.mrf.mxu0
      %v1835 = vadd.f32 %v1674, %v1834
      %v1836 = vpop.f32.mrf.mxu0
      %v1837 = vpop.f32.mrf.mxu0
      %v1838 = vadd.f32 %v1677, %v1837
      %v1839 = vpop.f32.mrf.mxu0
      %1840 = vmatprep.mubr.bf16.mxu0 %v1315
      %1841 = vmatmul.mubr.bf16.gmra.mxu0 %v1251
      %v1842 = vpop.f32.mrf.mxu0
      %v1843 = vadd.f32 %v1682, %v1842
      %v1844 = vpop.f32.mrf.mxu0
      %v1845 = vpop.f32.mrf.mxu0
      %v1846 = vadd.f32 %v1685, %v1845
      %v1847 = vpop.f32.mrf.mxu0
      %1848 = vmatprep.mubr.bf16.mxu0 %v1316
      %1849 = vmatmul.mubr.bf16.gmra.mxu0 %v1252
      %v1850 = vpop.f32.mrf.mxu0
      %v1851 = vadd.f32 %v1690, %v1850
      %v1852 = vpop.f32.mrf.mxu0
      %v1853 = vpop.f32.mrf.mxu0
      %v1854 = vadd.f32 %v1693, %v1853
      %v1855 = vpop.f32.mrf.mxu0
      %1856 = vmatprep.mubr.bf16.mxu0 %v1317
      %1857 = vmatmul.mubr.bf16.gmra.mxu0 %v1253
      %v1858 = vpop.f32.mrf.mxu0
      %v1859 = vadd.f32 %v1698, %v1858
      %v1860 = vpop.f32.mrf.mxu0
      %v1861 = vpop.f32.mrf.mxu0
      %v1862 = vadd.f32 %v1701, %v1861
      %v1863 = vpop.f32.mrf.mxu0
      %1864 = vmatprep.mubr.bf16.mxu0 %v1318
      %1865 = vmatmul.mubr.bf16.gmra.mxu0 %v1254
      %v1866 = vpop.f32.mrf.mxu0
      %v1867 = vadd.f32 %v1706, %v1866
      %v1868 = vpop.f32.mrf.mxu0
      %v1869 = vpop.f32.mrf.mxu0
      %v1870 = vadd.f32 %v1709, %v1869
      %v1871 = vpop.f32.mrf.mxu0
      %1872 = vmatprep.mubr.bf16.mxu0 %v1319
      %1873 = vmatmul.mubr.bf16.gmra.mxu0 %v1255
      %v1874 = vpop.f32.mrf.mxu0
      %v1875 = vadd.f32 %v1714, %v1874
      %v1876 = vpop.f32.mrf.mxu0
      %v1877 = vpop.f32.mrf.mxu0
      %v1878 = vadd.f32 %v1717, %v1877
      %v1879 = vpop.f32.mrf.mxu0
      %1880 = vmatprep.mubr.bf16.mxu0 %v1320
      %1881 = vmatmul.mubr.bf16.gmra.mxu0 %v1256
      %v1882 = vpop.f32.mrf.mxu0
      %v1883 = vadd.f32 %v1722, %v1882
      %v1884 = vpop.f32.mrf.mxu0
      %v1885 = vpop.f32.mrf.mxu0
      %v1886 = vadd.f32 %v1725, %v1885
      %v1887 = vpop.f32.mrf.mxu0
      %1888 = vmatprep.mubr.bf16.mxu0 %v1321
      %1889 = vmatmul.mubr.bf16.gmra.mxu0 %v1257
      %v1890 = vpop.f32.mrf.mxu0
      %v1891 = vadd.f32 %v1730, %v1890
      %v1892 = vpop.f32.mrf.mxu0
      %v1893 = vpop.f32.mrf.mxu0
      %v1894 = vadd.f32 %v1733, %v1893
      %v1895 = vpop.f32.mrf.mxu0
      %1896 = vmatprep.mubr.bf16.mxu0 %v1322
      %1897 = vmatmul.mubr.bf16.gmra.mxu0 %v1258
      %v1898 = vpop.f32.mrf.mxu0
      %v1899 = vadd.f32 %v1738, %v1898
      %v1900 = vpop.f32.mrf.mxu0
      %v1901 = vpop.f32.mrf.mxu0
      %v1902 = vadd.f32 %v1741, %v1901
      %v1903 = vpop.f32.mrf.mxu0
      %1904 = vmatprep.mubr.bf16.mxu0 %v1323
      %1905 = vmatmul.mubr.bf16.gmra.mxu0 %v1259
      %v1906 = vpop.f32.mrf.mxu0
      %v1907 = vadd.f32 %v1746, %v1906
      %v1908 = vpop.f32.mrf.mxu0
      %v1909 = vpop.f32.mrf.mxu0
      %v1910 = vadd.f32 %v1749, %v1909
      %v1911 = vpop.f32.mrf.mxu0
      %1912 = vmatprep.mubr.bf16.mxu0 %v1324
      %1913 = vmatmul.mubr.bf16.gmra.mxu0 %v1260
      %v1914 = vpop.f32.mrf.mxu0
      %v1915 = vadd.f32 %v1754, %v1914
      %v1916 = vpop.f32.mrf.mxu0
      %v1917 = vpop.f32.mrf.mxu0
      %v1918 = vadd.f32 %v1757, %v1917
      %v1919 = vpop.f32.mrf.mxu0
      %1920 = vmatprep.mubr.bf16.mxu0 %v1325
      %1921 = vmatmul.mubr.bf16.gmra.mxu0 %v1261
      %v1922 = vpop.f32.mrf.mxu0
      %v1923 = vadd.f32 %v1762, %v1922
      %v1924 = vpop.f32.mrf.mxu0
      %v1925 = vpop.f32.mrf.mxu0
      %v1926 = vadd.f32 %v1765, %v1925
      %v1927 = vpop.f32.mrf.mxu0
      %1928 = vmatprep.mubr.bf16.mxu0 %v1350
      %1929 = vmatmul.mubr.bf16.gmra.mxu0 %v1346
      %v1930 = vpop.f32.mrf.mxu0
      %v1931 = vadd.f32 %v1770, %v1930
      %v1932 = vpop.f32.mrf.mxu0
      %v1933 = vpop.f32.mrf.mxu0
      %v1934 = vadd.f32 %v1773, %v1933
      %v1935 = vpop.f32.mrf.mxu0
      %1936 = vdwg.mxu0
      %vm1953 = vcmask 1042432
      %vm1954 = vcmask 1046532
      %vm1955 = vmor %vm1953, %vm1954
      %v1956 = vrot.slane %v717, 5
      %v1957 = vrot.slane %v1956, 4
      %v1958 = vrot.slane %v718, 5
      %v1959 = vsel %vm1955, %v1957, %v1958
      %v1960 = vrot.slane %v1958, 4
      %v1961 = vrot.slane %v719, 5
      %v1962 = vsel %vm1955, %v1960, %v1961
      %v1963 = vrot.slane %v720, 5
      %v1964 = vrot.slane %v1963, 4
      %v1965 = vrot.slane %v721, 5
      %v1966 = vsel %vm1955, %v1964, %v1965
      %v1967 = vrot.slane %v1965, 4
      %v1968 = vrot.slane %v722, 5
      %v1969 = vsel %vm1955, %v1967, %v1968
      %v1970 = vrot.slane %v723, 5
      %v1971 = vrot.slane %v1970, 4
      %v1972 = vrot.slane %v724, 5
      %v1973 = vsel %vm1955, %v1971, %v1972
      %v1974 = vrot.slane %v1972, 4
      %v1975 = vrot.slane %v725, 5
      %v1976 = vsel %vm1955, %v1974, %v1975
      %v1977 = vrot.slane %v726, 5
      %v1978 = vrot.slane %v1977, 4
      %v1979 = vrot.slane %v727, 5
      %v1980 = vsel %vm1955, %v1978, %v1979
      %v1981 = vrot.slane %v1979, 4
      %v1982 = vrot.slane %v728, 5
      %v1983 = vsel %vm1955, %v1981, %v1982
      %v1984 = vrot.slane %v729, 5
      %v1985 = vrot.slane %v1984, 4
      %v1986 = vrot.slane %v730, 5
      %v1987 = vsel %vm1955, %v1985, %v1986
      %v1988 = vrot.slane %v1986, 4
      %v1989 = vrot.slane %v731, 5
      %v1990 = vsel %vm1955, %v1988, %v1989
      %v1991 = vrot.slane %v732, 5
      %v1992 = vrot.slane %v1991, 4
      %v1993 = vrot.slane %v733, 5
      %v1994 = vsel %vm1955, %v1992, %v1993
      %v1995 = vrot.slane %v1993, 4
      %v1996 = vrot.slane %v734, 5
      %v1997 = vsel %vm1955, %v1995, %v1996
      %v1998 = vrot.slane %v735, 5
      %v1999 = vrot.slane %v1998, 4
      %v2000 = vrot.slane %v736, 5
      %v2001 = vsel %vm1955, %v1999, %v2000
      %v2002 = vrot.slane %v2000, 4
      %v2003 = vrot.slane %v737, 5
      %v2004 = vsel %vm1955, %v2002, %v2003
      %v2005 = vrot.slane %v738, 5
      %v2006 = vrot.slane %v2005, 4
      %v2007 = vrot.slane %v739, 5
      %v2008 = vsel %vm1955, %v2006, %v2007
      %v2009 = vrot.slane %v2007, 4
      %v2010 = vrot.slane %v740, 5
      %v2011 = vsel %vm1955, %v2009, %v2010
      %v2012 = vrot.slane %v741, 5
      %v2013 = vrot.slane %v2012, 4
      %v2014 = vrot.slane %v742, 5
      %v2015 = vsel %vm1955, %v2013, %v2014
      %v2016 = vrot.slane %v2014, 4
      %v2017 = vrot.slane %v743, 5
      %v2018 = vsel %vm1955, %v2016, %v2017
      %v2019 = vrot.slane %v744, 5
      %v2020 = vrot.slane %v2019, 4
      %v2021 = vrot.slane %v745, 5
      %v2022 = vsel %vm1955, %v2020, %v2021
      %v2023 = vrot.slane %v2021, 4
      %v2024 = vrot.slane %v746, 5
      %v2025 = vsel %vm1955, %v2023, %v2024
      %v2026 = vrot.slane %v747, 5
      %v2027 = vrot.slane %v2026, 4
      %v2028 = vrot.slane %v748, 5
      %v2029 = vsel %vm1955, %v2027, %v2028
      %v2030 = vrot.slane %v2028, 4
      %v2031 = vrot.slane %v749, 5
      %v2032 = vsel %vm1955, %v2030, %v2031
      %v2033 = vrot.slane %v750, 5
      %v2034 = vrot.slane %v2033, 4
      %v2035 = vrot.slane %v751, 5
      %v2036 = vsel %vm1955, %v2034, %v2035
      %v2037 = vrot.slane %v2035, 4
      %v2038 = vrot.slane %v752, 5
      %v2039 = vsel %vm1955, %v2037, %v2038
      %v2040 = vrot.slane %v753, 5
      %v2041 = vrot.slane %v2040, 4
      %v2042 = vrot.slane %v754, 5
      %v2043 = vsel %vm1955, %v2041, %v2042
      %v2044 = vrot.slane %v2042, 4
      %v2045 = vrot.slane %v755, 5
      %v2046 = vsel %vm1955, %v2044, %v2045
      %v2047 = vrot.slane %v756, 5
      %v2048 = vrot.slane %v2047, 4
      %v2049 = vrot.slane %v757, 5
      %v2050 = vsel %vm1955, %v2048, %v2049
      %v2051 = vrot.slane %v2049, 4
      %v2052 = vrot.slane %v758, 5
      %v2053 = vsel %vm1955, %v2051, %v2052
      %v2054 = vrot.slane %v759, 5
      %v2055 = vrot.slane %v2054, 4
      %v2056 = vrot.slane %v760, 5
      %v2057 = vsel %vm1955, %v2055, %v2056
      %v2058 = vrot.slane %v2056, 4
      %v2059 = vrot.slane %v761, 5
      %v2060 = vsel %vm1955, %v2058, %v2059
      %v2061 = vrot.slane %v762, 5
      %v2062 = vrot.slane %v2061, 4
      %v2063 = vrot.slane %v763, 5
      %v2064 = vsel %vm1955, %v2062, %v2063
      %v2065 = vrot.slane %v2063, 4
      %v2066 = vrot.slane %v764, 5
      %v2067 = vsel %vm1955, %v2065, %v2066
      %v2069 = vrot.slane %v765, 5
      %v2070 = vrot.slane %v2069, 4
      %v2071 = vrot.slane %v766, 5
      %v2072 = vsel %vm1955, %v2070, %v2071
      %v2073 = vrot.slane %v2071, 4
      %v2074 = vrot.slane %v767, 5
      %v2075 = vsel %vm1955, %v2073, %v2074
      %v2076 = vunpack.c.l.b16 %v1959
      %v2077 = vunpack.c.l.b16 %v1962
      %v2078 = vunpack.c.l.b16 %v1966
      %v2079 = vunpack.c.l.b16 %v1969
      %v2080 = vunpack.c.l.b16 %v1973
      %v2081 = vunpack.c.l.b16 %v1976
      %v2082 = vunpack.c.l.b16 %v1980
      %v2083 = vunpack.c.l.b16 %v1983
      %v2084 = vunpack.c.l.b16 %v1987
      %v2085 = vunpack.c.l.b16 %v1990
      %v2086 = vunpack.c.l.b16 %v1994
      %v2087 = vunpack.c.l.b16 %v1997
      %v2088 = vunpack.c.l.b16 %v2001
      %v2089 = vunpack.c.l.b16 %v2004
      %v2090 = vunpack.c.l.b16 %v2008
      %v2091 = vunpack.c.l.b16 %v2011
      %v2092 = vunpack.c.l.b16 %v2015
      %v2093 = vunpack.c.l.b16 %v2018
      %v2094 = vunpack.c.l.b16 %v2022
      %v2095 = vunpack.c.l.b16 %v2025
      %v2096 = vunpack.c.l.b16 %v2029
      %v2097 = vunpack.c.l.b16 %v2032
      %v2098 = vunpack.c.l.b16 %v2036
      %v2099 = vunpack.c.l.b16 %v2039
      %v2100 = vunpack.c.l.b16 %v2043
      %v2101 = vunpack.c.l.b16 %v2046
      %v2102 = vunpack.c.l.b16 %v2050
      %v2103 = vunpack.c.l.b16 %v2053
      %v2104 = vunpack.c.l.b16 %v2057
      %v2105 = vunpack.c.l.b16 %v2060
      %v2106 = vunpack.c.l.b16 %v2064
      %v2107 = vunpack.c.l.b16 %v2067
      %v2108 = vpack.c.b16 %v2077, %v2076
      %v2109 = vpack.c.b16 %v2079, %v2078
      %v2110 = vpack.c.b16 %v2081, %v2080
      %v2111 = vpack.c.b16 %v2083, %v2082
      %v2112 = vpack.c.b16 %v2085, %v2084
      %v2113 = vpack.c.b16 %v2087, %v2086
      %v2114 = vpack.c.b16 %v2089, %v2088
      %v2115 = vpack.c.b16 %v2091, %v2090
      %v2116 = vpack.c.b16 %v2093, %v2092
      %v2117 = vpack.c.b16 %v2095, %v2094
      %v2118 = vpack.c.b16 %v2097, %v2096
      %v2119 = vpack.c.b16 %v2099, %v2098
      %v2120 = vpack.c.b16 %v2101, %v2100
      %v2121 = vpack.c.b16 %v2103, %v2102
      %v2122 = vpack.c.b16 %v2105, %v2104
      %v2123 = vpack.c.b16 %v2107, %v2106
      %v2140 = vunpack.c.l.b16 %v2072
      %v2141 = vunpack.c.l.b16 %v2075
      %v2142 = vpack.c.b16 %v2141, %v2140
      %s2144 = scalar_lea.vmem %s1, 256
      %v2145 = vld [vmem:[%s2144] sm:$0xf]
      %v2146 = vld [vmem:[%s2144 + $0x4] sm:$0xf]
      %v2147 = vld [vmem:[%s2144 + $0x8] sm:$0xf]
      %v2148 = vld [vmem:[%s2144 + $0xc] sm:$0xf]
      %v2149 = vld [vmem:[%s2144 + $0x10] sm:$0xf]
      %v2150 = vld [vmem:[%s2144 + $0x14] sm:$0xf]
      %v2151 = vld [vmem:[%s2144 + $0x18] sm:$0xf]
      %v2152 = vld [vmem:[%s2144 + $0x1c] sm:$0xf]
      %v2153 = vld [vmem:[%s2144 + $0x20] sm:$0xf]
      %v2154 = vld [vmem:[%s2144 + $0x24] sm:$0xf]
      %v2155 = vld [vmem:[%s2144 + $0x28] sm:$0xf]
      %v2156 = vld [vmem:[%s2144 + $0x2c] sm:$0xf]
      %v2157 = vld [vmem:[%s2144 + $0x30] sm:$0xf]
      %v2158 = vld [vmem:[%s2144 + $0x34] sm:$0xf]
      %v2159 = vld [vmem:[%s2144 + $0x38] sm:$0xf]
      %v2160 = vld [vmem:[%s2144 + $0x3c] sm:$0xf]
      %v2161 = vld [vmem:[%s2144 + $0x40] sm:$0xf]
      %v2162 = vld [vmem:[%s2144 + $0x44] sm:$0xf]
      %v2163 = vld [vmem:[%s2144 + $0x48] sm:$0xf]
      %v2164 = vld [vmem:[%s2144 + $0x4c] sm:$0xf]
      %v2165 = vld [vmem:[%s2144 + $0x50] sm:$0xf]
      %v2166 = vld [vmem:[%s2144 + $0x54] sm:$0xf]
      %v2167 = vld [vmem:[%s2144 + $0x58] sm:$0xf]
      %v2168 = vld [vmem:[%s2144 + $0x5c] sm:$0xf]
      %v2169 = vld [vmem:[%s2144 + $0x60] sm:$0xf]
      %v2170 = vld [vmem:[%s2144 + $0x64] sm:$0xf]
      %v2171 = vld [vmem:[%s2144 + $0x68] sm:$0xf]
      %v2172 = vld [vmem:[%s2144 + $0x6c] sm:$0xf]
      %v2173 = vld [vmem:[%s2144 + $0x70] sm:$0xf]
      %v2174 = vld [vmem:[%s2144 + $0x74] sm:$0xf]
      %v2175 = vld [vmem:[%s2144 + $0x78] sm:$0xf]
      %v2176 = vld [vmem:[%s2144 + $0x7c] sm:$0xf]
      %v2177 = vld [vmem:[%s2144 + $0x80] sm:$0xf]
      %v2178 = vld [vmem:[%s2144 + $0x84] sm:$0xf]
      %v2179 = vld [vmem:[%s2144 + $0x88] sm:$0xf]
      %v2180 = vld [vmem:[%s2144 + $0x8c] sm:$0xf]
      %v2181 = vld [vmem:[%s2144 + $0x90] sm:$0xf]
      %v2182 = vld [vmem:[%s2144 + $0x94] sm:$0xf]
      %v2183 = vld [vmem:[%s2144 + $0x98] sm:$0xf]
      %v2184 = vld [vmem:[%s2144 + $0x9c] sm:$0xf]
      %v2185 = vld [vmem:[%s2144 + $0xa0] sm:$0xf]
      %v2186 = vld [vmem:[%s2144 + $0xa4] sm:$0xf]
      %v2187 = vld [vmem:[%s2144 + $0xa8] sm:$0xf]
      %v2188 = vld [vmem:[%s2144 + $0xac] sm:$0xf]
      %v2189 = vld [vmem:[%s2144 + $0xb0] sm:$0xf]
      %v2190 = vld [vmem:[%s2144 + $0xb4] sm:$0xf]
      %v2191 = vld [vmem:[%s2144 + $0xb8] sm:$0xf]
      %v2192 = vld [vmem:[%s2144 + $0xbc] sm:$0xf]
      %v2193 = vld [vmem:[%s2144 + $0xc0] sm:$0xf]
      %v2194 = vld [vmem:[%s2144 + $0xc4] sm:$0xf]
      %v2195 = vld [vmem:[%s2144 + $0xc8] sm:$0xf]
      %v2196 = vld [vmem:[%s2144 + $0xcc] sm:$0xf]
      %v2197 = vld [vmem:[%s2144 + $0xd0] sm:$0xf]
      %v2198 = vld [vmem:[%s2144 + $0xd4] sm:$0xf]
      %v2199 = vld [vmem:[%s2144 + $0xd8] sm:$0xf]
      %v2200 = vld [vmem:[%s2144 + $0xdc] sm:$0xf]
      %v2201 = vld [vmem:[%s2144 + $0xe0] sm:$0xf]
      %v2202 = vld [vmem:[%s2144 + $0xe4] sm:$0xf]
      %v2203 = vld [vmem:[%s2144 + $0xe8] sm:$0xf]
      %v2204 = vld [vmem:[%s2144 + $0xec] sm:$0xf]
      %v2205 = vld [vmem:[%s2144 + $0xf0] sm:$0xf]
      %v2206 = vld [vmem:[%s2144 + $0xf4] sm:$0xf]
      %v2207 = vld [vmem:[%s2144 + $0xf8] sm:$0xf]
      %v2208 = vld [vmem:[%s2144 + $0xfc] sm:$0xf]
      %v2273 = vunpack.c.l.b16 %v2145
      %v2274 = vunpack.c.l.b16 %v2146
      %v2275 = vunpack.c.l.b16 %v2147
      %v2276 = vunpack.c.l.b16 %v2148
      %v2277 = vunpack.c.l.b16 %v2149
      %v2278 = vunpack.c.l.b16 %v2150
      %v2279 = vunpack.c.l.b16 %v2151
      %v2280 = vunpack.c.l.b16 %v2152
      %v2281 = vunpack.c.l.b16 %v2153
      %v2282 = vunpack.c.l.b16 %v2154
      %v2283 = vunpack.c.l.b16 %v2155
      %v2284 = vunpack.c.l.b16 %v2156
      %v2285 = vunpack.c.l.b16 %v2157
      %v2286 = vunpack.c.l.b16 %v2158
      %v2287 = vunpack.c.l.b16 %v2159
      %v2288 = vunpack.c.l.b16 %v2160
      %v2289 = vunpack.c.l.b16 %v2161
      %v2290 = vunpack.c.l.b16 %v2162
      %v2291 = vunpack.c.l.b16 %v2163
      %v2292 = vunpack.c.l.b16 %v2164
      %v2293 = vunpack.c.l.b16 %v2165
      %v2294 = vunpack.c.l.b16 %v2166
      %v2295 = vunpack.c.l.b16 %v2167
      %v2296 = vunpack.c.l.b16 %v2168
      %v2297 = vunpack.c.l.b16 %v2169
      %v2298 = vunpack.c.l.b16 %v2170
      %v2299 = vunpack.c.l.b16 %v2171
      %v2300 = vunpack.c.l.b16 %v2172
      %v2301 = vunpack.c.l.b16 %v2173
      %v2302 = vunpack.c.l.b16 %v2174
      %v2303 = vunpack.c.l.b16 %v2175
      %v2304 = vunpack.c.l.b16 %v2176
      %v2305 = vunpack.c.l.b16 %v2177
      %v2306 = vunpack.c.l.b16 %v2178
      %v2307 = vunpack.c.l.b16 %v2179
      %v2308 = vunpack.c.l.b16 %v2180
      %v2309 = vunpack.c.l.b16 %v2181
      %v2310 = vunpack.c.l.b16 %v2182
      %v2311 = vunpack.c.l.b16 %v2183
      %v2312 = vunpack.c.l.b16 %v2184
      %v2313 = vunpack.c.l.b16 %v2185
      %v2314 = vunpack.c.l.b16 %v2186
      %v2315 = vunpack.c.l.b16 %v2187
      %v2316 = vunpack.c.l.b16 %v2188
      %v2317 = vunpack.c.l.b16 %v2189
      %v2318 = vunpack.c.l.b16 %v2190
      %v2319 = vunpack.c.l.b16 %v2191
      %v2320 = vunpack.c.l.b16 %v2192
      %v2321 = vunpack.c.l.b16 %v2193
      %v2322 = vunpack.c.l.b16 %v2194
      %v2323 = vunpack.c.l.b16 %v2195
      %v2324 = vunpack.c.l.b16 %v2196
      %v2325 = vunpack.c.l.b16 %v2197
      %v2326 = vunpack.c.l.b16 %v2198
      %v2327 = vunpack.c.l.b16 %v2199
      %v2328 = vunpack.c.l.b16 %v2200
      %v2329 = vunpack.c.l.b16 %v2201
      %v2330 = vunpack.c.l.b16 %v2202
      %v2331 = vunpack.c.l.b16 %v2203
      %v2332 = vunpack.c.l.b16 %v2204
      %v2333 = vunpack.c.l.b16 %v2205
      %v2334 = vunpack.c.l.b16 %v2206
      %v2335 = vunpack.c.l.b16 %v2207
      %v2336 = vunpack.c.l.b16 %v2208
      %v2337 = vpack.c.b16 %v2274, %v2273
      %v2338 = vpack.c.b16 %v2276, %v2275
      %v2339 = vpack.c.b16 %v2278, %v2277
      %v2340 = vpack.c.b16 %v2280, %v2279
      %v2341 = vpack.c.b16 %v2282, %v2281
      %v2342 = vpack.c.b16 %v2284, %v2283
      %v2343 = vpack.c.b16 %v2286, %v2285
      %v2344 = vpack.c.b16 %v2288, %v2287
      %v2345 = vpack.c.b16 %v2290, %v2289
      %v2346 = vpack.c.b16 %v2292, %v2291
      %v2347 = vpack.c.b16 %v2294, %v2293
      %v2348 = vpack.c.b16 %v2296, %v2295
      %v2349 = vpack.c.b16 %v2298, %v2297
      %v2350 = vpack.c.b16 %v2300, %v2299
      %v2351 = vpack.c.b16 %v2302, %v2301
      %v2352 = vpack.c.b16 %v2304, %v2303
      %v2353 = vpack.c.b16 %v2306, %v2305
      %v2354 = vpack.c.b16 %v2308, %v2307
      %v2355 = vpack.c.b16 %v2310, %v2309
      %v2356 = vpack.c.b16 %v2312, %v2311
      %v2357 = vpack.c.b16 %v2314, %v2313
      %v2358 = vpack.c.b16 %v2316, %v2315
      %v2359 = vpack.c.b16 %v2318, %v2317
      %v2360 = vpack.c.b16 %v2320, %v2319
      %v2361 = vpack.c.b16 %v2322, %v2321
      %v2362 = vpack.c.b16 %v2324, %v2323
      %v2363 = vpack.c.b16 %v2326, %v2325
      %v2364 = vpack.c.b16 %v2328, %v2327
      %v2365 = vpack.c.b16 %v2330, %v2329
      %v2366 = vpack.c.b16 %v2332, %v2331
      %v2367 = vpack.c.b16 %v2334, %v2333
      %v2368 = vpack.c.b16 %v2336, %v2335
      %2401 = vmatprep.subr.bf16.mxu0 0
      %2402 = vmatpush1.bf16.msra.mxu0 %v2344
      %2403 = vmatprep.subr.bf16.mxu0 0
      %2404 = vmatpush1.bf16.msra.mxu0 %v2343
      %2405 = vmatprep.subr.bf16.mxu0 0
      %2406 = vmatpush1.bf16.msra.mxu0 %v2342
      %2407 = vmatprep.subr.bf16.mxu0 0
      %2408 = vmatpush1.bf16.msra.mxu0 %v2341
      %2409 = vmatprep.subr.bf16.mxu0 0
      %2410 = vmatpush1.bf16.msra.mxu0 %v2340
      %2411 = vmatprep.subr.bf16.mxu0 0
      %2412 = vmatpush1.bf16.msra.mxu0 %v2339
      %2413 = vmatprep.subr.bf16.mxu0 0
      %2414 = vmatpush1.bf16.msra.mxu0 %v2338
      %2415 = vmatprep.subr.bf16.mxu0 0
      %2416 = vmatpush1.bf16.msra.mxu0 %v2337
      %2417 = vmatprep.subr.bf16.mxu0 0
      %2418 = vmatpush2.bf16.msra.mxu0 %v2352
      %2419 = vmatprep.subr.bf16.mxu0 0
      %2420 = vmatpush2.bf16.msra.mxu0 %v2351
      %2421 = vmatprep.subr.bf16.mxu0 0
      %2422 = vmatpush2.bf16.msra.mxu0 %v2350
      %2423 = vmatprep.subr.bf16.mxu0 0
      %2424 = vmatpush2.bf16.msra.mxu0 %v2349
      %2425 = vmatprep.subr.bf16.mxu0 0
      %2426 = vmatpush2.bf16.msra.mxu0 %v2348
      %2427 = vmatprep.subr.bf16.mxu0 0
      %2428 = vmatpush2.bf16.msra.mxu0 %v2347
      %2429 = vmatprep.subr.bf16.mxu0 0
      %2430 = vmatpush2.bf16.msra.mxu0 %v2346
      %2431 = vmatprep.subr.bf16.mxu0 0
      %2432 = vmatpush2.bf16.msra.mxu0 %v2345
      %2433 = vmatprep.mubr.bf16.mxu0 %v2108
      %2434 = vmatmul.mubr.bf16.gmra.mxu0 %v1310
      %v2435 = vpop.f32.mrf.mxu0
      %v2436 = vadd.f32 %v1421, %v2435
      %v2437 = vpop.f32.mrf.mxu0
      %v2438 = vpop.f32.mrf.mxu0
      %v2439 = vadd.f32 %v1421, %v2438
      %v2440 = vpop.f32.mrf.mxu0
      %2441 = vmatprep.mubr.bf16.mxu0 %v2109
      %2442 = vmatmul.mubr.bf16.gmra.mxu0 %v1311
      %v2443 = vpop.f32.mrf.mxu0
      %v2444 = vadd.f32 %v1421, %v2443
      %v2445 = vpop.f32.mrf.mxu0
      %v2446 = vpop.f32.mrf.mxu0
      %v2447 = vadd.f32 %v1421, %v2446
      %v2448 = vpop.f32.mrf.mxu0
      %2449 = vmatprep.mubr.bf16.mxu0 %v2110
      %2450 = vmatmul.mubr.bf16.gmra.mxu0 %v1312
      %v2451 = vpop.f32.mrf.mxu0
      %v2452 = vadd.f32 %v1421, %v2451
      %v2453 = vpop.f32.mrf.mxu0
      %v2454 = vpop.f32.mrf.mxu0
      %v2455 = vadd.f32 %v1421, %v2454
      %v2456 = vpop.f32.mrf.mxu0
      %2457 = vmatprep.mubr.bf16.mxu0 %v2111
      %2458 = vmatmul.mubr.bf16.gmra.mxu0 %v1313
      %v2459 = vpop.f32.mrf.mxu0
      %v2460 = vadd.f32 %v1421, %v2459
      %v2461 = vpop.f32.mrf.mxu0
      %v2462 = vpop.f32.mrf.mxu0
      %v2463 = vadd.f32 %v1421, %v2462
      %v2464 = vpop.f32.mrf.mxu0
      %2465 = vmatprep.mubr.bf16.mxu0 %v2112
      %2466 = vmatmul.mubr.bf16.gmra.mxu0 %v1314
      %v2467 = vpop.f32.mrf.mxu0
      %v2468 = vadd.f32 %v1421, %v2467
      %v2469 = vpop.f32.mrf.mxu0
      %v2470 = vpop.f32.mrf.mxu0
      %v2471 = vadd.f32 %v1421, %v2470
      %v2472 = vpop.f32.mrf.mxu0
      %2473 = vmatprep.mubr.bf16.mxu0 %v2113
      %2474 = vmatmul.mubr.bf16.gmra.mxu0 %v1315
      %v2475 = vpop.f32.mrf.mxu0
      %v2476 = vadd.f32 %v1421, %v2475
      %v2477 = vpop.f32.mrf.mxu0
      %v2478 = vpop.f32.mrf.mxu0
      %v2479 = vadd.f32 %v1421, %v2478
      %v2480 = vpop.f32.mrf.mxu0
      %2481 = vmatprep.mubr.bf16.mxu0 %v2114
      %2482 = vmatmul.mubr.bf16.gmra.mxu0 %v1316
      %v2483 = vpop.f32.mrf.mxu0
      %v2484 = vadd.f32 %v1421, %v2483
      %v2485 = vpop.f32.mrf.mxu0
      %v2486 = vpop.f32.mrf.mxu0
      %v2487 = vadd.f32 %v1421, %v2486
      %v2488 = vpop.f32.mrf.mxu0
      %2489 = vmatprep.mubr.bf16.mxu0 %v2115
      %2490 = vmatmul.mubr.bf16.gmra.mxu0 %v1317
      %v2491 = vpop.f32.mrf.mxu0
      %v2492 = vadd.f32 %v1421, %v2491
      %v2493 = vpop.f32.mrf.mxu0
      %v2494 = vpop.f32.mrf.mxu0
      %v2495 = vadd.f32 %v1421, %v2494
      %v2496 = vpop.f32.mrf.mxu0
      %2497 = vmatprep.mubr.bf16.mxu0 %v2116
      %2498 = vmatmul.mubr.bf16.gmra.mxu0 %v1318
      %v2499 = vpop.f32.mrf.mxu0
      %v2500 = vadd.f32 %v1421, %v2499
      %v2501 = vpop.f32.mrf.mxu0
      %v2502 = vpop.f32.mrf.mxu0
      %v2503 = vadd.f32 %v1421, %v2502
      %v2504 = vpop.f32.mrf.mxu0
      %2505 = vmatprep.mubr.bf16.mxu0 %v2117
      %2506 = vmatmul.mubr.bf16.gmra.mxu0 %v1319
      %v2507 = vpop.f32.mrf.mxu0
      %v2508 = vadd.f32 %v1421, %v2507
      %v2509 = vpop.f32.mrf.mxu0
      %v2510 = vpop.f32.mrf.mxu0
      %v2511 = vadd.f32 %v1421, %v2510
      %v2512 = vpop.f32.mrf.mxu0
      %2513 = vmatprep.mubr.bf16.mxu0 %v2118
      %2514 = vmatmul.mubr.bf16.gmra.mxu0 %v1320
      %v2515 = vpop.f32.mrf.mxu0
      %v2516 = vadd.f32 %v1421, %v2515
      %v2517 = vpop.f32.mrf.mxu0
      %v2518 = vpop.f32.mrf.mxu0
      %v2519 = vadd.f32 %v1421, %v2518
      %v2520 = vpop.f32.mrf.mxu0
      %2521 = vmatprep.mubr.bf16.mxu0 %v2119
      %2522 = vmatmul.mubr.bf16.gmra.mxu0 %v1321
      %v2523 = vpop.f32.mrf.mxu0
      %v2524 = vadd.f32 %v1421, %v2523
      %v2525 = vpop.f32.mrf.mxu0
      %v2526 = vpop.f32.mrf.mxu0
      %v2527 = vadd.f32 %v1421, %v2526
      %v2528 = vpop.f32.mrf.mxu0
      %2529 = vmatprep.mubr.bf16.mxu0 %v2120
      %2530 = vmatmul.mubr.bf16.gmra.mxu0 %v1322
      %v2531 = vpop.f32.mrf.mxu0
      %v2532 = vadd.f32 %v1421, %v2531
      %v2533 = vpop.f32.mrf.mxu0
      %v2534 = vpop.f32.mrf.mxu0
      %v2535 = vadd.f32 %v1421, %v2534
      %v2536 = vpop.f32.mrf.mxu0
      %2537 = vmatprep.mubr.bf16.mxu0 %v2121
      %2538 = vmatmul.mubr.bf16.gmra.mxu0 %v1323
      %v2539 = vpop.f32.mrf.mxu0
      %v2540 = vadd.f32 %v1421, %v2539
      %v2541 = vpop.f32.mrf.mxu0
      %v2542 = vpop.f32.mrf.mxu0
      %v2543 = vadd.f32 %v1421, %v2542
      %v2544 = vpop.f32.mrf.mxu0
      %2545 = vmatprep.mubr.bf16.mxu0 %v2122
      %2546 = vmatmul.mubr.bf16.gmra.mxu0 %v1324
      %v2547 = vpop.f32.mrf.mxu0
      %v2548 = vadd.f32 %v1421, %v2547
      %v2549 = vpop.f32.mrf.mxu0
      %v2550 = vpop.f32.mrf.mxu0
      %v2551 = vadd.f32 %v1421, %v2550
      %v2552 = vpop.f32.mrf.mxu0
      %2553 = vmatprep.mubr.bf16.mxu0 %v2123
      %2554 = vmatmul.mubr.bf16.gmra.mxu0 %v1325
      %v2555 = vpop.f32.mrf.mxu0
      %v2556 = vadd.f32 %v1421, %v2555
      %v2557 = vpop.f32.mrf.mxu0
      %v2558 = vpop.f32.mrf.mxu0
      %v2559 = vadd.f32 %v1421, %v2558
      %v2560 = vpop.f32.mrf.mxu0
      %2561 = vdwg.mxu0
      %2562 = vmatprep.subr.bf16.mxu0 0
      %2563 = vmatpush1.bf16.msra.mxu0 %v2360
      %2564 = vmatprep.subr.bf16.mxu0 0
      %2565 = vmatpush1.bf16.msra.mxu0 %v2359
      %2566 = vmatprep.subr.bf16.mxu0 0
      %2567 = vmatpush1.bf16.msra.mxu0 %v2358
      %2568 = vmatprep.subr.bf16.mxu0 0
      %2569 = vmatpush1.bf16.msra.mxu0 %v2357
      %2570 = vmatprep.subr.bf16.mxu0 0
      %2571 = vmatpush1.bf16.msra.mxu0 %v2356
      %2572 = vmatprep.subr.bf16.mxu0 0
      %2573 = vmatpush1.bf16.msra.mxu0 %v2355
      %2574 = vmatprep.subr.bf16.mxu0 0
      %2575 = vmatpush1.bf16.msra.mxu0 %v2354
      %2576 = vmatprep.subr.bf16.mxu0 0
      %2577 = vmatpush1.bf16.msra.mxu0 %v2353
      %2578 = vmatprep.subr.bf16.mxu0 0
      %2579 = vmatpush2.bf16.msra.mxu0 %v2368
      %2580 = vmatprep.subr.bf16.mxu0 0
      %2581 = vmatpush2.bf16.msra.mxu0 %v2367
      %2582 = vmatprep.subr.bf16.mxu0 0
      %2583 = vmatpush2.bf16.msra.mxu0 %v2366
      %2584 = vmatprep.subr.bf16.mxu0 0
      %2585 = vmatpush2.bf16.msra.mxu0 %v2365
      %2586 = vmatprep.subr.bf16.mxu0 0
      %2587 = vmatpush2.bf16.msra.mxu0 %v2364
      %2588 = vmatprep.subr.bf16.mxu0 0
      %2589 = vmatpush2.bf16.msra.mxu0 %v2363
      %2590 = vmatprep.subr.bf16.mxu0 0
      %2591 = vmatpush2.bf16.msra.mxu0 %v2362
      %2592 = vmatprep.subr.bf16.mxu0 0
      %2593 = vmatpush2.bf16.msra.mxu0 %v2361
      %2594 = vmatprep.mubr.bf16.mxu0 %v2109
      %2595 = vmatmul.mubr.bf16.gmra.mxu0 %v1311
      %v2596 = vpop.f32.mrf.mxu0
      %v2597 = vadd.f32 %v2436, %v2596
      %v2598 = vpop.f32.mrf.mxu0
      %v2599 = vpop.f32.mrf.mxu0
      %v2600 = vadd.f32 %v2439, %v2599
      %v2601 = vpop.f32.mrf.mxu0
      %2602 = vmatprep.mubr.bf16.mxu0 %v2110
      %2603 = vmatmul.mubr.bf16.gmra.mxu0 %v1312
      %v2604 = vpop.f32.mrf.mxu0
      %v2605 = vadd.f32 %v2444, %v2604
      %v2606 = vpop.f32.mrf.mxu0
      %v2607 = vpop.f32.mrf.mxu0
      %v2608 = vadd.f32 %v2447, %v2607
      %v2609 = vpop.f32.mrf.mxu0
      %2610 = vmatprep.mubr.bf16.mxu0 %v2111
      %2611 = vmatmul.mubr.bf16.gmra.mxu0 %v1313
      %v2612 = vpop.f32.mrf.mxu0
      %v2613 = vadd.f32 %v2452, %v2612
      %v2614 = vpop.f32.mrf.mxu0
      %v2615 = vpop.f32.mrf.mxu0
      %v2616 = vadd.f32 %v2455, %v2615
      %v2617 = vpop.f32.mrf.mxu0
      %2618 = vmatprep.mubr.bf16.mxu0 %v2112
      %2619 = vmatmul.mubr.bf16.gmra.mxu0 %v1314
      %v2620 = vpop.f32.mrf.mxu0
      %v2621 = vadd.f32 %v2460, %v2620
      %v2622 = vpop.f32.mrf.mxu0
      %v2623 = vpop.f32.mrf.mxu0
      %v2624 = vadd.f32 %v2463, %v2623
      %v2625 = vpop.f32.mrf.mxu0
      %2626 = vmatprep.mubr.bf16.mxu0 %v2113
      %2627 = vmatmul.mubr.bf16.gmra.mxu0 %v1315
      %v2628 = vpop.f32.mrf.mxu0
      %v2629 = vadd.f32 %v2468, %v2628
      %v2630 = vpop.f32.mrf.mxu0
      %v2631 = vpop.f32.mrf.mxu0
      %v2632 = vadd.f32 %v2471, %v2631
      %v2633 = vpop.f32.mrf.mxu0
      %2634 = vmatprep.mubr.bf16.mxu0 %v2114
      %2635 = vmatmul.mubr.bf16.gmra.mxu0 %v1316
      %v2636 = vpop.f32.mrf.mxu0
      %v2637 = vadd.f32 %v2476, %v2636
      %v2638 = vpop.f32.mrf.mxu0
      %v2639 = vpop.f32.mrf.mxu0
      %v2640 = vadd.f32 %v2479, %v2639
      %v2641 = vpop.f32.mrf.mxu0
      %2642 = vmatprep.mubr.bf16.mxu0 %v2115
      %2643 = vmatmul.mubr.bf16.gmra.mxu0 %v1317
      %v2644 = vpop.f32.mrf.mxu0
      %v2645 = vadd.f32 %v2484, %v2644
      %v2646 = vpop.f32.mrf.mxu0
      %v2647 = vpop.f32.mrf.mxu0
      %v2648 = vadd.f32 %v2487, %v2647
      %v2649 = vpop.f32.mrf.mxu0
      %2650 = vmatprep.mubr.bf16.mxu0 %v2116
      %2651 = vmatmul.mubr.bf16.gmra.mxu0 %v1318
      %v2652 = vpop.f32.mrf.mxu0
      %v2653 = vadd.f32 %v2492, %v2652
      %v2654 = vpop.f32.mrf.mxu0
      %v2655 = vpop.f32.mrf.mxu0
      %v2656 = vadd.f32 %v2495, %v2655
      %v2657 = vpop.f32.mrf.mxu0
      %2658 = vmatprep.mubr.bf16.mxu0 %v2117
      %2659 = vmatmul.mubr.bf16.gmra.mxu0 %v1319
      %v2660 = vpop.f32.mrf.mxu0
      %v2661 = vadd.f32 %v2500, %v2660
      %v2662 = vpop.f32.mrf.mxu0
      %v2663 = vpop.f32.mrf.mxu0
      %v2664 = vadd.f32 %v2503, %v2663
      %v2665 = vpop.f32.mrf.mxu0
      %2666 = vmatprep.mubr.bf16.mxu0 %v2118
      %2667 = vmatmul.mubr.bf16.gmra.mxu0 %v1320
      %v2668 = vpop.f32.mrf.mxu0
      %v2669 = vadd.f32 %v2508, %v2668
      %v2670 = vpop.f32.mrf.mxu0
      %v2671 = vpop.f32.mrf.mxu0
      %v2672 = vadd.f32 %v2511, %v2671
      %v2673 = vpop.f32.mrf.mxu0
      %2674 = vmatprep.mubr.bf16.mxu0 %v2119
      %2675 = vmatmul.mubr.bf16.gmra.mxu0 %v1321
      %v2676 = vpop.f32.mrf.mxu0
      %v2677 = vadd.f32 %v2516, %v2676
      %v2678 = vpop.f32.mrf.mxu0
      %v2679 = vpop.f32.mrf.mxu0
      %v2680 = vadd.f32 %v2519, %v2679
      %v2681 = vpop.f32.mrf.mxu0
      %2682 = vmatprep.mubr.bf16.mxu0 %v2120
      %2683 = vmatmul.mubr.bf16.gmra.mxu0 %v1322
      %v2684 = vpop.f32.mrf.mxu0
      %v2685 = vadd.f32 %v2524, %v2684
      %v2686 = vpop.f32.mrf.mxu0
      %v2687 = vpop.f32.mrf.mxu0
      %v2688 = vadd.f32 %v2527, %v2687
      %v2689 = vpop.f32.mrf.mxu0
      %2690 = vmatprep.mubr.bf16.mxu0 %v2121
      %2691 = vmatmul.mubr.bf16.gmra.mxu0 %v1323
      %v2692 = vpop.f32.mrf.mxu0
      %v2693 = vadd.f32 %v2532, %v2692
      %v2694 = vpop.f32.mrf.mxu0
      %v2695 = vpop.f32.mrf.mxu0
      %v2696 = vadd.f32 %v2535, %v2695
      %v2697 = vpop.f32.mrf.mxu0
      %2698 = vmatprep.mubr.bf16.mxu0 %v2122
      %2699 = vmatmul.mubr.bf16.gmra.mxu0 %v1324
      %v2700 = vpop.f32.mrf.mxu0
      %v2701 = vadd.f32 %v2540, %v2700
      %v2702 = vpop.f32.mrf.mxu0
      %v2703 = vpop.f32.mrf.mxu0
      %v2704 = vadd.f32 %v2543, %v2703
      %v2705 = vpop.f32.mrf.mxu0
      %2706 = vmatprep.mubr.bf16.mxu0 %v2123
      %2707 = vmatmul.mubr.bf16.gmra.mxu0 %v1325
      %v2708 = vpop.f32.mrf.mxu0
      %v2709 = vadd.f32 %v2548, %v2708
      %v2710 = vpop.f32.mrf.mxu0
      %v2711 = vpop.f32.mrf.mxu0
      %v2712 = vadd.f32 %v2551, %v2711
      %v2713 = vpop.f32.mrf.mxu0
      %2714 = vmatprep.mubr.bf16.mxu0 %v2142
      %2715 = vmatmul.mubr.bf16.gmra.mxu0 %v1350
      %v2716 = vpop.f32.mrf.mxu0
      %v2717 = vadd.f32 %v2556, %v2716
      %v2718 = vpop.f32.mrf.mxu0
      %v2719 = vpop.f32.mrf.mxu0
      %v2720 = vadd.f32 %v2559, %v2719
      %v2721 = vpop.f32.mrf.mxu0
      %2722 = vdwg.mxu0
      %v2723 = vpack.c.bf16 %v1814, %v1811
      %v2724 = vpack.c.bf16 %v2600, %v2597
      %v2725 = vpack.c.bf16 %v1822, %v1819
      %v2726 = vpack.c.bf16 %v2608, %v2605
      %v2727 = vpack.c.bf16 %v1830, %v1827
      %v2728 = vpack.c.bf16 %v2616, %v2613
      %v2729 = vpack.c.bf16 %v1838, %v1835
      %v2730 = vpack.c.bf16 %v2624, %v2621
      %v2731 = vpack.c.bf16 %v1846, %v1843
      %v2732 = vpack.c.bf16 %v2632, %v2629
      %v2733 = vpack.c.bf16 %v1854, %v1851
      %v2734 = vpack.c.bf16 %v2640, %v2637
      %v2735 = vpack.c.bf16 %v1862, %v1859
      %v2736 = vpack.c.bf16 %v2648, %v2645
      %v2737 = vpack.c.bf16 %v1870, %v1867
      %v2738 = vpack.c.bf16 %v2656, %v2653
      %v2739 = vpack.c.bf16 %v1878, %v1875
      %v2740 = vpack.c.bf16 %v2664, %v2661
      %v2741 = vpack.c.bf16 %v1886, %v1883
      %v2742 = vpack.c.bf16 %v2672, %v2669
      %v2743 = vpack.c.bf16 %v1894, %v1891
      %v2744 = vpack.c.bf16 %v2680, %v2677
      %v2745 = vpack.c.bf16 %v1902, %v1899
      %v2746 = vpack.c.bf16 %v2688, %v2685
      %v2747 = vpack.c.bf16 %v1910, %v1907
      %v2748 = vpack.c.bf16 %v2696, %v2693
      %v2749 = vpack.c.bf16 %v1918, %v1915
      %v2750 = vpack.c.bf16 %v2704, %v2701
      %v2751 = vpack.c.bf16 %v1926, %v1923
      %v2752 = vpack.c.bf16 %v2712, %v2709
      %v2753 = vpack.c.bf16 %v1934, %v1931
      %v2754 = vpack.c.bf16 %v2720, %v2717
      %v2787 = vunpack.c.l.b16 %v2723
      %v2788 = vunpack.c.l.b16 %v2724
      %v2789 = vunpack.c.h.b16 %v2723
      %v2790 = vunpack.c.h.b16 %v2724
      %v2791 = vunpack.c.l.b16 %v2725
      %v2792 = vunpack.c.l.b16 %v2726
      %v2793 = vunpack.c.h.b16 %v2725
      %v2794 = vunpack.c.h.b16 %v2726
      %v2795 = vunpack.c.l.b16 %v2727
      %v2796 = vunpack.c.l.b16 %v2728
      %v2797 = vunpack.c.h.b16 %v2727
      %v2798 = vunpack.c.h.b16 %v2728
      %v2799 = vunpack.c.l.b16 %v2729
      %v2800 = vunpack.c.l.b16 %v2730
      %v2801 = vunpack.c.h.b16 %v2729
      %v2802 = vunpack.c.h.b16 %v2730
      %v2803 = vunpack.c.l.b16 %v2731
      %v2804 = vunpack.c.l.b16 %v2732
      %v2805 = vunpack.c.h.b16 %v2731
      %v2806 = vunpack.c.h.b16 %v2732
      %v2807 = vunpack.c.l.b16 %v2733
      %v2808 = vunpack.c.l.b16 %v2734
      %v2809 = vunpack.c.h.b16 %v2733
      %v2810 = vunpack.c.h.b16 %v2734
      %v2811 = vunpack.c.l.b16 %v2735
      %v2812 = vunpack.c.l.b16 %v2736
      %v2813 = vunpack.c.h.b16 %v2735
      %v2814 = vunpack.c.h.b16 %v2736
      %v2815 = vunpack.c.l.b16 %v2737
      %v2816 = vunpack.c.l.b16 %v2738
      %v2817 = vunpack.c.h.b16 %v2737
      %v2818 = vunpack.c.h.b16 %v2738
      %v2819 = vunpack.c.l.b16 %v2739
      %v2820 = vunpack.c.l.b16 %v2740
      %v2821 = vunpack.c.h.b16 %v2739
      %v2822 = vunpack.c.h.b16 %v2740
      %v2823 = vunpack.c.l.b16 %v2741
      %v2824 = vunpack.c.l.b16 %v2742
      %v2825 = vunpack.c.h.b16 %v2741
      %v2826 = vunpack.c.h.b16 %v2742
      %v2827 = vunpack.c.l.b16 %v2743
      %v2828 = vunpack.c.l.b16 %v2744
      %v2829 = vunpack.c.h.b16 %v2743
      %v2830 = vunpack.c.h.b16 %v2744
      %v2831 = vunpack.c.l.b16 %v2745
      %v2832 = vunpack.c.l.b16 %v2746
      %v2833 = vunpack.c.h.b16 %v2745
      %v2834 = vunpack.c.h.b16 %v2746
      %v2835 = vunpack.c.l.b16 %v2747
      %v2836 = vunpack.c.l.b16 %v2748
      %v2837 = vunpack.c.h.b16 %v2747
      %v2838 = vunpack.c.h.b16 %v2748
      %v2839 = vunpack.c.l.b16 %v2749
      %v2840 = vunpack.c.l.b16 %v2750
      %v2841 = vunpack.c.h.b16 %v2749
      %v2842 = vunpack.c.h.b16 %v2750
      %v2843 = vunpack.c.l.b16 %v2751
      %v2844 = vunpack.c.l.b16 %v2752
      %v2845 = vunpack.c.h.b16 %v2751
      %v2846 = vunpack.c.h.b16 %v2752
      %v2847 = vunpack.c.l.b16 %v2753
      %v2848 = vunpack.c.l.b16 %v2754
      %v2849 = vunpack.c.h.b16 %v2753
      %v2850 = vunpack.c.h.b16 %v2754
      %v2851 = vpack.c.b16 %v2788, %v2787
      %v2852 = vpack.c.b16 %v2790, %v2789
      %v2853 = vpack.c.b16 %v2792, %v2791
      %v2854 = vpack.c.b16 %v2794, %v2793
      %v2855 = vpack.c.b16 %v2796, %v2795
      %v2856 = vpack.c.b16 %v2798, %v2797
      %v2857 = vpack.c.b16 %v2800, %v2799
      %v2858 = vpack.c.b16 %v2802, %v2801
      %v2859 = vpack.c.b16 %v2804, %v2803
      %v2860 = vpack.c.b16 %v2806, %v2805
      %v2861 = vpack.c.b16 %v2808, %v2807
      %v2862 = vpack.c.b16 %v2810, %v2809
      %v2863 = vpack.c.b16 %v2812, %v2811
      %v2864 = vpack.c.b16 %v2814, %v2813
      %v2865 = vpack.c.b16 %v2816, %v2815
      %v2866 = vpack.c.b16 %v2818, %v2817
      %v2867 = vpack.c.b16 %v2820, %v2819
      %v2868 = vpack.c.b16 %v2822, %v2821
      %v2869 = vpack.c.b16 %v2824, %v2823
      %v2870 = vpack.c.b16 %v2826, %v2825
      %v2871 = vpack.c.b16 %v2828, %v2827
      %v2872 = vpack.c.b16 %v2830, %v2829
      %v2873 = vpack.c.b16 %v2832, %v2831
      %v2874 = vpack.c.b16 %v2834, %v2833
      %v2875 = vpack.c.b16 %v2836, %v2835
      %v2876 = vpack.c.b16 %v2838, %v2837
      %v2877 = vpack.c.b16 %v2840, %v2839
      %v2878 = vpack.c.b16 %v2842, %v2841
      %v2879 = vpack.c.b16 %v2844, %v2843
      %v2880 = vpack.c.b16 %v2846, %v2845
      %v2881 = vpack.c.b16 %v2848, %v2847
      %v2882 = vpack.c.b16 %v2850, %v2849
      %2915 = vst [vmem:[%s170] sm:$0xff] %v2851
      %2916 = vst [vmem:[%s170 + $0x8] sm:$0xff] %v2852
      %2917 = vst [vmem:[%s170 + $0x20] sm:$0xff] %v2853
      %2918 = vst [vmem:[%s170 + $0x28] sm:$0xff] %v2854
      %2919 = vst [vmem:[%s170 + $0x40] sm:$0xff] %v2855
      %2920 = vst [vmem:[%s170 + $0x48] sm:$0xff] %v2856
      %2921 = vst [vmem:[%s170 + $0x60] sm:$0xff] %v2857
      %2922 = vst [vmem:[%s170 + $0x68] sm:$0xff] %v2858
      %2923 = vst [vmem:[%s170 + $0x80] sm:$0xff] %v2859
      %2924 = vst [vmem:[%s170 + $0x88] sm:$0xff] %v2860
      %2925 = vst [vmem:[%s170 + $0xa0] sm:$0xff] %v2861
      %2926 = vst [vmem:[%s170 + $0xa8] sm:$0xff] %v2862
      %2927 = vst [vmem:[%s170 + $0xc0] sm:$0xff] %v2863
      %2928 = vst [vmem:[%s170 + $0xc8] sm:$0xff] %v2864
      %2929 = vst [vmem:[%s170 + $0xe0] sm:$0xff] %v2865
      %2930 = vst [vmem:[%s170 + $0xe8] sm:$0xff] %v2866
      %2931 = vst [vmem:[%s170 + $0x100] sm:$0xff] %v2867
      %2932 = vst [vmem:[%s170 + $0x108] sm:$0xff] %v2868
      %2933 = vst [vmem:[%s170 + $0x120] sm:$0xff] %v2869
      %2934 = vst [vmem:[%s170 + $0x128] sm:$0xff] %v2870
      %2935 = vst [vmem:[%s170 + $0x140] sm:$0xff] %v2871
      %2936 = vst [vmem:[%s170 + $0x148] sm:$0xff] %v2872
      %2937 = vst [vmem:[%s170 + $0x160] sm:$0xff] %v2873
      %2938 = vst [vmem:[%s170 + $0x168] sm:$0xff] %v2874
      %2939 = vst [vmem:[%s170 + $0x180] sm:$0xff] %v2875
      %2940 = vst [vmem:[%s170 + $0x188] sm:$0xff] %v2876
      %2941 = vst [vmem:[%s170 + $0x1a0] sm:$0xff] %v2877
      %2942 = vst [vmem:[%s170 + $0x1a8] sm:$0xff] %v2878
      %2943 = vst [vmem:[%s170 + $0x1c0] sm:$0xff] %v2879
      %2944 = vst [vmem:[%s170 + $0x1c8] sm:$0xff] %v2880
      %2945 = vst [vmem:[%s170 + $0x1e0] sm:$0xff] %v2881
      %2946 = vst [vmem:[%s170 + $0x1e8] sm:$0xff] %v2882
      %v2948 = vshrl.u32 %v768, 16
      %v2950 = vrot.slane %v2948, 4
      %v2951 = vshll.u32 %v768, 16
      %v2953 = vrot.slane %v2951, 5
      %v2954 = vor.u32 %v2950, %v2953
      %v2955 = vrot.slane %v2954, 4
      %v2957 = vshll.u32 %v769, 16
      %v2959 = vrot.slane %v2957, 5
      %v2960 = vsel %vm773, %v2955, %v2959
      %v2961 = vshrl.u32 %v769, 16
      %v2963 = vrot.slane %v2961, 4
      %v2964 = vor.u32 %v2963, %v2959
      %v2965 = vrot.slane %v2964, 4
      %v2967 = vshll.u32 %v770, 16
      %v2969 = vrot.slane %v2967, 5
      %v2970 = vsel %vm773, %v2965, %v2969
      %v2973 = vunpack.c.l.b16 %v768
      %v2974 = vunpack.c.l.b16 %v769
      %v2975 = vpack.c.b16 %v2974, %v2973
      %v2977 = vunpack.c.l.b16 %v2960
      %v2978 = vunpack.c.l.b16 %v2970
      %v2979 = vpack.c.b16 %v2978, %v2977
      %s2981 = scalar_lea.vmem %s1, 512
      %v2982 = vld [vmem:[%s2981] sm:$0xf]
      %v2983 = vld [vmem:[%s2981 + $0x4] sm:$0xf]
      %v2984 = vld [vmem:[%s2981 + $0x8] sm:$0xf]
      %v2985 = vld [vmem:[%s2981 + $0xc] sm:$0xf]
      %v2986 = vld [vmem:[%s2981 + $0x10] sm:$0xf]
      %v2987 = vld [vmem:[%s2981 + $0x14] sm:$0xf]
      %v2988 = vld [vmem:[%s2981 + $0x18] sm:$0xf]
      %v2989 = vld [vmem:[%s2981 + $0x1c] sm:$0xf]
      %v2990 = vld [vmem:[%s2981 + $0x20] sm:$0xf]
      %v2991 = vld [vmem:[%s2981 + $0x24] sm:$0xf]
      %v2992 = vld [vmem:[%s2981 + $0x28] sm:$0xf]
      %v2993 = vld [vmem:[%s2981 + $0x2c] sm:$0xf]
      %v2994 = vld [vmem:[%s2981 + $0x30] sm:$0xf]
      %v2995 = vld [vmem:[%s2981 + $0x34] sm:$0xf]
      %v2996 = vld [vmem:[%s2981 + $0x38] sm:$0xf]
      %v2997 = vld [vmem:[%s2981 + $0x3c] sm:$0xf]
      %v2998 = vld [vmem:[%s2981 + $0x40] sm:$0xf]
      %v2999 = vld [vmem:[%s2981 + $0x44] sm:$0xf]
      %v3000 = vld [vmem:[%s2981 + $0x48] sm:$0xf]
      %v3001 = vld [vmem:[%s2981 + $0x4c] sm:$0xf]
      %v3002 = vld [vmem:[%s2981 + $0x50] sm:$0xf]
      %v3003 = vld [vmem:[%s2981 + $0x54] sm:$0xf]
      %v3004 = vld [vmem:[%s2981 + $0x58] sm:$0xf]
      %v3005 = vld [vmem:[%s2981 + $0x5c] sm:$0xf]
      %v3006 = vld [vmem:[%s2981 + $0x60] sm:$0xf]
      %v3007 = vld [vmem:[%s2981 + $0x64] sm:$0xf]
      %v3008 = vld [vmem:[%s2981 + $0x68] sm:$0xf]
      %v3009 = vld [vmem:[%s2981 + $0x6c] sm:$0xf]
      %v3010 = vld [vmem:[%s2981 + $0x70] sm:$0xf]
      %v3011 = vld [vmem:[%s2981 + $0x74] sm:$0xf]
      %v3012 = vld [vmem:[%s2981 + $0x78] sm:$0xf]
      %v3013 = vld [vmem:[%s2981 + $0x7c] sm:$0xf]
      %v3014 = vld [vmem:[%s2981 + $0x80] sm:$0xf]
      %v3015 = vld [vmem:[%s2981 + $0x84] sm:$0xf]
      %v3016 = vld [vmem:[%s2981 + $0x88] sm:$0xf]
      %v3017 = vld [vmem:[%s2981 + $0x8c] sm:$0xf]
      %v3018 = vld [vmem:[%s2981 + $0x90] sm:$0xf]
      %v3019 = vld [vmem:[%s2981 + $0x94] sm:$0xf]
      %v3020 = vld [vmem:[%s2981 + $0x98] sm:$0xf]
      %v3021 = vld [vmem:[%s2981 + $0x9c] sm:$0xf]
      %v3022 = vld [vmem:[%s2981 + $0xa0] sm:$0xf]
      %v3023 = vld [vmem:[%s2981 + $0xa4] sm:$0xf]
      %v3024 = vld [vmem:[%s2981 + $0xa8] sm:$0xf]
      %v3025 = vld [vmem:[%s2981 + $0xac] sm:$0xf]
      %v3026 = vld [vmem:[%s2981 + $0xb0] sm:$0xf]
      %v3027 = vld [vmem:[%s2981 + $0xb4] sm:$0xf]
      %v3028 = vld [vmem:[%s2981 + $0xb8] sm:$0xf]
      %v3029 = vld [vmem:[%s2981 + $0xbc] sm:$0xf]
      %v3030 = vld [vmem:[%s2981 + $0xc0] sm:$0xf]
      %v3031 = vld [vmem:[%s2981 + $0xc4] sm:$0xf]
      %v3032 = vld [vmem:[%s2981 + $0xc8] sm:$0xf]
      %v3033 = vld [vmem:[%s2981 + $0xcc] sm:$0xf]
      %v3034 = vld [vmem:[%s2981 + $0xd0] sm:$0xf]
      %v3035 = vld [vmem:[%s2981 + $0xd4] sm:$0xf]
      %v3036 = vld [vmem:[%s2981 + $0xd8] sm:$0xf]
      %v3037 = vld [vmem:[%s2981 + $0xdc] sm:$0xf]
      %v3038 = vld [vmem:[%s2981 + $0xe0] sm:$0xf]
      %v3039 = vld [vmem:[%s2981 + $0xe4] sm:$0xf]
      %v3040 = vld [vmem:[%s2981 + $0xe8] sm:$0xf]
      %v3041 = vld [vmem:[%s2981 + $0xec] sm:$0xf]
      %v3042 = vld [vmem:[%s2981 + $0xf0] sm:$0xf]
      %v3043 = vld [vmem:[%s2981 + $0xf4] sm:$0xf]
      %v3044 = vld [vmem:[%s2981 + $0xf8] sm:$0xf]
      %v3045 = vld [vmem:[%s2981 + $0xfc] sm:$0xf]
      %v3046 = vld [vmem:[%s2] sm:$0x1]
      %v3048 = vlaneseq
      %v3049 = vshrl.u32 %v3048, 7
      %v3050 = vsub.s32 0, %v3049
      %v3051 = vrot.slane %v3046, %v3050
      %v3117 = vunpack.c.l.b16 %v2982
      %v3118 = vunpack.c.l.b16 %v2983
      %v3119 = vunpack.c.l.b16 %v2984
      %v3120 = vunpack.c.l.b16 %v2985
      %v3121 = vunpack.c.l.b16 %v2986
      %v3122 = vunpack.c.l.b16 %v2987
      %v3123 = vunpack.c.l.b16 %v2988
      %v3124 = vunpack.c.l.b16 %v2989
      %v3125 = vunpack.c.l.b16 %v2990
      %v3126 = vunpack.c.l.b16 %v2991
      %v3127 = vunpack.c.l.b16 %v2992
      %v3128 = vunpack.c.l.b16 %v2993
      %v3129 = vunpack.c.l.b16 %v2994
      %v3130 = vunpack.c.l.b16 %v2995
      %v3131 = vunpack.c.l.b16 %v2996
      %v3132 = vunpack.c.l.b16 %v2997
      %v3133 = vunpack.c.l.b16 %v2998
      %v3134 = vunpack.c.l.b16 %v2999
      %v3135 = vunpack.c.l.b16 %v3000
      %v3136 = vunpack.c.l.b16 %v3001
      %v3137 = vunpack.c.l.b16 %v3002
      %v3138 = vunpack.c.l.b16 %v3003
      %v3139 = vunpack.c.l.b16 %v3004
      %v3140 = vunpack.c.l.b16 %v3005
      %v3141 = vunpack.c.l.b16 %v3006
      %v3142 = vunpack.c.l.b16 %v3007
      %v3143 = vunpack.c.l.b16 %v3008
      %v3144 = vunpack.c.l.b16 %v3009
      %v3145 = vunpack.c.l.b16 %v3010
      %v3146 = vunpack.c.l.b16 %v3011
      %v3147 = vunpack.c.l.b16 %v3012
      %v3148 = vunpack.c.l.b16 %v3013
      %v3149 = vunpack.c.l.b16 %v3014
      %v3150 = vunpack.c.l.b16 %v3015
      %v3151 = vunpack.c.l.b16 %v3016
      %v3152 = vunpack.c.l.b16 %v3017
      %v3153 = vunpack.c.l.b16 %v3018
      %v3154 = vunpack.c.l.b16 %v3019
      %v3155 = vunpack.c.l.b16 %v3020
      %v3156 = vunpack.c.l.b16 %v3021
      %v3157 = vunpack.c.l.b16 %v3022
      %v3158 = vunpack.c.l.b16 %v3023
      %v3159 = vunpack.c.l.b16 %v3024
      %v3160 = vunpack.c.l.b16 %v3025
      %v3161 = vunpack.c.l.b16 %v3026
      %v3162 = vunpack.c.l.b16 %v3027
      %v3163 = vunpack.c.l.b16 %v3028
      %v3164 = vunpack.c.l.b16 %v3029
      %v3165 = vunpack.c.l.b16 %v3030
      %v3166 = vunpack.c.l.b16 %v3031
      %v3167 = vunpack.c.l.b16 %v3032
      %v3168 = vunpack.c.l.b16 %v3033
      %v3169 = vunpack.c.l.b16 %v3034
      %v3170 = vunpack.c.l.b16 %v3035
      %v3171 = vunpack.c.l.b16 %v3036
      %v3172 = vunpack.c.l.b16 %v3037
      %v3173 = vunpack.c.l.b16 %v3038
      %v3174 = vunpack.c.l.b16 %v3039
      %v3175 = vunpack.c.l.b16 %v3040
      %v3176 = vunpack.c.l.b16 %v3041
      %v3177 = vunpack.c.l.b16 %v3042
      %v3178 = vunpack.c.l.b16 %v3043
      %v3179 = vunpack.c.l.b16 %v3044
      %v3180 = vunpack.c.l.b16 %v3045
      %v3181 = vpack.c.b16 %v3118, %v3117
      %v3182 = vpack.c.b16 %v3120, %v3119
      %v3183 = vpack.c.b16 %v3122, %v3121
      %v3184 = vpack.c.b16 %v3124, %v3123
      %v3185 = vpack.c.b16 %v3126, %v3125
      %v3186 = vpack.c.b16 %v3128, %v3127
      %v3187 = vpack.c.b16 %v3130, %v3129
      %v3188 = vpack.c.b16 %v3132, %v3131
      %v3189 = vpack.c.b16 %v3134, %v3133
      %v3190 = vpack.c.b16 %v3136, %v3135
      %v3191 = vpack.c.b16 %v3138, %v3137
      %v3192 = vpack.c.b16 %v3140, %v3139
      %v3193 = vpack.c.b16 %v3142, %v3141
      %v3194 = vpack.c.b16 %v3144, %v3143
      %v3195 = vpack.c.b16 %v3146, %v3145
      %v3196 = vpack.c.b16 %v3148, %v3147
      %v3197 = vpack.c.b16 %v3150, %v3149
      %v3198 = vpack.c.b16 %v3152, %v3151
      %v3199 = vpack.c.b16 %v3154, %v3153
      %v3200 = vpack.c.b16 %v3156, %v3155
      %v3201 = vpack.c.b16 %v3158, %v3157
      %v3202 = vpack.c.b16 %v3160, %v3159
      %v3203 = vpack.c.b16 %v3162, %v3161
      %v3204 = vpack.c.b16 %v3164, %v3163
      %v3205 = vpack.c.b16 %v3166, %v3165
      %v3206 = vpack.c.b16 %v3168, %v3167
      %v3207 = vpack.c.b16 %v3170, %v3169
      %v3208 = vpack.c.b16 %v3172, %v3171
      %v3209 = vpack.c.b16 %v3174, %v3173
      %v3210 = vpack.c.b16 %v3176, %v3175
      %v3211 = vpack.c.b16 %v3178, %v3177
      %v3212 = vpack.c.b16 %v3180, %v3179
      %3245 = vmatprep.subr.bf16.mxu0 0
      %3246 = vmatpush1.bf16.msra.mxu0 %v3188
      %3247 = vmatprep.subr.bf16.mxu0 0
      %3248 = vmatpush1.bf16.msra.mxu0 %v3187
      %3249 = vmatprep.subr.bf16.mxu0 0
      %3250 = vmatpush1.bf16.msra.mxu0 %v3186
      %3251 = vmatprep.subr.bf16.mxu0 0
      %3252 = vmatpush1.bf16.msra.mxu0 %v3185
      %3253 = vmatprep.subr.bf16.mxu0 0
      %3254 = vmatpush1.bf16.msra.mxu0 %v3184
      %3255 = vmatprep.subr.bf16.mxu0 0
      %3256 = vmatpush1.bf16.msra.mxu0 %v3183
      %3257 = vmatprep.subr.bf16.mxu0 0
      %3258 = vmatpush1.bf16.msra.mxu0 %v3182
      %3259 = vmatprep.subr.bf16.mxu0 0
      %3260 = vmatpush1.bf16.msra.mxu0 %v3181
      %3261 = vmatprep.subr.bf16.mxu0 0
      %3262 = vmatpush2.bf16.msra.mxu0 %v3196
      %3263 = vmatprep.subr.bf16.mxu0 0
      %3264 = vmatpush2.bf16.msra.mxu0 %v3195
      %3265 = vmatprep.subr.bf16.mxu0 0
      %3266 = vmatpush2.bf16.msra.mxu0 %v3194
      %3267 = vmatprep.subr.bf16.mxu0 0
      %3268 = vmatpush2.bf16.msra.mxu0 %v3193
      %3269 = vmatprep.subr.bf16.mxu0 0
      %3270 = vmatpush2.bf16.msra.mxu0 %v3192
      %3271 = vmatprep.subr.bf16.mxu0 0
      %3272 = vmatpush2.bf16.msra.mxu0 %v3191
      %3273 = vmatprep.subr.bf16.mxu0 0
      %3274 = vmatpush2.bf16.msra.mxu0 %v3190
      %3275 = vmatprep.subr.bf16.mxu0 0
      %3276 = vmatpush2.bf16.msra.mxu0 %v3189
      %3277 = vmatprep.mubr.bf16.mxu0 %v1311
      %3278 = vmatmul.mubr.bf16.gmra.mxu0 %v1247
      %v3279 = vpop.f32.mrf.mxu0
      %v3280 = vadd.f32 %v3051, %v3279
      %v3281 = vpop.f32.mrf.mxu0
      %v3282 = vpop.f32.mrf.mxu0
      %v3283 = vadd.f32 %v3051, %v3282
      %v3284 = vpop.f32.mrf.mxu0
      %3285 = vmatprep.mubr.bf16.mxu0 %v1312
      %3286 = vmatmul.mubr.bf16.gmra.mxu0 %v1248
      %v3287 = vpop.f32.mrf.mxu0
      %v3288 = vadd.f32 %v3051, %v3287
      %v3289 = vpop.f32.mrf.mxu0
      %v3290 = vpop.f32.mrf.mxu0
      %v3291 = vadd.f32 %v3051, %v3290
      %v3292 = vpop.f32.mrf.mxu0
      %3293 = vmatprep.mubr.bf16.mxu0 %v1313
      %3294 = vmatmul.mubr.bf16.gmra.mxu0 %v1249
      %v3295 = vpop.f32.mrf.mxu0
      %v3296 = vadd.f32 %v3051, %v3295
      %v3297 = vpop.f32.mrf.mxu0
      %v3298 = vpop.f32.mrf.mxu0
      %v3299 = vadd.f32 %v3051, %v3298
      %v3300 = vpop.f32.mrf.mxu0
      %3301 = vmatprep.mubr.bf16.mxu0 %v1314
      %3302 = vmatmul.mubr.bf16.gmra.mxu0 %v1250
      %v3303 = vpop.f32.mrf.mxu0
      %v3304 = vadd.f32 %v3051, %v3303
      %v3305 = vpop.f32.mrf.mxu0
      %v3306 = vpop.f32.mrf.mxu0
      %v3307 = vadd.f32 %v3051, %v3306
      %v3308 = vpop.f32.mrf.mxu0
      %3309 = vmatprep.mubr.bf16.mxu0 %v1315
      %3310 = vmatmul.mubr.bf16.gmra.mxu0 %v1251
      %v3311 = vpop.f32.mrf.mxu0
      %v3312 = vadd.f32 %v3051, %v3311
      %v3313 = vpop.f32.mrf.mxu0
      %v3314 = vpop.f32.mrf.mxu0
      %v3315 = vadd.f32 %v3051, %v3314
      %v3316 = vpop.f32.mrf.mxu0
      %3317 = vmatprep.mubr.bf16.mxu0 %v1316
      %3318 = vmatmul.mubr.bf16.gmra.mxu0 %v1252
      %v3319 = vpop.f32.mrf.mxu0
      %v3320 = vadd.f32 %v3051, %v3319
      %v3321 = vpop.f32.mrf.mxu0
      %v3322 = vpop.f32.mrf.mxu0
      %v3323 = vadd.f32 %v3051, %v3322
      %v3324 = vpop.f32.mrf.mxu0
      %3325 = vmatprep.mubr.bf16.mxu0 %v1317
      %3326 = vmatmul.mubr.bf16.gmra.mxu0 %v1253
      %v3327 = vpop.f32.mrf.mxu0
      %v3328 = vadd.f32 %v3051, %v3327
      %v3329 = vpop.f32.mrf.mxu0
      %v3330 = vpop.f32.mrf.mxu0
      %v3331 = vadd.f32 %v3051, %v3330
      %v3332 = vpop.f32.mrf.mxu0
      %3333 = vmatprep.mubr.bf16.mxu0 %v1318
      %3334 = vmatmul.mubr.bf16.gmra.mxu0 %v1254
      %v3335 = vpop.f32.mrf.mxu0
      %v3336 = vadd.f32 %v3051, %v3335
      %v3337 = vpop.f32.mrf.mxu0
      %v3338 = vpop.f32.mrf.mxu0
      %v3339 = vadd.f32 %v3051, %v3338
      %v3340 = vpop.f32.mrf.mxu0
      %3341 = vmatprep.mubr.bf16.mxu0 %v1319
      %3342 = vmatmul.mubr.bf16.gmra.mxu0 %v1255
      %v3343 = vpop.f32.mrf.mxu0
      %v3344 = vadd.f32 %v3051, %v3343
      %v3345 = vpop.f32.mrf.mxu0
      %v3346 = vpop.f32.mrf.mxu0
      %v3347 = vadd.f32 %v3051, %v3346
      %v3348 = vpop.f32.mrf.mxu0
      %3349 = vmatprep.mubr.bf16.mxu0 %v1320
      %3350 = vmatmul.mubr.bf16.gmra.mxu0 %v1256
      %v3351 = vpop.f32.mrf.mxu0
      %v3352 = vadd.f32 %v3051, %v3351
      %v3353 = vpop.f32.mrf.mxu0
      %v3354 = vpop.f32.mrf.mxu0
      %v3355 = vadd.f32 %v3051, %v3354
      %v3356 = vpop.f32.mrf.mxu0
      %3357 = vmatprep.mubr.bf16.mxu0 %v1321
      %3358 = vmatmul.mubr.bf16.gmra.mxu0 %v1257
      %v3359 = vpop.f32.mrf.mxu0
      %v3360 = vadd.f32 %v3051, %v3359
      %v3361 = vpop.f32.mrf.mxu0
      %v3362 = vpop.f32.mrf.mxu0
      %v3363 = vadd.f32 %v3051, %v3362
      %v3364 = vpop.f32.mrf.mxu0
      %3365 = vmatprep.mubr.bf16.mxu0 %v1322
      %3366 = vmatmul.mubr.bf16.gmra.mxu0 %v1258
      %v3367 = vpop.f32.mrf.mxu0
      %v3368 = vadd.f32 %v3051, %v3367
      %v3369 = vpop.f32.mrf.mxu0
      %v3370 = vpop.f32.mrf.mxu0
      %v3371 = vadd.f32 %v3051, %v3370
      %v3372 = vpop.f32.mrf.mxu0
      %3373 = vmatprep.mubr.bf16.mxu0 %v1323
      %3374 = vmatmul.mubr.bf16.gmra.mxu0 %v1259
      %v3375 = vpop.f32.mrf.mxu0
      %v3376 = vadd.f32 %v3051, %v3375
      %v3377 = vpop.f32.mrf.mxu0
      %v3378 = vpop.f32.mrf.mxu0
      %v3379 = vadd.f32 %v3051, %v3378
      %v3380 = vpop.f32.mrf.mxu0
      %3381 = vmatprep.mubr.bf16.mxu0 %v1324
      %3382 = vmatmul.mubr.bf16.gmra.mxu0 %v1260
      %v3383 = vpop.f32.mrf.mxu0
      %v3384 = vadd.f32 %v3051, %v3383
      %v3385 = vpop.f32.mrf.mxu0
      %v3386 = vpop.f32.mrf.mxu0
      %v3387 = vadd.f32 %v3051, %v3386
      %v3388 = vpop.f32.mrf.mxu0
      %3389 = vmatprep.mubr.bf16.mxu0 %v1325
      %3390 = vmatmul.mubr.bf16.gmra.mxu0 %v1261
      %v3391 = vpop.f32.mrf.mxu0
      %v3392 = vadd.f32 %v3051, %v3391
      %v3393 = vpop.f32.mrf.mxu0
      %v3394 = vpop.f32.mrf.mxu0
      %v3395 = vadd.f32 %v3051, %v3394
      %v3396 = vpop.f32.mrf.mxu0
      %3397 = vmatprep.mubr.bf16.mxu0 %v1350
      %3398 = vmatmul.mubr.bf16.gmra.mxu0 %v1346
      %v3399 = vpop.f32.mrf.mxu0
      %v3400 = vadd.f32 %v3051, %v3399
      %v3401 = vpop.f32.mrf.mxu0
      %v3402 = vpop.f32.mrf.mxu0
      %v3403 = vadd.f32 %v3051, %v3402
      %v3404 = vpop.f32.mrf.mxu0
      %3405 = vdwg.mxu0
      %3406 = vmatprep.subr.bf16.mxu0 0
      %3407 = vmatpush1.bf16.msra.mxu0 %v3204
      %3408 = vmatprep.subr.bf16.mxu0 0
      %3409 = vmatpush1.bf16.msra.mxu0 %v3203
      %3410 = vmatprep.subr.bf16.mxu0 0
      %3411 = vmatpush1.bf16.msra.mxu0 %v3202
      %3412 = vmatprep.subr.bf16.mxu0 0
      %3413 = vmatpush1.bf16.msra.mxu0 %v3201
      %3414 = vmatprep.subr.bf16.mxu0 0
      %3415 = vmatpush1.bf16.msra.mxu0 %v3200
      %3416 = vmatprep.subr.bf16.mxu0 0
      %3417 = vmatpush1.bf16.msra.mxu0 %v3199
      %3418 = vmatprep.subr.bf16.mxu0 0
      %3419 = vmatpush1.bf16.msra.mxu0 %v3198
      %3420 = vmatprep.subr.bf16.mxu0 0
      %3421 = vmatpush1.bf16.msra.mxu0 %v3197
      %3422 = vmatprep.subr.bf16.mxu0 0
      %3423 = vmatpush2.bf16.msra.mxu0 %v3212
      %3424 = vmatprep.subr.bf16.mxu0 0
      %3425 = vmatpush2.bf16.msra.mxu0 %v3211
      %3426 = vmatprep.subr.bf16.mxu0 0
      %3427 = vmatpush2.bf16.msra.mxu0 %v3210
      %3428 = vmatprep.subr.bf16.mxu0 0
      %3429 = vmatpush2.bf16.msra.mxu0 %v3209
      %3430 = vmatprep.subr.bf16.mxu0 0
      %3431 = vmatpush2.bf16.msra.mxu0 %v3208
      %3432 = vmatprep.subr.bf16.mxu0 0
      %3433 = vmatpush2.bf16.msra.mxu0 %v3207
      %3434 = vmatprep.subr.bf16.mxu0 0
      %3435 = vmatpush2.bf16.msra.mxu0 %v3206
      %3436 = vmatprep.subr.bf16.mxu0 0
      %3437 = vmatpush2.bf16.msra.mxu0 %v3205
      %3438 = vmatprep.mubr.bf16.mxu0 %v1312
      %3439 = vmatmul.mubr.bf16.gmra.mxu0 %v1248
      %v3440 = vpop.f32.mrf.mxu0
      %v3441 = vadd.f32 %v3280, %v3440
      %v3442 = vpop.f32.mrf.mxu0
      %v3443 = vpop.f32.mrf.mxu0
      %v3444 = vadd.f32 %v3283, %v3443
      %v3445 = vpop.f32.mrf.mxu0
      %3446 = vmatprep.mubr.bf16.mxu0 %v1313
      %3447 = vmatmul.mubr.bf16.gmra.mxu0 %v1249
      %v3448 = vpop.f32.mrf.mxu0
      %v3449 = vadd.f32 %v3288, %v3448
      %v3450 = vpop.f32.mrf.mxu0
      %v3451 = vpop.f32.mrf.mxu0
      %v3452 = vadd.f32 %v3291, %v3451
      %v3453 = vpop.f32.mrf.mxu0
      %3454 = vmatprep.mubr.bf16.mxu0 %v1314
      %3455 = vmatmul.mubr.bf16.gmra.mxu0 %v1250
      %v3456 = vpop.f32.mrf.mxu0
      %v3457 = vadd.f32 %v3296, %v3456
      %v3458 = vpop.f32.mrf.mxu0
      %v3459 = vpop.f32.mrf.mxu0
      %v3460 = vadd.f32 %v3299, %v3459
      %v3461 = vpop.f32.mrf.mxu0
      %3462 = vmatprep.mubr.bf16.mxu0 %v1315
      %3463 = vmatmul.mubr.bf16.gmra.mxu0 %v1251
      %v3464 = vpop.f32.mrf.mxu0
      %v3465 = vadd.f32 %v3304, %v3464
      %v3466 = vpop.f32.mrf.mxu0
      %v3467 = vpop.f32.mrf.mxu0
      %v3468 = vadd.f32 %v3307, %v3467
      %v3469 = vpop.f32.mrf.mxu0
      %3470 = vmatprep.mubr.bf16.mxu0 %v1316
      %3471 = vmatmul.mubr.bf16.gmra.mxu0 %v1252
      %v3472 = vpop.f32.mrf.mxu0
      %v3473 = vadd.f32 %v3312, %v3472
      %v3474 = vpop.f32.mrf.mxu0
      %v3475 = vpop.f32.mrf.mxu0
      %v3476 = vadd.f32 %v3315, %v3475
      %v3477 = vpop.f32.mrf.mxu0
      %3478 = vmatprep.mubr.bf16.mxu0 %v1317
      %3479 = vmatmul.mubr.bf16.gmra.mxu0 %v1253
      %v3480 = vpop.f32.mrf.mxu0
      %v3481 = vadd.f32 %v3320, %v3480
      %v3482 = vpop.f32.mrf.mxu0
      %v3483 = vpop.f32.mrf.mxu0
      %v3484 = vadd.f32 %v3323, %v3483
      %v3485 = vpop.f32.mrf.mxu0
      %3486 = vmatprep.mubr.bf16.mxu0 %v1318
      %3487 = vmatmul.mubr.bf16.gmra.mxu0 %v1254
      %v3488 = vpop.f32.mrf.mxu0
      %v3489 = vadd.f32 %v3328, %v3488
      %v3490 = vpop.f32.mrf.mxu0
      %v3491 = vpop.f32.mrf.mxu0
      %v3492 = vadd.f32 %v3331, %v3491
      %v3493 = vpop.f32.mrf.mxu0
      %3494 = vmatprep.mubr.bf16.mxu0 %v1319
      %3495 = vmatmul.mubr.bf16.gmra.mxu0 %v1255
      %v3496 = vpop.f32.mrf.mxu0
      %v3497 = vadd.f32 %v3336, %v3496
      %v3498 = vpop.f32.mrf.mxu0
      %v3499 = vpop.f32.mrf.mxu0
      %v3500 = vadd.f32 %v3339, %v3499
      %v3501 = vpop.f32.mrf.mxu0
      %3502 = vmatprep.mubr.bf16.mxu0 %v1320
      %3503 = vmatmul.mubr.bf16.gmra.mxu0 %v1256
      %v3504 = vpop.f32.mrf.mxu0
      %v3505 = vadd.f32 %v3344, %v3504
      %v3506 = vpop.f32.mrf.mxu0
      %v3507 = vpop.f32.mrf.mxu0
      %v3508 = vadd.f32 %v3347, %v3507
      %v3509 = vpop.f32.mrf.mxu0
      %3510 = vmatprep.mubr.bf16.mxu0 %v1321
      %3511 = vmatmul.mubr.bf16.gmra.mxu0 %v1257
      %v3512 = vpop.f32.mrf.mxu0
      %v3513 = vadd.f32 %v3352, %v3512
      %v3514 = vpop.f32.mrf.mxu0
      %v3515 = vpop.f32.mrf.mxu0
      %v3516 = vadd.f32 %v3355, %v3515
      %v3517 = vpop.f32.mrf.mxu0
      %3518 = vmatprep.mubr.bf16.mxu0 %v1322
      %3519 = vmatmul.mubr.bf16.gmra.mxu0 %v1258
      %v3520 = vpop.f32.mrf.mxu0
      %v3521 = vadd.f32 %v3360, %v3520
      %v3522 = vpop.f32.mrf.mxu0
      %v3523 = vpop.f32.mrf.mxu0
      %v3524 = vadd.f32 %v3363, %v3523
      %v3525 = vpop.f32.mrf.mxu0
      %3526 = vmatprep.mubr.bf16.mxu0 %v1323
      %3527 = vmatmul.mubr.bf16.gmra.mxu0 %v1259
      %v3528 = vpop.f32.mrf.mxu0
      %v3529 = vadd.f32 %v3368, %v3528
      %v3530 = vpop.f32.mrf.mxu0
      %v3531 = vpop.f32.mrf.mxu0
      %v3532 = vadd.f32 %v3371, %v3531
      %v3533 = vpop.f32.mrf.mxu0
      %3534 = vmatprep.mubr.bf16.mxu0 %v1324
      %3535 = vmatmul.mubr.bf16.gmra.mxu0 %v1260
      %v3536 = vpop.f32.mrf.mxu0
      %v3537 = vadd.f32 %v3376, %v3536
      %v3538 = vpop.f32.mrf.mxu0
      %v3539 = vpop.f32.mrf.mxu0
      %v3540 = vadd.f32 %v3379, %v3539
      %v3541 = vpop.f32.mrf.mxu0
      %3542 = vmatprep.mubr.bf16.mxu0 %v1325
      %3543 = vmatmul.mubr.bf16.gmra.mxu0 %v1261
      %v3544 = vpop.f32.mrf.mxu0
      %v3545 = vadd.f32 %v3384, %v3544
      %v3546 = vpop.f32.mrf.mxu0
      %v3547 = vpop.f32.mrf.mxu0
      %v3548 = vadd.f32 %v3387, %v3547
      %v3549 = vpop.f32.mrf.mxu0
      %3550 = vmatprep.mubr.bf16.mxu0 %v1350
      %3551 = vmatmul.mubr.bf16.gmra.mxu0 %v1346
      %v3552 = vpop.f32.mrf.mxu0
      %v3553 = vadd.f32 %v3392, %v3552
      %v3554 = vpop.f32.mrf.mxu0
      %v3555 = vpop.f32.mrf.mxu0
      %v3556 = vadd.f32 %v3395, %v3555
      %v3557 = vpop.f32.mrf.mxu0
      %3558 = vmatprep.mubr.bf16.mxu0 %v2979
      %3559 = vmatmul.mubr.bf16.gmra.mxu0 %v2975
      %v3560 = vpop.f32.mrf.mxu0
      %v3561 = vadd.f32 %v3400, %v3560
      %v3562 = vpop.f32.mrf.mxu0
      %v3563 = vpop.f32.mrf.mxu0
      %v3564 = vadd.f32 %v3403, %v3563
      %v3565 = vpop.f32.mrf.mxu0
      %3566 = vdwg.mxu0
      %v3568 = vrot.slane %v768, 5
      %v3569 = vrot.slane %v3568, 4
      %v3570 = vrot.slane %v769, 5
      %v3571 = vsel %vm1955, %v3569, %v3570
      %v3572 = vrot.slane %v3570, 4
      %v3573 = vrot.slane %v770, 5
      %v3574 = vsel %vm1955, %v3572, %v3573
      %v3575 = vunpack.c.l.b16 %v3571
      %v3576 = vunpack.c.l.b16 %v3574
      %v3577 = vpack.c.b16 %v3576, %v3575
      %s3579 = scalar_lea.vmem %s1, 768
      %v3580 = vld [vmem:[%s3579] sm:$0xf]
      %v3581 = vld [vmem:[%s3579 + $0x4] sm:$0xf]
      %v3582 = vld [vmem:[%s3579 + $0x8] sm:$0xf]
      %v3583 = vld [vmem:[%s3579 + $0xc] sm:$0xf]
      %v3584 = vld [vmem:[%s3579 + $0x10] sm:$0xf]
      %v3585 = vld [vmem:[%s3579 + $0x14] sm:$0xf]
      %v3586 = vld [vmem:[%s3579 + $0x18] sm:$0xf]
      %v3587 = vld [vmem:[%s3579 + $0x1c] sm:$0xf]
      %v3588 = vld [vmem:[%s3579 + $0x20] sm:$0xf]
      %v3589 = vld [vmem:[%s3579 + $0x24] sm:$0xf]
      %v3590 = vld [vmem:[%s3579 + $0x28] sm:$0xf]
      %v3591 = vld [vmem:[%s3579 + $0x2c] sm:$0xf]
      %v3592 = vld [vmem:[%s3579 + $0x30] sm:$0xf]
      %v3593 = vld [vmem:[%s3579 + $0x34] sm:$0xf]
      %v3594 = vld [vmem:[%s3579 + $0x38] sm:$0xf]
      %v3595 = vld [vmem:[%s3579 + $0x3c] sm:$0xf]
      %v3596 = vld [vmem:[%s3579 + $0x40] sm:$0xf]
      %v3597 = vld [vmem:[%s3579 + $0x44] sm:$0xf]
      %v3598 = vld [vmem:[%s3579 + $0x48] sm:$0xf]
      %v3599 = vld [vmem:[%s3579 + $0x4c] sm:$0xf]
      %v3600 = vld [vmem:[%s3579 + $0x50] sm:$0xf]
      %v3601 = vld [vmem:[%s3579 + $0x54] sm:$0xf]
      %v3602 = vld [vmem:[%s3579 + $0x58] sm:$0xf]
      %v3603 = vld [vmem:[%s3579 + $0x5c] sm:$0xf]
      %v3604 = vld [vmem:[%s3579 + $0x60] sm:$0xf]
      %v3605 = vld [vmem:[%s3579 + $0x64] sm:$0xf]
      %v3606 = vld [vmem:[%s3579 + $0x68] sm:$0xf]
      %v3607 = vld [vmem:[%s3579 + $0x6c] sm:$0xf]
      %v3608 = vld [vmem:[%s3579 + $0x70] sm:$0xf]
      %v3609 = vld [vmem:[%s3579 + $0x74] sm:$0xf]
      %v3610 = vld [vmem:[%s3579 + $0x78] sm:$0xf]
      %v3611 = vld [vmem:[%s3579 + $0x7c] sm:$0xf]
      %v3612 = vld [vmem:[%s3579 + $0x80] sm:$0xf]
      %v3613 = vld [vmem:[%s3579 + $0x84] sm:$0xf]
      %v3614 = vld [vmem:[%s3579 + $0x88] sm:$0xf]
      %v3615 = vld [vmem:[%s3579 + $0x8c] sm:$0xf]
      %v3616 = vld [vmem:[%s3579 + $0x90] sm:$0xf]
      %v3617 = vld [vmem:[%s3579 + $0x94] sm:$0xf]
      %v3618 = vld [vmem:[%s3579 + $0x98] sm:$0xf]
      %v3619 = vld [vmem:[%s3579 + $0x9c] sm:$0xf]
      %v3620 = vld [vmem:[%s3579 + $0xa0] sm:$0xf]
      %v3621 = vld [vmem:[%s3579 + $0xa4] sm:$0xf]
      %v3622 = vld [vmem:[%s3579 + $0xa8] sm:$0xf]
      %v3623 = vld [vmem:[%s3579 + $0xac] sm:$0xf]
      %v3624 = vld [vmem:[%s3579 + $0xb0] sm:$0xf]
      %v3625 = vld [vmem:[%s3579 + $0xb4] sm:$0xf]
      %v3626 = vld [vmem:[%s3579 + $0xb8] sm:$0xf]
      %v3627 = vld [vmem:[%s3579 + $0xbc] sm:$0xf]
      %v3628 = vld [vmem:[%s3579 + $0xc0] sm:$0xf]
      %v3629 = vld [vmem:[%s3579 + $0xc4] sm:$0xf]
      %v3630 = vld [vmem:[%s3579 + $0xc8] sm:$0xf]
      %v3631 = vld [vmem:[%s3579 + $0xcc] sm:$0xf]
      %v3632 = vld [vmem:[%s3579 + $0xd0] sm:$0xf]
      %v3633 = vld [vmem:[%s3579 + $0xd4] sm:$0xf]
      %v3634 = vld [vmem:[%s3579 + $0xd8] sm:$0xf]
      %v3635 = vld [vmem:[%s3579 + $0xdc] sm:$0xf]
      %v3636 = vld [vmem:[%s3579 + $0xe0] sm:$0xf]
      %v3637 = vld [vmem:[%s3579 + $0xe4] sm:$0xf]
      %v3638 = vld [vmem:[%s3579 + $0xe8] sm:$0xf]
      %v3639 = vld [vmem:[%s3579 + $0xec] sm:$0xf]
      %v3640 = vld [vmem:[%s3579 + $0xf0] sm:$0xf]
      %v3641 = vld [vmem:[%s3579 + $0xf4] sm:$0xf]
      %v3642 = vld [vmem:[%s3579 + $0xf8] sm:$0xf]
      %v3643 = vld [vmem:[%s3579 + $0xfc] sm:$0xf]
      %v3708 = vunpack.c.l.b16 %v3580
      %v3709 = vunpack.c.l.b16 %v3581
      %v3710 = vunpack.c.l.b16 %v3582
      %v3711 = vunpack.c.l.b16 %v3583
      %v3712 = vunpack.c.l.b16 %v3584
      %v3713 = vunpack.c.l.b16 %v3585
      %v3714 = vunpack.c.l.b16 %v3586
      %v3715 = vunpack.c.l.b16 %v3587
      %v3716 = vunpack.c.l.b16 %v3588
      %v3717 = vunpack.c.l.b16 %v3589
      %v3718 = vunpack.c.l.b16 %v3590
      %v3719 = vunpack.c.l.b16 %v3591
      %v3720 = vunpack.c.l.b16 %v3592
      %v3721 = vunpack.c.l.b16 %v3593
      %v3722 = vunpack.c.l.b16 %v3594
      %v3723 = vunpack.c.l.b16 %v3595
      %v3724 = vunpack.c.l.b16 %v3596
      %v3725 = vunpack.c.l.b16 %v3597
      %v3726 = vunpack.c.l.b16 %v3598
      %v3727 = vunpack.c.l.b16 %v3599
      %v3728 = vunpack.c.l.b16 %v3600
      %v3729 = vunpack.c.l.b16 %v3601
      %v3730 = vunpack.c.l.b16 %v3602
      %v3731 = vunpack.c.l.b16 %v3603
      %v3732 = vunpack.c.l.b16 %v3604
      %v3733 = vunpack.c.l.b16 %v3605
      %v3734 = vunpack.c.l.b16 %v3606
      %v3735 = vunpack.c.l.b16 %v3607
      %v3736 = vunpack.c.l.b16 %v3608
      %v3737 = vunpack.c.l.b16 %v3609
      %v3738 = vunpack.c.l.b16 %v3610
      %v3739 = vunpack.c.l.b16 %v3611
      %v3740 = vunpack.c.l.b16 %v3612
      %v3741 = vunpack.c.l.b16 %v3613
      %v3742 = vunpack.c.l.b16 %v3614
      %v3743 = vunpack.c.l.b16 %v3615
      %v3744 = vunpack.c.l.b16 %v3616
      %v3745 = vunpack.c.l.b16 %v3617
      %v3746 = vunpack.c.l.b16 %v3618
      %v3747 = vunpack.c.l.b16 %v3619
      %v3748 = vunpack.c.l.b16 %v3620
      %v3749 = vunpack.c.l.b16 %v3621
      %v3750 = vunpack.c.l.b16 %v3622
      %v3751 = vunpack.c.l.b16 %v3623
      %v3752 = vunpack.c.l.b16 %v3624
      %v3753 = vunpack.c.l.b16 %v3625
      %v3754 = vunpack.c.l.b16 %v3626
      %v3755 = vunpack.c.l.b16 %v3627
      %v3756 = vunpack.c.l.b16 %v3628
      %v3757 = vunpack.c.l.b16 %v3629
      %v3758 = vunpack.c.l.b16 %v3630
      %v3759 = vunpack.c.l.b16 %v3631
      %v3760 = vunpack.c.l.b16 %v3632
      %v3761 = vunpack.c.l.b16 %v3633
      %v3762 = vunpack.c.l.b16 %v3634
      %v3763 = vunpack.c.l.b16 %v3635
      %v3764 = vunpack.c.l.b16 %v3636
      %v3765 = vunpack.c.l.b16 %v3637
      %v3766 = vunpack.c.l.b16 %v3638
      %v3767 = vunpack.c.l.b16 %v3639
      %v3768 = vunpack.c.l.b16 %v3640
      %v3769 = vunpack.c.l.b16 %v3641
      %v3770 = vunpack.c.l.b16 %v3642
      %v3771 = vunpack.c.l.b16 %v3643
      %v3772 = vpack.c.b16 %v3709, %v3708
      %v3773 = vpack.c.b16 %v3711, %v3710
      %v3774 = vpack.c.b16 %v3713, %v3712
      %v3775 = vpack.c.b16 %v3715, %v3714
      %v3776 = vpack.c.b16 %v3717, %v3716
      %v3777 = vpack.c.b16 %v3719, %v3718
      %v3778 = vpack.c.b16 %v3721, %v3720
      %v3779 = vpack.c.b16 %v3723, %v3722
      %v3780 = vpack.c.b16 %v3725, %v3724
      %v3781 = vpack.c.b16 %v3727, %v3726
      %v3782 = vpack.c.b16 %v3729, %v3728
      %v3783 = vpack.c.b16 %v3731, %v3730
      %v3784 = vpack.c.b16 %v3733, %v3732
      %v3785 = vpack.c.b16 %v3735, %v3734
      %v3786 = vpack.c.b16 %v3737, %v3736
      %v3787 = vpack.c.b16 %v3739, %v3738
      %v3788 = vpack.c.b16 %v3741, %v3740
      %v3789 = vpack.c.b16 %v3743, %v3742
      %v3790 = vpack.c.b16 %v3745, %v3744
      %v3791 = vpack.c.b16 %v3747, %v3746
      %v3792 = vpack.c.b16 %v3749, %v3748
      %v3793 = vpack.c.b16 %v3751, %v3750
      %v3794 = vpack.c.b16 %v3753, %v3752
      %v3795 = vpack.c.b16 %v3755, %v3754
      %v3796 = vpack.c.b16 %v3757, %v3756
      %v3797 = vpack.c.b16 %v3759, %v3758
      %v3798 = vpack.c.b16 %v3761, %v3760
      %v3799 = vpack.c.b16 %v3763, %v3762
      %v3800 = vpack.c.b16 %v3765, %v3764
      %v3801 = vpack.c.b16 %v3767, %v3766
      %v3802 = vpack.c.b16 %v3769, %v3768
      %v3803 = vpack.c.b16 %v3771, %v3770
      %3836 = vmatprep.subr.bf16.mxu0 0
      %3837 = vmatpush1.bf16.msra.mxu0 %v3779
      %3838 = vmatprep.subr.bf16.mxu0 0
      %3839 = vmatpush1.bf16.msra.mxu0 %v3778
      %3840 = vmatprep.subr.bf16.mxu0 0
      %3841 = vmatpush1.bf16.msra.mxu0 %v3777
      %3842 = vmatprep.subr.bf16.mxu0 0
      %3843 = vmatpush1.bf16.msra.mxu0 %v3776
      %3844 = vmatprep.subr.bf16.mxu0 0
      %3845 = vmatpush1.bf16.msra.mxu0 %v3775
      %3846 = vmatprep.subr.bf16.mxu0 0
      %3847 = vmatpush1.bf16.msra.mxu0 %v3774
      %3848 = vmatprep.subr.bf16.mxu0 0
      %3849 = vmatpush1.bf16.msra.mxu0 %v3773
      %3850 = vmatprep.subr.bf16.mxu0 0
      %3851 = vmatpush1.bf16.msra.mxu0 %v3772
      %3852 = vmatprep.subr.bf16.mxu0 0
      %3853 = vmatpush2.bf16.msra.mxu0 %v3787
      %3854 = vmatprep.subr.bf16.mxu0 0
      %3855 = vmatpush2.bf16.msra.mxu0 %v3786
      %3856 = vmatprep.subr.bf16.mxu0 0
      %3857 = vmatpush2.bf16.msra.mxu0 %v3785
      %3858 = vmatprep.subr.bf16.mxu0 0
      %3859 = vmatpush2.bf16.msra.mxu0 %v3784
      %3860 = vmatprep.subr.bf16.mxu0 0
      %3861 = vmatpush2.bf16.msra.mxu0 %v3783
      %3862 = vmatprep.subr.bf16.mxu0 0
      %3863 = vmatpush2.bf16.msra.mxu0 %v3782
      %3864 = vmatprep.subr.bf16.mxu0 0
      %3865 = vmatpush2.bf16.msra.mxu0 %v3781
      %3866 = vmatprep.subr.bf16.mxu0 0
      %3867 = vmatpush2.bf16.msra.mxu0 %v3780
      %3868 = vmatprep.mubr.bf16.mxu0 %v2109
      %3869 = vmatmul.mubr.bf16.gmra.mxu0 %v1311
      %v3870 = vpop.f32.mrf.mxu0
      %v3871 = vadd.f32 %v3051, %v3870
      %v3872 = vpop.f32.mrf.mxu0
      %v3873 = vpop.f32.mrf.mxu0
      %v3874 = vadd.f32 %v3051, %v3873
      %v3875 = vpop.f32.mrf.mxu0
      %3876 = vmatprep.mubr.bf16.mxu0 %v2110
      %3877 = vmatmul.mubr.bf16.gmra.mxu0 %v1312
      %v3878 = vpop.f32.mrf.mxu0
      %v3879 = vadd.f32 %v3051, %v3878
      %v3880 = vpop.f32.mrf.mxu0
      %v3881 = vpop.f32.mrf.mxu0
      %v3882 = vadd.f32 %v3051, %v3881
      %v3883 = vpop.f32.mrf.mxu0
      %3884 = vmatprep.mubr.bf16.mxu0 %v2111
      %3885 = vmatmul.mubr.bf16.gmra.mxu0 %v1313
      %v3886 = vpop.f32.mrf.mxu0
      %v3887 = vadd.f32 %v3051, %v3886
      %v3888 = vpop.f32.mrf.mxu0
      %v3889 = vpop.f32.mrf.mxu0
      %v3890 = vadd.f32 %v3051, %v3889
      %v3891 = vpop.f32.mrf.mxu0
      %3892 = vmatprep.mubr.bf16.mxu0 %v2112
      %3893 = vmatmul.mubr.bf16.gmra.mxu0 %v1314
      %v3894 = vpop.f32.mrf.mxu0
      %v3895 = vadd.f32 %v3051, %v3894
      %v3896 = vpop.f32.mrf.mxu0
      %v3897 = vpop.f32.mrf.mxu0
      %v3898 = vadd.f32 %v3051, %v3897
      %v3899 = vpop.f32.mrf.mxu0
      %3900 = vmatprep.mubr.bf16.mxu0 %v2113
      %3901 = vmatmul.mubr.bf16.gmra.mxu0 %v1315
      %v3902 = vpop.f32.mrf.mxu0
      %v3903 = vadd.f32 %v3051, %v3902
      %v3904 = vpop.f32.mrf.mxu0
      %v3905 = vpop.f32.mrf.mxu0
      %v3906 = vadd.f32 %v3051, %v3905
      %v3907 = vpop.f32.mrf.mxu0
      %3908 = vmatprep.mubr.bf16.mxu0 %v2114
      %3909 = vmatmul.mubr.bf16.gmra.mxu0 %v1316
      %v3910 = vpop.f32.mrf.mxu0
      %v3911 = vadd.f32 %v3051, %v3910
      %v3912 = vpop.f32.mrf.mxu0
      %v3913 = vpop.f32.mrf.mxu0
      %v3914 = vadd.f32 %v3051, %v3913
      %v3915 = vpop.f32.mrf.mxu0
      %3916 = vmatprep.mubr.bf16.mxu0 %v2115
      %3917 = vmatmul.mubr.bf16.gmra.mxu0 %v1317
      %v3918 = vpop.f32.mrf.mxu0
      %v3919 = vadd.f32 %v3051, %v3918
      %v3920 = vpop.f32.mrf.mxu0
      %v3921 = vpop.f32.mrf.mxu0
      %v3922 = vadd.f32 %v3051, %v3921
      %v3923 = vpop.f32.mrf.mxu0
      %3924 = vmatprep.mubr.bf16.mxu0 %v2116
      %3925 = vmatmul.mubr.bf16.gmra.mxu0 %v1318
      %v3926 = vpop.f32.mrf.mxu0
      %v3927 = vadd.f32 %v3051, %v3926
      %v3928 = vpop.f32.mrf.mxu0
      %v3929 = vpop.f32.mrf.mxu0
      %v3930 = vadd.f32 %v3051, %v3929
      %v3931 = vpop.f32.mrf.mxu0
      %3932 = vmatprep.mubr.bf16.mxu0 %v2117
      %3933 = vmatmul.mubr.bf16.gmra.mxu0 %v1319
      %v3934 = vpop.f32.mrf.mxu0
      %v3935 = vadd.f32 %v3051, %v3934
      %v3936 = vpop.f32.mrf.mxu0
      %v3937 = vpop.f32.mrf.mxu0
      %v3938 = vadd.f32 %v3051, %v3937
      %v3939 = vpop.f32.mrf.mxu0
      %3940 = vmatprep.mubr.bf16.mxu0 %v2118
      %3941 = vmatmul.mubr.bf16.gmra.mxu0 %v1320
      %v3942 = vpop.f32.mrf.mxu0
      %v3943 = vadd.f32 %v3051, %v3942
      %v3944 = vpop.f32.mrf.mxu0
      %v3945 = vpop.f32.mrf.mxu0
      %v3946 = vadd.f32 %v3051, %v3945
      %v3947 = vpop.f32.mrf.mxu0
      %3948 = vmatprep.mubr.bf16.mxu0 %v2119
      %3949 = vmatmul.mubr.bf16.gmra.mxu0 %v1321
      %v3950 = vpop.f32.mrf.mxu0
      %v3951 = vadd.f32 %v3051, %v3950
      %v3952 = vpop.f32.mrf.mxu0
      %v3953 = vpop.f32.mrf.mxu0
      %v3954 = vadd.f32 %v3051, %v3953
      %v3955 = vpop.f32.mrf.mxu0
      %3956 = vmatprep.mubr.bf16.mxu0 %v2120
      %3957 = vmatmul.mubr.bf16.gmra.mxu0 %v1322
      %v3958 = vpop.f32.mrf.mxu0
      %v3959 = vadd.f32 %v3051, %v3958
      %v3960 = vpop.f32.mrf.mxu0
      %v3961 = vpop.f32.mrf.mxu0
      %v3962 = vadd.f32 %v3051, %v3961
      %v3963 = vpop.f32.mrf.mxu0
      %3964 = vmatprep.mubr.bf16.mxu0 %v2121
      %3965 = vmatmul.mubr.bf16.gmra.mxu0 %v1323
      %v3966 = vpop.f32.mrf.mxu0
      %v3967 = vadd.f32 %v3051, %v3966
      %v3968 = vpop.f32.mrf.mxu0
      %v3969 = vpop.f32.mrf.mxu0
      %v3970 = vadd.f32 %v3051, %v3969
      %v3971 = vpop.f32.mrf.mxu0
      %3972 = vmatprep.mubr.bf16.mxu0 %v2122
      %3973 = vmatmul.mubr.bf16.gmra.mxu0 %v1324
      %v3974 = vpop.f32.mrf.mxu0
      %v3975 = vadd.f32 %v3051, %v3974
      %v3976 = vpop.f32.mrf.mxu0
      %v3977 = vpop.f32.mrf.mxu0
      %v3978 = vadd.f32 %v3051, %v3977
      %v3979 = vpop.f32.mrf.mxu0
      %3980 = vmatprep.mubr.bf16.mxu0 %v2123
      %3981 = vmatmul.mubr.bf16.gmra.mxu0 %v1325
      %v3982 = vpop.f32.mrf.mxu0
      %v3983 = vadd.f32 %v3051, %v3982
      %v3984 = vpop.f32.mrf.mxu0
      %v3985 = vpop.f32.mrf.mxu0
      %v3986 = vadd.f32 %v3051, %v3985
      %v3987 = vpop.f32.mrf.mxu0
      %3988 = vmatprep.mubr.bf16.mxu0 %v2142
      %3989 = vmatmul.mubr.bf16.gmra.mxu0 %v1350
      %v3990 = vpop.f32.mrf.mxu0
      %v3991 = vadd.f32 %v3051, %v3990
      %v3992 = vpop.f32.mrf.mxu0
      %v3993 = vpop.f32.mrf.mxu0
      %v3994 = vadd.f32 %v3051, %v3993
      %v3995 = vpop.f32.mrf.mxu0
      %3996 = vdwg.mxu0
      %3997 = vmatprep.subr.bf16.mxu0 0
      %3998 = vmatpush1.bf16.msra.mxu0 %v3795
      %3999 = vmatprep.subr.bf16.mxu0 0
      %4000 = vmatpush1.bf16.msra.mxu0 %v3794
      %4001 = vmatprep.subr.bf16.mxu0 0
      %4002 = vmatpush1.bf16.msra.mxu0 %v3793
      %4003 = vmatprep.subr.bf16.mxu0 0
      %4004 = vmatpush1.bf16.msra.mxu0 %v3792
      %4005 = vmatprep.subr.bf16.mxu0 0
      %4006 = vmatpush1.bf16.msra.mxu0 %v3791
      %4007 = vmatprep.subr.bf16.mxu0 0
      %4008 = vmatpush1.bf16.msra.mxu0 %v3790
      %4009 = vmatprep.subr.bf16.mxu0 0
      %4010 = vmatpush1.bf16.msra.mxu0 %v3789
      %4011 = vmatprep.subr.bf16.mxu0 0
      %4012 = vmatpush1.bf16.msra.mxu0 %v3788
      %4013 = vmatprep.subr.bf16.mxu0 0
      %4014 = vmatpush2.bf16.msra.mxu0 %v3803
      %4015 = vmatprep.subr.bf16.mxu0 0
      %4016 = vmatpush2.bf16.msra.mxu0 %v3802
      %4017 = vmatprep.subr.bf16.mxu0 0
      %4018 = vmatpush2.bf16.msra.mxu0 %v3801
      %4019 = vmatprep.subr.bf16.mxu0 0
      %4020 = vmatpush2.bf16.msra.mxu0 %v3800
      %4021 = vmatprep.subr.bf16.mxu0 0
      %4022 = vmatpush2.bf16.msra.mxu0 %v3799
      %4023 = vmatprep.subr.bf16.mxu0 0
      %4024 = vmatpush2.bf16.msra.mxu0 %v3798
      %4025 = vmatprep.subr.bf16.mxu0 0
      %4026 = vmatpush2.bf16.msra.mxu0 %v3797
      %4027 = vmatprep.subr.bf16.mxu0 0
      %4028 = vmatpush2.bf16.msra.mxu0 %v3796
      %4029 = vmatprep.mubr.bf16.mxu0 %v2110
      %4030 = vmatmul.mubr.bf16.gmra.mxu0 %v1312
      %v4031 = vpop.f32.mrf.mxu0
      %v4032 = vadd.f32 %v3871, %v4031
      %v4033 = vpop.f32.mrf.mxu0
      %v4034 = vpop.f32.mrf.mxu0
      %v4035 = vadd.f32 %v3874, %v4034
      %v4036 = vpop.f32.mrf.mxu0
      %4037 = vmatprep.mubr.bf16.mxu0 %v2111
      %4038 = vmatmul.mubr.bf16.gmra.mxu0 %v1313
      %v4039 = vpop.f32.mrf.mxu0
      %v4040 = vadd.f32 %v3879, %v4039
      %v4041 = vpop.f32.mrf.mxu0
      %v4042 = vpop.f32.mrf.mxu0
      %v4043 = vadd.f32 %v3882, %v4042
      %v4044 = vpop.f32.mrf.mxu0
      %4045 = vmatprep.mubr.bf16.mxu0 %v2112
      %4046 = vmatmul.mubr.bf16.gmra.mxu0 %v1314
      %v4047 = vpop.f32.mrf.mxu0
      %v4048 = vadd.f32 %v3887, %v4047
      %v4049 = vpop.f32.mrf.mxu0
      %v4050 = vpop.f32.mrf.mxu0
      %v4051 = vadd.f32 %v3890, %v4050
      %v4052 = vpop.f32.mrf.mxu0
      %4053 = vmatprep.mubr.bf16.mxu0 %v2113
      %4054 = vmatmul.mubr.bf16.gmra.mxu0 %v1315
      %v4055 = vpop.f32.mrf.mxu0
      %v4056 = vadd.f32 %v3895, %v4055
      %v4057 = vpop.f32.mrf.mxu0
      %v4058 = vpop.f32.mrf.mxu0
      %v4059 = vadd.f32 %v3898, %v4058
      %v4060 = vpop.f32.mrf.mxu0
      %4061 = vmatprep.mubr.bf16.mxu0 %v2114
      %4062 = vmatmul.mubr.bf16.gmra.mxu0 %v1316
      %v4063 = vpop.f32.mrf.mxu0
      %v4064 = vadd.f32 %v3903, %v4063
      %v4065 = vpop.f32.mrf.mxu0
      %v4066 = vpop.f32.mrf.mxu0
      %v4067 = vadd.f32 %v3906, %v4066
      %v4068 = vpop.f32.mrf.mxu0
      %4069 = vmatprep.mubr.bf16.mxu0 %v2115
      %4070 = vmatmul.mubr.bf16.gmra.mxu0 %v1317
      %v4071 = vpop.f32.mrf.mxu0
      %v4072 = vadd.f32 %v3911, %v4071
      %v4073 = vpop.f32.mrf.mxu0
      %v4074 = vpop.f32.mrf.mxu0
      %v4075 = vadd.f32 %v3914, %v4074
      %v4076 = vpop.f32.mrf.mxu0
      %4077 = vmatprep.mubr.bf16.mxu0 %v2116
      %4078 = vmatmul.mubr.bf16.gmra.mxu0 %v1318
      %v4079 = vpop.f32.mrf.mxu0
      %v4080 = vadd.f32 %v3919, %v4079
      %v4081 = vpop.f32.mrf.mxu0
      %v4082 = vpop.f32.mrf.mxu0
      %v4083 = vadd.f32 %v3922, %v4082
      %v4084 = vpop.f32.mrf.mxu0
      %4085 = vmatprep.mubr.bf16.mxu0 %v2117
      %4086 = vmatmul.mubr.bf16.gmra.mxu0 %v1319
      %v4087 = vpop.f32.mrf.mxu0
      %v4088 = vadd.f32 %v3927, %v4087
      %v4089 = vpop.f32.mrf.mxu0
      %v4090 = vpop.f32.mrf.mxu0
      %v4091 = vadd.f32 %v3930, %v4090
      %v4092 = vpop.f32.mrf.mxu0
      %4093 = vmatprep.mubr.bf16.mxu0 %v2118
      %4094 = vmatmul.mubr.bf16.gmra.mxu0 %v1320
      %v4095 = vpop.f32.mrf.mxu0
      %v4096 = vadd.f32 %v3935, %v4095
      %v4097 = vpop.f32.mrf.mxu0
      %v4098 = vpop.f32.mrf.mxu0
      %v4099 = vadd.f32 %v3938, %v4098
      %v4100 = vpop.f32.mrf.mxu0
      %4101 = vmatprep.mubr.bf16.mxu0 %v2119
      %4102 = vmatmul.mubr.bf16.gmra.mxu0 %v1321
      %v4103 = vpop.f32.mrf.mxu0
      %v4104 = vadd.f32 %v3943, %v4103
      %v4105 = vpop.f32.mrf.mxu0
      %v4106 = vpop.f32.mrf.mxu0
      %v4107 = vadd.f32 %v3946, %v4106
      %v4108 = vpop.f32.mrf.mxu0
      %4109 = vmatprep.mubr.bf16.mxu0 %v2120
      %4110 = vmatmul.mubr.bf16.gmra.mxu0 %v1322
      %v4111 = vpop.f32.mrf.mxu0
      %v4112 = vadd.f32 %v3951, %v4111
      %v4113 = vpop.f32.mrf.mxu0
      %v4114 = vpop.f32.mrf.mxu0
      %v4115 = vadd.f32 %v3954, %v4114
      %v4116 = vpop.f32.mrf.mxu0
      %4117 = vmatprep.mubr.bf16.mxu0 %v2121
      %4118 = vmatmul.mubr.bf16.gmra.mxu0 %v1323
      %v4119 = vpop.f32.mrf.mxu0
      %v4120 = vadd.f32 %v3959, %v4119
      %v4121 = vpop.f32.mrf.mxu0
      %v4122 = vpop.f32.mrf.mxu0
      %v4123 = vadd.f32 %v3962, %v4122
      %v4124 = vpop.f32.mrf.mxu0
      %4125 = vmatprep.mubr.bf16.mxu0 %v2122
      %4126 = vmatmul.mubr.bf16.gmra.mxu0 %v1324
      %v4127 = vpop.f32.mrf.mxu0
      %v4128 = vadd.f32 %v3967, %v4127
      %v4129 = vpop.f32.mrf.mxu0
      %v4130 = vpop.f32.mrf.mxu0
      %v4131 = vadd.f32 %v3970, %v4130
      %v4132 = vpop.f32.mrf.mxu0
      %4133 = vmatprep.mubr.bf16.mxu0 %v2123
      %4134 = vmatmul.mubr.bf16.gmra.mxu0 %v1325
      %v4135 = vpop.f32.mrf.mxu0
      %v4136 = vadd.f32 %v3975, %v4135
      %v4137 = vpop.f32.mrf.mxu0
      %v4138 = vpop.f32.mrf.mxu0
      %v4139 = vadd.f32 %v3978, %v4138
      %v4140 = vpop.f32.mrf.mxu0
      %4141 = vmatprep.mubr.bf16.mxu0 %v2142
      %4142 = vmatmul.mubr.bf16.gmra.mxu0 %v1350
      %v4143 = vpop.f32.mrf.mxu0
      %v4144 = vadd.f32 %v3983, %v4143
      %v4145 = vpop.f32.mrf.mxu0
      %v4146 = vpop.f32.mrf.mxu0
      %v4147 = vadd.f32 %v3986, %v4146
      %v4148 = vpop.f32.mrf.mxu0
      %4149 = vmatprep.mubr.bf16.mxu0 %v3577
      %4150 = vmatmul.mubr.bf16.gmra.mxu0 %v2979
      %v4151 = vpop.f32.mrf.mxu0
      %v4152 = vadd.f32 %v3991, %v4151
      %v4153 = vpop.f32.mrf.mxu0
      %v4154 = vpop.f32.mrf.mxu0
      %v4155 = vadd.f32 %v3994, %v4154
      %v4156 = vpop.f32.mrf.mxu0
      %4157 = vdwg.mxu0
      %v4158 = vpack.c.bf16 %v3444, %v3441
      %v4159 = vpack.c.bf16 %v4035, %v4032
      %v4160 = vpack.c.bf16 %v3452, %v3449
      %v4161 = vpack.c.bf16 %v4043, %v4040
      %v4162 = vpack.c.bf16 %v3460, %v3457
      %v4163 = vpack.c.bf16 %v4051, %v4048
      %v4164 = vpack.c.bf16 %v3468, %v3465
      %v4165 = vpack.c.bf16 %v4059, %v4056
      %v4166 = vpack.c.bf16 %v3476, %v3473
      %v4167 = vpack.c.bf16 %v4067, %v4064
      %v4168 = vpack.c.bf16 %v3484, %v3481
      %v4169 = vpack.c.bf16 %v4075, %v4072
      %v4170 = vpack.c.bf16 %v3492, %v3489
      %v4171 = vpack.c.bf16 %v4083, %v4080
      %v4172 = vpack.c.bf16 %v3500, %v3497
      %v4173 = vpack.c.bf16 %v4091, %v4088
      %v4174 = vpack.c.bf16 %v3508, %v3505
      %v4175 = vpack.c.bf16 %v4099, %v4096
      %v4176 = vpack.c.bf16 %v3516, %v3513
      %v4177 = vpack.c.bf16 %v4107, %v4104
      %v4178 = vpack.c.bf16 %v3524, %v3521
      %v4179 = vpack.c.bf16 %v4115, %v4112
      %v4180 = vpack.c.bf16 %v3532, %v3529
      %v4181 = vpack.c.bf16 %v4123, %v4120
      %v4182 = vpack.c.bf16 %v3540, %v3537
      %v4183 = vpack.c.bf16 %v4131, %v4128
      %v4184 = vpack.c.bf16 %v3548, %v3545
      %v4185 = vpack.c.bf16 %v4139, %v4136
      %v4186 = vpack.c.bf16 %v3556, %v3553
      %v4187 = vpack.c.bf16 %v4147, %v4144
      %v4188 = vpack.c.bf16 %v3564, %v3561
      %v4189 = vpack.c.bf16 %v4155, %v4152
      %v4222 = vunpack.c.l.b16 %v4158
      %v4223 = vunpack.c.l.b16 %v4159
      %v4224 = vunpack.c.h.b16 %v4158
      %v4225 = vunpack.c.h.b16 %v4159
      %v4226 = vunpack.c.l.b16 %v4160
      %v4227 = vunpack.c.l.b16 %v4161
      %v4228 = vunpack.c.h.b16 %v4160
      %v4229 = vunpack.c.h.b16 %v4161
      %v4230 = vunpack.c.l.b16 %v4162
      %v4231 = vunpack.c.l.b16 %v4163
      %v4232 = vunpack.c.h.b16 %v4162
      %v4233 = vunpack.c.h.b16 %v4163
      %v4234 = vunpack.c.l.b16 %v4164
      %v4235 = vunpack.c.l.b16 %v4165
      %v4236 = vunpack.c.h.b16 %v4164
      %v4237 = vunpack.c.h.b16 %v4165
      %v4238 = vunpack.c.l.b16 %v4166
      %v4239 = vunpack.c.l.b16 %v4167
      %v4240 = vunpack.c.h.b16 %v4166
      %v4241 = vunpack.c.h.b16 %v4167
      %v4242 = vunpack.c.l.b16 %v4168
      %v4243 = vunpack.c.l.b16 %v4169
      %v4244 = vunpack.c.h.b16 %v4168
      %v4245 = vunpack.c.h.b16 %v4169
      %v4246 = vunpack.c.l.b16 %v4170
      %v4247 = vunpack.c.l.b16 %v4171
      %v4248 = vunpack.c.h.b16 %v4170
      %v4249 = vunpack.c.h.b16 %v4171
      %v4250 = vunpack.c.l.b16 %v4172
      %v4251 = vunpack.c.l.b16 %v4173
      %v4252 = vunpack.c.h.b16 %v4172
      %v4253 = vunpack.c.h.b16 %v4173
      %v4254 = vunpack.c.l.b16 %v4174
      %v4255 = vunpack.c.l.b16 %v4175
      %v4256 = vunpack.c.h.b16 %v4174
      %v4257 = vunpack.c.h.b16 %v4175
      %v4258 = vunpack.c.l.b16 %v4176
      %v4259 = vunpack.c.l.b16 %v4177
      %v4260 = vunpack.c.h.b16 %v4176
      %v4261 = vunpack.c.h.b16 %v4177
      %v4262 = vunpack.c.l.b16 %v4178
      %v4263 = vunpack.c.l.b16 %v4179
      %v4264 = vunpack.c.h.b16 %v4178
      %v4265 = vunpack.c.h.b16 %v4179
      %v4266 = vunpack.c.l.b16 %v4180
      %v4267 = vunpack.c.l.b16 %v4181
      %v4268 = vunpack.c.h.b16 %v4180
      %v4269 = vunpack.c.h.b16 %v4181
      %v4270 = vunpack.c.l.b16 %v4182
      %v4271 = vunpack.c.l.b16 %v4183
      %v4272 = vunpack.c.h.b16 %v4182
      %v4273 = vunpack.c.h.b16 %v4183
      %v4274 = vunpack.c.l.b16 %v4184
      %v4275 = vunpack.c.l.b16 %v4185
      %v4276 = vunpack.c.h.b16 %v4184
      %v4277 = vunpack.c.h.b16 %v4185
      %v4278 = vunpack.c.l.b16 %v4186
      %v4279 = vunpack.c.l.b16 %v4187
      %v4280 = vunpack.c.h.b16 %v4186
      %v4281 = vunpack.c.h.b16 %v4187
      %v4282 = vunpack.c.l.b16 %v4188
      %v4283 = vunpack.c.l.b16 %v4189
      %v4284 = vunpack.c.h.b16 %v4188
      %v4285 = vunpack.c.h.b16 %v4189
      %v4286 = vpack.c.b16 %v4223, %v4222
      %v4287 = vpack.c.b16 %v4225, %v4224
      %v4288 = vpack.c.b16 %v4227, %v4226
      %v4289 = vpack.c.b16 %v4229, %v4228
      %v4290 = vpack.c.b16 %v4231, %v4230
      %v4291 = vpack.c.b16 %v4233, %v4232
      %v4292 = vpack.c.b16 %v4235, %v4234
      %v4293 = vpack.c.b16 %v4237, %v4236
      %v4294 = vpack.c.b16 %v4239, %v4238
      %v4295 = vpack.c.b16 %v4241, %v4240
      %v4296 = vpack.c.b16 %v4243, %v4242
      %v4297 = vpack.c.b16 %v4245, %v4244
      %v4298 = vpack.c.b16 %v4247, %v4246
      %v4299 = vpack.c.b16 %v4249, %v4248
      %v4300 = vpack.c.b16 %v4251, %v4250
      %v4301 = vpack.c.b16 %v4253, %v4252
      %v4302 = vpack.c.b16 %v4255, %v4254
      %v4303 = vpack.c.b16 %v4257, %v4256
      %v4304 = vpack.c.b16 %v4259, %v4258
      %v4305 = vpack.c.b16 %v4261, %v4260
      %v4306 = vpack.c.b16 %v4263, %v4262
      %v4307 = vpack.c.b16 %v4265, %v4264
      %v4308 = vpack.c.b16 %v4267, %v4266
      %v4309 = vpack.c.b16 %v4269, %v4268
      %v4310 = vpack.c.b16 %v4271, %v4270
      %v4311 = vpack.c.b16 %v4273, %v4272
      %v4312 = vpack.c.b16 %v4275, %v4274
      %v4313 = vpack.c.b16 %v4277, %v4276
      %v4314 = vpack.c.b16 %v4279, %v4278
      %v4315 = vpack.c.b16 %v4281, %v4280
      %v4316 = vpack.c.b16 %v4283, %v4282
      %v4317 = vpack.c.b16 %v4285, %v4284
      %s4350 = scalar_lea.vmem %s170, 16
      %4351 = vst [vmem:[%s4350] sm:$0xff] %v4286
      %4352 = vst [vmem:[%s4350 + $0x8] sm:$0xff] %v4287
      %4353 = vst [vmem:[%s4350 + $0x20] sm:$0xff] %v4288
      %4354 = vst [vmem:[%s4350 + $0x28] sm:$0xff] %v4289
      %4355 = vst [vmem:[%s4350 + $0x40] sm:$0xff] %v4290
      %4356 = vst [vmem:[%s4350 + $0x48] sm:$0xff] %v4291
      %4357 = vst [vmem:[%s4350 + $0x60] sm:$0xff] %v4292
      %4358 = vst [vmem:[%s4350 + $0x68] sm:$0xff] %v4293
      %4359 = vst [vmem:[%s4350 + $0x80] sm:$0xff] %v4294
      %4360 = vst [vmem:[%s4350 + $0x88] sm:$0xff] %v4295
      %4361 = vst [vmem:[%s4350 + $0xa0] sm:$0xff] %v4296
      %4362 = vst [vmem:[%s4350 + $0xa8] sm:$0xff] %v4297
      %4363 = vst [vmem:[%s4350 + $0xc0] sm:$0xff] %v4298
      %4364 = vst [vmem:[%s4350 + $0xc8] sm:$0xff] %v4299
      %4365 = vst [vmem:[%s4350 + $0xe0] sm:$0xff] %v4300
      %4366 = vst [vmem:[%s4350 + $0xe8] sm:$0xff] %v4301
      %4367 = vst [vmem:[%s4350 + $0x100] sm:$0xff] %v4302
      %4368 = vst [vmem:[%s4350 + $0x108] sm:$0xff] %v4303
      %4369 = vst [vmem:[%s4350 + $0x120] sm:$0xff] %v4304
      %4370 = vst [vmem:[%s4350 + $0x128] sm:$0xff] %v4305
      %4371 = vst [vmem:[%s4350 + $0x140] sm:$0xff] %v4306
      %4372 = vst [vmem:[%s4350 + $0x148] sm:$0xff] %v4307
      %4373 = vst [vmem:[%s4350 + $0x160] sm:$0xff] %v4308
      %4374 = vst [vmem:[%s4350 + $0x168] sm:$0xff] %v4309
      %4375 = vst [vmem:[%s4350 + $0x180] sm:$0xff] %v4310
      %4376 = vst [vmem:[%s4350 + $0x188] sm:$0xff] %v4311
      %4377 = vst [vmem:[%s4350 + $0x1a0] sm:$0xff] %v4312
      %4378 = vst [vmem:[%s4350 + $0x1a8] sm:$0xff] %v4313
      %4379 = vst [vmem:[%s4350 + $0x1c0] sm:$0xff] %v4314
      %4380 = vst [vmem:[%s4350 + $0x1c8] sm:$0xff] %v4315
      %4381 = vst [vmem:[%s4350 + $0x1e0] sm:$0xff] %v4316
      %4382 = vst [vmem:[%s4350 + $0x1e8] sm:$0xff] %v4317
      %p4383 = scmp.lt.s32.totalorder %s14, 1
      %s4384 = scalar_select %p4383, %s14, 1
      %s4385 = smul.addr %s4384, 128
      %s4386 = smul.addr %s4385, 4
      %s4387 = scalar_lea.vmem %s3, %s4386
      // Predicated region
      $region33: #{decoder_forward_pallas.5} parent=31 // pred_check
        %p4388 = pneg %p100
      $region34: #{decoder_forward_pallas.5} parent=31 // pred_check_branch
        %4390 = sbr.rel (%p4388) target = $region36
      $region35: #{decoder_forward_pallas.5} parent=31 // pred_region
        _
      $region36: #{decoder_forward_pallas.5} parent=31 // pred_fallthru
        _
    $region32: #{decoder_forward_pallas.5} parent=5 // pred_fallthru
      _
    %p4391 = scmp.le.s32.totalorder 2, %s9
    // Predicated region
    $region37: #{decoder_forward_pallas.5} parent=5 // pred_check
      %p4392 = pneg %p4391
    $region38: #{decoder_forward_pallas.5} parent=5 // pred_check_branch
      %4394 = sbr.rel (%p4392) target = $region40
    $region39: #{decoder_forward_pallas.5} parent=5 // pred_region
      %s4395 = ssub.s32 %s9, 2
      // Predicated region
      $region41: #{decoder_forward_pallas.5} parent=39 // pred_check
        %p4396 = pneg %p106
      $region42: #{decoder_forward_pallas.5} parent=39 // pred_check_branch
        %4398 = sbr.rel (%p4396) target = $region44
      $region43: #{decoder_forward_pallas.5} parent=39 // pred_region
        %p4399 = scmp.lt.s32.totalorder %s15, 1
        %s4400 = scalar_select %p4399, %s15, 1
        %s4401 = smul.addr %s4400, 128
        %s4402 = smul.addr %s4401, 4
        %s4403 = scalar_lea.vmem %s3, %s4402
      $region44: #{decoder_forward_pallas.5} parent=39 // pred_fallthru
        _
    $region40: #{decoder_forward_pallas.5} parent=5 // pred_fallthru
      _
  $region6: #{decoder_forward_pallas.5} parent=0 // loop_footer
    %s13 = sadd.s32 1, %s9
  $region7: #{decoder_forward_pallas.5} parent=0 // loop_footer_branch
    %8 = sbr.rel target = $region3
  $region8: #{decoder_forward_pallas.5} parent=0 // loop_exit
    _

</llo_original>
